<compile_context>
chip_gen: v7x
topology: tpu7x:2x2x1
jax: 0.10.0
libtpu: 0.0.40
codegen_flags: <defaults>
</compile_context>

<pallas_src>
import functools

import jax
import jax.numpy as jnp
import numpy as np
from jax.experimental import pallas as pl
from jax.experimental.pallas import tpu as pltpu


def _attn_temporal_kernel(x_ref, wqkv_ref, wproj_ref, pbias_ref, o_ref,
                          qkv_sc, heads_sc, *, num_heads: int):
    TB, T, C = x_ref.shape
    hd = C // num_heads

    # f32 tile -> bf16 on the VPU (4 B/elem HBM traffic instead of 4+2+2 with a
    # wrapper-side cast).  (TB, T, C) -> (TB*T, C) is a leading-dim collapse.
    x2 = x_ref[...].reshape(TB * T, C).astype(jnp.bfloat16)

    # Hot matmul #1: QKV projection, bf16 operands, f32 accumulation, staged
    # into a bf16 VMEM scratch so the head loop reads slices from the Ref.
    qkv_sc[...] = jnp.dot(
        x2, wqkv_ref[...], preferred_element_type=jnp.float32
    ).reshape(TB, T, 3 * C).astype(jnp.bfloat16)

    for h in range(num_heads):           # static loop; slices are static offsets
        q = qkv_sc[:, :, 0 * C + h * hd:0 * C + (h + 1) * hd]   # (TB,T,hd) bf16
        k = qkv_sc[:, :, 1 * C + h * hd:1 * C + (h + 1) * hd]
        v = qkv_sc[:, :, 2 * C + h * hd:2 * C + (h + 1) * hd]

        # Hot matmul #2: scores; 1/sqrt(hd) is pre-folded into w_qkv q-columns.
        s = jnp.einsum('bqd,bkd->bqk', q, k,
                       preferred_element_type=jnp.float32)       # (TB,T,T) f32
        # TODO(synk): for large production T, tile over kv blocks with an
        # online-softmax accumulator instead of materializing (TB,T,T) scores.
        s = s - jnp.max(s, axis=-1, keepdims=True)
        p = jnp.exp(s)
        p = p * pl.reciprocal(jnp.sum(p, axis=-1, keepdims=True), approx=True)

        # Hot matmul #3: attn @ v.
        o_h = jnp.einsum('bqk,bkd->bqd', p.astype(jnp.bfloat16), v,
                         preferred_element_type=jnp.float32)     # (TB,T,hd) f32

        # Head concat via lane-offset store (replaces per-head K=hd projection
        # folds and the f32 accumulator read-modify-write).
        heads_sc[:, h * hd:(h + 1) * hd] = (
            o_h.reshape(TB * T, hd).astype(jnp.bfloat16))

    # Hot matmul #4: ONE output projection at full K=C contraction depth.
    out = jnp.dot(heads_sc[...], wproj_ref[...],
                  preferred_element_type=jnp.float32) + pbias_ref[...]
    o_ref[...] = out.reshape(TB, T, C).astype(o_ref.dtype)


def prepare_attention_temporal_params(w_qkv, w_proj, b_proj, *, num_heads):
    """One-time ("init-time") parameter prep: fold the softmax scale into the
    q-columns of w_qkv and cast weights to bf16 MXU operand dtype."""
    C = w_proj.shape[0]
    hd = C // num_heads
    scale = hd ** (-0.5)
    w_qkv_scaled = w_qkv.at[:, :C].multiply(scale)
    return (w_qkv_scaled.astype(jnp.bfloat16),
            w_proj.astype(jnp.bfloat16),
            b_proj.reshape(1, C).astype(jnp.float32))


def _vmem_limit_bytes(tb, T, C):
    """Explicit scoped-VMEM budget (double-buffered tiles + scratch + temps),
    with headroom, clamped to [16 MiB, 64 MiB] so it is valid on v5e..v7x."""
    x_tile = tb * T * C * 4
    out_tile = tb * T * C * 4
    weights = C * 3 * C * 2 + C * C * 2 + C * 4
    scratch = tb * T * 3 * C * 2 + tb * T * C * 2
    temps = tb * T * 3 * C * 4 + tb * T * C * 4 + 2 * tb * T * T * 4
    est = 2 * (x_tile + out_tile) + 2 * weights + scratch + 2 * temps
    return int(min(64 * 2 ** 20, max(16 * 2 ** 20, est + 4 * 2 ** 20)))


def attention_temporal_pallas(x, wqkv_bf, wproj_bf, bias2d, *, num_heads,
                              B=None, block_items=8):
    """x: (B*K, T, C) f32; weights from prepare_attention_temporal_params.

    `B` is accepted for API fidelity with the PyTorch forward but is unused
    (it does not change the math).  `block_items` = (b,k) items per grid step:
    keep >= 4 grid steps on v7x (2 TCs, >=2 steps/core for pipelining);
    raise it substantially on single-TC v5e/v6e so each step carries
    ~512-1024 MXU rows (set a matching vmem budget, which this wrapper does).
    """
    del B
    BK, T, C = x.shape

    tb = max(1, min(block_items, BK))
    BK_pad = pl.cdiv(BK, tb) * tb
    if BK_pad != BK:
        # Pad instead of shrinking tb: awkward/prime BK keeps the intended tile.
        x = jnp.pad(x, ((0, BK_pad - BK), (0, 0), (0, 0)))

    kernel = functools.partial(_attn_temporal_kernel, num_heads=num_heads)

    out = pl.pallas_call(
        kernel,
        out_shape=jax.ShapeDtypeStruct((BK_pad, T, C), x.dtype),
        grid_spec=pltpu.PrefetchScalarGridSpec(
            num_scalar_prefetch=0,
            grid=(BK_pad // tb,),
            in_specs=[
                pl.BlockSpec((tb, T, C), lambda i: (i, 0, 0)),       # x tile (f32)
                pl.BlockSpec((C, 3 * C), lambda i: (0, 0),           # qkv weight
                             pipeline_mode=pl.Buffered(1)),          #  resident, single-buffered
                pl.BlockSpec((C, C), lambda i: (0, 0),               # proj weight
                             pipeline_mode=pl.Buffered(1)),
                pl.BlockSpec((1, C), lambda i: (0, 0),               # proj bias
                             pipeline_mode=pl.Buffered(1)),
            ],
            out_specs=pl.BlockSpec((tb, T, C), lambda i: (i, 0, 0)),
            scratch_shapes=[
                pltpu.VMEM((tb, T, 3 * C), jnp.bfloat16),            # qkv stage
                pltpu.VMEM((tb * T, C), jnp.bfloat16),                # head concat
            ],
        ),
        compiler_params=pltpu.CompilerParams(
            dimension_semantics=("parallel",),
            vmem_limit_bytes=_vmem_limit_bytes(tb, T, C)),
    )(x, wqkv_bf, wproj_bf, bias2d)

    return out[:BK] if BK_pad != BK else out


def attention_temporal_ref(x, w_qkv, w_proj, b_proj, *, num_heads):
    """Pure-JAX f32 reference mirroring the PyTorch forward."""
    BK, T, C = x.shape
    hd = C // num_heads
    scale = hd ** (-0.5)
    qkv = x @ w_qkv                                            # (BK, T, 3C)
    qkv = qkv.reshape(BK, T, 3, num_heads, hd)
    qkv = jnp.transpose(qkv, (2, 0, 3, 1, 4))                  # (3, BK, H, T, hd)
    q, k, v = qkv[0], qkv[1], qkv[2]
    attn = jnp.einsum('bhqd,bhkd->bhqk', q, k) * scale
    attn = jax.nn.softmax(attn, axis=-1)
    o = jnp.einsum('bhqk,bhkd->bhqd', attn, v)                 # (BK, H, T, hd)
    o = jnp.transpose(o, (0, 2, 1, 3)).reshape(BK, T, C)
    return o @ w_proj + b_proj


if __name__ == "__main__":
    # Small shapes consistent with the module defaults (num_heads=8):
    # B=2, K=16 -> BK=32 items, T=8 temporal tokens, C=128 channels, head_dim=16.
    B, K, T, C, H = 2, 16, 8, 128, 8
    BK = B * K

    key = jax.random.PRNGKey(0)
    kx, kqkv, kproj, kb = jax.random.split(key, 4)
    x = jax.random.normal(kx, (BK, T, C), dtype=jnp.float32)
    w_qkv = jax.random.normal(kqkv, (C, 3 * C), dtype=jnp.float32) * 0.05
    w_proj = jax.random.normal(kproj, (C, C), dtype=jnp.float32) * 0.05
    b_proj = jax.random.normal(kb, (C,), dtype=jnp.float32) * 0.01

    # One-time parameter prep (scale fold + bf16 casts) -- not redone per call.
    wqkv_bf, wproj_bf, bias2d = prepare_attention_temporal_params(
        w_qkv, w_proj, b_proj, num_heads=H)

    out = attention_temporal_pallas(x, wqkv_bf, wproj_bf, bias2d,
                                    num_heads=H, B=B, block_items=8)
    out = jax.block_until_ready(out)

    ref = attention_temporal_ref(x, w_qkv, w_proj, b_proj, num_heads=H)
    # bf16 MXU operands + approx reciprocal vs f32 reference -> loose-ish tolerance.
    np.testing.assert_allclose(np.asarray(out), np.asarray(ref),
                               rtol=2e-2, atol=1e-2)
    print("KERNEL_OK")
</pallas_src>

<mosaic_0001>
module attributes {stable_mosaic.version = 11 : i64} {
  func.func @_attn_temporal_kernel(%arg0: i32, %arg1: memref<8x8x128xf32, #tpu.memory_space<vmem>>, %arg2: memref<128x384xbf16, #tpu.memory_space<vmem>>, %arg3: memref<128x128xbf16, #tpu.memory_space<vmem>>, %arg4: memref<1x128xf32, #tpu.memory_space<vmem>>, %arg5: memref<8x8x128xf32, #tpu.memory_space<vmem>>, %arg6: memref<8x8x384xbf16, #tpu.memory_space<vmem>>, %arg7: memref<64x128xbf16, #tpu.memory_space<vmem>>) attributes {dimension_semantics = [#tpu.dimension_semantics<parallel>], iteration_bounds = array<i64: 4>, scalar_prefetch = 0 : i64, scratch_operands = 2 : i64, tpu.core_type = #tpu.core_type<tc>, window_params = [{transform_indices = @transform_0, window_bounds = array<i64: 8, 8, 128>}, {pipeline_mode = #tpu.pipeline_mode<synchronous>, transform_indices = @transform_1, window_bounds = array<i64: 128, 384>}, {pipeline_mode = #tpu.pipeline_mode<synchronous>, transform_indices = @transform_2, window_bounds = array<i64: 128, 128>}, {pipeline_mode = #tpu.pipeline_mode<synchronous>, transform_indices = @transform_3, window_bounds = array<i64: 1, 128>}, {transform_indices = @transform_4, window_bounds = array<i64: 8, 8, 128>}]} {
    %c0 = arith.constant 0 : index
    %c0_0 = arith.constant 0 : index
    %c0_1 = arith.constant 0 : index
    %0 = vector.load %arg1[%c0, %c0_0, %c0_1] : memref<8x8x128xf32, #tpu.memory_space<vmem>>, vector<8x8x128xf32>
    %1 = vector.shape_cast %0 : vector<8x8x128xf32> to vector<64x128xf32>
    %2 = arith.truncf %1 : vector<64x128xf32> to vector<64x128xbf16>
    %c0_2 = arith.constant 0 : index
    %c0_3 = arith.constant 0 : index
    %3 = vector.load %arg2[%c0_2, %c0_3] : memref<128x384xbf16, #tpu.memory_space<vmem>>, vector<128x384xbf16>
    %cst = arith.constant dense<0.000000e+00> : vector<64x384xf32>
    %4 = tpu.matmul %2, %3, %cst {dimension_numbers = #tpu.dot_dimension_numbers<[1], [0], [0], [1], [0, 0, 1, 1], [], []>} : vector<64x128xbf16>, vector<128x384xbf16>, vector<64x384xf32> -> vector<64x384xf32>
    %5 = vector.shape_cast %4 : vector<64x384xf32> to vector<8x8x384xf32>
    %6 = arith.truncf %5 : vector<8x8x384xf32> to vector<8x8x384xbf16>
    %c0_4 = arith.constant 0 : index
    %c0_5 = arith.constant 0 : index
    %c0_6 = arith.constant 0 : index
    %7 = vector.load %arg6[%c0_4, %c0_5, %c0_6] : memref<8x8x384xbf16, #tpu.memory_space<vmem>>, vector<8x8x384xbf16>
    tpu.vector_store %arg6[%c0_4, %c0_5, %c0_6], %6 {strides = array<i32>} : memref<8x8x384xbf16, #tpu.memory_space<vmem>>, vector<8x8x384xbf16>,
    %c0_7 = arith.constant 0 : index
    %c0_8 = arith.constant 0 : index
    %c0_9 = arith.constant 0 : index
    %8 = vector.load %arg6[%c0_7, %c0_8, %c0_9] : memref<8x8x384xbf16, #tpu.memory_space<vmem>>, vector<8x8x16xbf16>
    %c0_10 = arith.constant 0 : index
    %c0_11 = arith.constant 0 : index
    %c128 = arith.constant 128 : index
    %9 = vector.load %arg6[%c0_10, %c0_11, %c128] : memref<8x8x384xbf16, #tpu.memory_space<vmem>>, vector<8x8x16xbf16>
    %c0_12 = arith.constant 0 : index
    %c0_13 = arith.constant 0 : index
    %c256 = arith.constant 256 : index
    %10 = vector.load %arg6[%c0_12, %c0_13, %c256] : memref<8x8x384xbf16, #tpu.memory_space<vmem>>, vector<8x8x16xbf16>
    "tpu.trace_start"() <{level = 10 : i32, message = "bqd,bkd->bqk"}> : () -> ()
    %cst_14 = arith.constant dense<0.000000e+00> : vector<8x8x8xf32>
    %11 = tpu.matmul %8, %9, %cst_14 {dimension_numbers = #tpu.dot_dimension_numbers<[2], [2], [1], [1], [0, 0, 0, 1, 1, 1], [0], [0]>} : vector<8x8x16xbf16>, vector<8x8x16xbf16>, vector<8x8x8xf32> -> vector<8x8x8xf32>
    "tpu.trace_stop"() : () -> ()
    %cst_15 = arith.constant dense<0xFF800000> : vector<8x8xf32>
    %12 = vector.multi_reduction <maximumf>, %11, %cst_15 [2] : vector<8x8x8xf32> to vector<8x8xf32>
    %13 = vector.shape_cast %12 : vector<8x8xf32> to vector<8x8x1xf32>
    %14 = vector.broadcast %13 : vector<8x8x1xf32> to vector<8x8x8xf32>
    %15 = arith.subf %11, %14 : vector<8x8x8xf32>
    %16 = math.exp %15 : vector<8x8x8xf32>
    %cst_16 = arith.constant dense<0.000000e+00> : vector<8x8xf32>
    %17 = vector.multi_reduction <add>, %16, %cst_16 [2] : vector<8x8x8xf32> to vector<8x8xf32>
    %18 = vector.shape_cast %17 : vector<8x8xf32> to vector<8x8x1xf32>
    %19 = tpu.reciprocal %18 {approx = true} : vector<8x8x1xf32> -> vector<8x8x1xf32>
    %20 = vector.broadcast %19 : vector<8x8x1xf32> to vector<8x8x8xf32>
    %21 = arith.mulf %16, %20 : vector<8x8x8xf32>
    %22 = arith.truncf %21 : vector<8x8x8xf32> to vector<8x8x8xbf16>
    "tpu.trace_start"() <{level = 10 : i32, message = "bqk,bkd->bqd"}> : () -> ()
    %cst_17 = arith.constant dense<0.000000e+00> : vector<8x8x16xf32>
    %23 = tpu.matmul %22, %10, %cst_17 {dimension_numbers = #tpu.dot_dimension_numbers<[2], [1], [1], [2], [0, 0, 0, 1, 1, 2], [0], [0]>} : vector<8x8x8xbf16>, vector<8x8x16xbf16>, vector<8x8x16xf32> -> vector<8x8x16xf32>
    "tpu.trace_stop"() : () -> ()
    %24 = vector.shape_cast %23 : vector<8x8x16xf32> to vector<64x16xf32>
    %25 = arith.truncf %24 : vector<64x16xf32> to vector<64x16xbf16>
    %c0_18 = arith.constant 0 : index
    %c0_19 = arith.constant 0 : index
    %26 = vector.load %arg7[%c0_18, %c0_19] : memref<64x128xbf16, #tpu.memory_space<vmem>>, vector<64x16xbf16>
    tpu.vector_store %arg7[%c0_18, %c0_19], %25 {strides = array<i32>} : memref<64x128xbf16, #tpu.memory_space<vmem>>, vector<64x16xbf16>,
    %c0_20 = arith.constant 0 : index
    %c0_21 = arith.constant 0 : index
    %c16 = arith.constant 16 : index
    %27 = vector.load %arg6[%c0_20, %c0_21, %c16] : memref<8x8x384xbf16, #tpu.memory_space<vmem>>, vector<8x8x16xbf16>
    %c0_22 = arith.constant 0 : index
    %c0_23 = arith.constant 0 : index
    %c144 = arith.constant 144 : index
    %28 = vector.load %arg6[%c0_22, %c0_23, %c144] : memref<8x8x384xbf16, #tpu.memory_space<vmem>>, vector<8x8x16xbf16>
    %c0_24 = arith.constant 0 : index
    %c0_25 = arith.constant 0 : index
    %c272 = arith.constant 272 : index
    %29 = vector.load %arg6[%c0_24, %c0_25, %c272] : memref<8x8x384xbf16, #tpu.memory_space<vmem>>, vector<8x8x16xbf16>
    "tpu.trace_start"() <{level = 10 : i32, message = "bqd,bkd->bqk"}> : () -> ()
    %cst_26 = arith.constant dense<0.000000e+00> : vector<8x8x8xf32>
    %30 = tpu.matmul %27, %28, %cst_26 {dimension_numbers = #tpu.dot_dimension_numbers<[2], [2], [1], [1], [0, 0, 0, 1, 1, 1], [0], [0]>} : vector<8x8x16xbf16>, vector<8x8x16xbf16>, vector<8x8x8xf32> -> vector<8x8x8xf32>
    "tpu.trace_stop"() : () -> ()
    %cst_27 = arith.constant dense<0xFF800000> : vector<8x8xf32>
    %31 = vector.multi_reduction <maximumf>, %30, %cst_27 [2] : vector<8x8x8xf32> to vector<8x8xf32>
    %32 = vector.shape_cast %31 : vector<8x8xf32> to vector<8x8x1xf32>
    %33 = vector.broadcast %32 : vector<8x8x1xf32> to vector<8x8x8xf32>
    %34 = arith.subf %30, %33 : vector<8x8x8xf32>
    %35 = math.exp %34 : vector<8x8x8xf32>
    %cst_28 = arith.constant dense<0.000000e+00> : vector<8x8xf32>
    %36 = vector.multi_reduction <add>, %35, %cst_28 [2] : vector<8x8x8xf32> to vector<8x8xf32>
    %37 = vector.shape_cast %36 : vector<8x8xf32> to vector<8x8x1xf32>
    %38 = tpu.reciprocal %37 {approx = true} : vector<8x8x1xf32> -> vector<8x8x1xf32>
    %39 = vector.broadcast %38 : vector<8x8x1xf32> to vector<8x8x8xf32>
    %40 = arith.mulf %35, %39 : vector<8x8x8xf32>
    %41 = arith.truncf %40 : vector<8x8x8xf32> to vector<8x8x8xbf16>
    "tpu.trace_start"() <{level = 10 : i32, message = "bqk,bkd->bqd"}> : () -> ()
    %cst_29 = arith.constant dense<0.000000e+00> : vector<8x8x16xf32>
    %42 = tpu.matmul %41, %29, %cst_29 {dimension_numbers = #tpu.dot_dimension_numbers<[2], [1], [1], [2], [0, 0, 0, 1, 1, 2], [0], [0]>} : vector<8x8x8xbf16>, vector<8x8x16xbf16>, vector<8x8x16xf32> -> vector<8x8x16xf32>
    "tpu.trace_stop"() : () -> ()
    %43 = vector.shape_cast %42 : vector<8x8x16xf32> to vector<64x16xf32>
    %44 = arith.truncf %43 : vector<64x16xf32> to vector<64x16xbf16>
    %c0_30 = arith.constant 0 : index
    %c16_31 = arith.constant 16 : index
    %45 = vector.load %arg7[%c0_30, %c16_31] : memref<64x128xbf16, #tpu.memory_space<vmem>>, vector<64x16xbf16>
    tpu.vector_store %arg7[%c0_30, %c16_31], %44 {strides = array<i32>} : memref<64x128xbf16, #tpu.memory_space<vmem>>, vector<64x16xbf16>,
    %c0_32 = arith.constant 0 : index
    %c0_33 = arith.constant 0 : index
    %c32 = arith.constant 32 : index
    %46 = vector.load %arg6[%c0_32, %c0_33, %c32] : memref<8x8x384xbf16, #tpu.memory_space<vmem>>, vector<8x8x16xbf16>
    %c0_34 = arith.constant 0 : index
    %c0_35 = arith.constant 0 : index
    %c160 = arith.constant 160 : index
    %47 = vector.load %arg6[%c0_34, %c0_35, %c160] : memref<8x8x384xbf16, #tpu.memory_space<vmem>>, vector<8x8x16xbf16>
    %c0_36 = arith.constant 0 : index
    %c0_37 = arith.constant 0 : index
    %c288 = arith.constant 288 : index
    %48 = vector.load %arg6[%c0_36, %c0_37, %c288] : memref<8x8x384xbf16, #tpu.memory_space<vmem>>, vector<8x8x16xbf16>
    "tpu.trace_start"() <{level = 10 : i32, message = "bqd,bkd->bqk"}> : () -> ()
    %cst_38 = arith.constant dense<0.000000e+00> : vector<8x8x8xf32>
    %49 = tpu.matmul %46, %47, %cst_38 {dimension_numbers = #tpu.dot_dimension_numbers<[2], [2], [1], [1], [0, 0, 0, 1, 1, 1], [0], [0]>} : vector<8x8x16xbf16>, vector<8x8x16xbf16>, vector<8x8x8xf32> -> vector<8x8x8xf32>
    "tpu.trace_stop"() : () -> ()
    %cst_39 = arith.constant dense<0xFF800000> : vector<8x8xf32>
    %50 = vector.multi_reduction <maximumf>, %49, %cst_39 [2] : vector<8x8x8xf32> to vector<8x8xf32>
    %51 = vector.shape_cast %50 : vector<8x8xf32> to vector<8x8x1xf32>
    %52 = vector.broadcast %51 : vector<8x8x1xf32> to vector<8x8x8xf32>
    %53 = arith.subf %49, %52 : vector<8x8x8xf32>
    %54 = math.exp %53 : vector<8x8x8xf32>
    %cst_40 = arith.constant dense<0.000000e+00> : vector<8x8xf32>
    %55 = vector.multi_reduction <add>, %54, %cst_40 [2] : vector<8x8x8xf32> to vector<8x8xf32>
    %56 = vector.shape_cast %55 : vector<8x8xf32> to vector<8x8x1xf32>
    %57 = tpu.reciprocal %56 {approx = true} : vector<8x8x1xf32> -> vector<8x8x1xf32>
    %58 = vector.broadcast %57 : vector<8x8x1xf32> to vector<8x8x8xf32>
    %59 = arith.mulf %54, %58 : vector<8x8x8xf32>
    %60 = arith.truncf %59 : vector<8x8x8xf32> to vector<8x8x8xbf16>
    "tpu.trace_start"() <{level = 10 : i32, message = "bqk,bkd->bqd"}> : () -> ()
    %cst_41 = arith.constant dense<0.000000e+00> : vector<8x8x16xf32>
    %61 = tpu.matmul %60, %48, %cst_41 {dimension_numbers = #tpu.dot_dimension_numbers<[2], [1], [1], [2], [0, 0, 0, 1, 1, 2], [0], [0]>} : vector<8x8x8xbf16>, vector<8x8x16xbf16>, vector<8x8x16xf32> -> vector<8x8x16xf32>
    "tpu.trace_stop"() : () -> ()
    %62 = vector.shape_cast %61 : vector<8x8x16xf32> to vector<64x16xf32>
    %63 = arith.truncf %62 : vector<64x16xf32> to vector<64x16xbf16>
    %c0_42 = arith.constant 0 : index
    %c32_43 = arith.constant 32 : index
    %64 = vector.load %arg7[%c0_42, %c32_43] : memref<64x128xbf16, #tpu.memory_space<vmem>>, vector<64x16xbf16>
    tpu.vector_store %arg7[%c0_42, %c32_43], %63 {strides = array<i32>} : memref<64x128xbf16, #tpu.memory_space<vmem>>, vector<64x16xbf16>,
    %c0_44 = arith.constant 0 : index
    %c0_45 = arith.constant 0 : index
    %c48 = arith.constant 48 : index
    %65 = vector.load %arg6[%c0_44, %c0_45, %c48] : memref<8x8x384xbf16, #tpu.memory_space<vmem>>, vector<8x8x16xbf16>
    %c0_46 = arith.constant 0 : index
    %c0_47 = arith.constant 0 : index
    %c176 = arith.constant 176 : index
    %66 = vector.load %arg6[%c0_46, %c0_47, %c176] : memref<8x8x384xbf16, #tpu.memory_space<vmem>>, vector<8x8x16xbf16>
    %c0_48 = arith.constant 0 : index
    %c0_49 = arith.constant 0 : index
    %c304 = arith.constant 304 : index
    %67 = vector.load %arg6[%c0_48, %c0_49, %c304] : memref<8x8x384xbf16, #tpu.memory_space<vmem>>, vector<8x8x16xbf16>
    "tpu.trace_start"() <{level = 10 : i32, message = "bqd,bkd->bqk"}> : () -> ()
    %cst_50 = arith.constant dense<0.000000e+00> : vector<8x8x8xf32>
    %68 = tpu.matmul %65, %66, %cst_50 {dimension_numbers = #tpu.dot_dimension_numbers<[2], [2], [1], [1], [0, 0, 0, 1, 1, 1], [0], [0]>} : vector<8x8x16xbf16>, vector<8x8x16xbf16>, vector<8x8x8xf32> -> vector<8x8x8xf32>
    "tpu.trace_stop"() : () -> ()
    %cst_51 = arith.constant dense<0xFF800000> : vector<8x8xf32>
    %69 = vector.multi_reduction <maximumf>, %68, %cst_51 [2] : vector<8x8x8xf32> to vector<8x8xf32>
    %70 = vector.shape_cast %69 : vector<8x8xf32> to vector<8x8x1xf32>
    %71 = vector.broadcast %70 : vector<8x8x1xf32> to vector<8x8x8xf32>
    %72 = arith.subf %68, %71 : vector<8x8x8xf32>
    %73 = math.exp %72 : vector<8x8x8xf32>
    %cst_52 = arith.constant dense<0.000000e+00> : vector<8x8xf32>
    %74 = vector.multi_reduction <add>, %73, %cst_52 [2] : vector<8x8x8xf32> to vector<8x8xf32>
    %75 = vector.shape_cast %74 : vector<8x8xf32> to vector<8x8x1xf32>
    %76 = tpu.reciprocal %75 {approx = true} : vector<8x8x1xf32> -> vector<8x8x1xf32>
    %77 = vector.broadcast %76 : vector<8x8x1xf32> to vector<8x8x8xf32>
    %78 = arith.mulf %73, %77 : vector<8x8x8xf32>
    %79 = arith.truncf %78 : vector<8x8x8xf32> to vector<8x8x8xbf16>
    "tpu.trace_start"() <{level = 10 : i32, message = "bqk,bkd->bqd"}> : () -> ()
    %cst_53 = arith.constant dense<0.000000e+00> : vector<8x8x16xf32>
    %80 = tpu.matmul %79, %67, %cst_53 {dimension_numbers = #tpu.dot_dimension_numbers<[2], [1], [1], [2], [0, 0, 0, 1, 1, 2], [0], [0]>} : vector<8x8x8xbf16>, vector<8x8x16xbf16>, vector<8x8x16xf32> -> vector<8x8x16xf32>
    "tpu.trace_stop"() : () -> ()
    %81 = vector.shape_cast %80 : vector<8x8x16xf32> to vector<64x16xf32>
    %82 = arith.truncf %81 : vector<64x16xf32> to vector<64x16xbf16>
    %c0_54 = arith.constant 0 : index
    %c48_55 = arith.constant 48 : index
    %83 = vector.load %arg7[%c0_54, %c48_55] : memref<64x128xbf16, #tpu.memory_space<vmem>>, vector<64x16xbf16>
    tpu.vector_store %arg7[%c0_54, %c48_55], %82 {strides = array<i32>} : memref<64x128xbf16, #tpu.memory_space<vmem>>, vector<64x16xbf16>,
    %c0_56 = arith.constant 0 : index
    %c0_57 = arith.constant 0 : index
    %c64 = arith.constant 64 : index
    %84 = vector.load %arg6[%c0_56, %c0_57, %c64] : memref<8x8x384xbf16, #tpu.memory_space<vmem>>, vector<8x8x16xbf16>
    %c0_58 = arith.constant 0 : index
    %c0_59 = arith.constant 0 : index
    %c192 = arith.constant 192 : index
    %85 = vector.load %arg6[%c0_58, %c0_59, %c192] : memref<8x8x384xbf16, #tpu.memory_space<vmem>>, vector<8x8x16xbf16>
    %c0_60 = arith.constant 0 : index
    %c0_61 = arith.constant 0 : index
    %c320 = arith.constant 320 : index
    %86 = vector.load %arg6[%c0_60, %c0_61, %c320] : memref<8x8x384xbf16, #tpu.memory_space<vmem>>, vector<8x8x16xbf16>
    "tpu.trace_start"() <{level = 10 : i32, message = "bqd,bkd->bqk"}> : () -> ()
    %cst_62 = arith.constant dense<0.000000e+00> : vector<8x8x8xf32>
    %87 = tpu.matmul %84, %85, %cst_62 {dimension_numbers = #tpu.dot_dimension_numbers<[2], [2], [1], [1], [0, 0, 0, 1, 1, 1], [0], [0]>} : vector<8x8x16xbf16>, vector<8x8x16xbf16>, vector<8x8x8xf32> -> vector<8x8x8xf32>
    "tpu.trace_stop"() : () -> ()
    %cst_63 = arith.constant dense<0xFF800000> : vector<8x8xf32>
    %88 = vector.multi_reduction <maximumf>, %87, %cst_63 [2] : vector<8x8x8xf32> to vector<8x8xf32>
    %89 = vector.shape_cast %88 : vector<8x8xf32> to vector<8x8x1xf32>
    %90 = vector.broadcast %89 : vector<8x8x1xf32> to vector<8x8x8xf32>
    %91 = arith.subf %87, %90 : vector<8x8x8xf32>
    %92 = math.exp %91 : vector<8x8x8xf32>
    %cst_64 = arith.constant dense<0.000000e+00> : vector<8x8xf32>
    %93 = vector.multi_reduction <add>, %92, %cst_64 [2] : vector<8x8x8xf32> to vector<8x8xf32>
    %94 = vector.shape_cast %93 : vector<8x8xf32> to vector<8x8x1xf32>
    %95 = tpu.reciprocal %94 {approx = true} : vector<8x8x1xf32> -> vector<8x8x1xf32>
    %96 = vector.broadcast %95 : vector<8x8x1xf32> to vector<8x8x8xf32>
    %97 = arith.mulf %92, %96 : vector<8x8x8xf32>
    %98 = arith.truncf %97 : vector<8x8x8xf32> to vector<8x8x8xbf16>
    "tpu.trace_start"() <{level = 10 : i32, message = "bqk,bkd->bqd"}> : () -> ()
    %cst_65 = arith.constant dense<0.000000e+00> : vector<8x8x16xf32>
    %99 = tpu.matmul %98, %86, %cst_65 {dimension_numbers = #tpu.dot_dimension_numbers<[2], [1], [1], [2], [0, 0, 0, 1, 1, 2], [0], [0]>} : vector<8x8x8xbf16>, vector<8x8x16xbf16>, vector<8x8x16xf32> -> vector<8x8x16xf32>
    "tpu.trace_stop"() : () -> ()
    %100 = vector.shape_cast %99 : vector<8x8x16xf32> to vector<64x16xf32>
    %101 = arith.truncf %100 : vector<64x16xf32> to vector<64x16xbf16>
    %c0_66 = arith.constant 0 : index
    %c64_67 = arith.constant 64 : index
    %102 = vector.load %arg7[%c0_66, %c64_67] : memref<64x128xbf16, #tpu.memory_space<vmem>>, vector<64x16xbf16>
    tpu.vector_store %arg7[%c0_66, %c64_67], %101 {strides = array<i32>} : memref<64x128xbf16, #tpu.memory_space<vmem>>, vector<64x16xbf16>,
    %c0_68 = arith.constant 0 : index
    %c0_69 = arith.constant 0 : index
    %c80 = arith.constant 80 : index
    %103 = vector.load %arg6[%c0_68, %c0_69, %c80] : memref<8x8x384xbf16, #tpu.memory_space<vmem>>, vector<8x8x16xbf16>
    %c0_70 = arith.constant 0 : index
    %c0_71 = arith.constant 0 : index
    %c208 = arith.constant 208 : index
    %104 = vector.load %arg6[%c0_70, %c0_71, %c208] : memref<8x8x384xbf16, #tpu.memory_space<vmem>>, vector<8x8x16xbf16>
    %c0_72 = arith.constant 0 : index
    %c0_73 = arith.constant 0 : index
    %c336 = arith.constant 336 : index
    %105 = vector.load %arg6[%c0_72, %c0_73, %c336] : memref<8x8x384xbf16, #tpu.memory_space<vmem>>, vector<8x8x16xbf16>
    "tpu.trace_start"() <{level = 10 : i32, message = "bqd,bkd->bqk"}> : () -> ()
    %cst_74 = arith.constant dense<0.000000e+00> : vector<8x8x8xf32>
    %106 = tpu.matmul %103, %104, %cst_74 {dimension_numbers = #tpu.dot_dimension_numbers<[2], [2], [1], [1], [0, 0, 0, 1, 1, 1], [0], [0]>} : vector<8x8x16xbf16>, vector<8x8x16xbf16>, vector<8x8x8xf32> -> vector<8x8x8xf32>
    "tpu.trace_stop"() : () -> ()
    %cst_75 = arith.constant dense<0xFF800000> : vector<8x8xf32>
    %107 = vector.multi_reduction <maximumf>, %106, %cst_75 [2] : vector<8x8x8xf32> to vector<8x8xf32>
    %108 = vector.shape_cast %107 : vector<8x8xf32> to vector<8x8x1xf32>
    %109 = vector.broadcast %108 : vector<8x8x1xf32> to vector<8x8x8xf32>
    %110 = arith.subf %106, %109 : vector<8x8x8xf32>
    %111 = math.exp %110 : vector<8x8x8xf32>
    %cst_76 = arith.constant dense<0.000000e+00> : vector<8x8xf32>
    %112 = vector.multi_reduction <add>, %111, %cst_76 [2] : vector<8x8x8xf32> to vector<8x8xf32>
    %113 = vector.shape_cast %112 : vector<8x8xf32> to vector<8x8x1xf32>
    %114 = tpu.reciprocal %113 {approx = true} : vector<8x8x1xf32> -> vector<8x8x1xf32>
    %115 = vector.broadcast %114 : vector<8x8x1xf32> to vector<8x8x8xf32>
    %116 = arith.mulf %111, %115 : vector<8x8x8xf32>
    %117 = arith.truncf %116 : vector<8x8x8xf32> to vector<8x8x8xbf16>
    "tpu.trace_start"() <{level = 10 : i32, message = "bqk,bkd->bqd"}> : () -> ()
    %cst_77 = arith.constant dense<0.000000e+00> : vector<8x8x16xf32>
    %118 = tpu.matmul %117, %105, %cst_77 {dimension_numbers = #tpu.dot_dimension_numbers<[2], [1], [1], [2], [0, 0, 0, 1, 1, 2], [0], [0]>} : vector<8x8x8xbf16>, vector<8x8x16xbf16>, vector<8x8x16xf32> -> vector<8x8x16xf32>
    "tpu.trace_stop"() : () -> ()
    %119 = vector.shape_cast %118 : vector<8x8x16xf32> to vector<64x16xf32>
    %120 = arith.truncf %119 : vector<64x16xf32> to vector<64x16xbf16>
    %c0_78 = arith.constant 0 : index
    %c80_79 = arith.constant 80 : index
    %121 = vector.load %arg7[%c0_78, %c80_79] : memref<64x128xbf16, #tpu.memory_space<vmem>>, vector<64x16xbf16>
    tpu.vector_store %arg7[%c0_78, %c80_79], %120 {strides = array<i32>} : memref<64x128xbf16, #tpu.memory_space<vmem>>, vector<64x16xbf16>,
    %c0_80 = arith.constant 0 : index
    %c0_81 = arith.constant 0 : index
    %c96 = arith.constant 96 : index
    %122 = vector.load %arg6[%c0_80, %c0_81, %c96] : memref<8x8x384xbf16, #tpu.memory_space<vmem>>, vector<8x8x16xbf16>
    %c0_82 = arith.constant 0 : index
    %c0_83 = arith.constant 0 : index
    %c224 = arith.constant 224 : index
    %123 = vector.load %arg6[%c0_82, %c0_83, %c224] : memref<8x8x384xbf16, #tpu.memory_space<vmem>>, vector<8x8x16xbf16>
    %c0_84 = arith.constant 0 : index
    %c0_85 = arith.constant 0 : index
    %c352 = arith.constant 352 : index
    %124 = vector.load %arg6[%c0_84, %c0_85, %c352] : memref<8x8x384xbf16, #tpu.memory_space<vmem>>, vector<8x8x16xbf16>
    "tpu.trace_start"() <{level = 10 : i32, message = "bqd,bkd->bqk"}> : () -> ()
    %cst_86 = arith.constant dense<0.000000e+00> : vector<8x8x8xf32>
    %125 = tpu.matmul %122, %123, %cst_86 {dimension_numbers = #tpu.dot_dimension_numbers<[2], [2], [1], [1], [0, 0, 0, 1, 1, 1], [0], [0]>} : vector<8x8x16xbf16>, vector<8x8x16xbf16>, vector<8x8x8xf32> -> vector<8x8x8xf32>
    "tpu.trace_stop"() : () -> ()
    %cst_87 = arith.constant dense<0xFF800000> : vector<8x8xf32>
    %126 = vector.multi_reduction <maximumf>, %125, %cst_87 [2] : vector<8x8x8xf32> to vector<8x8xf32>
    %127 = vector.shape_cast %126 : vector<8x8xf32> to vector<8x8x1xf32>
    %128 = vector.broadcast %127 : vector<8x8x1xf32> to vector<8x8x8xf32>
    %129 = arith.subf %125, %128 : vector<8x8x8xf32>
    %130 = math.exp %129 : vector<8x8x8xf32>
    %cst_88 = arith.constant dense<0.000000e+00> : vector<8x8xf32>
    %131 = vector.multi_reduction <add>, %130, %cst_88 [2] : vector<8x8x8xf32> to vector<8x8xf32>
    %132 = vector.shape_cast %131 : vector<8x8xf32> to vector<8x8x1xf32>
    %133 = tpu.reciprocal %132 {approx = true} : vector<8x8x1xf32> -> vector<8x8x1xf32>
    %134 = vector.broadcast %133 : vector<8x8x1xf32> to vector<8x8x8xf32>
    %135 = arith.mulf %130, %134 : vector<8x8x8xf32>
    %136 = arith.truncf %135 : vector<8x8x8xf32> to vector<8x8x8xbf16>
    "tpu.trace_start"() <{level = 10 : i32, message = "bqk,bkd->bqd"}> : () -> ()
    %cst_89 = arith.constant dense<0.000000e+00> : vector<8x8x16xf32>
    %137 = tpu.matmul %136, %124, %cst_89 {dimension_numbers = #tpu.dot_dimension_numbers<[2], [1], [1], [2], [0, 0, 0, 1, 1, 2], [0], [0]>} : vector<8x8x8xbf16>, vector<8x8x16xbf16>, vector<8x8x16xf32> -> vector<8x8x16xf32>
    "tpu.trace_stop"() : () -> ()
    %138 = vector.shape_cast %137 : vector<8x8x16xf32> to vector<64x16xf32>
    %139 = arith.truncf %138 : vector<64x16xf32> to vector<64x16xbf16>
    %c0_90 = arith.constant 0 : index
    %c96_91 = arith.constant 96 : index
    %140 = vector.load %arg7[%c0_90, %c96_91] : memref<64x128xbf16, #tpu.memory_space<vmem>>, vector<64x16xbf16>
    tpu.vector_store %arg7[%c0_90, %c96_91], %139 {strides = array<i32>} : memref<64x128xbf16, #tpu.memory_space<vmem>>, vector<64x16xbf16>,
    %c0_92 = arith.constant 0 : index
    %c0_93 = arith.constant 0 : index
    %c112 = arith.constant 112 : index
    %141 = vector.load %arg6[%c0_92, %c0_93, %c112] : memref<8x8x384xbf16, #tpu.memory_space<vmem>>, vector<8x8x16xbf16>
    %c0_94 = arith.constant 0 : index
    %c0_95 = arith.constant 0 : index
    %c240 = arith.constant 240 : index
    %142 = vector.load %arg6[%c0_94, %c0_95, %c240] : memref<8x8x384xbf16, #tpu.memory_space<vmem>>, vector<8x8x16xbf16>
    %c0_96 = arith.constant 0 : index
    %c0_97 = arith.constant 0 : index
    %c368 = arith.constant 368 : index
    %143 = vector.load %arg6[%c0_96, %c0_97, %c368] : memref<8x8x384xbf16, #tpu.memory_space<vmem>>, vector<8x8x16xbf16>
    "tpu.trace_start"() <{level = 10 : i32, message = "bqd,bkd->bqk"}> : () -> ()
    %cst_98 = arith.constant dense<0.000000e+00> : vector<8x8x8xf32>
    %144 = tpu.matmul %141, %142, %cst_98 {dimension_numbers = #tpu.dot_dimension_numbers<[2], [2], [1], [1], [0, 0, 0, 1, 1, 1], [0], [0]>} : vector<8x8x16xbf16>, vector<8x8x16xbf16>, vector<8x8x8xf32> -> vector<8x8x8xf32>
    "tpu.trace_stop"() : () -> ()
    %cst_99 = arith.constant dense<0xFF800000> : vector<8x8xf32>
    %145 = vector.multi_reduction <maximumf>, %144, %cst_99 [2] : vector<8x8x8xf32> to vector<8x8xf32>
    %146 = vector.shape_cast %145 : vector<8x8xf32> to vector<8x8x1xf32>
    %147 = vector.broadcast %146 : vector<8x8x1xf32> to vector<8x8x8xf32>
    %148 = arith.subf %144, %147 : vector<8x8x8xf32>
    %149 = math.exp %148 : vector<8x8x8xf32>
    %cst_100 = arith.constant dense<0.000000e+00> : vector<8x8xf32>
    %150 = vector.multi_reduction <add>, %149, %cst_100 [2] : vector<8x8x8xf32> to vector<8x8xf32>
    %151 = vector.shape_cast %150 : vector<8x8xf32> to vector<8x8x1xf32>
    %152 = tpu.reciprocal %151 {approx = true} : vector<8x8x1xf32> -> vector<8x8x1xf32>
    %153 = vector.broadcast %152 : vector<8x8x1xf32> to vector<8x8x8xf32>
    %154 = arith.mulf %149, %153 : vector<8x8x8xf32>
    %155 = arith.truncf %154 : vector<8x8x8xf32> to vector<8x8x8xbf16>
    "tpu.trace_start"() <{level = 10 : i32, message = "bqk,bkd->bqd"}> : () -> ()
    %cst_101 = arith.constant dense<0.000000e+00> : vector<8x8x16xf32>
    %156 = tpu.matmul %155, %143, %cst_101 {dimension_numbers = #tpu.dot_dimension_numbers<[2], [1], [1], [2], [0, 0, 0, 1, 1, 2], [0], [0]>} : vector<8x8x8xbf16>, vector<8x8x16xbf16>, vector<8x8x16xf32> -> vector<8x8x16xf32>
    "tpu.trace_stop"() : () -> ()
    %157 = vector.shape_cast %156 : vector<8x8x16xf32> to vector<64x16xf32>
    %158 = arith.truncf %157 : vector<64x16xf32> to vector<64x16xbf16>
    %c0_102 = arith.constant 0 : index
    %c112_103 = arith.constant 112 : index
    %159 = vector.load %arg7[%c0_102, %c112_103] : memref<64x128xbf16, #tpu.memory_space<vmem>>, vector<64x16xbf16>
    tpu.vector_store %arg7[%c0_102, %c112_103], %158 {strides = array<i32>} : memref<64x128xbf16, #tpu.memory_space<vmem>>, vector<64x16xbf16>,
    %c0_104 = arith.constant 0 : index
    %c0_105 = arith.constant 0 : index
    %160 = vector.load %arg7[%c0_104, %c0_105] : memref<64x128xbf16, #tpu.memory_space<vmem>>, vector<64x128xbf16>
    %c0_106 = arith.constant 0 : index
    %c0_107 = arith.constant 0 : index
    %161 = vector.load %arg3[%c0_106, %c0_107] : memref<128x128xbf16, #tpu.memory_space<vmem>>, vector<128x128xbf16>
    %cst_108 = arith.constant dense<0.000000e+00> : vector<64x128xf32>
    %162 = tpu.matmul %160, %161, %cst_108 {dimension_numbers = #tpu.dot_dimension_numbers<[1], [0], [0], [1], [0, 0, 1, 1], [], []>} : vector<64x128xbf16>, vector<128x128xbf16>, vector<64x128xf32> -> vector<64x128xf32>
    %c0_109 = arith.constant 0 : index
    %c0_110 = arith.constant 0 : index
    %163 = vector.load %arg4[%c0_109, %c0_110] : memref<1x128xf32, #tpu.memory_space<vmem>>, vector<1x128xf32>
    %164 = vector.broadcast %163 : vector<1x128xf32> to vector<64x128xf32>
    %165 = arith.addf %162, %164 : vector<64x128xf32>
    %166 = vector.shape_cast %165 : vector<64x128xf32> to vector<8x8x128xf32>
    %c0_111 = arith.constant 0 : index
    %c0_112 = arith.constant 0 : index
    %c0_113 = arith.constant 0 : index
    %167 = vector.load %arg5[%c0_111, %c0_112, %c0_113] : memref<8x8x128xf32, #tpu.memory_space<vmem>>, vector<8x8x128xf32>
    tpu.vector_store %arg5[%c0_111, %c0_112, %c0_113], %166 {strides = array<i32>} : memref<8x8x128xf32, #tpu.memory_space<vmem>>, vector<8x8x128xf32>,
    return
  }
  func.func @transform_0(%arg0: i32) -> (i32, i32, i32) {
    %c0_i32 = arith.constant 0 : i32
    %c0_i32_0 = arith.constant 0 : i32
    %c0_i32_1 = arith.constant 0 : i32
    return %arg0, %c0_i32, %c0_i32_0 : i32, i32, i32
  }
  func.func @transform_1(%arg0: i32) -> (i32, i32) {
    %c0_i32 = arith.constant 0 : i32
    %c0_i32_0 = arith.constant 0 : i32
    %c0_i32_1 = arith.constant 0 : i32
    return %c0_i32, %c0_i32_0 : i32, i32
  }
  func.func @transform_2(%arg0: i32) -> (i32, i32) {
    %c0_i32 = arith.constant 0 : i32
    %c0_i32_0 = arith.constant 0 : i32
    %c0_i32_1 = arith.constant 0 : i32
    return %c0_i32, %c0_i32_0 : i32, i32
  }
  func.func @transform_3(%arg0: i32) -> (i32, i32) {
    %c0_i32 = arith.constant 0 : i32
    %c0_i32_0 = arith.constant 0 : i32
    %c0_i32_1 = arith.constant 0 : i32
    return %c0_i32, %c0_i32_0 : i32, i32
  }
  func.func @transform_4(%arg0: i32) -> (i32, i32, i32) {
    %c0_i32 = arith.constant 0 : i32
    %c0_i32_0 = arith.constant 0 : i32
    %c0_i32_1 = arith.constant 0 : i32
    return %arg0, %c0_i32, %c0_i32_0 : i32, i32, i32
  }
}

</mosaic_0001>

<llo_original>
// kernel: tpu_custom_call.1
$region0: #{tpu_custom_call.1}
  #allocation0 [shape = 'u32[]', space=smem, size = 0x4, offset = 0x4, fixed_abs, tag = 'smem constant byte address 0x4 - core index']
  #allocation1 [shape = 'u32[144,128]{1,0:T(1,128)}', space=vmem, size = 0x12000, scoped, tag = 'internal scratch']
  #allocation2 [shape = 'bf16[8,8,384]{2,1,0:T(8,128)(2,1)}', space=vmem, size = 0xc000, scoped, tag = 'scratch operand']
  #allocation3 [shape = 'bf16[64,128]{1,0:T(16,128)(2,1)}', space=vmem, size = 0x4000, scoped, tag = 'scratch operand']
  %s0 = inlined_call_operand.hbm [shape: f32[32,8,128], index: 0, kind: input, shape index: {}]
  %s1 = inlined_call_operand.hbm [shape: bf16[128,384], index: 1, kind: input, shape index: {}]
  %s2 = inlined_call_operand.hbm [shape: bf16[128,128], index: 2, kind: input, shape index: {}]
  %s3 = inlined_call_operand.vmem [shape: f32[1,128], index: 3, kind: input, shape index: {}]
  %s4 = inlined_call_operand.hbm [shape: f32[32,8,128], index: 4, kind: output, shape index: {}]
  %s5 = sld [smem:[#allocation0]]
  $region61: #{tpu_custom_call.1} parent=0
    _
  %s7 = ssub.s32 1, %s5
  %s8 = scalar_select 0, %s7, %s5
  $region1: #{tpu_custom_call.1} parent=0
    #allocation4 [shape = 'u8[65536]{0}', space=vmem, size = 0x10000, scoped, tag = 'input window, operand 0']
    #allocation5 [shape = 's32[2]{0}', space=sflag, size = 0x8, scoped, tag = 'scoped memory for tpu_custom_call.1']
    #allocation6 [shape = 's32[2]{0}', space=sflag, size = 0x8, scoped, tag = 'scoped memory for tpu_custom_call.1']
    #allocation7 [shape = 'u8[98304]{0}', space=vmem, size = 0x18000, scoped, tag = 'input window, operand 1, single buffered']
    #allocation8 [shape = 's32[1]{0}', space=sflag, size = 0x4, scoped, tag = 'scoped memory for tpu_custom_call.1']
    #allocation9 [shape = 'u8[32768]{0}', space=vmem, size = 0x8000, scoped, tag = 'input window, operand 2, single buffered']
    #allocation10 [shape = 'u8[65536]{0}', space=vmem, size = 0x10000, scoped, tag = 'output window, operand 0']
    %9 = vsyncpa [#allocation5], 0
    %s10 = scalar_lea.sflag [#allocation5], 1
    %11 = vsyncpa %s10, 0
    %12 = vsyncpa [#allocation8], 0
    %13 = vsyncpa [#allocation6], 0
    %s14 = scalar_lea.sflag [#allocation6], 1
    %15 = vsyncpa %s14, 0
    loop: start=0, step=1, limit=6
    $region2: #{tpu_custom_call.1} parent=1 // loop_pre_header
      _
    $region3: #{tpu_custom_call.1} parent=1 // loop_header
      %s17 = sphi 0, %s21
      %p18 = scmp.ge.s32.totalorder %s17, 6
      %s27 = sphi 0, %s29
      %s30 = sphi 0, %s27
      %s31 = sphi 0, %s30
      %s47 = sphi 0, %s31
      %s51 = sphi 0, %s51
      %s53 = sphi 0, %s51
      %s54 = sphi 0, %s53
      %s68 = sphi 0, %s54
      %s72 = sphi 0, %s72
      %s74 = sphi 0, %s72
      %s75 = sphi 0, %s74
      %s89 = sphi 0, %s75
      %s93 = sphi 0, %s93
      %s95 = sphi 0, %s93
      %s96 = sphi 0, %s95
      %s110 = sphi 0, %s96
      %s116 = sphi 0, %s118
      %s119 = sphi 0, %s116
      %s120 = sphi 0, %s119
      %s136 = sphi 0, %s120
    $region4: #{tpu_custom_call.1} parent=1 // loop_header_branch
      %20 = sbr.rel (%p18) target = $region8
    $region5: #{tpu_custom_call.1} parent=1 // loop_body
      %s22 = ssub.s32 %s17, 1
      %s23 = ssub.s32 %s17, 2
      %s24 = sadd.s32 %s17, 1
      %s25 = ssub.s32 %s17, %s24
      %p26 = scmp.eq.s32.totalorder %s25, 0
      %s28 = sadd.s32 %s27, 1
      %s29 = scalar_select %p26, %s27, %s28
      %p32 = pneg %p26
      %p33 = scmp.eq.s32.totalorder %s17, 3
      %p34 = por %p32, %p33
      %p35 = scmp.ne.s32.totalorder %s27, %s30
      %p36 = scmp.eq.s32.totalorder %s17, 0
      %p37 = por %p35, %p36
      %p38 = scmp.ne.s32.totalorder %s27, %s30
      %p39 = scmp.eq.s32.totalorder %s22, 3
      %p40 = por %p38, %p39
      %p41 = scmp.ne.s32.totalorder %s30, %s31
      %p42 = scmp.eq.s32.totalorder %s22, 0
      %p43 = por %p41, %p42
      %p44 = scmp.ne.s32.totalorder %s30, %s31
      %p45 = scmp.eq.s32.totalorder %s23, 3
      %p46 = por %p44, %p45
      %p48 = scmp.ne.s32.totalorder %s31, %s47
      %p49 = scmp.eq.s32.totalorder %s23, 0
      %p50 = por %p48, %p49
      %s52 = sadd.s32 %s51, 1
      %p55 = scmp.eq.s32.totalorder %s17, 3
      %p56 = scmp.ne.s32.totalorder %s51, %s53
      %p57 = scmp.eq.s32.totalorder %s17, 0
      %p58 = por %p56, %p57
      %p59 = scmp.ne.s32.totalorder %s51, %s53
      %p60 = scmp.eq.s32.totalorder %s22, 3
      %p61 = por %p59, %p60
      %p62 = scmp.ne.s32.totalorder %s53, %s54
      %p63 = scmp.eq.s32.totalorder %s22, 0
      %p64 = por %p62, %p63
      %p65 = scmp.ne.s32.totalorder %s53, %s54
      %p66 = scmp.eq.s32.totalorder %s23, 3
      %p67 = por %p65, %p66
      %p69 = scmp.ne.s32.totalorder %s54, %s68
      %p70 = scmp.eq.s32.totalorder %s23, 0
      %p71 = por %p69, %p70
      %s73 = sadd.s32 %s72, 1
      %p76 = scmp.eq.s32.totalorder %s17, 3
      %p77 = scmp.ne.s32.totalorder %s72, %s74
      %p78 = scmp.eq.s32.totalorder %s17, 0
      %p79 = por %p77, %p78
      %p80 = scmp.ne.s32.totalorder %s72, %s74
      %p81 = scmp.eq.s32.totalorder %s22, 3
      %p82 = por %p80, %p81
      %p83 = scmp.ne.s32.totalorder %s74, %s75
      %p84 = scmp.eq.s32.totalorder %s22, 0
      %p85 = por %p83, %p84
      %p86 = scmp.ne.s32.totalorder %s74, %s75
      %p87 = scmp.eq.s32.totalorder %s23, 3
      %p88 = por %p86, %p87
      %p90 = scmp.ne.s32.totalorder %s75, %s89
      %p91 = scmp.eq.s32.totalorder %s23, 0
      %p92 = por %p90, %p91
      %s94 = sadd.s32 %s93, 1
      %p97 = scmp.eq.s32.totalorder %s17, 3
      %p98 = scmp.ne.s32.totalorder %s93, %s95
      %p99 = scmp.eq.s32.totalorder %s17, 0
      %p100 = por %p98, %p99
      %p101 = scmp.ne.s32.totalorder %s93, %s95
      %p102 = scmp.eq.s32.totalorder %s22, 3
      %p103 = por %p101, %p102
      %p104 = scmp.ne.s32.totalorder %s95, %s96
      %p105 = scmp.eq.s32.totalorder %s22, 0
      %p106 = por %p104, %p105
      %p107 = scmp.ne.s32.totalorder %s95, %s96
      %p108 = scmp.eq.s32.totalorder %s23, 3
      %p109 = por %p107, %p108
      %p111 = scmp.ne.s32.totalorder %s96, %s110
      %p112 = scmp.eq.s32.totalorder %s23, 0
      %p113 = por %p111, %p112
      %s114 = ssub.s32 %s17, %s24
      %p115 = scmp.eq.s32.totalorder %s114, 0
      %s117 = sadd.s32 %s116, 1
      %s118 = scalar_select %p115, %s116, %s117
      %p121 = pneg %p115
      %p122 = scmp.eq.s32.totalorder %s17, 3
      %p123 = por %p121, %p122
      %p124 = scmp.ne.s32.totalorder %s116, %s119
      %p125 = scmp.eq.s32.totalorder %s17, 0
      %p126 = por %p124, %p125
      %p127 = scmp.ne.s32.totalorder %s116, %s119
      %p128 = scmp.eq.s32.totalorder %s22, 3
      %p129 = por %p127, %p128
      %p130 = scmp.ne.s32.totalorder %s119, %s120
      %p131 = scmp.eq.s32.totalorder %s22, 0
      %p132 = por %p130, %p131
      %p133 = scmp.ne.s32.totalorder %s119, %s120
      %p134 = scmp.eq.s32.totalorder %s23, 3
      %p135 = por %p133, %p134
      %p137 = scmp.ne.s32.totalorder %s120, %s136
      %p138 = scmp.eq.s32.totalorder %s23, 0
      %p139 = por %p137, %p138
      %p140 = scmp.le.s32.totalorder 1, %s17
      %p141 = scmp.lt.s32.totalorder %s17, 5
      %p142 = pnand %p140, %p141
      %p143 = pneg %p142
      // Predicated region
      $region9: #{tpu_custom_call.1} parent=5 // pred_check
        _
      $region10: #{tpu_custom_call.1} parent=5 // pred_check_branch
        %145 = sbr.rel (%p142) target = $region12
      $region11: #{tpu_custom_call.1} parent=5 // pred_region
        %s146 = ssub.s32 %s17, 1
        // Predicated region
        $region13: #{tpu_custom_call.1} parent=11 // pred_check
          %p147 = pneg %p64
        $region14: #{tpu_custom_call.1} parent=11 // pred_check_branch
          %149 = sbr.rel (%p147) target = $region16
        $region15: #{tpu_custom_call.1} parent=11 // pred_region
          %s151 = ssub.s32 3072, 3072
          %152 = vsyncadd [#allocation8], %s151
          %s153 = sshll.u32 [#allocation7], 4
          %s154 = int_to_ptr.vmem [resolvable:$true] %s153
          %159 = dma.hbm_to_vmem [thread:$0]  %s1, 3072, %s154, [#allocation8], 192, 192, 12
        $region16: #{tpu_custom_call.1} parent=11 // pred_fallthru
          _
        // Predicated region
        $region17: #{tpu_custom_call.1} parent=11 // pred_check
          %p160 = pneg %p85
        $region18: #{tpu_custom_call.1} parent=11 // pred_check_branch
          %162 = sbr.rel (%p160) target = $region20
        $region19: #{tpu_custom_call.1} parent=11 // pred_region
          %s164 = ssub.s32 1024, 1024
          %165 = vsyncadd [#allocation8], %s164
          %s166 = sshll.u32 [#allocation9], 4
          %s167 = int_to_ptr.vmem [resolvable:$true] %s166
          %172 = dma.hbm_to_vmem [thread:$0]  %s2, 1024, %s167, [#allocation8], 64, 64, 4
        $region20: #{tpu_custom_call.1} parent=11 // pred_fallthru
          _
        // Predicated region
        $region21: #{tpu_custom_call.1} parent=11 // pred_check
          %p173 = pneg %p106
        $region22: #{tpu_custom_call.1} parent=11 // pred_check_branch
          %175 = sbr.rel (%p173) target = $region24
        $region23: #{tpu_custom_call.1} parent=11 // pred_region
          _
        $region24: #{tpu_custom_call.1} parent=11 // pred_fallthru
          _
      $region12: #{tpu_custom_call.1} parent=5 // pred_fallthru
        _
      %p176 = scmp.lt.s32.totalorder %s17, 4
      // Predicated region
      $region25: #{tpu_custom_call.1} parent=5 // pred_check
        %p177 = pneg %p176
      $region26: #{tpu_custom_call.1} parent=5 // pred_check_branch
        %179 = sbr.rel (%p177) target = $region28
      $region27: #{tpu_custom_call.1} parent=5 // pred_region
        // Predicated region
        $region29: #{tpu_custom_call.1} parent=27 // pred_check
          %p180 = pneg %p37
        $region30: #{tpu_custom_call.1} parent=27 // pred_check_branch
          %182 = sbr.rel (%p180) target = $region32
        $region31: #{tpu_custom_call.1} parent=27 // pred_region
          %s183 = sand.u32 %s27, 1
          %s184 = scalar_lea.sflag [#allocation5], %s183
          %s185 = sand.u32 %s27, 1
          %s186 = smul.addr %s185, 64
          %s187 = scalar_lea.vmem [#allocation4], %s186
          %s188 = smul.u32 8, %s17
          %s190 = ssub.s32 1024, 1024
          %191 = vsyncadd %s184, %s190
          %s192 = smul.addr %s188, 128
          %s193 = scalar_lea.hbm %s0, %s192
          %s194 = sshll.u32 %s187, 4
          %s195 = int_to_ptr.vmem [resolvable:$true] %s194
          %200 = dma.hbm_to_vmem [thread:$0]  %s193, 1024, %s195, %s184, 128, 128, 8
        $region32: #{tpu_custom_call.1} parent=27 // pred_fallthru
          _
      $region28: #{tpu_custom_call.1} parent=5 // pred_fallthru
        _
      %p201 = scmp.le.s32.totalorder 1, %s17
      %p202 = scmp.lt.s32.totalorder %s17, 5
      %p203 = pnand %p201, %p202
      %p204 = pneg %p203
      // Predicated region
      $region33: #{tpu_custom_call.1} parent=5 // pred_check
        _
      $region34: #{tpu_custom_call.1} parent=5 // pred_check_branch
        %206 = sbr.rel (%p203) target = $region36
      $region35: #{tpu_custom_call.1} parent=5 // pred_region
        %s207 = ssub.s32 %s17, 1
        %s208 = sand.u32 %s30, 1
        %s209 = scalar_lea.sflag [#allocation5], %s208
        %s210 = sand.u32 %s30, 1
        %s211 = smul.addr %s210, 64
        %s212 = scalar_lea.vmem [#allocation4], %s211
        // Predicated region
        $region37: #{tpu_custom_call.1} parent=35 // pred_check
          %p213 = pneg %p43
        $region38: #{tpu_custom_call.1} parent=35 // pred_check_branch
          %215 = sbr.rel (%p213) target = $region40
        $region39: #{tpu_custom_call.1} parent=35 // pred_region
          %216 = dma.done %s209, 1024
        $region40: #{tpu_custom_call.1} parent=35 // pred_fallthru
          _
        // Predicated region
        $region41: #{tpu_custom_call.1} parent=35 // pred_check
          %p217 = pneg %p64
        $region42: #{tpu_custom_call.1} parent=35 // pred_check_branch
          %219 = sbr.rel (%p217) target = $region44
        $region43: #{tpu_custom_call.1} parent=35 // pred_region
          %220 = dma.done [#allocation8], 3072
        $region44: #{tpu_custom_call.1} parent=35 // pred_fallthru
          _
        // Predicated region
        $region45: #{tpu_custom_call.1} parent=35 // pred_check
          %p221 = pneg %p85
        $region46: #{tpu_custom_call.1} parent=35 // pred_check_branch
          %223 = sbr.rel (%p221) target = $region48
        $region47: #{tpu_custom_call.1} parent=35 // pred_region
          %224 = dma.done [#allocation8], 1024
        $region48: #{tpu_custom_call.1} parent=35 // pred_fallthru
          _
        %s225 = sand.u32 %s30, 1
        %s226 = scalar_lea.sflag [#allocation5], %s225
        %s227 = sand.u32 %s30, 1
        %s228 = smul.addr %s227, 64
        %s229 = scalar_lea.vmem [#allocation4], %s228
        %p230 = pneg %p43
        %p231 = pneg %p40
        %p232 = pneg %p64
        %p233 = pneg %p61
        %p234 = pneg %p85
        %p235 = pneg %p82
        %p236 = pneg %p106
        %p237 = pneg %p103
        %p238 = pneg %p132
        %p239 = pneg %p129
        %s240 = sand.u32 %s119, 1
        %s241 = scalar_lea.sflag [#allocation6], %s240
        %s242 = sand.u32 %s119, 1
        %s243 = smul.addr %s242, 64
        %s244 = scalar_lea.vmem [#allocation10], %s243
        %s245 = smul.u32 8, %s22
        %s246 = smul.u32 8, %s22
        %v248 = vld [vmem:[%s212] sm:$0xff]
        %v249 = vld [vmem:[%s212 + $0x8] sm:$0xff]
        %v250 = vld [vmem:[%s212 + $0x10] sm:$0xff]
        %v251 = vld [vmem:[%s212 + $0x18] sm:$0xff]
        %v252 = vld [vmem:[%s212 + $0x20] sm:$0xff]
        %v253 = vld [vmem:[%s212 + $0x28] sm:$0xff]
        %v254 = vld [vmem:[%s212 + $0x30] sm:$0xff]
        %v255 = vld [vmem:[%s212 + $0x38] sm:$0xff]
        %v256 = vpack.c.bf16 %v249, %v248
        %v257 = vpack.c.bf16 %v251, %v250
        %v258 = vpack.c.bf16 %v253, %v252
        %v259 = vpack.c.bf16 %v255, %v254
        %v260 = vld [vmem:[#allocation7] sm:$0xff]
        %v261 = vld [vmem:[#allocation7 + $0x8] sm:$0xf]
        %v262 = vld [vmem:[#allocation7 + $0xc] sm:$0xff]
        %v263 = vld [vmem:[#allocation7 + $0x14] sm:$0xf]
        %v264 = vld [vmem:[#allocation7 + $0x18] sm:$0xff]
        %v265 = vld [vmem:[#allocation7 + $0x20] sm:$0xf]
        %v266 = vld [vmem:[#allocation7 + $0x24] sm:$0xff]
        %v267 = vld [vmem:[#allocation7 + $0x2c] sm:$0xf]
        %v268 = vld [vmem:[#allocation7 + $0x30] sm:$0xff]
        %v269 = vld [vmem:[#allocation7 + $0x38] sm:$0xf]
        %v270 = vld [vmem:[#allocation7 + $0x3c] sm:$0xff]
        %v271 = vld [vmem:[#allocation7 + $0x44] sm:$0xf]
        %v272 = vld [vmem:[#allocation7 + $0x48] sm:$0xff]
        %v273 = vld [vmem:[#allocation7 + $0x50] sm:$0xf]
        %v274 = vld [vmem:[#allocation7 + $0x54] sm:$0xff]
        %v275 = vld [vmem:[#allocation7 + $0x5c] sm:$0xf]
        %v276 = vld [vmem:[#allocation7 + $0x60] sm:$0xff]
        %v277 = vld [vmem:[#allocation7 + $0x68] sm:$0xf]
        %v278 = vld [vmem:[#allocation7 + $0x6c] sm:$0xff]
        %v279 = vld [vmem:[#allocation7 + $0x74] sm:$0xf]
        %v280 = vld [vmem:[#allocation7 + $0x78] sm:$0xff]
        %v281 = vld [vmem:[#allocation7 + $0x80] sm:$0xf]
        %v282 = vld [vmem:[#allocation7 + $0x84] sm:$0xff]
        %v283 = vld [vmem:[#allocation7 + $0x8c] sm:$0xf]
        %v284 = vld [vmem:[#allocation7 + $0x90] sm:$0xff]
        %v285 = vld [vmem:[#allocation7 + $0x98] sm:$0xf]
        %v286 = vld [vmem:[#allocation7 + $0x9c] sm:$0xff]
        %v287 = vld [vmem:[#allocation7 + $0xa4] sm:$0xf]
        %v288 = vld [vmem:[#allocation7 + $0xa8] sm:$0xff]
        %v289 = vld [vmem:[#allocation7 + $0xb0] sm:$0xf]
        %v290 = vld [vmem:[#allocation7 + $0xb4] sm:$0xff]
        %v291 = vld [vmem:[#allocation7 + $0xbc] sm:$0xf]
        %v324 = vunpack.c.l.b16 %v260
        %v325 = vunpack.c.h.b16 %v260
        %v326 = vunpack.c.l.b16 %v261
        %v327 = vunpack.c.l.b16 %v262
        %v328 = vunpack.c.h.b16 %v262
        %v329 = vunpack.c.l.b16 %v263
        %v330 = vunpack.c.l.b16 %v264
        %v331 = vunpack.c.h.b16 %v264
        %v332 = vunpack.c.l.b16 %v265
        %v333 = vunpack.c.l.b16 %v266
        %v334 = vunpack.c.h.b16 %v266
        %v335 = vunpack.c.l.b16 %v267
        %v336 = vunpack.c.l.b16 %v268
        %v337 = vunpack.c.h.b16 %v268
        %v338 = vunpack.c.l.b16 %v269
        %v339 = vunpack.c.l.b16 %v270
        %v340 = vunpack.c.h.b16 %v270
        %v341 = vunpack.c.l.b16 %v271
        %v342 = vunpack.c.l.b16 %v272
        %v343 = vunpack.c.h.b16 %v272
        %v344 = vunpack.c.l.b16 %v273
        %v345 = vunpack.c.l.b16 %v274
        %v346 = vunpack.c.h.b16 %v274
        %v347 = vunpack.c.l.b16 %v275
        %v348 = vunpack.c.l.b16 %v276
        %v349 = vunpack.c.h.b16 %v276
        %v350 = vunpack.c.l.b16 %v277
        %v351 = vunpack.c.l.b16 %v278
        %v352 = vunpack.c.h.b16 %v278
        %v353 = vunpack.c.l.b16 %v279
        %v354 = vunpack.c.l.b16 %v280
        %v355 = vunpack.c.h.b16 %v280
        %v356 = vunpack.c.l.b16 %v281
        %v357 = vunpack.c.l.b16 %v282
        %v358 = vunpack.c.h.b16 %v282
        %v359 = vunpack.c.l.b16 %v283
        %v360 = vunpack.c.l.b16 %v284
        %v361 = vunpack.c.h.b16 %v284
        %v362 = vunpack.c.l.b16 %v285
        %v363 = vunpack.c.l.b16 %v286
        %v364 = vunpack.c.h.b16 %v286
        %v365 = vunpack.c.l.b16 %v287
        %v366 = vunpack.c.l.b16 %v288
        %v367 = vunpack.c.h.b16 %v288
        %v368 = vunpack.c.l.b16 %v289
        %v369 = vunpack.c.l.b16 %v290
        %v370 = vunpack.c.h.b16 %v290
        %v371 = vunpack.c.l.b16 %v291
        %v372 = vpack.c.b16 %v327, %v324
        %v373 = vpack.c.b16 %v328, %v325
        %v374 = vpack.c.b16 %v329, %v326
        %v375 = vpack.c.b16 %v333, %v330
        %v376 = vpack.c.b16 %v334, %v331
        %v377 = vpack.c.b16 %v335, %v332
        %v378 = vpack.c.b16 %v339, %v336
        %v379 = vpack.c.b16 %v340, %v337
        %v380 = vpack.c.b16 %v341, %v338
        %v381 = vpack.c.b16 %v345, %v342
        %v382 = vpack.c.b16 %v346, %v343
        %v383 = vpack.c.b16 %v347, %v344
        %v384 = vpack.c.b16 %v351, %v348
        %v385 = vpack.c.b16 %v352, %v349
        %v386 = vpack.c.b16 %v353, %v350
        %v387 = vpack.c.b16 %v357, %v354
        %v388 = vpack.c.b16 %v358, %v355
        %v389 = vpack.c.b16 %v359, %v356
        %v390 = vpack.c.b16 %v363, %v360
        %v391 = vpack.c.b16 %v364, %v361
        %v392 = vpack.c.b16 %v365, %v362
        %v393 = vpack.c.b16 %v369, %v366
        %v394 = vpack.c.b16 %v370, %v367
        %v395 = vpack.c.b16 %v371, %v368
        %420 = vmatprep.subr.bf16.mxu0 %v373
        %421 = vmatpush1.bf16.msra.mxu0 %v372
        %422 = vmatprep.subr.bf16.mxu0 %v376
        %423 = vmatpush1.bf16.msra.mxu0 %v375
        %424 = vmatprep.subr.bf16.mxu0 %v379
        %425 = vmatpush1.bf16.msra.mxu0 %v378
        %426 = vmatprep.subr.bf16.mxu0 %v382
        %427 = vmatpush1.bf16.msra.mxu0 %v381
        %428 = vmatprep.subr.bf16.mxu0 %v385
        %429 = vmatpush1.bf16.msra.mxu0 %v384
        %430 = vmatprep.subr.bf16.mxu0 %v388
        %431 = vmatpush1.bf16.msra.mxu0 %v387
        %432 = vmatprep.subr.bf16.mxu0 %v391
        %433 = vmatpush1.bf16.msra.mxu0 %v390
        %434 = vmatprep.subr.bf16.mxu0 %v394
        %435 = vmatpush1.bf16.msra.mxu0 %v393
        %436 = vmatprep.subr.bf16.mxu0 0
        %437 = vmatpush1.bf16.msra.mxu0 0
        %438 = vmatprep.subr.bf16.mxu0 0
        %439 = vmatpush1.bf16.msra.mxu0 0
        %440 = vmatprep.subr.bf16.mxu0 0
        %441 = vmatpush1.bf16.msra.mxu0 0
        %442 = vmatprep.subr.bf16.mxu0 0
        %443 = vmatpush1.bf16.msra.mxu0 0
        %444 = vmatprep.subr.bf16.mxu0 0
        %445 = vmatpush1.bf16.msra.mxu0 0
        %446 = vmatprep.subr.bf16.mxu0 0
        %447 = vmatpush1.bf16.msra.mxu0 0
        %448 = vmatprep.subr.bf16.mxu0 0
        %449 = vmatpush1.bf16.msra.mxu0 0
        %450 = vmatprep.subr.bf16.mxu0 0
        %451 = vmatpush1.bf16.msra.mxu0 0
        %452 = vmatprep.mubr.bf16.mxu0 0
        %453 = vmatmul.mubr.bf16.gmra.mrb[0].mxu0 %v256
        %v454 = vpop.f32.mrb[0].mxu0
        %v455 = vadd.f32 0.0, %v454
        %v456 = vpop.f32.mrb[0].mxu0
        %v457 = vadd.f32 0.0, %v456
        %v458 = vpop.f32.mrb[0].mxu0
        %v459 = vadd.f32 0.0, %v458
        %v460 = vpop.f32.mrb[0].mxu0
        %v461 = vadd.f32 0.0, %v460
        %462 = vmatprep.mubr.bf16.mxu0 0
        %463 = vmatmul.mubr.bf16.gmra.mrb[0].mxu0 %v257
        %v464 = vpop.f32.mrb[0].mxu0
        %v465 = vadd.f32 0.0, %v464
        %v466 = vpop.f32.mrb[0].mxu0
        %v467 = vadd.f32 0.0, %v466
        %v468 = vpop.f32.mrb[0].mxu0
        %v469 = vadd.f32 0.0, %v468
        %v470 = vpop.f32.mrb[0].mxu0
        %v471 = vadd.f32 0.0, %v470
        %472 = vmatprep.mubr.bf16.mxu0 0
        %473 = vmatmul.mubr.bf16.gmra.mrb[0].mxu0 %v258
        %v474 = vpop.f32.mrb[0].mxu0
        %v475 = vadd.f32 0.0, %v474
        %v476 = vpop.f32.mrb[0].mxu0
        %v477 = vadd.f32 0.0, %v476
        %v478 = vpop.f32.mrb[0].mxu0
        %v479 = vadd.f32 0.0, %v478
        %v480 = vpop.f32.mrb[0].mxu0
        %v481 = vadd.f32 0.0, %v480
        %482 = vmatprep.mubr.bf16.mxu0 0
        %483 = vmatmul.mubr.bf16.gmra.mrb[0].mxu0 %v259
        %v484 = vpop.f32.mrb[0].mxu0
        %v485 = vadd.f32 0.0, %v484
        %v486 = vpop.f32.mrb[0].mxu0
        %v487 = vadd.f32 0.0, %v486
        %v488 = vpop.f32.mrb[0].mxu0
        %v489 = vadd.f32 0.0, %v488
        %v490 = vpop.f32.mrb[0].mxu0
        %v491 = vadd.f32 0.0, %v490
        %492 = vdwg.mxu0
        %493 = vmatprep.subr.bf16.mxu0 0
        %494 = vmatpush1.bf16.msra.mxu0 %v374
        %495 = vmatprep.subr.bf16.mxu0 0
        %496 = vmatpush1.bf16.msra.mxu0 %v377
        %497 = vmatprep.subr.bf16.mxu0 0
        %498 = vmatpush1.bf16.msra.mxu0 %v380
        %499 = vmatprep.subr.bf16.mxu0 0
        %500 = vmatpush1.bf16.msra.mxu0 %v383
        %501 = vmatprep.subr.bf16.mxu0 0
        %502 = vmatpush1.bf16.msra.mxu0 %v386
        %503 = vmatprep.subr.bf16.mxu0 0
        %504 = vmatpush1.bf16.msra.mxu0 %v389
        %505 = vmatprep.subr.bf16.mxu0 0
        %506 = vmatpush1.bf16.msra.mxu0 %v392
        %507 = vmatprep.subr.bf16.mxu0 0
        %508 = vmatpush1.bf16.msra.mxu0 %v395
        %509 = vmatprep.subr.bf16.mxu0 0
        %510 = vmatpush1.bf16.msra.mxu0 0
        %511 = vmatprep.subr.bf16.mxu0 0
        %512 = vmatpush1.bf16.msra.mxu0 0
        %513 = vmatprep.subr.bf16.mxu0 0
        %514 = vmatpush1.bf16.msra.mxu0 0
        %515 = vmatprep.subr.bf16.mxu0 0
        %516 = vmatpush1.bf16.msra.mxu0 0
        %517 = vmatprep.subr.bf16.mxu0 0
        %518 = vmatpush1.bf16.msra.mxu0 0
        %519 = vmatprep.subr.bf16.mxu0 0
        %520 = vmatpush1.bf16.msra.mxu0 0
        %521 = vmatprep.subr.bf16.mxu0 0
        %522 = vmatpush1.bf16.msra.mxu0 0
        %523 = vmatprep.subr.bf16.mxu0 0
        %524 = vmatpush1.bf16.msra.mxu0 0
        %525 = vmatprep.mubr.bf16.mxu0 0
        %526 = vmatmul.mubr.bf16.gmra.mrb[0].mxu0 %v256
        %v527 = vpop.f32.mrb[0].mxu0
        %v528 = vadd.f32 0.0, %v527
        %v529 = vpop.f32.mrb[0].mxu0
        %v530 = vpop.f32.mrb[0].mxu0
        %v531 = vadd.f32 0.0, %v530
        %v532 = vpop.f32.mrb[0].mxu0
        %533 = vmatprep.mubr.bf16.mxu0 0
        %534 = vmatmul.mubr.bf16.gmra.mrb[0].mxu0 %v257
        %v535 = vpop.f32.mrb[0].mxu0
        %v536 = vadd.f32 0.0, %v535
        %v537 = vpop.f32.mrb[0].mxu0
        %v538 = vpop.f32.mrb[0].mxu0
        %v539 = vadd.f32 0.0, %v538
        %v540 = vpop.f32.mrb[0].mxu0
        %541 = vmatprep.mubr.bf16.mxu0 0
        %542 = vmatmul.mubr.bf16.gmra.mrb[0].mxu0 %v258
        %v543 = vpop.f32.mrb[0].mxu0
        %v544 = vadd.f32 0.0, %v543
        %v545 = vpop.f32.mrb[0].mxu0
        %v546 = vpop.f32.mrb[0].mxu0
        %v547 = vadd.f32 0.0, %v546
        %v548 = vpop.f32.mrb[0].mxu0
        %549 = vmatprep.mubr.bf16.mxu0 0
        %550 = vmatmul.mubr.bf16.gmra.mrb[0].mxu0 %v259
        %v551 = vpop.f32.mrb[0].mxu0
        %v552 = vadd.f32 0.0, %v551
        %v553 = vpop.f32.mrb[0].mxu0
        %v554 = vpop.f32.mrb[0].mxu0
        %v555 = vadd.f32 0.0, %v554
        %v556 = vpop.f32.mrb[0].mxu0
        %557 = vdwg.mxu0
        %v558 = vpack.c.bf16 %v455, %v455
        %v559 = vpack.c.bf16 %v457, %v457
        %v560 = vpack.c.bf16 %v528, %v528
        %v561 = vpack.c.bf16 %v459, %v459
        %v562 = vpack.c.bf16 %v461, %v461
        %v563 = vpack.c.bf16 %v531, %v531
        %v564 = vpack.c.bf16 %v465, %v465
        %v565 = vpack.c.bf16 %v467, %v467
        %v566 = vpack.c.bf16 %v536, %v536
        %v567 = vpack.c.bf16 %v469, %v469
        %v568 = vpack.c.bf16 %v471, %v471
        %v569 = vpack.c.bf16 %v539, %v539
        %v570 = vpack.c.bf16 %v475, %v475
        %v571 = vpack.c.bf16 %v477, %v477
        %v572 = vpack.c.bf16 %v544, %v544
        %v573 = vpack.c.bf16 %v479, %v479
        %v574 = vpack.c.bf16 %v481, %v481
        %v575 = vpack.c.bf16 %v547, %v547
        %v576 = vpack.c.bf16 %v485, %v485
        %v577 = vpack.c.bf16 %v487, %v487
        %v578 = vpack.c.bf16 %v552, %v552
        %v579 = vpack.c.bf16 %v489, %v489
        %v580 = vpack.c.bf16 %v491, %v491
        %v581 = vpack.c.bf16 %v555, %v555
        %v606 = vunpack.c.l.b16 %v558
        %v607 = vunpack.c.l.b16 %v559
        %v608 = vunpack.c.l.b16 %v560
        %v609 = vunpack.c.l.b16 %v561
        %v610 = vunpack.c.l.b16 %v562
        %v611 = vunpack.c.l.b16 %v563
        %v612 = vunpack.c.l.b16 %v564
        %v613 = vunpack.c.l.b16 %v565
        %v614 = vunpack.c.l.b16 %v566
        %v615 = vunpack.c.l.b16 %v567
        %v616 = vunpack.c.l.b16 %v568
        %v617 = vunpack.c.l.b16 %v569
        %v618 = vunpack.c.l.b16 %v570
        %v619 = vunpack.c.l.b16 %v571
        %v620 = vunpack.c.l.b16 %v572
        %v621 = vunpack.c.l.b16 %v573
        %v622 = vunpack.c.l.b16 %v574
        %v623 = vunpack.c.l.b16 %v575
        %v624 = vunpack.c.l.b16 %v576
        %v625 = vunpack.c.l.b16 %v577
        %v626 = vunpack.c.l.b16 %v578
        %v627 = vunpack.c.l.b16 %v579
        %v628 = vunpack.c.l.b16 %v580
        %v629 = vunpack.c.l.b16 %v581
        %v630 = vpack.c.b16 %v607, %v606
        %v631 = vpack.c.b16 %v608, %v608
        %v632 = vpack.c.b16 %v610, %v609
        %v633 = vpack.c.b16 %v611, %v611
        %v634 = vpack.c.b16 %v613, %v612
        %v635 = vpack.c.b16 %v614, %v614
        %v636 = vpack.c.b16 %v616, %v615
        %v637 = vpack.c.b16 %v617, %v617
        %v638 = vpack.c.b16 %v619, %v618
        %v639 = vpack.c.b16 %v620, %v620
        %v640 = vpack.c.b16 %v622, %v621
        %v641 = vpack.c.b16 %v623, %v623
        %v642 = vpack.c.b16 %v625, %v624
        %v643 = vpack.c.b16 %v626, %v626
        %v644 = vpack.c.b16 %v628, %v627
        %v645 = vpack.c.b16 %v629, %v629
        %662 = vst [vmem:[#allocation2] sm:$0xff] %v630
        %663 = vst [vmem:[#allocation2 + $0x8] sm:$0xf] %v631
        %664 = vst [vmem:[#allocation2 + $0xc] sm:$0xff] %v632
        %665 = vst [vmem:[#allocation2 + $0x14] sm:$0xf] %v633
        %666 = vst [vmem:[#allocation2 + $0x18] sm:$0xff] %v634
        %667 = vst [vmem:[#allocation2 + $0x20] sm:$0xf] %v635
        %668 = vst [vmem:[#allocation2 + $0x24] sm:$0xff] %v636
        %669 = vst [vmem:[#allocation2 + $0x2c] sm:$0xf] %v637
        %670 = vst [vmem:[#allocation2 + $0x30] sm:$0xff] %v638
        %671 = vst [vmem:[#allocation2 + $0x38] sm:$0xf] %v639
        %672 = vst [vmem:[#allocation2 + $0x3c] sm:$0xff] %v640
        %673 = vst [vmem:[#allocation2 + $0x44] sm:$0xf] %v641
        %674 = vst [vmem:[#allocation2 + $0x48] sm:$0xff] %v642
        %675 = vst [vmem:[#allocation2 + $0x50] sm:$0xf] %v643
        %676 = vst [vmem:[#allocation2 + $0x54] sm:$0xff] %v644
        %677 = vst [vmem:[#allocation2 + $0x5c] sm:$0xf] %v645
        %v678 = vld [vmem:[#allocation2] sm:$0xf]
        %v679 = vld [vmem:[#allocation2 + $0xc] sm:$0xf]
        %v680 = vld [vmem:[#allocation2 + $0x18] sm:$0xf]
        %v681 = vld [vmem:[#allocation2 + $0x24] sm:$0xf]
        %v682 = vld [vmem:[#allocation2 + $0x30] sm:$0xf]
        %v683 = vld [vmem:[#allocation2 + $0x3c] sm:$0xf]
        %v684 = vld [vmem:[#allocation2 + $0x48] sm:$0xf]
        %v685 = vld [vmem:[#allocation2 + $0x54] sm:$0xf]
        %v686 = vld [vmem:[#allocation2 + $0x4] sm:$0xf]
        %v687 = vld [vmem:[#allocation2 + $0x10] sm:$0xf]
        %v688 = vld [vmem:[#allocation2 + $0x1c] sm:$0xf]
        %v689 = vld [vmem:[#allocation2 + $0x28] sm:$0xf]
        %v690 = vld [vmem:[#allocation2 + $0x34] sm:$0xf]
        %v691 = vld [vmem:[#allocation2 + $0x40] sm:$0xf]
        %v692 = vld [vmem:[#allocation2 + $0x4c] sm:$0xf]
        %v693 = vld [vmem:[#allocation2 + $0x58] sm:$0xf]
        %v694 = vld [vmem:[#allocation2 + $0x8] sm:$0xf]
        %v695 = vld [vmem:[#allocation2 + $0x14] sm:$0xf]
        %v696 = vld [vmem:[#allocation2 + $0x20] sm:$0xf]
        %v697 = vld [vmem:[#allocation2 + $0x2c] sm:$0xf]
        %v698 = vld [vmem:[#allocation2 + $0x38] sm:$0xf]
        %v699 = vld [vmem:[#allocation2 + $0x44] sm:$0xf]
        %v700 = vld [vmem:[#allocation2 + $0x50] sm:$0xf]
        %v701 = vld [vmem:[#allocation2 + $0x5c] sm:$0xf]
        %vm702 = vcmask 130048
        %v704 = vsel %vm702, %v678, 0
        %v707 = vsel %vm702, %v686, 0
        %709 = vmatprep.subr.bf16.mxu0 0
        %710 = vmatpush1.bf16.xpose.msra.mxu0 %v707
        %711 = vmatprep.subr.bf16.mxu0 0
        %712 = vmatpush1.bf16.xpose.msra.mxu0 0
        %713 = vmatprep.subr.bf16.mxu0 0
        %714 = vmatpush1.bf16.xpose.msra.mxu0 0
        %715 = vmatprep.subr.bf16.mxu0 0
        %716 = vmatpush1.bf16.xpose.msra.mxu0 0
        %717 = vmatprep.subr.bf16.mxu0 0
        %718 = vmatpush1.bf16.xpose.msra.mxu0 0
        %719 = vmatprep.subr.bf16.mxu0 0
        %720 = vmatpush1.bf16.xpose.msra.mxu0 0
        %721 = vmatprep.subr.bf16.mxu0 0
        %722 = vmatpush1.bf16.xpose.msra.mxu0 0
        %723 = vmatprep.subr.bf16.mxu0 0
        %724 = vmatpush1.bf16.xpose.msra.mxu0 0
        %725 = vmatprep.subr.bf16.mxu0 0
        %726 = vmatpush1.bf16.xpose.msra.mxu0 0
        %727 = vmatprep.subr.bf16.mxu0 0
        %728 = vmatpush1.bf16.xpose.msra.mxu0 0
        %729 = vmatprep.subr.bf16.mxu0 0
        %730 = vmatpush1.bf16.xpose.msra.mxu0 0
        %731 = vmatprep.subr.bf16.mxu0 0
        %732 = vmatpush1.bf16.xpose.msra.mxu0 0
        %733 = vmatprep.subr.bf16.mxu0 0
        %734 = vmatpush1.bf16.xpose.msra.mxu0 0
        %735 = vmatprep.subr.bf16.mxu0 0
        %736 = vmatpush1.bf16.xpose.msra.mxu0 0
        %737 = vmatprep.subr.bf16.mxu0 0
        %738 = vmatpush1.bf16.xpose.msra.mxu0 0
        %739 = vmatprep.subr.bf16.mxu0 0
        %740 = vmatpush1.bf16.xpose.msra.mxu0 0
        %741 = vmatprep.mubr.bf16.mxu0 0
        %742 = vmatmul.mubr.bf16.gmra.mrb[0].mxu0 %v704
        %v743 = vpop.f32.mrb[0].mxu0
        %v744 = vadd.f32 0.0, %v743
        %v745 = vpop.f32.mrb[0].mxu0
        %v746 = vpop.f32.mrb[0].mxu0
        %v747 = vpop.f32.mrb[0].mxu0
        %748 = vdwg.mxu0
        %v750 = vsel %vm702, %v679, 0
        %v753 = vsel %vm702, %v687, 0
        %755 = vmatprep.subr.bf16.mxu0 0
        %756 = vmatpush1.bf16.xpose.msra.mxu0 %v753
        %757 = vmatprep.subr.bf16.mxu0 0
        %758 = vmatpush1.bf16.xpose.msra.mxu0 0
        %759 = vmatprep.subr.bf16.mxu0 0
        %760 = vmatpush1.bf16.xpose.msra.mxu0 0
        %761 = vmatprep.subr.bf16.mxu0 0
        %762 = vmatpush1.bf16.xpose.msra.mxu0 0
        %763 = vmatprep.subr.bf16.mxu0 0
        %764 = vmatpush1.bf16.xpose.msra.mxu0 0
        %765 = vmatprep.subr.bf16.mxu0 0
        %766 = vmatpush1.bf16.xpose.msra.mxu0 0
        %767 = vmatprep.subr.bf16.mxu0 0
        %768 = vmatpush1.bf16.xpose.msra.mxu0 0
        %769 = vmatprep.subr.bf16.mxu0 0
        %770 = vmatpush1.bf16.xpose.msra.mxu0 0
        %771 = vmatprep.subr.bf16.mxu0 0
        %772 = vmatpush1.bf16.xpose.msra.mxu0 0
        %773 = vmatprep.subr.bf16.mxu0 0
        %774 = vmatpush1.bf16.xpose.msra.mxu0 0
        %775 = vmatprep.subr.bf16.mxu0 0
        %776 = vmatpush1.bf16.xpose.msra.mxu0 0
        %777 = vmatprep.subr.bf16.mxu0 0
        %778 = vmatpush1.bf16.xpose.msra.mxu0 0
        %779 = vmatprep.subr.bf16.mxu0 0
        %780 = vmatpush1.bf16.xpose.msra.mxu0 0
        %781 = vmatprep.subr.bf16.mxu0 0
        %782 = vmatpush1.bf16.xpose.msra.mxu0 0
        %783 = vmatprep.subr.bf16.mxu0 0
        %784 = vmatpush1.bf16.xpose.msra.mxu0 0
        %785 = vmatprep.subr.bf16.mxu0 0
        %786 = vmatpush1.bf16.xpose.msra.mxu0 0
        %787 = vmatprep.mubr.bf16.mxu0 0
        %788 = vmatmul.mubr.bf16.gmra.mrb[0].mxu0 %v750
        %v789 = vpop.f32.mrb[0].mxu0
        %v790 = vadd.f32 0.0, %v789
        %v791 = vpop.f32.mrb[0].mxu0
        %v792 = vpop.f32.mrb[0].mxu0
        %v793 = vpop.f32.mrb[0].mxu0
        %794 = vdwg.mxu0
        %v796 = vsel %vm702, %v680, 0
        %v799 = vsel %vm702, %v688, 0
        %801 = vmatprep.subr.bf16.mxu0 0
        %802 = vmatpush1.bf16.xpose.msra.mxu0 %v799
        %803 = vmatprep.subr.bf16.mxu0 0
        %804 = vmatpush1.bf16.xpose.msra.mxu0 0
        %805 = vmatprep.subr.bf16.mxu0 0
        %806 = vmatpush1.bf16.xpose.msra.mxu0 0
        %807 = vmatprep.subr.bf16.mxu0 0
        %808 = vmatpush1.bf16.xpose.msra.mxu0 0
        %809 = vmatprep.subr.bf16.mxu0 0
        %810 = vmatpush1.bf16.xpose.msra.mxu0 0
        %811 = vmatprep.subr.bf16.mxu0 0
        %812 = vmatpush1.bf16.xpose.msra.mxu0 0
        %813 = vmatprep.subr.bf16.mxu0 0
        %814 = vmatpush1.bf16.xpose.msra.mxu0 0
        %815 = vmatprep.subr.bf16.mxu0 0
        %816 = vmatpush1.bf16.xpose.msra.mxu0 0
        %817 = vmatprep.subr.bf16.mxu0 0
        %818 = vmatpush1.bf16.xpose.msra.mxu0 0
        %819 = vmatprep.subr.bf16.mxu0 0
        %820 = vmatpush1.bf16.xpose.msra.mxu0 0
        %821 = vmatprep.subr.bf16.mxu0 0
        %822 = vmatpush1.bf16.xpose.msra.mxu0 0
        %823 = vmatprep.subr.bf16.mxu0 0
        %824 = vmatpush1.bf16.xpose.msra.mxu0 0
        %825 = vmatprep.subr.bf16.mxu0 0
        %826 = vmatpush1.bf16.xpose.msra.mxu0 0
        %827 = vmatprep.subr.bf16.mxu0 0
        %828 = vmatpush1.bf16.xpose.msra.mxu0 0
        %829 = vmatprep.subr.bf16.mxu0 0
        %830 = vmatpush1.bf16.xpose.msra.mxu0 0
        %831 = vmatprep.subr.bf16.mxu0 0
        %832 = vmatpush1.bf16.xpose.msra.mxu0 0
        %833 = vmatprep.mubr.bf16.mxu0 0
        %834 = vmatmul.mubr.bf16.gmra.mrb[0].mxu0 %v796
        %v835 = vpop.f32.mrb[0].mxu0
        %v836 = vadd.f32 0.0, %v835
        %v837 = vpop.f32.mrb[0].mxu0
        %v838 = vpop.f32.mrb[0].mxu0
        %v839 = vpop.f32.mrb[0].mxu0
        %840 = vdwg.mxu0
        %v842 = vsel %vm702, %v681, 0
        %v845 = vsel %vm702, %v689, 0
        %847 = vmatprep.subr.bf16.mxu0 0
        %848 = vmatpush1.bf16.xpose.msra.mxu0 %v845
        %849 = vmatprep.subr.bf16.mxu0 0
        %850 = vmatpush1.bf16.xpose.msra.mxu0 0
        %851 = vmatprep.subr.bf16.mxu0 0
        %852 = vmatpush1.bf16.xpose.msra.mxu0 0
        %853 = vmatprep.subr.bf16.mxu0 0
        %854 = vmatpush1.bf16.xpose.msra.mxu0 0
        %855 = vmatprep.subr.bf16.mxu0 0
        %856 = vmatpush1.bf16.xpose.msra.mxu0 0
        %857 = vmatprep.subr.bf16.mxu0 0
        %858 = vmatpush1.bf16.xpose.msra.mxu0 0
        %859 = vmatprep.subr.bf16.mxu0 0
        %860 = vmatpush1.bf16.xpose.msra.mxu0 0
        %861 = vmatprep.subr.bf16.mxu0 0
        %862 = vmatpush1.bf16.xpose.msra.mxu0 0
        %863 = vmatprep.subr.bf16.mxu0 0
        %864 = vmatpush1.bf16.xpose.msra.mxu0 0
        %865 = vmatprep.subr.bf16.mxu0 0
        %866 = vmatpush1.bf16.xpose.msra.mxu0 0
        %867 = vmatprep.subr.bf16.mxu0 0
        %868 = vmatpush1.bf16.xpose.msra.mxu0 0
        %869 = vmatprep.subr.bf16.mxu0 0
        %870 = vmatpush1.bf16.xpose.msra.mxu0 0
        %871 = vmatprep.subr.bf16.mxu0 0
        %872 = vmatpush1.bf16.xpose.msra.mxu0 0
        %873 = vmatprep.subr.bf16.mxu0 0
        %874 = vmatpush1.bf16.xpose.msra.mxu0 0
        %875 = vmatprep.subr.bf16.mxu0 0
        %876 = vmatpush1.bf16.xpose.msra.mxu0 0
        %877 = vmatprep.subr.bf16.mxu0 0
        %878 = vmatpush1.bf16.xpose.msra.mxu0 0
        %879 = vmatprep.mubr.bf16.mxu0 0
        %880 = vmatmul.mubr.bf16.gmra.mrb[0].mxu0 %v842
        %v881 = vpop.f32.mrb[0].mxu0
        %v882 = vadd.f32 0.0, %v881
        %v883 = vpop.f32.mrb[0].mxu0
        %v884 = vpop.f32.mrb[0].mxu0
        %v885 = vpop.f32.mrb[0].mxu0
        %886 = vdwg.mxu0
        %v888 = vsel %vm702, %v682, 0
        %v891 = vsel %vm702, %v690, 0
        %893 = vmatprep.subr.bf16.mxu0 0
        %894 = vmatpush1.bf16.xpose.msra.mxu0 %v891
        %895 = vmatprep.subr.bf16.mxu0 0
        %896 = vmatpush1.bf16.xpose.msra.mxu0 0
        %897 = vmatprep.subr.bf16.mxu0 0
        %898 = vmatpush1.bf16.xpose.msra.mxu0 0
        %899 = vmatprep.subr.bf16.mxu0 0
        %900 = vmatpush1.bf16.xpose.msra.mxu0 0
        %901 = vmatprep.subr.bf16.mxu0 0
        %902 = vmatpush1.bf16.xpose.msra.mxu0 0
        %903 = vmatprep.subr.bf16.mxu0 0
        %904 = vmatpush1.bf16.xpose.msra.mxu0 0
        %905 = vmatprep.subr.bf16.mxu0 0
        %906 = vmatpush1.bf16.xpose.msra.mxu0 0
        %907 = vmatprep.subr.bf16.mxu0 0
        %908 = vmatpush1.bf16.xpose.msra.mxu0 0
        %909 = vmatprep.subr.bf16.mxu0 0
        %910 = vmatpush1.bf16.xpose.msra.mxu0 0
        %911 = vmatprep.subr.bf16.mxu0 0
        %912 = vmatpush1.bf16.xpose.msra.mxu0 0
        %913 = vmatprep.subr.bf16.mxu0 0
        %914 = vmatpush1.bf16.xpose.msra.mxu0 0
        %915 = vmatprep.subr.bf16.mxu0 0
        %916 = vmatpush1.bf16.xpose.msra.mxu0 0
        %917 = vmatprep.subr.bf16.mxu0 0
        %918 = vmatpush1.bf16.xpose.msra.mxu0 0
        %919 = vmatprep.subr.bf16.mxu0 0
        %920 = vmatpush1.bf16.xpose.msra.mxu0 0
        %921 = vmatprep.subr.bf16.mxu0 0
        %922 = vmatpush1.bf16.xpose.msra.mxu0 0
        %923 = vmatprep.subr.bf16.mxu0 0
        %924 = vmatpush1.bf16.xpose.msra.mxu0 0
        %925 = vmatprep.mubr.bf16.mxu0 0
        %926 = vmatmul.mubr.bf16.gmra.mrb[0].mxu0 %v888
        %v927 = vpop.f32.mrb[0].mxu0
        %v928 = vadd.f32 0.0, %v927
        %v929 = vpop.f32.mrb[0].mxu0
        %v930 = vpop.f32.mrb[0].mxu0
        %v931 = vpop.f32.mrb[0].mxu0
        %932 = vdwg.mxu0
        %v934 = vsel %vm702, %v683, 0
        %v937 = vsel %vm702, %v691, 0
        %939 = vmatprep.subr.bf16.mxu0 0
        %940 = vmatpush1.bf16.xpose.msra.mxu0 %v937
        %941 = vmatprep.subr.bf16.mxu0 0
        %942 = vmatpush1.bf16.xpose.msra.mxu0 0
        %943 = vmatprep.subr.bf16.mxu0 0
        %944 = vmatpush1.bf16.xpose.msra.mxu0 0
        %945 = vmatprep.subr.bf16.mxu0 0
        %946 = vmatpush1.bf16.xpose.msra.mxu0 0
        %947 = vmatprep.subr.bf16.mxu0 0
        %948 = vmatpush1.bf16.xpose.msra.mxu0 0
        %949 = vmatprep.subr.bf16.mxu0 0
        %950 = vmatpush1.bf16.xpose.msra.mxu0 0
        %951 = vmatprep.subr.bf16.mxu0 0
        %952 = vmatpush1.bf16.xpose.msra.mxu0 0
        %953 = vmatprep.subr.bf16.mxu0 0
        %954 = vmatpush1.bf16.xpose.msra.mxu0 0
        %955 = vmatprep.subr.bf16.mxu0 0
        %956 = vmatpush1.bf16.xpose.msra.mxu0 0
        %957 = vmatprep.subr.bf16.mxu0 0
        %958 = vmatpush1.bf16.xpose.msra.mxu0 0
        %959 = vmatprep.subr.bf16.mxu0 0
        %960 = vmatpush1.bf16.xpose.msra.mxu0 0
        %961 = vmatprep.subr.bf16.mxu0 0
        %962 = vmatpush1.bf16.xpose.msra.mxu0 0
        %963 = vmatprep.subr.bf16.mxu0 0
        %964 = vmatpush1.bf16.xpose.msra.mxu0 0
        %965 = vmatprep.subr.bf16.mxu0 0
        %966 = vmatpush1.bf16.xpose.msra.mxu0 0
        %967 = vmatprep.subr.bf16.mxu0 0
        %968 = vmatpush1.bf16.xpose.msra.mxu0 0
        %969 = vmatprep.subr.bf16.mxu0 0
        %970 = vmatpush1.bf16.xpose.msra.mxu0 0
        %971 = vmatprep.mubr.bf16.mxu0 0
        %972 = vmatmul.mubr.bf16.gmra.mrb[0].mxu0 %v934
        %v973 = vpop.f32.mrb[0].mxu0
        %v974 = vadd.f32 0.0, %v973
        %v975 = vpop.f32.mrb[0].mxu0
        %v976 = vpop.f32.mrb[0].mxu0
        %v977 = vpop.f32.mrb[0].mxu0
        %978 = vdwg.mxu0
        %v980 = vsel %vm702, %v684, 0
        %v983 = vsel %vm702, %v692, 0
        %985 = vmatprep.subr.bf16.mxu0 0
        %986 = vmatpush1.bf16.xpose.msra.mxu0 %v983
        %987 = vmatprep.subr.bf16.mxu0 0
        %988 = vmatpush1.bf16.xpose.msra.mxu0 0
        %989 = vmatprep.subr.bf16.mxu0 0
        %990 = vmatpush1.bf16.xpose.msra.mxu0 0
        %991 = vmatprep.subr.bf16.mxu0 0
        %992 = vmatpush1.bf16.xpose.msra.mxu0 0
        %993 = vmatprep.subr.bf16.mxu0 0
        %994 = vmatpush1.bf16.xpose.msra.mxu0 0
        %995 = vmatprep.subr.bf16.mxu0 0
        %996 = vmatpush1.bf16.xpose.msra.mxu0 0
        %997 = vmatprep.subr.bf16.mxu0 0
        %998 = vmatpush1.bf16.xpose.msra.mxu0 0
        %999 = vmatprep.subr.bf16.mxu0 0
        %1000 = vmatpush1.bf16.xpose.msra.mxu0 0
        %1001 = vmatprep.subr.bf16.mxu0 0
        %1002 = vmatpush1.bf16.xpose.msra.mxu0 0
        %1003 = vmatprep.subr.bf16.mxu0 0
        %1004 = vmatpush1.bf16.xpose.msra.mxu0 0
        %1005 = vmatprep.subr.bf16.mxu0 0
        %1006 = vmatpush1.bf16.xpose.msra.mxu0 0
        %1007 = vmatprep.subr.bf16.mxu0 0
        %1008 = vmatpush1.bf16.xpose.msra.mxu0 0
        %1009 = vmatprep.subr.bf16.mxu0 0
        %1010 = vmatpush1.bf16.xpose.msra.mxu0 0
        %1011 = vmatprep.subr.bf16.mxu0 0
        %1012 = vmatpush1.bf16.xpose.msra.mxu0 0
        %1013 = vmatprep.subr.bf16.mxu0 0
        %1014 = vmatpush1.bf16.xpose.msra.mxu0 0
        %1015 = vmatprep.subr.bf16.mxu0 0
        %1016 = vmatpush1.bf16.xpose.msra.mxu0 0
        %1017 = vmatprep.mubr.bf16.mxu0 0
        %1018 = vmatmul.mubr.bf16.gmra.mrb[0].mxu0 %v980
        %v1019 = vpop.f32.mrb[0].mxu0
        %v1020 = vadd.f32 0.0, %v1019
        %v1021 = vpop.f32.mrb[0].mxu0
        %v1022 = vpop.f32.mrb[0].mxu0
        %v1023 = vpop.f32.mrb[0].mxu0
        %1024 = vdwg.mxu0
        %v1026 = vsel %vm702, %v685, 0
        %v1029 = vsel %vm702, %v693, 0
        %1031 = vmatprep.subr.bf16.mxu0 0
        %1032 = vmatpush1.bf16.xpose.msra.mxu0 %v1029
        %1033 = vmatprep.subr.bf16.mxu0 0
        %1034 = vmatpush1.bf16.xpose.msra.mxu0 0
        %1035 = vmatprep.subr.bf16.mxu0 0
        %1036 = vmatpush1.bf16.xpose.msra.mxu0 0
        %1037 = vmatprep.subr.bf16.mxu0 0
        %1038 = vmatpush1.bf16.xpose.msra.mxu0 0
        %1039 = vmatprep.subr.bf16.mxu0 0
        %1040 = vmatpush1.bf16.xpose.msra.mxu0 0
        %1041 = vmatprep.subr.bf16.mxu0 0
        %1042 = vmatpush1.bf16.xpose.msra.mxu0 0
        %1043 = vmatprep.subr.bf16.mxu0 0
        %1044 = vmatpush1.bf16.xpose.msra.mxu0 0
        %1045 = vmatprep.subr.bf16.mxu0 0
        %1046 = vmatpush1.bf16.xpose.msra.mxu0 0
        %1047 = vmatprep.subr.bf16.mxu0 0
        %1048 = vmatpush1.bf16.xpose.msra.mxu0 0
        %1049 = vmatprep.subr.bf16.mxu0 0
        %1050 = vmatpush1.bf16.xpose.msra.mxu0 0
        %1051 = vmatprep.subr.bf16.mxu0 0
        %1052 = vmatpush1.bf16.xpose.msra.mxu0 0
        %1053 = vmatprep.subr.bf16.mxu0 0
        %1054 = vmatpush1.bf16.xpose.msra.mxu0 0
        %1055 = vmatprep.subr.bf16.mxu0 0
        %1056 = vmatpush1.bf16.xpose.msra.mxu0 0
        %1057 = vmatprep.subr.bf16.mxu0 0
        %1058 = vmatpush1.bf16.xpose.msra.mxu0 0
        %1059 = vmatprep.subr.bf16.mxu0 0
        %1060 = vmatpush1.bf16.xpose.msra.mxu0 0
        %1061 = vmatprep.subr.bf16.mxu0 0
        %1062 = vmatpush1.bf16.xpose.msra.mxu0 0
        %1063 = vmatprep.mubr.bf16.mxu0 0
        %1064 = vmatmul.mubr.bf16.gmra.mrb[0].mxu0 %v1026
        %v1065 = vpop.f32.mrb[0].mxu0
        %v1066 = vadd.f32 0.0, %v1065
        %v1067 = vpop.f32.mrb[0].mxu0
        %v1068 = vpop.f32.mrb[0].mxu0
        %v1069 = vpop.f32.mrb[0].mxu0
        %1070 = vdwg.mxu0
        %vm1071 = vcmask 64512
        %v1072 = vsel %vm1071, %v744, -inf
        %1073 = vmax.xlane.f32.xlu0 %v1072
        %v1074 = vpop.xlane.xlu0 %1073
        %v1075 = vsel %vm1071, %v790, -inf
        %1076 = vmax.xlane.f32.xlu0 %v1075
        %v1077 = vpop.xlane.xlu0 %1076
        %v1078 = vsel %vm1071, %v836, -inf
        %1079 = vmax.xlane.f32.xlu0 %v1078
        %v1080 = vpop.xlane.xlu0 %1079
        %v1081 = vsel %vm1071, %v882, -inf
        %1082 = vmax.xlane.f32.xlu0 %v1081
        %v1083 = vpop.xlane.xlu0 %1082
        %v1084 = vsel %vm1071, %v928, -inf
        %1085 = vmax.xlane.f32.xlu0 %v1084
        %v1086 = vpop.xlane.xlu0 %1085
        %v1087 = vsel %vm1071, %v974, -inf
        %1088 = vmax.xlane.f32.xlu0 %v1087
        %v1089 = vpop.xlane.xlu0 %1088
        %v1090 = vsel %vm1071, %v1020, -inf
        %1091 = vmax.xlane.f32.xlu0 %v1090
        %v1092 = vpop.xlane.xlu0 %1091
        %v1093 = vsel %vm1071, %v1066, -inf
        %1094 = vmax.xlane.f32.xlu0 %v1093
        %v1095 = vpop.xlane.xlu0 %1094
        %v1096 = vsub.f32 %v744, %v1074
        %v1097 = vsub.f32 %v790, %v1077
        %v1098 = vsub.f32 %v836, %v1080
        %v1099 = vsub.f32 %v882, %v1083
        %v1100 = vsub.f32 %v928, %v1086
        %v1101 = vsub.f32 %v974, %v1089
        %v1102 = vsub.f32 %v1020, %v1092
        %v1103 = vsub.f32 %v1066, %v1095
        %v1104 = vmul.f32 %v1096, 1.442695
        %v1105 = vpow.pop %v1104
        %v1106 = vmul.f32 %v1097, 1.442695
        %v1107 = vpow.pop %v1106
        %v1108 = vmul.f32 %v1098, 1.442695
        %v1109 = vpow.pop %v1108
        %v1110 = vmul.f32 %v1099, 1.442695
        %v1111 = vpow.pop %v1110
        %v1112 = vmul.f32 %v1100, 1.442695
        %v1113 = vpow.pop %v1112
        %v1114 = vmul.f32 %v1101, 1.442695
        %v1115 = vpow.pop %v1114
        %v1116 = vmul.f32 %v1102, 1.442695
        %v1117 = vpow.pop %v1116
        %v1118 = vmul.f32 %v1103, 1.442695
        %v1119 = vpow.pop %v1118
        %v1120 = vsel %vm1071, %v1105, 0.0
        %1121 = vadd.xlane.f32.xlu0 %v1120
        %v1122 = vpop.xlane.xlu0 %1121
        %v1123 = vsel %vm1071, %v1107, 0.0
        %1124 = vadd.xlane.f32.xlu0 %v1123
        %v1125 = vpop.xlane.xlu0 %1124
        %v1126 = vsel %vm1071, %v1109, 0.0
        %1127 = vadd.xlane.f32.xlu0 %v1126
        %v1128 = vpop.xlane.xlu0 %1127
        %v1129 = vsel %vm1071, %v1111, 0.0
        %1130 = vadd.xlane.f32.xlu0 %v1129
        %v1131 = vpop.xlane.xlu0 %1130
        %v1132 = vsel %vm1071, %v1113, 0.0
        %1133 = vadd.xlane.f32.xlu0 %v1132
        %v1134 = vpop.xlane.xlu0 %1133
        %v1135 = vsel %vm1071, %v1115, 0.0
        %1136 = vadd.xlane.f32.xlu0 %v1135
        %v1137 = vpop.xlane.xlu0 %1136
        %v1138 = vsel %vm1071, %v1117, 0.0
        %1139 = vadd.xlane.f32.xlu0 %v1138
        %v1140 = vpop.xlane.xlu0 %1139
        %v1141 = vsel %vm1071, %v1119, 0.0
        %1142 = vadd.xlane.f32.xlu0 %v1141
        %v1143 = vpop.xlane.xlu0 %1142
        %v1144 = vrcp.pop %v1122
        %v1145 = vrcp.pop %v1125
        %v1146 = vrcp.pop %v1128
        %v1147 = vrcp.pop %v1131
        %v1148 = vrcp.pop %v1134
        %v1149 = vrcp.pop %v1137
        %v1150 = vrcp.pop %v1140
        %v1151 = vrcp.pop %v1143
        %v1152 = vmul.f32 %v1105, %v1144
        %v1153 = vmul.f32 %v1107, %v1145
        %v1154 = vmul.f32 %v1109, %v1146
        %v1155 = vmul.f32 %v1111, %v1147
        %v1156 = vmul.f32 %v1113, %v1148
        %v1157 = vmul.f32 %v1115, %v1149
        %v1158 = vmul.f32 %v1117, %v1150
        %v1159 = vmul.f32 %v1119, %v1151
        %v1160 = vpack.c.bf16 %v1152, %v1152
        %v1161 = vpack.c.bf16 %v1153, %v1153
        %v1162 = vpack.c.bf16 %v1154, %v1154
        %v1163 = vpack.c.bf16 %v1155, %v1155
        %v1164 = vpack.c.bf16 %v1156, %v1156
        %v1165 = vpack.c.bf16 %v1157, %v1157
        %v1166 = vpack.c.bf16 %v1158, %v1158
        %v1167 = vpack.c.bf16 %v1159, %v1159
        %v1169 = vsel %vm1071, %v1160, 0
        %vm1171 = vcmask 1043456
        %v1173 = vsel %vm1171, %v694, 0
        %1175 = vmatprep.subr.bf16.mxu0 0
        %1176 = vmatpush1.bf16.msra.mxu0 %v1173
        %1177 = vmatprep.subr.bf16.mxu0 0
        %1178 = vmatpush1.bf16.msra.mxu0 0
        %1179 = vmatprep.subr.bf16.mxu0 0
        %1180 = vmatpush1.bf16.msra.mxu0 0
        %1181 = vmatprep.subr.bf16.mxu0 0
        %1182 = vmatpush1.bf16.msra.mxu0 0
        %1183 = vmatprep.subr.bf16.mxu0 0
        %1184 = vmatpush1.bf16.msra.mxu0 0
        %1185 = vmatprep.subr.bf16.mxu0 0
        %1186 = vmatpush1.bf16.msra.mxu0 0
        %1187 = vmatprep.subr.bf16.mxu0 0
        %1188 = vmatpush1.bf16.msra.mxu0 0
        %1189 = vmatprep.subr.bf16.mxu0 0
        %1190 = vmatpush1.bf16.msra.mxu0 0
        %1191 = vmatprep.subr.bf16.mxu0 0
        %1192 = vmatpush1.bf16.msra.mxu0 0
        %1193 = vmatprep.subr.bf16.mxu0 0
        %1194 = vmatpush1.bf16.msra.mxu0 0
        %1195 = vmatprep.subr.bf16.mxu0 0
        %1196 = vmatpush1.bf16.msra.mxu0 0
        %1197 = vmatprep.subr.bf16.mxu0 0
        %1198 = vmatpush1.bf16.msra.mxu0 0
        %1199 = vmatprep.subr.bf16.mxu0 0
        %1200 = vmatpush1.bf16.msra.mxu0 0
        %1201 = vmatprep.subr.bf16.mxu0 0
        %1202 = vmatpush1.bf16.msra.mxu0 0
        %1203 = vmatprep.subr.bf16.mxu0 0
        %1204 = vmatpush1.bf16.msra.mxu0 0
        %1205 = vmatprep.subr.bf16.mxu0 0
        %1206 = vmatpush1.bf16.msra.mxu0 0
        %1207 = vmatprep.mubr.bf16.mxu0 0
        %1208 = vmatmul.mubr.bf16.gmra.mrb[0].mxu0 %v1169
        %v1209 = vpop.f32.mrb[0].mxu0
        %v1210 = vadd.f32 0.0, %v1209
        %v1211 = vpop.f32.mrb[0].mxu0
        %v1212 = vpop.f32.mrb[0].mxu0
        %v1213 = vpop.f32.mrb[0].mxu0
        %1214 = vdwg.mxu0
        %v1216 = vsel %vm1071, %v1161, 0
        %v1219 = vsel %vm1171, %v695, 0
        %1221 = vmatprep.subr.bf16.mxu0 0
        %1222 = vmatpush1.bf16.msra.mxu0 %v1219
        %1223 = vmatprep.subr.bf16.mxu0 0
        %1224 = vmatpush1.bf16.msra.mxu0 0
        %1225 = vmatprep.subr.bf16.mxu0 0
        %1226 = vmatpush1.bf16.msra.mxu0 0
        %1227 = vmatprep.subr.bf16.mxu0 0
        %1228 = vmatpush1.bf16.msra.mxu0 0
        %1229 = vmatprep.subr.bf16.mxu0 0
        %1230 = vmatpush1.bf16.msra.mxu0 0
        %1231 = vmatprep.subr.bf16.mxu0 0
        %1232 = vmatpush1.bf16.msra.mxu0 0
        %1233 = vmatprep.subr.bf16.mxu0 0
        %1234 = vmatpush1.bf16.msra.mxu0 0
        %1235 = vmatprep.subr.bf16.mxu0 0
        %1236 = vmatpush1.bf16.msra.mxu0 0
        %1237 = vmatprep.subr.bf16.mxu0 0
        %1238 = vmatpush1.bf16.msra.mxu0 0
        %1239 = vmatprep.subr.bf16.mxu0 0
        %1240 = vmatpush1.bf16.msra.mxu0 0
        %1241 = vmatprep.subr.bf16.mxu0 0
        %1242 = vmatpush1.bf16.msra.mxu0 0
        %1243 = vmatprep.subr.bf16.mxu0 0
        %1244 = vmatpush1.bf16.msra.mxu0 0
        %1245 = vmatprep.subr.bf16.mxu0 0
        %1246 = vmatpush1.bf16.msra.mxu0 0
        %1247 = vmatprep.subr.bf16.mxu0 0
        %1248 = vmatpush1.bf16.msra.mxu0 0
        %1249 = vmatprep.subr.bf16.mxu0 0
        %1250 = vmatpush1.bf16.msra.mxu0 0
        %1251 = vmatprep.subr.bf16.mxu0 0
        %1252 = vmatpush1.bf16.msra.mxu0 0
        %1253 = vmatprep.mubr.bf16.mxu0 0
        %1254 = vmatmul.mubr.bf16.gmra.mrb[0].mxu0 %v1216
        %v1255 = vpop.f32.mrb[0].mxu0
        %v1256 = vadd.f32 0.0, %v1255
        %v1257 = vpop.f32.mrb[0].mxu0
        %v1258 = vpop.f32.mrb[0].mxu0
        %v1259 = vpop.f32.mrb[0].mxu0
        %1260 = vdwg.mxu0
        %v1262 = vsel %vm1071, %v1162, 0
        %v1265 = vsel %vm1171, %v696, 0
        %1267 = vmatprep.subr.bf16.mxu0 0
        %1268 = vmatpush1.bf16.msra.mxu0 %v1265
        %1269 = vmatprep.subr.bf16.mxu0 0
        %1270 = vmatpush1.bf16.msra.mxu0 0
        %1271 = vmatprep.subr.bf16.mxu0 0
        %1272 = vmatpush1.bf16.msra.mxu0 0
        %1273 = vmatprep.subr.bf16.mxu0 0
        %1274 = vmatpush1.bf16.msra.mxu0 0
        %1275 = vmatprep.subr.bf16.mxu0 0
        %1276 = vmatpush1.bf16.msra.mxu0 0
        %1277 = vmatprep.subr.bf16.mxu0 0
        %1278 = vmatpush1.bf16.msra.mxu0 0
        %1279 = vmatprep.subr.bf16.mxu0 0
        %1280 = vmatpush1.bf16.msra.mxu0 0
        %1281 = vmatprep.subr.bf16.mxu0 0
        %1282 = vmatpush1.bf16.msra.mxu0 0
        %1283 = vmatprep.subr.bf16.mxu0 0
        %1284 = vmatpush1.bf16.msra.mxu0 0
        %1285 = vmatprep.subr.bf16.mxu0 0
        %1286 = vmatpush1.bf16.msra.mxu0 0
        %1287 = vmatprep.subr.bf16.mxu0 0
        %1288 = vmatpush1.bf16.msra.mxu0 0
        %1289 = vmatprep.subr.bf16.mxu0 0
        %1290 = vmatpush1.bf16.msra.mxu0 0
        %1291 = vmatprep.subr.bf16.mxu0 0
        %1292 = vmatpush1.bf16.msra.mxu0 0
        %1293 = vmatprep.subr.bf16.mxu0 0
        %1294 = vmatpush1.bf16.msra.mxu0 0
        %1295 = vmatprep.subr.bf16.mxu0 0
        %1296 = vmatpush1.bf16.msra.mxu0 0
        %1297 = vmatprep.subr.bf16.mxu0 0
        %1298 = vmatpush1.bf16.msra.mxu0 0
        %1299 = vmatprep.mubr.bf16.mxu0 0
        %1300 = vmatmul.mubr.bf16.gmra.mrb[0].mxu0 %v1262
        %v1301 = vpop.f32.mrb[0].mxu0
        %v1302 = vadd.f32 0.0, %v1301
        %v1303 = vpop.f32.mrb[0].mxu0
        %v1304 = vpop.f32.mrb[0].mxu0
        %v1305 = vpop.f32.mrb[0].mxu0
        %1306 = vdwg.mxu0
        %v1308 = vsel %vm1071, %v1163, 0
        %v1311 = vsel %vm1171, %v697, 0
        %1313 = vmatprep.subr.bf16.mxu0 0
        %1314 = vmatpush1.bf16.msra.mxu0 %v1311
        %1315 = vmatprep.subr.bf16.mxu0 0
        %1316 = vmatpush1.bf16.msra.mxu0 0
        %1317 = vmatprep.subr.bf16.mxu0 0
        %1318 = vmatpush1.bf16.msra.mxu0 0
        %1319 = vmatprep.subr.bf16.mxu0 0
        %1320 = vmatpush1.bf16.msra.mxu0 0
        %1321 = vmatprep.subr.bf16.mxu0 0
        %1322 = vmatpush1.bf16.msra.mxu0 0
        %1323 = vmatprep.subr.bf16.mxu0 0
        %1324 = vmatpush1.bf16.msra.mxu0 0
        %1325 = vmatprep.subr.bf16.mxu0 0
        %1326 = vmatpush1.bf16.msra.mxu0 0
        %1327 = vmatprep.subr.bf16.mxu0 0
        %1328 = vmatpush1.bf16.msra.mxu0 0
        %1329 = vmatprep.subr.bf16.mxu0 0
        %1330 = vmatpush1.bf16.msra.mxu0 0
        %1331 = vmatprep.subr.bf16.mxu0 0
        %1332 = vmatpush1.bf16.msra.mxu0 0
        %1333 = vmatprep.subr.bf16.mxu0 0
        %1334 = vmatpush1.bf16.msra.mxu0 0
        %1335 = vmatprep.subr.bf16.mxu0 0
        %1336 = vmatpush1.bf16.msra.mxu0 0
        %1337 = vmatprep.subr.bf16.mxu0 0
        %1338 = vmatpush1.bf16.msra.mxu0 0
        %1339 = vmatprep.subr.bf16.mxu0 0
        %1340 = vmatpush1.bf16.msra.mxu0 0
        %1341 = vmatprep.subr.bf16.mxu0 0
        %1342 = vmatpush1.bf16.msra.mxu0 0
        %1343 = vmatprep.subr.bf16.mxu0 0
        %1344 = vmatpush1.bf16.msra.mxu0 0
        %1345 = vmatprep.mubr.bf16.mxu0 0
        %1346 = vmatmul.mubr.bf16.gmra.mrb[0].mxu0 %v1308
        %v1347 = vpop.f32.mrb[0].mxu0
        %v1348 = vadd.f32 0.0, %v1347
        %v1349 = vpop.f32.mrb[0].mxu0
        %v1350 = vpop.f32.mrb[0].mxu0
        %v1351 = vpop.f32.mrb[0].mxu0
        %1352 = vdwg.mxu0
        %v1354 = vsel %vm1071, %v1164, 0
        %v1357 = vsel %vm1171, %v698, 0
        %1359 = vmatprep.subr.bf16.mxu0 0
        %1360 = vmatpush1.bf16.msra.mxu0 %v1357
        %1361 = vmatprep.subr.bf16.mxu0 0
        %1362 = vmatpush1.bf16.msra.mxu0 0
        %1363 = vmatprep.subr.bf16.mxu0 0
        %1364 = vmatpush1.bf16.msra.mxu0 0
        %1365 = vmatprep.subr.bf16.mxu0 0
        %1366 = vmatpush1.bf16.msra.mxu0 0
        %1367 = vmatprep.subr.bf16.mxu0 0
        %1368 = vmatpush1.bf16.msra.mxu0 0
        %1369 = vmatprep.subr.bf16.mxu0 0
        %1370 = vmatpush1.bf16.msra.mxu0 0
        %1371 = vmatprep.subr.bf16.mxu0 0
        %1372 = vmatpush1.bf16.msra.mxu0 0
        %1373 = vmatprep.subr.bf16.mxu0 0
        %1374 = vmatpush1.bf16.msra.mxu0 0
        %1375 = vmatprep.subr.bf16.mxu0 0
        %1376 = vmatpush1.bf16.msra.mxu0 0
        %1377 = vmatprep.subr.bf16.mxu0 0
        %1378 = vmatpush1.bf16.msra.mxu0 0
        %1379 = vmatprep.subr.bf16.mxu0 0
        %1380 = vmatpush1.bf16.msra.mxu0 0
        %1381 = vmatprep.subr.bf16.mxu0 0
        %1382 = vmatpush1.bf16.msra.mxu0 0
        %1383 = vmatprep.subr.bf16.mxu0 0
        %1384 = vmatpush1.bf16.msra.mxu0 0
        %1385 = vmatprep.subr.bf16.mxu0 0
        %1386 = vmatpush1.bf16.msra.mxu0 0
        %1387 = vmatprep.subr.bf16.mxu0 0
        %1388 = vmatpush1.bf16.msra.mxu0 0
        %1389 = vmatprep.subr.bf16.mxu0 0
        %1390 = vmatpush1.bf16.msra.mxu0 0
        %1391 = vmatprep.mubr.bf16.mxu0 0
        %1392 = vmatmul.mubr.bf16.gmra.mrb[0].mxu0 %v1354
        %v1393 = vpop.f32.mrb[0].mxu0
        %v1394 = vadd.f32 0.0, %v1393
        %v1395 = vpop.f32.mrb[0].mxu0
        %v1396 = vpop.f32.mrb[0].mxu0
        %v1397 = vpop.f32.mrb[0].mxu0
        %1398 = vdwg.mxu0
        %v1400 = vsel %vm1071, %v1165, 0
        %v1403 = vsel %vm1171, %v699, 0
        %1405 = vmatprep.subr.bf16.mxu0 0
        %1406 = vmatpush1.bf16.msra.mxu0 %v1403
        %1407 = vmatprep.subr.bf16.mxu0 0
        %1408 = vmatpush1.bf16.msra.mxu0 0
        %1409 = vmatprep.subr.bf16.mxu0 0
        %1410 = vmatpush1.bf16.msra.mxu0 0
        %1411 = vmatprep.subr.bf16.mxu0 0
        %1412 = vmatpush1.bf16.msra.mxu0 0
        %1413 = vmatprep.subr.bf16.mxu0 0
        %1414 = vmatpush1.bf16.msra.mxu0 0
        %1415 = vmatprep.subr.bf16.mxu0 0
        %1416 = vmatpush1.bf16.msra.mxu0 0
        %1417 = vmatprep.subr.bf16.mxu0 0
        %1418 = vmatpush1.bf16.msra.mxu0 0
        %1419 = vmatprep.subr.bf16.mxu0 0
        %1420 = vmatpush1.bf16.msra.mxu0 0
        %1421 = vmatprep.subr.bf16.mxu0 0
        %1422 = vmatpush1.bf16.msra.mxu0 0
        %1423 = vmatprep.subr.bf16.mxu0 0
        %1424 = vmatpush1.bf16.msra.mxu0 0
        %1425 = vmatprep.subr.bf16.mxu0 0
        %1426 = vmatpush1.bf16.msra.mxu0 0
        %1427 = vmatprep.subr.bf16.mxu0 0
        %1428 = vmatpush1.bf16.msra.mxu0 0
        %1429 = vmatprep.subr.bf16.mxu0 0
        %1430 = vmatpush1.bf16.msra.mxu0 0
        %1431 = vmatprep.subr.bf16.mxu0 0
        %1432 = vmatpush1.bf16.msra.mxu0 0
        %1433 = vmatprep.subr.bf16.mxu0 0
        %1434 = vmatpush1.bf16.msra.mxu0 0
        %1435 = vmatprep.subr.bf16.mxu0 0
        %1436 = vmatpush1.bf16.msra.mxu0 0
        %1437 = vmatprep.mubr.bf16.mxu0 0
        %1438 = vmatmul.mubr.bf16.gmra.mrb[0].mxu0 %v1400
        %v1439 = vpop.f32.mrb[0].mxu0
        %v1440 = vadd.f32 0.0, %v1439
        %v1441 = vpop.f32.mrb[0].mxu0
        %v1442 = vpop.f32.mrb[0].mxu0
        %v1443 = vpop.f32.mrb[0].mxu0
        %1444 = vdwg.mxu0
        %v1446 = vsel %vm1071, %v1166, 0
        %v1449 = vsel %vm1171, %v700, 0
        %1451 = vmatprep.subr.bf16.mxu0 0
        %1452 = vmatpush1.bf16.msra.mxu0 %v1449
        %1453 = vmatprep.subr.bf16.mxu0 0
        %1454 = vmatpush1.bf16.msra.mxu0 0
        %1455 = vmatprep.subr.bf16.mxu0 0
        %1456 = vmatpush1.bf16.msra.mxu0 0
        %1457 = vmatprep.subr.bf16.mxu0 0
        %1458 = vmatpush1.bf16.msra.mxu0 0
        %1459 = vmatprep.subr.bf16.mxu0 0
        %1460 = vmatpush1.bf16.msra.mxu0 0
        %1461 = vmatprep.subr.bf16.mxu0 0
        %1462 = vmatpush1.bf16.msra.mxu0 0
        %1463 = vmatprep.subr.bf16.mxu0 0
        %1464 = vmatpush1.bf16.msra.mxu0 0
        %1465 = vmatprep.subr.bf16.mxu0 0
        %1466 = vmatpush1.bf16.msra.mxu0 0
        %1467 = vmatprep.subr.bf16.mxu0 0
        %1468 = vmatpush1.bf16.msra.mxu0 0
        %1469 = vmatprep.subr.bf16.mxu0 0
        %1470 = vmatpush1.bf16.msra.mxu0 0
        %1471 = vmatprep.subr.bf16.mxu0 0
        %1472 = vmatpush1.bf16.msra.mxu0 0
        %1473 = vmatprep.subr.bf16.mxu0 0
        %1474 = vmatpush1.bf16.msra.mxu0 0
        %1475 = vmatprep.subr.bf16.mxu0 0
        %1476 = vmatpush1.bf16.msra.mxu0 0
        %1477 = vmatprep.subr.bf16.mxu0 0
        %1478 = vmatpush1.bf16.msra.mxu0 0
        %1479 = vmatprep.subr.bf16.mxu0 0
        %1480 = vmatpush1.bf16.msra.mxu0 0
        %1481 = vmatprep.subr.bf16.mxu0 0
        %1482 = vmatpush1.bf16.msra.mxu0 0
        %1483 = vmatprep.mubr.bf16.mxu0 0
        %1484 = vmatmul.mubr.bf16.gmra.mrb[0].mxu0 %v1446
        %v1485 = vpop.f32.mrb[0].mxu0
        %v1486 = vadd.f32 0.0, %v1485
        %v1487 = vpop.f32.mrb[0].mxu0
        %v1488 = vpop.f32.mrb[0].mxu0
        %v1489 = vpop.f32.mrb[0].mxu0
        %1490 = vdwg.mxu0
        %v1492 = vsel %vm1071, %v1167, 0
        %v1495 = vsel %vm1171, %v701, 0
        %1497 = vmatprep.subr.bf16.mxu0 0
        %1498 = vmatpush1.bf16.msra.mxu0 %v1495
        %1499 = vmatprep.subr.bf16.mxu0 0
        %1500 = vmatpush1.bf16.msra.mxu0 0
        %1501 = vmatprep.subr.bf16.mxu0 0
        %1502 = vmatpush1.bf16.msra.mxu0 0
        %1503 = vmatprep.subr.bf16.mxu0 0
        %1504 = vmatpush1.bf16.msra.mxu0 0
        %1505 = vmatprep.subr.bf16.mxu0 0
        %1506 = vmatpush1.bf16.msra.mxu0 0
        %1507 = vmatprep.subr.bf16.mxu0 0
        %1508 = vmatpush1.bf16.msra.mxu0 0
        %1509 = vmatprep.subr.bf16.mxu0 0
        %1510 = vmatpush1.bf16.msra.mxu0 0
        %1511 = vmatprep.subr.bf16.mxu0 0
        %1512 = vmatpush1.bf16.msra.mxu0 0
        %1513 = vmatprep.subr.bf16.mxu0 0
        %1514 = vmatpush1.bf16.msra.mxu0 0
        %1515 = vmatprep.subr.bf16.mxu0 0
        %1516 = vmatpush1.bf16.msra.mxu0 0
        %1517 = vmatprep.subr.bf16.mxu0 0
        %1518 = vmatpush1.bf16.msra.mxu0 0
        %1519 = vmatprep.subr.bf16.mxu0 0
        %1520 = vmatpush1.bf16.msra.mxu0 0
        %1521 = vmatprep.subr.bf16.mxu0 0
        %1522 = vmatpush1.bf16.msra.mxu0 0
        %1523 = vmatprep.subr.bf16.mxu0 0
        %1524 = vmatpush1.bf16.msra.mxu0 0
        %1525 = vmatprep.subr.bf16.mxu0 0
        %1526 = vmatpush1.bf16.msra.mxu0 0
        %1527 = vmatprep.subr.bf16.mxu0 0
        %1528 = vmatpush1.bf16.msra.mxu0 0
        %1529 = vmatprep.mubr.bf16.mxu0 0
        %1530 = vmatmul.mubr.bf16.gmra.mrb[0].mxu0 %v1492
        %v1531 = vpop.f32.mrb[0].mxu0
        %v1532 = vadd.f32 0.0, %v1531
        %v1533 = vpop.f32.mrb[0].mxu0
        %v1534 = vpop.f32.mrb[0].mxu0
        %v1535 = vpop.f32.mrb[0].mxu0
        %1536 = vdwg.mxu0
        %v1537 = vpack.c.bf16 %v1256, %v1210
        %v1538 = vpack.c.bf16 %v1348, %v1302
        %v1539 = vpack.c.bf16 %v1440, %v1394
        %v1540 = vpack.c.bf16 %v1532, %v1486
        %1541 = vst.msk [vmem:[#allocation3] sm:$0xff] %vm702, %v1537
        %1542 = vst.msk [vmem:[#allocation3 + $0x8] sm:$0xff] %vm702, %v1538
        %1543 = vst.msk [vmem:[#allocation3 + $0x10] sm:$0xff] %vm702, %v1539
        %1544 = vst.msk [vmem:[#allocation3 + $0x18] sm:$0xff] %vm702, %v1540
        %v1545 = vld [vmem:[#allocation2] sm:$0xf]
        %v1546 = vld [vmem:[#allocation2 + $0xc] sm:$0xf]
        %v1547 = vld [vmem:[#allocation2 + $0x18] sm:$0xf]
        %v1548 = vld [vmem:[#allocation2 + $0x24] sm:$0xf]
        %v1549 = vld [vmem:[#allocation2 + $0x30] sm:$0xf]
        %v1550 = vld [vmem:[#allocation2 + $0x3c] sm:$0xf]
        %v1551 = vld [vmem:[#allocation2 + $0x48] sm:$0xf]
        %v1552 = vld [vmem:[#allocation2 + $0x54] sm:$0xf]
        %v1553 = vld [vmem:[#allocation2 + $0x4] sm:$0xf]
        %v1554 = vld [vmem:[#allocation2 + $0x10] sm:$0xf]
        %v1555 = vld [vmem:[#allocation2 + $0x1c] sm:$0xf]
        %v1556 = vld [vmem:[#allocation2 + $0x28] sm:$0xf]
        %v1557 = vld [vmem:[#allocation2 + $0x34] sm:$0xf]
        %v1558 = vld [vmem:[#allocation2 + $0x40] sm:$0xf]
        %v1559 = vld [vmem:[#allocation2 + $0x4c] sm:$0xf]
        %v1560 = vld [vmem:[#allocation2 + $0x58] sm:$0xf]
        %v1561 = vld [vmem:[#allocation2 + $0x8] sm:$0xf]
        %v1562 = vld [vmem:[#allocation2 + $0x14] sm:$0xf]
        %v1563 = vld [vmem:[#allocation2 + $0x20] sm:$0xf]
        %v1564 = vld [vmem:[#allocation2 + $0x2c] sm:$0xf]
        %v1565 = vld [vmem:[#allocation2 + $0x38] sm:$0xf]
        %v1566 = vld [vmem:[#allocation2 + $0x44] sm:$0xf]
        %v1567 = vld [vmem:[#allocation2 + $0x50] sm:$0xf]
        %v1568 = vld [vmem:[#allocation2 + $0x5c] sm:$0xf]
        %v1570 = vunpack.c.l.b16 %v1545
        %v1571 = vpack.c.b16 %v1570, %v1570
        %1572 = vrot.lane.b32.xlu0 %v1571, 112
        %v1573 = vpop.permute.xlu0 %1572
        %v1575 = vunpack.c.l.b16 %v1553
        %v1576 = vpack.c.b16 %v1575, %v1575
        %1577 = vrot.lane.b32.xlu0 %v1576, 112
        %v1578 = vpop.permute.xlu0 %1577
        %v1580 = vsel %vm702, %v1573, 0
        %v1583 = vsel %vm702, %v1578, 0
        %1585 = vmatprep.subr.bf16.mxu0 0
        %1586 = vmatpush1.bf16.xpose.msra.mxu0 %v1583
        %1587 = vmatprep.subr.bf16.mxu0 0
        %1588 = vmatpush1.bf16.xpose.msra.mxu0 0
        %1589 = vmatprep.subr.bf16.mxu0 0
        %1590 = vmatpush1.bf16.xpose.msra.mxu0 0
        %1591 = vmatprep.subr.bf16.mxu0 0
        %1592 = vmatpush1.bf16.xpose.msra.mxu0 0
        %1593 = vmatprep.subr.bf16.mxu0 0
        %1594 = vmatpush1.bf16.xpose.msra.mxu0 0
        %1595 = vmatprep.subr.bf16.mxu0 0
        %1596 = vmatpush1.bf16.xpose.msra.mxu0 0
        %1597 = vmatprep.subr.bf16.mxu0 0
        %1598 = vmatpush1.bf16.xpose.msra.mxu0 0
        %1599 = vmatprep.subr.bf16.mxu0 0
        %1600 = vmatpush1.bf16.xpose.msra.mxu0 0
        %1601 = vmatprep.subr.bf16.mxu0 0
        %1602 = vmatpush1.bf16.xpose.msra.mxu0 0
        %1603 = vmatprep.subr.bf16.mxu0 0
        %1604 = vmatpush1.bf16.xpose.msra.mxu0 0
        %1605 = vmatprep.subr.bf16.mxu0 0
        %1606 = vmatpush1.bf16.xpose.msra.mxu0 0
        %1607 = vmatprep.subr.bf16.mxu0 0
        %1608 = vmatpush1.bf16.xpose.msra.mxu0 0
        %1609 = vmatprep.subr.bf16.mxu0 0
        %1610 = vmatpush1.bf16.xpose.msra.mxu0 0
        %1611 = vmatprep.subr.bf16.mxu0 0
        %1612 = vmatpush1.bf16.xpose.msra.mxu0 0
        %1613 = vmatprep.subr.bf16.mxu0 0
        %1614 = vmatpush1.bf16.xpose.msra.mxu0 0
        %1615 = vmatprep.subr.bf16.mxu0 0
        %1616 = vmatpush1.bf16.xpose.msra.mxu0 0
        %1617 = vmatprep.mubr.bf16.mxu0 0
        %1618 = vmatmul.mubr.bf16.gmra.mrb[0].mxu0 %v1580
        %v1619 = vpop.f32.mrb[0].mxu0
        %v1620 = vadd.f32 0.0, %v1619
        %v1621 = vpop.f32.mrb[0].mxu0
        %v1622 = vpop.f32.mrb[0].mxu0
        %v1623 = vpop.f32.mrb[0].mxu0
        %1624 = vdwg.mxu0
        %v1626 = vunpack.c.l.b16 %v1546
        %v1627 = vpack.c.b16 %v1626, %v1626
        %1628 = vrot.lane.b32.xlu0 %v1627, 112
        %v1629 = vpop.permute.xlu0 %1628
        %v1631 = vunpack.c.l.b16 %v1554
        %v1632 = vpack.c.b16 %v1631, %v1631
        %1633 = vrot.lane.b32.xlu0 %v1632, 112
        %v1634 = vpop.permute.xlu0 %1633
        %v1636 = vsel %vm702, %v1629, 0
        %v1639 = vsel %vm702, %v1634, 0
        %1641 = vmatprep.subr.bf16.mxu0 0
        %1642 = vmatpush1.bf16.xpose.msra.mxu0 %v1639
        %1643 = vmatprep.subr.bf16.mxu0 0
        %1644 = vmatpush1.bf16.xpose.msra.mxu0 0
        %1645 = vmatprep.subr.bf16.mxu0 0
        %1646 = vmatpush1.bf16.xpose.msra.mxu0 0
        %1647 = vmatprep.subr.bf16.mxu0 0
        %1648 = vmatpush1.bf16.xpose.msra.mxu0 0
        %1649 = vmatprep.subr.bf16.mxu0 0
        %1650 = vmatpush1.bf16.xpose.msra.mxu0 0
        %1651 = vmatprep.subr.bf16.mxu0 0
        %1652 = vmatpush1.bf16.xpose.msra.mxu0 0
        %1653 = vmatprep.subr.bf16.mxu0 0
        %1654 = vmatpush1.bf16.xpose.msra.mxu0 0
        %1655 = vmatprep.subr.bf16.mxu0 0
        %1656 = vmatpush1.bf16.xpose.msra.mxu0 0
        %1657 = vmatprep.subr.bf16.mxu0 0
        %1658 = vmatpush1.bf16.xpose.msra.mxu0 0
        %1659 = vmatprep.subr.bf16.mxu0 0
        %1660 = vmatpush1.bf16.xpose.msra.mxu0 0
        %1661 = vmatprep.subr.bf16.mxu0 0
        %1662 = vmatpush1.bf16.xpose.msra.mxu0 0
        %1663 = vmatprep.subr.bf16.mxu0 0
        %1664 = vmatpush1.bf16.xpose.msra.mxu0 0
        %1665 = vmatprep.subr.bf16.mxu0 0
        %1666 = vmatpush1.bf16.xpose.msra.mxu0 0
        %1667 = vmatprep.subr.bf16.mxu0 0
        %1668 = vmatpush1.bf16.xpose.msra.mxu0 0
        %1669 = vmatprep.subr.bf16.mxu0 0
        %1670 = vmatpush1.bf16.xpose.msra.mxu0 0
        %1671 = vmatprep.subr.bf16.mxu0 0
        %1672 = vmatpush1.bf16.xpose.msra.mxu0 0
        %1673 = vmatprep.mubr.bf16.mxu0 0
        %1674 = vmatmul.mubr.bf16.gmra.mrb[0].mxu0 %v1636
        %v1675 = vpop.f32.mrb[0].mxu0
        %v1676 = vadd.f32 0.0, %v1675
        %v1677 = vpop.f32.mrb[0].mxu0
        %v1678 = vpop.f32.mrb[0].mxu0
        %v1679 = vpop.f32.mrb[0].mxu0
        %1680 = vdwg.mxu0
        %v1682 = vunpack.c.l.b16 %v1547
        %v1683 = vpack.c.b16 %v1682, %v1682
        %1684 = vrot.lane.b32.xlu0 %v1683, 112
        %v1685 = vpop.permute.xlu0 %1684
        %v1687 = vunpack.c.l.b16 %v1555
        %v1688 = vpack.c.b16 %v1687, %v1687
        %1689 = vrot.lane.b32.xlu0 %v1688, 112
        %v1690 = vpop.permute.xlu0 %1689
        %v1692 = vsel %vm702, %v1685, 0
        %v1695 = vsel %vm702, %v1690, 0
        %1697 = vmatprep.subr.bf16.mxu0 0
        %1698 = vmatpush1.bf16.xpose.msra.mxu0 %v1695
        %1699 = vmatprep.subr.bf16.mxu0 0
        %1700 = vmatpush1.bf16.xpose.msra.mxu0 0
        %1701 = vmatprep.subr.bf16.mxu0 0
        %1702 = vmatpush1.bf16.xpose.msra.mxu0 0
        %1703 = vmatprep.subr.bf16.mxu0 0
        %1704 = vmatpush1.bf16.xpose.msra.mxu0 0
        %1705 = vmatprep.subr.bf16.mxu0 0
        %1706 = vmatpush1.bf16.xpose.msra.mxu0 0
        %1707 = vmatprep.subr.bf16.mxu0 0
        %1708 = vmatpush1.bf16.xpose.msra.mxu0 0
        %1709 = vmatprep.subr.bf16.mxu0 0
        %1710 = vmatpush1.bf16.xpose.msra.mxu0 0
        %1711 = vmatprep.subr.bf16.mxu0 0
        %1712 = vmatpush1.bf16.xpose.msra.mxu0 0
        %1713 = vmatprep.subr.bf16.mxu0 0
        %1714 = vmatpush1.bf16.xpose.msra.mxu0 0
        %1715 = vmatprep.subr.bf16.mxu0 0
        %1716 = vmatpush1.bf16.xpose.msra.mxu0 0
        %1717 = vmatprep.subr.bf16.mxu0 0
        %1718 = vmatpush1.bf16.xpose.msra.mxu0 0
        %1719 = vmatprep.subr.bf16.mxu0 0
        %1720 = vmatpush1.bf16.xpose.msra.mxu0 0
        %1721 = vmatprep.subr.bf16.mxu0 0
        %1722 = vmatpush1.bf16.xpose.msra.mxu0 0
        %1723 = vmatprep.subr.bf16.mxu0 0
        %1724 = vmatpush1.bf16.xpose.msra.mxu0 0
        %1725 = vmatprep.subr.bf16.mxu0 0
        %1726 = vmatpush1.bf16.xpose.msra.mxu0 0
        %1727 = vmatprep.subr.bf16.mxu0 0
        %1728 = vmatpush1.bf16.xpose.msra.mxu0 0
        %1729 = vmatprep.mubr.bf16.mxu0 0
        %1730 = vmatmul.mubr.bf16.gmra.mrb[0].mxu0 %v1692
        %v1731 = vpop.f32.mrb[0].mxu0
        %v1732 = vadd.f32 0.0, %v1731
        %v1733 = vpop.f32.mrb[0].mxu0
        %v1734 = vpop.f32.mrb[0].mxu0
        %v1735 = vpop.f32.mrb[0].mxu0
        %1736 = vdwg.mxu0
        %v1738 = vunpack.c.l.b16 %v1548
        %v1739 = vpack.c.b16 %v1738, %v1738
        %1740 = vrot.lane.b32.xlu0 %v1739, 112
        %v1741 = vpop.permute.xlu0 %1740
        %v1743 = vunpack.c.l.b16 %v1556
        %v1744 = vpack.c.b16 %v1743, %v1743
        %1745 = vrot.lane.b32.xlu0 %v1744, 112
        %v1746 = vpop.permute.xlu0 %1745
        %v1748 = vsel %vm702, %v1741, 0
        %v1751 = vsel %vm702, %v1746, 0
        %1753 = vmatprep.subr.bf16.mxu0 0
        %1754 = vmatpush1.bf16.xpose.msra.mxu0 %v1751
        %1755 = vmatprep.subr.bf16.mxu0 0
        %1756 = vmatpush1.bf16.xpose.msra.mxu0 0
        %1757 = vmatprep.subr.bf16.mxu0 0
        %1758 = vmatpush1.bf16.xpose.msra.mxu0 0
        %1759 = vmatprep.subr.bf16.mxu0 0
        %1760 = vmatpush1.bf16.xpose.msra.mxu0 0
        %1761 = vmatprep.subr.bf16.mxu0 0
        %1762 = vmatpush1.bf16.xpose.msra.mxu0 0
        %1763 = vmatprep.subr.bf16.mxu0 0
        %1764 = vmatpush1.bf16.xpose.msra.mxu0 0
        %1765 = vmatprep.subr.bf16.mxu0 0
        %1766 = vmatpush1.bf16.xpose.msra.mxu0 0
        %1767 = vmatprep.subr.bf16.mxu0 0
        %1768 = vmatpush1.bf16.xpose.msra.mxu0 0
        %1769 = vmatprep.subr.bf16.mxu0 0
        %1770 = vmatpush1.bf16.xpose.msra.mxu0 0
        %1771 = vmatprep.subr.bf16.mxu0 0
        %1772 = vmatpush1.bf16.xpose.msra.mxu0 0
        %1773 = vmatprep.subr.bf16.mxu0 0
        %1774 = vmatpush1.bf16.xpose.msra.mxu0 0
        %1775 = vmatprep.subr.bf16.mxu0 0
        %1776 = vmatpush1.bf16.xpose.msra.mxu0 0
        %1777 = vmatprep.subr.bf16.mxu0 0
        %1778 = vmatpush1.bf16.xpose.msra.mxu0 0
        %1779 = vmatprep.subr.bf16.mxu0 0
        %1780 = vmatpush1.bf16.xpose.msra.mxu0 0
        %1781 = vmatprep.subr.bf16.mxu0 0
        %1782 = vmatpush1.bf16.xpose.msra.mxu0 0
        %1783 = vmatprep.subr.bf16.mxu0 0
        %1784 = vmatpush1.bf16.xpose.msra.mxu0 0
        %1785 = vmatprep.mubr.bf16.mxu0 0
        %1786 = vmatmul.mubr.bf16.gmra.mrb[0].mxu0 %v1748
        %v1787 = vpop.f32.mrb[0].mxu0
        %v1788 = vadd.f32 0.0, %v1787
        %v1789 = vpop.f32.mrb[0].mxu0
        %v1790 = vpop.f32.mrb[0].mxu0
        %v1791 = vpop.f32.mrb[0].mxu0
        %1792 = vdwg.mxu0
        %v1794 = vunpack.c.l.b16 %v1549
        %v1795 = vpack.c.b16 %v1794, %v1794
        %1796 = vrot.lane.b32.xlu0 %v1795, 112
        %v1797 = vpop.permute.xlu0 %1796
        %v1799 = vunpack.c.l.b16 %v1557
        %v1800 = vpack.c.b16 %v1799, %v1799
        %1801 = vrot.lane.b32.xlu0 %v1800, 112
        %v1802 = vpop.permute.xlu0 %1801
        %v1804 = vsel %vm702, %v1797, 0
        %v1807 = vsel %vm702, %v1802, 0
        %1809 = vmatprep.subr.bf16.mxu0 0
        %1810 = vmatpush1.bf16.xpose.msra.mxu0 %v1807
        %1811 = vmatprep.subr.bf16.mxu0 0
        %1812 = vmatpush1.bf16.xpose.msra.mxu0 0
        %1813 = vmatprep.subr.bf16.mxu0 0
        %1814 = vmatpush1.bf16.xpose.msra.mxu0 0
        %1815 = vmatprep.subr.bf16.mxu0 0
        %1816 = vmatpush1.bf16.xpose.msra.mxu0 0
        %1817 = vmatprep.subr.bf16.mxu0 0
        %1818 = vmatpush1.bf16.xpose.msra.mxu0 0
        %1819 = vmatprep.subr.bf16.mxu0 0
        %1820 = vmatpush1.bf16.xpose.msra.mxu0 0
        %1821 = vmatprep.subr.bf16.mxu0 0
        %1822 = vmatpush1.bf16.xpose.msra.mxu0 0
        %1823 = vmatprep.subr.bf16.mxu0 0
        %1824 = vmatpush1.bf16.xpose.msra.mxu0 0
        %1825 = vmatprep.subr.bf16.mxu0 0
        %1826 = vmatpush1.bf16.xpose.msra.mxu0 0
        %1827 = vmatprep.subr.bf16.mxu0 0
        %1828 = vmatpush1.bf16.xpose.msra.mxu0 0
        %1829 = vmatprep.subr.bf16.mxu0 0
        %1830 = vmatpush1.bf16.xpose.msra.mxu0 0
        %1831 = vmatprep.subr.bf16.mxu0 0
        %1832 = vmatpush1.bf16.xpose.msra.mxu0 0
        %1833 = vmatprep.subr.bf16.mxu0 0
        %1834 = vmatpush1.bf16.xpose.msra.mxu0 0
        %1835 = vmatprep.subr.bf16.mxu0 0
        %1836 = vmatpush1.bf16.xpose.msra.mxu0 0
        %1837 = vmatprep.subr.bf16.mxu0 0
        %1838 = vmatpush1.bf16.xpose.msra.mxu0 0
        %1839 = vmatprep.subr.bf16.mxu0 0
        %1840 = vmatpush1.bf16.xpose.msra.mxu0 0
        %1841 = vmatprep.mubr.bf16.mxu0 0
        %1842 = vmatmul.mubr.bf16.gmra.mrb[0].mxu0 %v1804
        %v1843 = vpop.f32.mrb[0].mxu0
        %v1844 = vadd.f32 0.0, %v1843
        %v1845 = vpop.f32.mrb[0].mxu0
        %v1846 = vpop.f32.mrb[0].mxu0
        %v1847 = vpop.f32.mrb[0].mxu0
        %1848 = vdwg.mxu0
        %v1850 = vunpack.c.l.b16 %v1550
        %v1851 = vpack.c.b16 %v1850, %v1850
        %1852 = vrot.lane.b32.xlu0 %v1851, 112
        %v1853 = vpop.permute.xlu0 %1852
        %v1855 = vunpack.c.l.b16 %v1558
        %v1856 = vpack.c.b16 %v1855, %v1855
        %1857 = vrot.lane.b32.xlu0 %v1856, 112
        %v1858 = vpop.permute.xlu0 %1857
        %v1860 = vsel %vm702, %v1853, 0
        %v1863 = vsel %vm702, %v1858, 0
        %1865 = vmatprep.subr.bf16.mxu0 0
        %1866 = vmatpush1.bf16.xpose.msra.mxu0 %v1863
        %1867 = vmatprep.subr.bf16.mxu0 0
        %1868 = vmatpush1.bf16.xpose.msra.mxu0 0
        %1869 = vmatprep.subr.bf16.mxu0 0
        %1870 = vmatpush1.bf16.xpose.msra.mxu0 0
        %1871 = vmatprep.subr.bf16.mxu0 0
        %1872 = vmatpush1.bf16.xpose.msra.mxu0 0
        %1873 = vmatprep.subr.bf16.mxu0 0
        %1874 = vmatpush1.bf16.xpose.msra.mxu0 0
        %1875 = vmatprep.subr.bf16.mxu0 0
        %1876 = vmatpush1.bf16.xpose.msra.mxu0 0
        %1877 = vmatprep.subr.bf16.mxu0 0
        %1878 = vmatpush1.bf16.xpose.msra.mxu0 0
        %1879 = vmatprep.subr.bf16.mxu0 0
        %1880 = vmatpush1.bf16.xpose.msra.mxu0 0
        %1881 = vmatprep.subr.bf16.mxu0 0
        %1882 = vmatpush1.bf16.xpose.msra.mxu0 0
        %1883 = vmatprep.subr.bf16.mxu0 0
        %1884 = vmatpush1.bf16.xpose.msra.mxu0 0
        %1885 = vmatprep.subr.bf16.mxu0 0
        %1886 = vmatpush1.bf16.xpose.msra.mxu0 0
        %1887 = vmatprep.subr.bf16.mxu0 0
        %1888 = vmatpush1.bf16.xpose.msra.mxu0 0
        %1889 = vmatprep.subr.bf16.mxu0 0
        %1890 = vmatpush1.bf16.xpose.msra.mxu0 0
        %1891 = vmatprep.subr.bf16.mxu0 0
        %1892 = vmatpush1.bf16.xpose.msra.mxu0 0
        %1893 = vmatprep.subr.bf16.mxu0 0
        %1894 = vmatpush1.bf16.xpose.msra.mxu0 0
        %1895 = vmatprep.subr.bf16.mxu0 0
        %1896 = vmatpush1.bf16.xpose.msra.mxu0 0
        %1897 = vmatprep.mubr.bf16.mxu0 0
        %1898 = vmatmul.mubr.bf16.gmra.mrb[0].mxu0 %v1860
        %v1899 = vpop.f32.mrb[0].mxu0
        %v1900 = vadd.f32 0.0, %v1899
        %v1901 = vpop.f32.mrb[0].mxu0
        %v1902 = vpop.f32.mrb[0].mxu0
        %v1903 = vpop.f32.mrb[0].mxu0
        %1904 = vdwg.mxu0
        %v1906 = vunpack.c.l.b16 %v1551
        %v1907 = vpack.c.b16 %v1906, %v1906
        %1908 = vrot.lane.b32.xlu0 %v1907, 112
        %v1909 = vpop.permute.xlu0 %1908
        %v1911 = vunpack.c.l.b16 %v1559
        %v1912 = vpack.c.b16 %v1911, %v1911
        %1913 = vrot.lane.b32.xlu0 %v1912, 112
        %v1914 = vpop.permute.xlu0 %1913
        %v1916 = vsel %vm702, %v1909, 0
        %v1919 = vsel %vm702, %v1914, 0
        %1921 = vmatprep.subr.bf16.mxu0 0
        %1922 = vmatpush1.bf16.xpose.msra.mxu0 %v1919
        %1923 = vmatprep.subr.bf16.mxu0 0
        %1924 = vmatpush1.bf16.xpose.msra.mxu0 0
        %1925 = vmatprep.subr.bf16.mxu0 0
        %1926 = vmatpush1.bf16.xpose.msra.mxu0 0
        %1927 = vmatprep.subr.bf16.mxu0 0
        %1928 = vmatpush1.bf16.xpose.msra.mxu0 0
        %1929 = vmatprep.subr.bf16.mxu0 0
        %1930 = vmatpush1.bf16.xpose.msra.mxu0 0
        %1931 = vmatprep.subr.bf16.mxu0 0
        %1932 = vmatpush1.bf16.xpose.msra.mxu0 0
        %1933 = vmatprep.subr.bf16.mxu0 0
        %1934 = vmatpush1.bf16.xpose.msra.mxu0 0
        %1935 = vmatprep.subr.bf16.mxu0 0
        %1936 = vmatpush1.bf16.xpose.msra.mxu0 0
        %1937 = vmatprep.subr.bf16.mxu0 0
        %1938 = vmatpush1.bf16.xpose.msra.mxu0 0
        %1939 = vmatprep.subr.bf16.mxu0 0
        %1940 = vmatpush1.bf16.xpose.msra.mxu0 0
        %1941 = vmatprep.subr.bf16.mxu0 0
        %1942 = vmatpush1.bf16.xpose.msra.mxu0 0
        %1943 = vmatprep.subr.bf16.mxu0 0
        %1944 = vmatpush1.bf16.xpose.msra.mxu0 0
        %1945 = vmatprep.subr.bf16.mxu0 0
        %1946 = vmatpush1.bf16.xpose.msra.mxu0 0
        %1947 = vmatprep.subr.bf16.mxu0 0
        %1948 = vmatpush1.bf16.xpose.msra.mxu0 0
        %1949 = vmatprep.subr.bf16.mxu0 0
        %1950 = vmatpush1.bf16.xpose.msra.mxu0 0
        %1951 = vmatprep.subr.bf16.mxu0 0
        %1952 = vmatpush1.bf16.xpose.msra.mxu0 0
        %1953 = vmatprep.mubr.bf16.mxu0 0
        %1954 = vmatmul.mubr.bf16.gmra.mrb[0].mxu0 %v1916
        %v1955 = vpop.f32.mrb[0].mxu0
        %v1956 = vadd.f32 0.0, %v1955
        %v1957 = vpop.f32.mrb[0].mxu0
        %v1958 = vpop.f32.mrb[0].mxu0
        %v1959 = vpop.f32.mrb[0].mxu0
        %1960 = vdwg.mxu0
        %v1962 = vunpack.c.l.b16 %v1552
        %v1963 = vpack.c.b16 %v1962, %v1962
        %1964 = vrot.lane.b32.xlu0 %v1963, 112
        %v1965 = vpop.permute.xlu0 %1964
        %v1967 = vunpack.c.l.b16 %v1560
        %v1968 = vpack.c.b16 %v1967, %v1967
        %1969 = vrot.lane.b32.xlu0 %v1968, 112
        %v1970 = vpop.permute.xlu0 %1969
        %v1972 = vsel %vm702, %v1965, 0
        %v1975 = vsel %vm702, %v1970, 0
        %1977 = vmatprep.subr.bf16.mxu0 0
        %1978 = vmatpush1.bf16.xpose.msra.mxu0 %v1975
        %1979 = vmatprep.subr.bf16.mxu0 0
        %1980 = vmatpush1.bf16.xpose.msra.mxu0 0
        %1981 = vmatprep.subr.bf16.mxu0 0
        %1982 = vmatpush1.bf16.xpose.msra.mxu0 0
        %1983 = vmatprep.subr.bf16.mxu0 0
        %1984 = vmatpush1.bf16.xpose.msra.mxu0 0
        %1985 = vmatprep.subr.bf16.mxu0 0
        %1986 = vmatpush1.bf16.xpose.msra.mxu0 0
        %1987 = vmatprep.subr.bf16.mxu0 0
        %1988 = vmatpush1.bf16.xpose.msra.mxu0 0
        %1989 = vmatprep.subr.bf16.mxu0 0
        %1990 = vmatpush1.bf16.xpose.msra.mxu0 0
        %1991 = vmatprep.subr.bf16.mxu0 0
        %1992 = vmatpush1.bf16.xpose.msra.mxu0 0
        %1993 = vmatprep.subr.bf16.mxu0 0
        %1994 = vmatpush1.bf16.xpose.msra.mxu0 0
        %1995 = vmatprep.subr.bf16.mxu0 0
        %1996 = vmatpush1.bf16.xpose.msra.mxu0 0
        %1997 = vmatprep.subr.bf16.mxu0 0
        %1998 = vmatpush1.bf16.xpose.msra.mxu0 0
        %1999 = vmatprep.subr.bf16.mxu0 0
        %2000 = vmatpush1.bf16.xpose.msra.mxu0 0
        %2001 = vmatprep.subr.bf16.mxu0 0
        %2002 = vmatpush1.bf16.xpose.msra.mxu0 0
        %2003 = vmatprep.subr.bf16.mxu0 0
        %2004 = vmatpush1.bf16.xpose.msra.mxu0 0
        %2005 = vmatprep.subr.bf16.mxu0 0
        %2006 = vmatpush1.bf16.xpose.msra.mxu0 0
        %2007 = vmatprep.subr.bf16.mxu0 0
        %2008 = vmatpush1.bf16.xpose.msra.mxu0 0
        %2009 = vmatprep.mubr.bf16.mxu0 0
        %2010 = vmatmul.mubr.bf16.gmra.mrb[0].mxu0 %v1972
        %v2011 = vpop.f32.mrb[0].mxu0
        %v2012 = vadd.f32 0.0, %v2011
        %v2013 = vpop.f32.mrb[0].mxu0
        %v2014 = vpop.f32.mrb[0].mxu0
        %v2015 = vpop.f32.mrb[0].mxu0
        %2016 = vdwg.mxu0
        %v2017 = vsel %vm1071, %v1620, -inf
        %2018 = vmax.xlane.f32.xlu0 %v2017
        %v2019 = vpop.xlane.xlu0 %2018
        %v2020 = vsel %vm1071, %v1676, -inf
        %2021 = vmax.xlane.f32.xlu0 %v2020
        %v2022 = vpop.xlane.xlu0 %2021
        %v2023 = vsel %vm1071, %v1732, -inf
        %2024 = vmax.xlane.f32.xlu0 %v2023
        %v2025 = vpop.xlane.xlu0 %2024
        %v2026 = vsel %vm1071, %v1788, -inf
        %2027 = vmax.xlane.f32.xlu0 %v2026
        %v2028 = vpop.xlane.xlu0 %2027
        %v2029 = vsel %vm1071, %v1844, -inf
        %2030 = vmax.xlane.f32.xlu0 %v2029
        %v2031 = vpop.xlane.xlu0 %2030
        %v2032 = vsel %vm1071, %v1900, -inf
        %2033 = vmax.xlane.f32.xlu0 %v2032
        %v2034 = vpop.xlane.xlu0 %2033
        %v2035 = vsel %vm1071, %v1956, -inf
        %2036 = vmax.xlane.f32.xlu0 %v2035
        %v2037 = vpop.xlane.xlu0 %2036
        %v2038 = vsel %vm1071, %v2012, -inf
        %2039 = vmax.xlane.f32.xlu0 %v2038
        %v2040 = vpop.xlane.xlu0 %2039
        %v2041 = vsub.f32 %v1620, %v2019
        %v2042 = vsub.f32 %v1676, %v2022
        %v2043 = vsub.f32 %v1732, %v2025
        %v2044 = vsub.f32 %v1788, %v2028
        %v2045 = vsub.f32 %v1844, %v2031
        %v2046 = vsub.f32 %v1900, %v2034
        %v2047 = vsub.f32 %v1956, %v2037
        %v2048 = vsub.f32 %v2012, %v2040
        %v2049 = vmul.f32 %v2041, 1.442695
        %v2050 = vpow.pop %v2049
        %v2051 = vmul.f32 %v2042, 1.442695
        %v2052 = vpow.pop %v2051
        %v2053 = vmul.f32 %v2043, 1.442695
        %v2054 = vpow.pop %v2053
        %v2055 = vmul.f32 %v2044, 1.442695
        %v2056 = vpow.pop %v2055
        %v2057 = vmul.f32 %v2045, 1.442695
        %v2058 = vpow.pop %v2057
        %v2059 = vmul.f32 %v2046, 1.442695
        %v2060 = vpow.pop %v2059
        %v2061 = vmul.f32 %v2047, 1.442695
        %v2062 = vpow.pop %v2061
        %v2063 = vmul.f32 %v2048, 1.442695
        %v2064 = vpow.pop %v2063
        %v2065 = vsel %vm1071, %v2050, 0.0
        %2066 = vadd.xlane.f32.xlu0 %v2065
        %v2067 = vpop.xlane.xlu0 %2066
        %v2068 = vsel %vm1071, %v2052, 0.0
        %2069 = vadd.xlane.f32.xlu0 %v2068
        %v2070 = vpop.xlane.xlu0 %2069
        %v2071 = vsel %vm1071, %v2054, 0.0
        %2072 = vadd.xlane.f32.xlu0 %v2071
        %v2073 = vpop.xlane.xlu0 %2072
        %v2074 = vsel %vm1071, %v2056, 0.0
        %2075 = vadd.xlane.f32.xlu0 %v2074
        %v2076 = vpop.xlane.xlu0 %2075
        %v2077 = vsel %vm1071, %v2058, 0.0
        %2078 = vadd.xlane.f32.xlu0 %v2077
        %v2079 = vpop.xlane.xlu0 %2078
        %v2080 = vsel %vm1071, %v2060, 0.0
        %2081 = vadd.xlane.f32.xlu0 %v2080
        %v2082 = vpop.xlane.xlu0 %2081
        %v2083 = vsel %vm1071, %v2062, 0.0
        %2084 = vadd.xlane.f32.xlu0 %v2083
        %v2085 = vpop.xlane.xlu0 %2084
        %v2086 = vsel %vm1071, %v2064, 0.0
        %2087 = vadd.xlane.f32.xlu0 %v2086
        %v2088 = vpop.xlane.xlu0 %2087
        %v2089 = vrcp.pop %v2067
        %v2090 = vrcp.pop %v2070
        %v2091 = vrcp.pop %v2073
        %v2092 = vrcp.pop %v2076
        %v2093 = vrcp.pop %v2079
        %v2094 = vrcp.pop %v2082
        %v2095 = vrcp.pop %v2085
        %v2096 = vrcp.pop %v2088
        %v2097 = vmul.f32 %v2050, %v2089
        %v2098 = vmul.f32 %v2052, %v2090
        %v2099 = vmul.f32 %v2054, %v2091
        %v2100 = vmul.f32 %v2056, %v2092
        %v2101 = vmul.f32 %v2058, %v2093
        %v2102 = vmul.f32 %v2060, %v2094
        %v2103 = vmul.f32 %v2062, %v2095
        %v2104 = vmul.f32 %v2064, %v2096
        %v2105 = vpack.c.bf16 %v2097, %v2097
        %v2106 = vpack.c.bf16 %v2098, %v2098
        %v2107 = vpack.c.bf16 %v2099, %v2099
        %v2108 = vpack.c.bf16 %v2100, %v2100
        %v2109 = vpack.c.bf16 %v2101, %v2101
        %v2110 = vpack.c.bf16 %v2102, %v2102
        %v2111 = vpack.c.bf16 %v2103, %v2103
        %v2112 = vpack.c.bf16 %v2104, %v2104
        %v2114 = vunpack.c.l.b16 %v1561
        %v2115 = vpack.c.b16 %v2114, %v2114
        %2116 = vrot.lane.b32.xlu0 %v2115, 112
        %v2117 = vpop.permute.xlu0 %2116
        %v2119 = vsel %vm1071, %v2105, 0
        %v2122 = vsel %vm1171, %v2117, 0
        %2124 = vmatprep.subr.bf16.mxu0 0
        %2125 = vmatpush1.bf16.msra.mxu0 %v2122
        %2126 = vmatprep.subr.bf16.mxu0 0
        %2127 = vmatpush1.bf16.msra.mxu0 0
        %2128 = vmatprep.subr.bf16.mxu0 0
        %2129 = vmatpush1.bf16.msra.mxu0 0
        %2130 = vmatprep.subr.bf16.mxu0 0
        %2131 = vmatpush1.bf16.msra.mxu0 0
        %2132 = vmatprep.subr.bf16.mxu0 0
        %2133 = vmatpush1.bf16.msra.mxu0 0
        %2134 = vmatprep.subr.bf16.mxu0 0
        %2135 = vmatpush1.bf16.msra.mxu0 0
        %2136 = vmatprep.subr.bf16.mxu0 0
        %2137 = vmatpush1.bf16.msra.mxu0 0
        %2138 = vmatprep.subr.bf16.mxu0 0
        %2139 = vmatpush1.bf16.msra.mxu0 0
        %2140 = vmatprep.subr.bf16.mxu0 0
        %2141 = vmatpush1.bf16.msra.mxu0 0
        %2142 = vmatprep.subr.bf16.mxu0 0
        %2143 = vmatpush1.bf16.msra.mxu0 0
        %2144 = vmatprep.subr.bf16.mxu0 0
        %2145 = vmatpush1.bf16.msra.mxu0 0
        %2146 = vmatprep.subr.bf16.mxu0 0
        %2147 = vmatpush1.bf16.msra.mxu0 0
        %2148 = vmatprep.subr.bf16.mxu0 0
        %2149 = vmatpush1.bf16.msra.mxu0 0
        %2150 = vmatprep.subr.bf16.mxu0 0
        %2151 = vmatpush1.bf16.msra.mxu0 0
        %2152 = vmatprep.subr.bf16.mxu0 0
        %2153 = vmatpush1.bf16.msra.mxu0 0
        %2154 = vmatprep.subr.bf16.mxu0 0
        %2155 = vmatpush1.bf16.msra.mxu0 0
        %2156 = vmatprep.mubr.bf16.mxu0 0
        %2157 = vmatmul.mubr.bf16.gmra.mrb[0].mxu0 %v2119
        %v2158 = vpop.f32.mrb[0].mxu0
        %v2159 = vadd.f32 0.0, %v2158
        %v2160 = vpop.f32.mrb[0].mxu0
        %v2161 = vpop.f32.mrb[0].mxu0
        %v2162 = vpop.f32.mrb[0].mxu0
        %2163 = vdwg.mxu0
        %v2165 = vunpack.c.l.b16 %v1562
        %v2166 = vpack.c.b16 %v2165, %v2165
        %2167 = vrot.lane.b32.xlu0 %v2166, 112
        %v2168 = vpop.permute.xlu0 %2167
        %v2170 = vsel %vm1071, %v2106, 0
        %v2173 = vsel %vm1171, %v2168, 0
        %2175 = vmatprep.subr.bf16.mxu0 0
        %2176 = vmatpush1.bf16.msra.mxu0 %v2173
        %2177 = vmatprep.subr.bf16.mxu0 0
        %2178 = vmatpush1.bf16.msra.mxu0 0
        %2179 = vmatprep.subr.bf16.mxu0 0
        %2180 = vmatpush1.bf16.msra.mxu0 0
        %2181 = vmatprep.subr.bf16.mxu0 0
        %2182 = vmatpush1.bf16.msra.mxu0 0
        %2183 = vmatprep.subr.bf16.mxu0 0
        %2184 = vmatpush1.bf16.msra.mxu0 0
        %2185 = vmatprep.subr.bf16.mxu0 0
        %2186 = vmatpush1.bf16.msra.mxu0 0
        %2187 = vmatprep.subr.bf16.mxu0 0
        %2188 = vmatpush1.bf16.msra.mxu0 0
        %2189 = vmatprep.subr.bf16.mxu0 0
        %2190 = vmatpush1.bf16.msra.mxu0 0
        %2191 = vmatprep.subr.bf16.mxu0 0
        %2192 = vmatpush1.bf16.msra.mxu0 0
        %2193 = vmatprep.subr.bf16.mxu0 0
        %2194 = vmatpush1.bf16.msra.mxu0 0
        %2195 = vmatprep.subr.bf16.mxu0 0
        %2196 = vmatpush1.bf16.msra.mxu0 0
        %2197 = vmatprep.subr.bf16.mxu0 0
        %2198 = vmatpush1.bf16.msra.mxu0 0
        %2199 = vmatprep.subr.bf16.mxu0 0
        %2200 = vmatpush1.bf16.msra.mxu0 0
        %2201 = vmatprep.subr.bf16.mxu0 0
        %2202 = vmatpush1.bf16.msra.mxu0 0
        %2203 = vmatprep.subr.bf16.mxu0 0
        %2204 = vmatpush1.bf16.msra.mxu0 0
        %2205 = vmatprep.subr.bf16.mxu0 0
        %2206 = vmatpush1.bf16.msra.mxu0 0
        %2207 = vmatprep.mubr.bf16.mxu0 0
        %2208 = vmatmul.mubr.bf16.gmra.mrb[0].mxu0 %v2170
        %v2209 = vpop.f32.mrb[0].mxu0
        %v2210 = vadd.f32 0.0, %v2209
        %v2211 = vpop.f32.mrb[0].mxu0
        %v2212 = vpop.f32.mrb[0].mxu0
        %v2213 = vpop.f32.mrb[0].mxu0
        %2214 = vdwg.mxu0
        %v2216 = vunpack.c.l.b16 %v1563
        %v2217 = vpack.c.b16 %v2216, %v2216
        %2218 = vrot.lane.b32.xlu0 %v2217, 112
        %v2219 = vpop.permute.xlu0 %2218
        %v2221 = vsel %vm1071, %v2107, 0
        %v2224 = vsel %vm1171, %v2219, 0
        %2226 = vmatprep.subr.bf16.mxu0 0
        %2227 = vmatpush1.bf16.msra.mxu0 %v2224
        %2228 = vmatprep.subr.bf16.mxu0 0
        %2229 = vmatpush1.bf16.msra.mxu0 0
        %2230 = vmatprep.subr.bf16.mxu0 0
        %2231 = vmatpush1.bf16.msra.mxu0 0
        %2232 = vmatprep.subr.bf16.mxu0 0
        %2233 = vmatpush1.bf16.msra.mxu0 0
        %2234 = vmatprep.subr.bf16.mxu0 0
        %2235 = vmatpush1.bf16.msra.mxu0 0
        %2236 = vmatprep.subr.bf16.mxu0 0
        %2237 = vmatpush1.bf16.msra.mxu0 0
        %2238 = vmatprep.subr.bf16.mxu0 0
        %2239 = vmatpush1.bf16.msra.mxu0 0
        %2240 = vmatprep.subr.bf16.mxu0 0
        %2241 = vmatpush1.bf16.msra.mxu0 0
        %2242 = vmatprep.subr.bf16.mxu0 0
        %2243 = vmatpush1.bf16.msra.mxu0 0
        %2244 = vmatprep.subr.bf16.mxu0 0
        %2245 = vmatpush1.bf16.msra.mxu0 0
        %2246 = vmatprep.subr.bf16.mxu0 0
        %2247 = vmatpush1.bf16.msra.mxu0 0
        %2248 = vmatprep.subr.bf16.mxu0 0
        %2249 = vmatpush1.bf16.msra.mxu0 0
        %2250 = vmatprep.subr.bf16.mxu0 0
        %2251 = vmatpush1.bf16.msra.mxu0 0
        %2252 = vmatprep.subr.bf16.mxu0 0
        %2253 = vmatpush1.bf16.msra.mxu0 0
        %2254 = vmatprep.subr.bf16.mxu0 0
        %2255 = vmatpush1.bf16.msra.mxu0 0
        %2256 = vmatprep.subr.bf16.mxu0 0
        %2257 = vmatpush1.bf16.msra.mxu0 0
        %2258 = vmatprep.mubr.bf16.mxu0 0
        %2259 = vmatmul.mubr.bf16.gmra.mrb[0].mxu0 %v2221
        %v2260 = vpop.f32.mrb[0].mxu0
        %v2261 = vadd.f32 0.0, %v2260
        %v2262 = vpop.f32.mrb[0].mxu0
        %v2263 = vpop.f32.mrb[0].mxu0
        %v2264 = vpop.f32.mrb[0].mxu0
        %2265 = vdwg.mxu0
        %v2267 = vunpack.c.l.b16 %v1564
        %v2268 = vpack.c.b16 %v2267, %v2267
        %2269 = vrot.lane.b32.xlu0 %v2268, 112
        %v2270 = vpop.permute.xlu0 %2269
        %v2272 = vsel %vm1071, %v2108, 0
        %v2275 = vsel %vm1171, %v2270, 0
        %2277 = vmatprep.subr.bf16.mxu0 0
        %2278 = vmatpush1.bf16.msra.mxu0 %v2275
        %2279 = vmatprep.subr.bf16.mxu0 0
        %2280 = vmatpush1.bf16.msra.mxu0 0
        %2281 = vmatprep.subr.bf16.mxu0 0
        %2282 = vmatpush1.bf16.msra.mxu0 0
        %2283 = vmatprep.subr.bf16.mxu0 0
        %2284 = vmatpush1.bf16.msra.mxu0 0
        %2285 = vmatprep.subr.bf16.mxu0 0
        %2286 = vmatpush1.bf16.msra.mxu0 0
        %2287 = vmatprep.subr.bf16.mxu0 0
        %2288 = vmatpush1.bf16.msra.mxu0 0
        %2289 = vmatprep.subr.bf16.mxu0 0
        %2290 = vmatpush1.bf16.msra.mxu0 0
        %2291 = vmatprep.subr.bf16.mxu0 0
        %2292 = vmatpush1.bf16.msra.mxu0 0
        %2293 = vmatprep.subr.bf16.mxu0 0
        %2294 = vmatpush1.bf16.msra.mxu0 0
        %2295 = vmatprep.subr.bf16.mxu0 0
        %2296 = vmatpush1.bf16.msra.mxu0 0
        %2297 = vmatprep.subr.bf16.mxu0 0
        %2298 = vmatpush1.bf16.msra.mxu0 0
        %2299 = vmatprep.subr.bf16.mxu0 0
        %2300 = vmatpush1.bf16.msra.mxu0 0
        %2301 = vmatprep.subr.bf16.mxu0 0
        %2302 = vmatpush1.bf16.msra.mxu0 0
        %2303 = vmatprep.subr.bf16.mxu0 0
        %2304 = vmatpush1.bf16.msra.mxu0 0
        %2305 = vmatprep.subr.bf16.mxu0 0
        %2306 = vmatpush1.bf16.msra.mxu0 0
        %2307 = vmatprep.subr.bf16.mxu0 0
        %2308 = vmatpush1.bf16.msra.mxu0 0
        %2309 = vmatprep.mubr.bf16.mxu0 0
        %2310 = vmatmul.mubr.bf16.gmra.mrb[0].mxu0 %v2272
        %v2311 = vpop.f32.mrb[0].mxu0
        %v2312 = vadd.f32 0.0, %v2311
        %v2313 = vpop.f32.mrb[0].mxu0
        %v2314 = vpop.f32.mrb[0].mxu0
        %v2315 = vpop.f32.mrb[0].mxu0
        %2316 = vdwg.mxu0
        %v2318 = vunpack.c.l.b16 %v1565
        %v2319 = vpack.c.b16 %v2318, %v2318
        %2320 = vrot.lane.b32.xlu0 %v2319, 112
        %v2321 = vpop.permute.xlu0 %2320
        %v2323 = vsel %vm1071, %v2109, 0
        %v2326 = vsel %vm1171, %v2321, 0
        %2328 = vmatprep.subr.bf16.mxu0 0
        %2329 = vmatpush1.bf16.msra.mxu0 %v2326
        %2330 = vmatprep.subr.bf16.mxu0 0
        %2331 = vmatpush1.bf16.msra.mxu0 0
        %2332 = vmatprep.subr.bf16.mxu0 0
        %2333 = vmatpush1.bf16.msra.mxu0 0
        %2334 = vmatprep.subr.bf16.mxu0 0
        %2335 = vmatpush1.bf16.msra.mxu0 0
        %2336 = vmatprep.subr.bf16.mxu0 0
        %2337 = vmatpush1.bf16.msra.mxu0 0
        %2338 = vmatprep.subr.bf16.mxu0 0
        %2339 = vmatpush1.bf16.msra.mxu0 0
        %2340 = vmatprep.subr.bf16.mxu0 0
        %2341 = vmatpush1.bf16.msra.mxu0 0
        %2342 = vmatprep.subr.bf16.mxu0 0
        %2343 = vmatpush1.bf16.msra.mxu0 0
        %2344 = vmatprep.subr.bf16.mxu0 0
        %2345 = vmatpush1.bf16.msra.mxu0 0
        %2346 = vmatprep.subr.bf16.mxu0 0
        %2347 = vmatpush1.bf16.msra.mxu0 0
        %2348 = vmatprep.subr.bf16.mxu0 0
        %2349 = vmatpush1.bf16.msra.mxu0 0
        %2350 = vmatprep.subr.bf16.mxu0 0
        %2351 = vmatpush1.bf16.msra.mxu0 0
        %2352 = vmatprep.subr.bf16.mxu0 0
        %2353 = vmatpush1.bf16.msra.mxu0 0
        %2354 = vmatprep.subr.bf16.mxu0 0
        %2355 = vmatpush1.bf16.msra.mxu0 0
        %2356 = vmatprep.subr.bf16.mxu0 0
        %2357 = vmatpush1.bf16.msra.mxu0 0
        %2358 = vmatprep.subr.bf16.mxu0 0
        %2359 = vmatpush1.bf16.msra.mxu0 0
        %2360 = vmatprep.mubr.bf16.mxu0 0
        %2361 = vmatmul.mubr.bf16.gmra.mrb[0].mxu0 %v2323
        %v2362 = vpop.f32.mrb[0].mxu0
        %v2363 = vadd.f32 0.0, %v2362
        %v2364 = vpop.f32.mrb[0].mxu0
        %v2365 = vpop.f32.mrb[0].mxu0
        %v2366 = vpop.f32.mrb[0].mxu0
        %2367 = vdwg.mxu0
        %v2369 = vunpack.c.l.b16 %v1566
        %v2370 = vpack.c.b16 %v2369, %v2369
        %2371 = vrot.lane.b32.xlu0 %v2370, 112
        %v2372 = vpop.permute.xlu0 %2371
        %v2374 = vsel %vm1071, %v2110, 0
        %v2377 = vsel %vm1171, %v2372, 0
        %2379 = vmatprep.subr.bf16.mxu0 0
        %2380 = vmatpush1.bf16.msra.mxu0 %v2377
        %2381 = vmatprep.subr.bf16.mxu0 0
        %2382 = vmatpush1.bf16.msra.mxu0 0
        %2383 = vmatprep.subr.bf16.mxu0 0
        %2384 = vmatpush1.bf16.msra.mxu0 0
        %2385 = vmatprep.subr.bf16.mxu0 0
        %2386 = vmatpush1.bf16.msra.mxu0 0
        %2387 = vmatprep.subr.bf16.mxu0 0
        %2388 = vmatpush1.bf16.msra.mxu0 0
        %2389 = vmatprep.subr.bf16.mxu0 0
        %2390 = vmatpush1.bf16.msra.mxu0 0
        %2391 = vmatprep.subr.bf16.mxu0 0
        %2392 = vmatpush1.bf16.msra.mxu0 0
        %2393 = vmatprep.subr.bf16.mxu0 0
        %2394 = vmatpush1.bf16.msra.mxu0 0
        %2395 = vmatprep.subr.bf16.mxu0 0
        %2396 = vmatpush1.bf16.msra.mxu0 0
        %2397 = vmatprep.subr.bf16.mxu0 0
        %2398 = vmatpush1.bf16.msra.mxu0 0
        %2399 = vmatprep.subr.bf16.mxu0 0
        %2400 = vmatpush1.bf16.msra.mxu0 0
        %2401 = vmatprep.subr.bf16.mxu0 0
        %2402 = vmatpush1.bf16.msra.mxu0 0
        %2403 = vmatprep.subr.bf16.mxu0 0
        %2404 = vmatpush1.bf16.msra.mxu0 0
        %2405 = vmatprep.subr.bf16.mxu0 0
        %2406 = vmatpush1.bf16.msra.mxu0 0
        %2407 = vmatprep.subr.bf16.mxu0 0
        %2408 = vmatpush1.bf16.msra.mxu0 0
        %2409 = vmatprep.subr.bf16.mxu0 0
        %2410 = vmatpush1.bf16.msra.mxu0 0
        %2411 = vmatprep.mubr.bf16.mxu0 0
        %2412 = vmatmul.mubr.bf16.gmra.mrb[0].mxu0 %v2374
        %v2413 = vpop.f32.mrb[0].mxu0
        %v2414 = vadd.f32 0.0, %v2413
        %v2415 = vpop.f32.mrb[0].mxu0
        %v2416 = vpop.f32.mrb[0].mxu0
        %v2417 = vpop.f32.mrb[0].mxu0
        %2418 = vdwg.mxu0
        %v2420 = vunpack.c.l.b16 %v1567
        %v2421 = vpack.c.b16 %v2420, %v2420
        %2422 = vrot.lane.b32.xlu0 %v2421, 112
        %v2423 = vpop.permute.xlu0 %2422
        %v2425 = vsel %vm1071, %v2111, 0
        %v2428 = vsel %vm1171, %v2423, 0
        %2430 = vmatprep.subr.bf16.mxu0 0
        %2431 = vmatpush1.bf16.msra.mxu0 %v2428
        %2432 = vmatprep.subr.bf16.mxu0 0
        %2433 = vmatpush1.bf16.msra.mxu0 0
        %2434 = vmatprep.subr.bf16.mxu0 0
        %2435 = vmatpush1.bf16.msra.mxu0 0
        %2436 = vmatprep.subr.bf16.mxu0 0
        %2437 = vmatpush1.bf16.msra.mxu0 0
        %2438 = vmatprep.subr.bf16.mxu0 0
        %2439 = vmatpush1.bf16.msra.mxu0 0
        %2440 = vmatprep.subr.bf16.mxu0 0
        %2441 = vmatpush1.bf16.msra.mxu0 0
        %2442 = vmatprep.subr.bf16.mxu0 0
        %2443 = vmatpush1.bf16.msra.mxu0 0
        %2444 = vmatprep.subr.bf16.mxu0 0
        %2445 = vmatpush1.bf16.msra.mxu0 0
        %2446 = vmatprep.subr.bf16.mxu0 0
        %2447 = vmatpush1.bf16.msra.mxu0 0
        %2448 = vmatprep.subr.bf16.mxu0 0
        %2449 = vmatpush1.bf16.msra.mxu0 0
        %2450 = vmatprep.subr.bf16.mxu0 0
        %2451 = vmatpush1.bf16.msra.mxu0 0
        %2452 = vmatprep.subr.bf16.mxu0 0
        %2453 = vmatpush1.bf16.msra.mxu0 0
        %2454 = vmatprep.subr.bf16.mxu0 0
        %2455 = vmatpush1.bf16.msra.mxu0 0
        %2456 = vmatprep.subr.bf16.mxu0 0
        %2457 = vmatpush1.bf16.msra.mxu0 0
        %2458 = vmatprep.subr.bf16.mxu0 0
        %2459 = vmatpush1.bf16.msra.mxu0 0
        %2460 = vmatprep.subr.bf16.mxu0 0
        %2461 = vmatpush1.bf16.msra.mxu0 0
        %2462 = vmatprep.mubr.bf16.mxu0 0
        %2463 = vmatmul.mubr.bf16.gmra.mrb[0].mxu0 %v2425
        %v2464 = vpop.f32.mrb[0].mxu0
        %v2465 = vadd.f32 0.0, %v2464
        %v2466 = vpop.f32.mrb[0].mxu0
        %v2467 = vpop.f32.mrb[0].mxu0
        %v2468 = vpop.f32.mrb[0].mxu0
        %2469 = vdwg.mxu0
        %v2471 = vunpack.c.l.b16 %v1568
        %v2472 = vpack.c.b16 %v2471, %v2471
        %2473 = vrot.lane.b32.xlu0 %v2472, 112
        %v2474 = vpop.permute.xlu0 %2473
        %v2476 = vsel %vm1071, %v2112, 0
        %v2479 = vsel %vm1171, %v2474, 0
        %2481 = vmatprep.subr.bf16.mxu0 0
        %2482 = vmatpush1.bf16.msra.mxu0 %v2479
        %2483 = vmatprep.subr.bf16.mxu0 0
        %2484 = vmatpush1.bf16.msra.mxu0 0
        %2485 = vmatprep.subr.bf16.mxu0 0
        %2486 = vmatpush1.bf16.msra.mxu0 0
        %2487 = vmatprep.subr.bf16.mxu0 0
        %2488 = vmatpush1.bf16.msra.mxu0 0
        %2489 = vmatprep.subr.bf16.mxu0 0
        %2490 = vmatpush1.bf16.msra.mxu0 0
        %2491 = vmatprep.subr.bf16.mxu0 0
        %2492 = vmatpush1.bf16.msra.mxu0 0
        %2493 = vmatprep.subr.bf16.mxu0 0
        %2494 = vmatpush1.bf16.msra.mxu0 0
        %2495 = vmatprep.subr.bf16.mxu0 0
        %2496 = vmatpush1.bf16.msra.mxu0 0
        %2497 = vmatprep.subr.bf16.mxu0 0
        %2498 = vmatpush1.bf16.msra.mxu0 0
        %2499 = vmatprep.subr.bf16.mxu0 0
        %2500 = vmatpush1.bf16.msra.mxu0 0
        %2501 = vmatprep.subr.bf16.mxu0 0
        %2502 = vmatpush1.bf16.msra.mxu0 0
        %2503 = vmatprep.subr.bf16.mxu0 0
        %2504 = vmatpush1.bf16.msra.mxu0 0
        %2505 = vmatprep.subr.bf16.mxu0 0
        %2506 = vmatpush1.bf16.msra.mxu0 0
        %2507 = vmatprep.subr.bf16.mxu0 0
        %2508 = vmatpush1.bf16.msra.mxu0 0
        %2509 = vmatprep.subr.bf16.mxu0 0
        %2510 = vmatpush1.bf16.msra.mxu0 0
        %2511 = vmatprep.subr.bf16.mxu0 0
        %2512 = vmatpush1.bf16.msra.mxu0 0
        %2513 = vmatprep.mubr.bf16.mxu0 0
        %2514 = vmatmul.mubr.bf16.gmra.mrb[0].mxu0 %v2476
        %v2515 = vpop.f32.mrb[0].mxu0
        %v2516 = vadd.f32 0.0, %v2515
        %v2517 = vpop.f32.mrb[0].mxu0
        %v2518 = vpop.f32.mrb[0].mxu0
        %v2519 = vpop.f32.mrb[0].mxu0
        %2520 = vdwg.mxu0
        %v2521 = vpack.c.bf16 %v2210, %v2159
        %v2522 = vpack.c.bf16 %v2312, %v2261
        %v2523 = vpack.c.bf16 %v2414, %v2363
        %v2524 = vpack.c.bf16 %v2516, %v2465
        %2529 = vrot.lane.b32.xlu0 %v2521, 16
        %v2530 = vpop.permute.xlu0 %2529
        %2531 = vrot.lane.b32.xlu0 %v2522, 16
        %v2532 = vpop.permute.xlu0 %2531
        %2533 = vrot.lane.b32.xlu0 %v2523, 16
        %v2534 = vpop.permute.xlu0 %2533
        %2535 = vrot.lane.b32.xlu0 %v2524, 16
        %v2536 = vpop.permute.xlu0 %2535
        %vm2541 = vcmask 261248
        %2542 = vst.msk [vmem:[#allocation3] sm:$0xff] %vm2541, %v2530
        %2543 = vst.msk [vmem:[#allocation3 + $0x8] sm:$0xff] %vm2541, %v2532
        %2544 = vst.msk [vmem:[#allocation3 + $0x10] sm:$0xff] %vm2541, %v2534
        %2545 = vst.msk [vmem:[#allocation3 + $0x18] sm:$0xff] %vm2541, %v2536
        %v2546 = vld [vmem:[#allocation2] sm:$0xf]
        %v2547 = vld [vmem:[#allocation2 + $0xc] sm:$0xf]
        %v2548 = vld [vmem:[#allocation2 + $0x18] sm:$0xf]
        %v2549 = vld [vmem:[#allocation2 + $0x24] sm:$0xf]
        %v2550 = vld [vmem:[#allocation2 + $0x30] sm:$0xf]
        %v2551 = vld [vmem:[#allocation2 + $0x3c] sm:$0xf]
        %v2552 = vld [vmem:[#allocation2 + $0x48] sm:$0xf]
        %v2553 = vld [vmem:[#allocation2 + $0x54] sm:$0xf]
        %v2554 = vld [vmem:[#allocation2 + $0x4] sm:$0xf]
        %v2555 = vld [vmem:[#allocation2 + $0x10] sm:$0xf]
        %v2556 = vld [vmem:[#allocation2 + $0x1c] sm:$0xf]
        %v2557 = vld [vmem:[#allocation2 + $0x28] sm:$0xf]
        %v2558 = vld [vmem:[#allocation2 + $0x34] sm:$0xf]
        %v2559 = vld [vmem:[#allocation2 + $0x40] sm:$0xf]
        %v2560 = vld [vmem:[#allocation2 + $0x4c] sm:$0xf]
        %v2561 = vld [vmem:[#allocation2 + $0x58] sm:$0xf]
        %v2562 = vld [vmem:[#allocation2 + $0x8] sm:$0xf]
        %v2563 = vld [vmem:[#allocation2 + $0x14] sm:$0xf]
        %v2564 = vld [vmem:[#allocation2 + $0x20] sm:$0xf]
        %v2565 = vld [vmem:[#allocation2 + $0x2c] sm:$0xf]
        %v2566 = vld [vmem:[#allocation2 + $0x38] sm:$0xf]
        %v2567 = vld [vmem:[#allocation2 + $0x44] sm:$0xf]
        %v2568 = vld [vmem:[#allocation2 + $0x50] sm:$0xf]
        %v2569 = vld [vmem:[#allocation2 + $0x5c] sm:$0xf]
        %v2571 = vunpack.c.l.b16 %v2546
        %v2572 = vpack.c.b16 %v2571, %v2571
        %2573 = vrot.lane.b32.xlu0 %v2572, 96
        %v2574 = vpop.permute.xlu0 %2573
        %v2576 = vunpack.c.l.b16 %v2554
        %v2577 = vpack.c.b16 %v2576, %v2576
        %2578 = vrot.lane.b32.xlu0 %v2577, 96
        %v2579 = vpop.permute.xlu0 %2578
        %v2581 = vsel %vm702, %v2574, 0
        %v2584 = vsel %vm702, %v2579, 0
        %2586 = vmatprep.subr.bf16.mxu0 0
        %2587 = vmatpush1.bf16.xpose.msra.mxu0 %v2584
        %2588 = vmatprep.subr.bf16.mxu0 0
        %2589 = vmatpush1.bf16.xpose.msra.mxu0 0
        %2590 = vmatprep.subr.bf16.mxu0 0
        %2591 = vmatpush1.bf16.xpose.msra.mxu0 0
        %2592 = vmatprep.subr.bf16.mxu0 0
        %2593 = vmatpush1.bf16.xpose.msra.mxu0 0
        %2594 = vmatprep.subr.bf16.mxu0 0
        %2595 = vmatpush1.bf16.xpose.msra.mxu0 0
        %2596 = vmatprep.subr.bf16.mxu0 0
        %2597 = vmatpush1.bf16.xpose.msra.mxu0 0
        %2598 = vmatprep.subr.bf16.mxu0 0
        %2599 = vmatpush1.bf16.xpose.msra.mxu0 0
        %2600 = vmatprep.subr.bf16.mxu0 0
        %2601 = vmatpush1.bf16.xpose.msra.mxu0 0
        %2602 = vmatprep.subr.bf16.mxu0 0
        %2603 = vmatpush1.bf16.xpose.msra.mxu0 0
        %2604 = vmatprep.subr.bf16.mxu0 0
        %2605 = vmatpush1.bf16.xpose.msra.mxu0 0
        %2606 = vmatprep.subr.bf16.mxu0 0
        %2607 = vmatpush1.bf16.xpose.msra.mxu0 0
        %2608 = vmatprep.subr.bf16.mxu0 0
        %2609 = vmatpush1.bf16.xpose.msra.mxu0 0
        %2610 = vmatprep.subr.bf16.mxu0 0
        %2611 = vmatpush1.bf16.xpose.msra.mxu0 0
        %2612 = vmatprep.subr.bf16.mxu0 0
        %2613 = vmatpush1.bf16.xpose.msra.mxu0 0
        %2614 = vmatprep.subr.bf16.mxu0 0
        %2615 = vmatpush1.bf16.xpose.msra.mxu0 0
        %2616 = vmatprep.subr.bf16.mxu0 0
        %2617 = vmatpush1.bf16.xpose.msra.mxu0 0
        %2618 = vmatprep.mubr.bf16.mxu0 0
        %2619 = vmatmul.mubr.bf16.gmra.mrb[0].mxu0 %v2581
        %v2620 = vpop.f32.mrb[0].mxu0
        %v2621 = vadd.f32 0.0, %v2620
        %v2622 = vpop.f32.mrb[0].mxu0
        %v2623 = vpop.f32.mrb[0].mxu0
        %v2624 = vpop.f32.mrb[0].mxu0
        %2625 = vdwg.mxu0
        %v2627 = vunpack.c.l.b16 %v2547
        %v2628 = vpack.c.b16 %v2627, %v2627
        %2629 = vrot.lane.b32.xlu0 %v2628, 96
        %v2630 = vpop.permute.xlu0 %2629
        %v2632 = vunpack.c.l.b16 %v2555
        %v2633 = vpack.c.b16 %v2632, %v2632
        %2634 = vrot.lane.b32.xlu0 %v2633, 96
        %v2635 = vpop.permute.xlu0 %2634
        %v2637 = vsel %vm702, %v2630, 0
        %v2640 = vsel %vm702, %v2635, 0
        %2642 = vmatprep.subr.bf16.mxu0 0
        %2643 = vmatpush1.bf16.xpose.msra.mxu0 %v2640
        %2644 = vmatprep.subr.bf16.mxu0 0
        %2645 = vmatpush1.bf16.xpose.msra.mxu0 0
        %2646 = vmatprep.subr.bf16.mxu0 0
        %2647 = vmatpush1.bf16.xpose.msra.mxu0 0
        %2648 = vmatprep.subr.bf16.mxu0 0
        %2649 = vmatpush1.bf16.xpose.msra.mxu0 0
        %2650 = vmatprep.subr.bf16.mxu0 0
        %2651 = vmatpush1.bf16.xpose.msra.mxu0 0
        %2652 = vmatprep.subr.bf16.mxu0 0
        %2653 = vmatpush1.bf16.xpose.msra.mxu0 0
        %2654 = vmatprep.subr.bf16.mxu0 0
        %2655 = vmatpush1.bf16.xpose.msra.mxu0 0
        %2656 = vmatprep.subr.bf16.mxu0 0
        %2657 = vmatpush1.bf16.xpose.msra.mxu0 0
        %2658 = vmatprep.subr.bf16.mxu0 0
        %2659 = vmatpush1.bf16.xpose.msra.mxu0 0
        %2660 = vmatprep.subr.bf16.mxu0 0
        %2661 = vmatpush1.bf16.xpose.msra.mxu0 0
        %2662 = vmatprep.subr.bf16.mxu0 0
        %2663 = vmatpush1.bf16.xpose.msra.mxu0 0
        %2664 = vmatprep.subr.bf16.mxu0 0
        %2665 = vmatpush1.bf16.xpose.msra.mxu0 0
        %2666 = vmatprep.subr.bf16.mxu0 0
        %2667 = vmatpush1.bf16.xpose.msra.mxu0 0
        %2668 = vmatprep.subr.bf16.mxu0 0
        %2669 = vmatpush1.bf16.xpose.msra.mxu0 0
        %2670 = vmatprep.subr.bf16.mxu0 0
        %2671 = vmatpush1.bf16.xpose.msra.mxu0 0
        %2672 = vmatprep.subr.bf16.mxu0 0
        %2673 = vmatpush1.bf16.xpose.msra.mxu0 0
        %2674 = vmatprep.mubr.bf16.mxu0 0
        %2675 = vmatmul.mubr.bf16.gmra.mrb[0].mxu0 %v2637
        %v2676 = vpop.f32.mrb[0].mxu0
        %v2677 = vadd.f32 0.0, %v2676
        %v2678 = vpop.f32.mrb[0].mxu0
        %v2679 = vpop.f32.mrb[0].mxu0
        %v2680 = vpop.f32.mrb[0].mxu0
        %2681 = vdwg.mxu0
        %v2683 = vunpack.c.l.b16 %v2548
        %v2684 = vpack.c.b16 %v2683, %v2683
        %2685 = vrot.lane.b32.xlu0 %v2684, 96
        %v2686 = vpop.permute.xlu0 %2685
        %v2688 = vunpack.c.l.b16 %v2556
        %v2689 = vpack.c.b16 %v2688, %v2688
        %2690 = vrot.lane.b32.xlu0 %v2689, 96
        %v2691 = vpop.permute.xlu0 %2690
        %v2693 = vsel %vm702, %v2686, 0
        %v2696 = vsel %vm702, %v2691, 0
        %2698 = vmatprep.subr.bf16.mxu0 0
        %2699 = vmatpush1.bf16.xpose.msra.mxu0 %v2696
        %2700 = vmatprep.subr.bf16.mxu0 0
        %2701 = vmatpush1.bf16.xpose.msra.mxu0 0
        %2702 = vmatprep.subr.bf16.mxu0 0
        %2703 = vmatpush1.bf16.xpose.msra.mxu0 0
        %2704 = vmatprep.subr.bf16.mxu0 0
        %2705 = vmatpush1.bf16.xpose.msra.mxu0 0
        %2706 = vmatprep.subr.bf16.mxu0 0
        %2707 = vmatpush1.bf16.xpose.msra.mxu0 0
        %2708 = vmatprep.subr.bf16.mxu0 0
        %2709 = vmatpush1.bf16.xpose.msra.mxu0 0
        %2710 = vmatprep.subr.bf16.mxu0 0
        %2711 = vmatpush1.bf16.xpose.msra.mxu0 0
        %2712 = vmatprep.subr.bf16.mxu0 0
        %2713 = vmatpush1.bf16.xpose.msra.mxu0 0
        %2714 = vmatprep.subr.bf16.mxu0 0
        %2715 = vmatpush1.bf16.xpose.msra.mxu0 0
        %2716 = vmatprep.subr.bf16.mxu0 0
        %2717 = vmatpush1.bf16.xpose.msra.mxu0 0
        %2718 = vmatprep.subr.bf16.mxu0 0
        %2719 = vmatpush1.bf16.xpose.msra.mxu0 0
        %2720 = vmatprep.subr.bf16.mxu0 0
        %2721 = vmatpush1.bf16.xpose.msra.mxu0 0
        %2722 = vmatprep.subr.bf16.mxu0 0
        %2723 = vmatpush1.bf16.xpose.msra.mxu0 0
        %2724 = vmatprep.subr.bf16.mxu0 0
        %2725 = vmatpush1.bf16.xpose.msra.mxu0 0
        %2726 = vmatprep.subr.bf16.mxu0 0
        %2727 = vmatpush1.bf16.xpose.msra.mxu0 0
        %2728 = vmatprep.subr.bf16.mxu0 0
        %2729 = vmatpush1.bf16.xpose.msra.mxu0 0
        %2730 = vmatprep.mubr.bf16.mxu0 0
        %2731 = vmatmul.mubr.bf16.gmra.mrb[0].mxu0 %v2693
        %v2732 = vpop.f32.mrb[0].mxu0
        %v2733 = vadd.f32 0.0, %v2732
        %v2734 = vpop.f32.mrb[0].mxu0
        %v2735 = vpop.f32.mrb[0].mxu0
        %v2736 = vpop.f32.mrb[0].mxu0
        %2737 = vdwg.mxu0
        %v2739 = vunpack.c.l.b16 %v2549
        %v2740 = vpack.c.b16 %v2739, %v2739
        %2741 = vrot.lane.b32.xlu0 %v2740, 96
        %v2742 = vpop.permute.xlu0 %2741
        %v2744 = vunpack.c.l.b16 %v2557
        %v2745 = vpack.c.b16 %v2744, %v2744
        %2746 = vrot.lane.b32.xlu0 %v2745, 96
        %v2747 = vpop.permute.xlu0 %2746
        %v2749 = vsel %vm702, %v2742, 0
        %v2752 = vsel %vm702, %v2747, 0
        %2754 = vmatprep.subr.bf16.mxu0 0
        %2755 = vmatpush1.bf16.xpose.msra.mxu0 %v2752
        %2756 = vmatprep.subr.bf16.mxu0 0
        %2757 = vmatpush1.bf16.xpose.msra.mxu0 0
        %2758 = vmatprep.subr.bf16.mxu0 0
        %2759 = vmatpush1.bf16.xpose.msra.mxu0 0
        %2760 = vmatprep.subr.bf16.mxu0 0
        %2761 = vmatpush1.bf16.xpose.msra.mxu0 0
        %2762 = vmatprep.subr.bf16.mxu0 0
        %2763 = vmatpush1.bf16.xpose.msra.mxu0 0
        %2764 = vmatprep.subr.bf16.mxu0 0
        %2765 = vmatpush1.bf16.xpose.msra.mxu0 0
        %2766 = vmatprep.subr.bf16.mxu0 0
        %2767 = vmatpush1.bf16.xpose.msra.mxu0 0
        %2768 = vmatprep.subr.bf16.mxu0 0
        %2769 = vmatpush1.bf16.xpose.msra.mxu0 0
        %2770 = vmatprep.subr.bf16.mxu0 0
        %2771 = vmatpush1.bf16.xpose.msra.mxu0 0
        %2772 = vmatprep.subr.bf16.mxu0 0
        %2773 = vmatpush1.bf16.xpose.msra.mxu0 0
        %2774 = vmatprep.subr.bf16.mxu0 0
        %2775 = vmatpush1.bf16.xpose.msra.mxu0 0
        %2776 = vmatprep.subr.bf16.mxu0 0
        %2777 = vmatpush1.bf16.xpose.msra.mxu0 0
        %2778 = vmatprep.subr.bf16.mxu0 0
        %2779 = vmatpush1.bf16.xpose.msra.mxu0 0
        %2780 = vmatprep.subr.bf16.mxu0 0
        %2781 = vmatpush1.bf16.xpose.msra.mxu0 0
        %2782 = vmatprep.subr.bf16.mxu0 0
        %2783 = vmatpush1.bf16.xpose.msra.mxu0 0
        %2784 = vmatprep.subr.bf16.mxu0 0
        %2785 = vmatpush1.bf16.xpose.msra.mxu0 0
        %2786 = vmatprep.mubr.bf16.mxu0 0
        %2787 = vmatmul.mubr.bf16.gmra.mrb[0].mxu0 %v2749
        %v2788 = vpop.f32.mrb[0].mxu0
        %v2789 = vadd.f32 0.0, %v2788
        %v2790 = vpop.f32.mrb[0].mxu0
        %v2791 = vpop.f32.mrb[0].mxu0
        %v2792 = vpop.f32.mrb[0].mxu0
        %2793 = vdwg.mxu0
        %v2795 = vunpack.c.l.b16 %v2550
        %v2796 = vpack.c.b16 %v2795, %v2795
        %2797 = vrot.lane.b32.xlu0 %v2796, 96
        %v2798 = vpop.permute.xlu0 %2797
        %v2800 = vunpack.c.l.b16 %v2558
        %v2801 = vpack.c.b16 %v2800, %v2800
        %2802 = vrot.lane.b32.xlu0 %v2801, 96
        %v2803 = vpop.permute.xlu0 %2802
        %v2805 = vsel %vm702, %v2798, 0
        %v2808 = vsel %vm702, %v2803, 0
        %2810 = vmatprep.subr.bf16.mxu0 0
        %2811 = vmatpush1.bf16.xpose.msra.mxu0 %v2808
        %2812 = vmatprep.subr.bf16.mxu0 0
        %2813 = vmatpush1.bf16.xpose.msra.mxu0 0
        %2814 = vmatprep.subr.bf16.mxu0 0
        %2815 = vmatpush1.bf16.xpose.msra.mxu0 0
        %2816 = vmatprep.subr.bf16.mxu0 0
        %2817 = vmatpush1.bf16.xpose.msra.mxu0 0
        %2818 = vmatprep.subr.bf16.mxu0 0
        %2819 = vmatpush1.bf16.xpose.msra.mxu0 0
        %2820 = vmatprep.subr.bf16.mxu0 0
        %2821 = vmatpush1.bf16.xpose.msra.mxu0 0
        %2822 = vmatprep.subr.bf16.mxu0 0
        %2823 = vmatpush1.bf16.xpose.msra.mxu0 0
        %2824 = vmatprep.subr.bf16.mxu0 0
        %2825 = vmatpush1.bf16.xpose.msra.mxu0 0
        %2826 = vmatprep.subr.bf16.mxu0 0
        %2827 = vmatpush1.bf16.xpose.msra.mxu0 0
        %2828 = vmatprep.subr.bf16.mxu0 0
        %2829 = vmatpush1.bf16.xpose.msra.mxu0 0
        %2830 = vmatprep.subr.bf16.mxu0 0
        %2831 = vmatpush1.bf16.xpose.msra.mxu0 0
        %2832 = vmatprep.subr.bf16.mxu0 0
        %2833 = vmatpush1.bf16.xpose.msra.mxu0 0
        %2834 = vmatprep.subr.bf16.mxu0 0
        %2835 = vmatpush1.bf16.xpose.msra.mxu0 0
        %2836 = vmatprep.subr.bf16.mxu0 0
        %2837 = vmatpush1.bf16.xpose.msra.mxu0 0
        %2838 = vmatprep.subr.bf16.mxu0 0
        %2839 = vmatpush1.bf16.xpose.msra.mxu0 0
        %2840 = vmatprep.subr.bf16.mxu0 0
        %2841 = vmatpush1.bf16.xpose.msra.mxu0 0
        %2842 = vmatprep.mubr.bf16.mxu0 0
        %2843 = vmatmul.mubr.bf16.gmra.mrb[0].mxu0 %v2805
        %v2844 = vpop.f32.mrb[0].mxu0
        %v2845 = vadd.f32 0.0, %v2844
        %v2846 = vpop.f32.mrb[0].mxu0
        %v2847 = vpop.f32.mrb[0].mxu0
        %v2848 = vpop.f32.mrb[0].mxu0
        %2849 = vdwg.mxu0
        %v2851 = vunpack.c.l.b16 %v2551
        %v2852 = vpack.c.b16 %v2851, %v2851
        %2853 = vrot.lane.b32.xlu0 %v2852, 96
        %v2854 = vpop.permute.xlu0 %2853
        %v2856 = vunpack.c.l.b16 %v2559
        %v2857 = vpack.c.b16 %v2856, %v2856
        %2858 = vrot.lane.b32.xlu0 %v2857, 96
        %v2859 = vpop.permute.xlu0 %2858
        %v2861 = vsel %vm702, %v2854, 0
        %v2864 = vsel %vm702, %v2859, 0
        %2866 = vmatprep.subr.bf16.mxu0 0
        %2867 = vmatpush1.bf16.xpose.msra.mxu0 %v2864
        %2868 = vmatprep.subr.bf16.mxu0 0
        %2869 = vmatpush1.bf16.xpose.msra.mxu0 0
        %2870 = vmatprep.subr.bf16.mxu0 0
        %2871 = vmatpush1.bf16.xpose.msra.mxu0 0
        %2872 = vmatprep.subr.bf16.mxu0 0
        %2873 = vmatpush1.bf16.xpose.msra.mxu0 0
        %2874 = vmatprep.subr.bf16.mxu0 0
        %2875 = vmatpush1.bf16.xpose.msra.mxu0 0
        %2876 = vmatprep.subr.bf16.mxu0 0
        %2877 = vmatpush1.bf16.xpose.msra.mxu0 0
        %2878 = vmatprep.subr.bf16.mxu0 0
        %2879 = vmatpush1.bf16.xpose.msra.mxu0 0
        %2880 = vmatprep.subr.bf16.mxu0 0
        %2881 = vmatpush1.bf16.xpose.msra.mxu0 0
        %2882 = vmatprep.subr.bf16.mxu0 0
        %2883 = vmatpush1.bf16.xpose.msra.mxu0 0
        %2884 = vmatprep.subr.bf16.mxu0 0
        %2885 = vmatpush1.bf16.xpose.msra.mxu0 0
        %2886 = vmatprep.subr.bf16.mxu0 0
        %2887 = vmatpush1.bf16.xpose.msra.mxu0 0
        %2888 = vmatprep.subr.bf16.mxu0 0
        %2889 = vmatpush1.bf16.xpose.msra.mxu0 0
        %2890 = vmatprep.subr.bf16.mxu0 0
        %2891 = vmatpush1.bf16.xpose.msra.mxu0 0
        %2892 = vmatprep.subr.bf16.mxu0 0
        %2893 = vmatpush1.bf16.xpose.msra.mxu0 0
        %2894 = vmatprep.subr.bf16.mxu0 0
        %2895 = vmatpush1.bf16.xpose.msra.mxu0 0
        %2896 = vmatprep.subr.bf16.mxu0 0
        %2897 = vmatpush1.bf16.xpose.msra.mxu0 0
        %2898 = vmatprep.mubr.bf16.mxu0 0
        %2899 = vmatmul.mubr.bf16.gmra.mrb[0].mxu0 %v2861
        %v2900 = vpop.f32.mrb[0].mxu0
        %v2901 = vadd.f32 0.0, %v2900
        %v2902 = vpop.f32.mrb[0].mxu0
        %v2903 = vpop.f32.mrb[0].mxu0
        %v2904 = vpop.f32.mrb[0].mxu0
        %2905 = vdwg.mxu0
        %v2907 = vunpack.c.l.b16 %v2552
        %v2908 = vpack.c.b16 %v2907, %v2907
        %2909 = vrot.lane.b32.xlu0 %v2908, 96
        %v2910 = vpop.permute.xlu0 %2909
        %v2912 = vunpack.c.l.b16 %v2560
        %v2913 = vpack.c.b16 %v2912, %v2912
        %2914 = vrot.lane.b32.xlu0 %v2913, 96
        %v2915 = vpop.permute.xlu0 %2914
        %v2917 = vsel %vm702, %v2910, 0
        %v2920 = vsel %vm702, %v2915, 0
        %2922 = vmatprep.subr.bf16.mxu0 0
        %2923 = vmatpush1.bf16.xpose.msra.mxu0 %v2920
        %2924 = vmatprep.subr.bf16.mxu0 0
        %2925 = vmatpush1.bf16.xpose.msra.mxu0 0
        %2926 = vmatprep.subr.bf16.mxu0 0
        %2927 = vmatpush1.bf16.xpose.msra.mxu0 0
        %2928 = vmatprep.subr.bf16.mxu0 0
        %2929 = vmatpush1.bf16.xpose.msra.mxu0 0
        %2930 = vmatprep.subr.bf16.mxu0 0
        %2931 = vmatpush1.bf16.xpose.msra.mxu0 0
        %2932 = vmatprep.subr.bf16.mxu0 0
        %2933 = vmatpush1.bf16.xpose.msra.mxu0 0
        %2934 = vmatprep.subr.bf16.mxu0 0
        %2935 = vmatpush1.bf16.xpose.msra.mxu0 0
        %2936 = vmatprep.subr.bf16.mxu0 0
        %2937 = vmatpush1.bf16.xpose.msra.mxu0 0
        %2938 = vmatprep.subr.bf16.mxu0 0
        %2939 = vmatpush1.bf16.xpose.msra.mxu0 0
        %2940 = vmatprep.subr.bf16.mxu0 0
        %2941 = vmatpush1.bf16.xpose.msra.mxu0 0
        %2942 = vmatprep.subr.bf16.mxu0 0
        %2943 = vmatpush1.bf16.xpose.msra.mxu0 0
        %2944 = vmatprep.subr.bf16.mxu0 0
        %2945 = vmatpush1.bf16.xpose.msra.mxu0 0
        %2946 = vmatprep.subr.bf16.mxu0 0
        %2947 = vmatpush1.bf16.xpose.msra.mxu0 0
        %2948 = vmatprep.subr.bf16.mxu0 0
        %2949 = vmatpush1.bf16.xpose.msra.mxu0 0
        %2950 = vmatprep.subr.bf16.mxu0 0
        %2951 = vmatpush1.bf16.xpose.msra.mxu0 0
        %2952 = vmatprep.subr.bf16.mxu0 0
        %2953 = vmatpush1.bf16.xpose.msra.mxu0 0
        %2954 = vmatprep.mubr.bf16.mxu0 0
        %2955 = vmatmul.mubr.bf16.gmra.mrb[0].mxu0 %v2917
        %v2956 = vpop.f32.mrb[0].mxu0
        %v2957 = vadd.f32 0.0, %v2956
        %v2958 = vpop.f32.mrb[0].mxu0
        %v2959 = vpop.f32.mrb[0].mxu0
        %v2960 = vpop.f32.mrb[0].mxu0
        %2961 = vdwg.mxu0
        %v2963 = vunpack.c.l.b16 %v2553
        %v2964 = vpack.c.b16 %v2963, %v2963
        %2965 = vrot.lane.b32.xlu0 %v2964, 96
        %v2966 = vpop.permute.xlu0 %2965
        %v2968 = vunpack.c.l.b16 %v2561
        %v2969 = vpack.c.b16 %v2968, %v2968
        %2970 = vrot.lane.b32.xlu0 %v2969, 96
        %v2971 = vpop.permute.xlu0 %2970
        %v2973 = vsel %vm702, %v2966, 0
        %v2976 = vsel %vm702, %v2971, 0
        %2978 = vmatprep.subr.bf16.mxu0 0
        %2979 = vmatpush1.bf16.xpose.msra.mxu0 %v2976
        %2980 = vmatprep.subr.bf16.mxu0 0
        %2981 = vmatpush1.bf16.xpose.msra.mxu0 0
        %2982 = vmatprep.subr.bf16.mxu0 0
        %2983 = vmatpush1.bf16.xpose.msra.mxu0 0
        %2984 = vmatprep.subr.bf16.mxu0 0
        %2985 = vmatpush1.bf16.xpose.msra.mxu0 0
        %2986 = vmatprep.subr.bf16.mxu0 0
        %2987 = vmatpush1.bf16.xpose.msra.mxu0 0
        %2988 = vmatprep.subr.bf16.mxu0 0
        %2989 = vmatpush1.bf16.xpose.msra.mxu0 0
        %2990 = vmatprep.subr.bf16.mxu0 0
        %2991 = vmatpush1.bf16.xpose.msra.mxu0 0
        %2992 = vmatprep.subr.bf16.mxu0 0
        %2993 = vmatpush1.bf16.xpose.msra.mxu0 0
        %2994 = vmatprep.subr.bf16.mxu0 0
        %2995 = vmatpush1.bf16.xpose.msra.mxu0 0
        %2996 = vmatprep.subr.bf16.mxu0 0
        %2997 = vmatpush1.bf16.xpose.msra.mxu0 0
        %2998 = vmatprep.subr.bf16.mxu0 0
        %2999 = vmatpush1.bf16.xpose.msra.mxu0 0
        %3000 = vmatprep.subr.bf16.mxu0 0
        %3001 = vmatpush1.bf16.xpose.msra.mxu0 0
        %3002 = vmatprep.subr.bf16.mxu0 0
        %3003 = vmatpush1.bf16.xpose.msra.mxu0 0
        %3004 = vmatprep.subr.bf16.mxu0 0
        %3005 = vmatpush1.bf16.xpose.msra.mxu0 0
        %3006 = vmatprep.subr.bf16.mxu0 0
        %3007 = vmatpush1.bf16.xpose.msra.mxu0 0
        %3008 = vmatprep.subr.bf16.mxu0 0
        %3009 = vmatpush1.bf16.xpose.msra.mxu0 0
        %3010 = vmatprep.mubr.bf16.mxu0 0
        %3011 = vmatmul.mubr.bf16.gmra.mrb[0].mxu0 %v2973
        %v3012 = vpop.f32.mrb[0].mxu0
        %v3013 = vadd.f32 0.0, %v3012
        %v3014 = vpop.f32.mrb[0].mxu0
        %v3015 = vpop.f32.mrb[0].mxu0
        %v3016 = vpop.f32.mrb[0].mxu0
        %3017 = vdwg.mxu0
        %v3018 = vsel %vm1071, %v2621, -inf
        %3019 = vmax.xlane.f32.xlu0 %v3018
        %v3020 = vpop.xlane.xlu0 %3019
        %v3021 = vsel %vm1071, %v2677, -inf
        %3022 = vmax.xlane.f32.xlu0 %v3021
        %v3023 = vpop.xlane.xlu0 %3022
        %v3024 = vsel %vm1071, %v2733, -inf
        %3025 = vmax.xlane.f32.xlu0 %v3024
        %v3026 = vpop.xlane.xlu0 %3025
        %v3027 = vsel %vm1071, %v2789, -inf
        %3028 = vmax.xlane.f32.xlu0 %v3027
        %v3029 = vpop.xlane.xlu0 %3028
        %v3030 = vsel %vm1071, %v2845, -inf
        %3031 = vmax.xlane.f32.xlu0 %v3030
        %v3032 = vpop.xlane.xlu0 %3031
        %v3033 = vsel %vm1071, %v2901, -inf
        %3034 = vmax.xlane.f32.xlu0 %v3033
        %v3035 = vpop.xlane.xlu0 %3034
        %v3036 = vsel %vm1071, %v2957, -inf
        %3037 = vmax.xlane.f32.xlu0 %v3036
        %v3038 = vpop.xlane.xlu0 %3037
        %v3039 = vsel %vm1071, %v3013, -inf
        %3040 = vmax.xlane.f32.xlu0 %v3039
        %v3041 = vpop.xlane.xlu0 %3040
        %v3042 = vsub.f32 %v2621, %v3020
        %v3043 = vsub.f32 %v2677, %v3023
        %v3044 = vsub.f32 %v2733, %v3026
        %v3045 = vsub.f32 %v2789, %v3029
        %v3046 = vsub.f32 %v2845, %v3032
        %v3047 = vsub.f32 %v2901, %v3035
        %v3048 = vsub.f32 %v2957, %v3038
        %v3049 = vsub.f32 %v3013, %v3041
        %v3050 = vmul.f32 %v3042, 1.442695
        %v3051 = vpow.pop %v3050
        %v3052 = vmul.f32 %v3043, 1.442695
        %v3053 = vpow.pop %v3052
        %v3054 = vmul.f32 %v3044, 1.442695
        %v3055 = vpow.pop %v3054
        %v3056 = vmul.f32 %v3045, 1.442695
        %v3057 = vpow.pop %v3056
        %v3058 = vmul.f32 %v3046, 1.442695
        %v3059 = vpow.pop %v3058
        %v3060 = vmul.f32 %v3047, 1.442695
        %v3061 = vpow.pop %v3060
        %v3062 = vmul.f32 %v3048, 1.442695
        %v3063 = vpow.pop %v3062
        %v3064 = vmul.f32 %v3049, 1.442695
        %v3065 = vpow.pop %v3064
        %v3066 = vsel %vm1071, %v3051, 0.0
        %3067 = vadd.xlane.f32.xlu0 %v3066
        %v3068 = vpop.xlane.xlu0 %3067
        %v3069 = vsel %vm1071, %v3053, 0.0
        %3070 = vadd.xlane.f32.xlu0 %v3069
        %v3071 = vpop.xlane.xlu0 %3070
        %v3072 = vsel %vm1071, %v3055, 0.0
        %3073 = vadd.xlane.f32.xlu0 %v3072
        %v3074 = vpop.xlane.xlu0 %3073
        %v3075 = vsel %vm1071, %v3057, 0.0
        %3076 = vadd.xlane.f32.xlu0 %v3075
        %v3077 = vpop.xlane.xlu0 %3076
        %v3078 = vsel %vm1071, %v3059, 0.0
        %3079 = vadd.xlane.f32.xlu0 %v3078
        %v3080 = vpop.xlane.xlu0 %3079
        %v3081 = vsel %vm1071, %v3061, 0.0
        %3082 = vadd.xlane.f32.xlu0 %v3081
        %v3083 = vpop.xlane.xlu0 %3082
        %v3084 = vsel %vm1071, %v3063, 0.0
        %3085 = vadd.xlane.f32.xlu0 %v3084
        %v3086 = vpop.xlane.xlu0 %3085
        %v3087 = vsel %vm1071, %v3065, 0.0
        %3088 = vadd.xlane.f32.xlu0 %v3087
        %v3089 = vpop.xlane.xlu0 %3088
        %v3090 = vrcp.pop %v3068
        %v3091 = vrcp.pop %v3071
        %v3092 = vrcp.pop %v3074
        %v3093 = vrcp.pop %v3077
        %v3094 = vrcp.pop %v3080
        %v3095 = vrcp.pop %v3083
        %v3096 = vrcp.pop %v3086
        %v3097 = vrcp.pop %v3089
        %v3098 = vmul.f32 %v3051, %v3090
        %v3099 = vmul.f32 %v3053, %v3091
        %v3100 = vmul.f32 %v3055, %v3092
        %v3101 = vmul.f32 %v3057, %v3093
        %v3102 = vmul.f32 %v3059, %v3094
        %v3103 = vmul.f32 %v3061, %v3095
        %v3104 = vmul.f32 %v3063, %v3096
        %v3105 = vmul.f32 %v3065, %v3097
        %v3106 = vpack.c.bf16 %v3098, %v3098
        %v3107 = vpack.c.bf16 %v3099, %v3099
        %v3108 = vpack.c.bf16 %v3100, %v3100
        %v3109 = vpack.c.bf16 %v3101, %v3101
        %v3110 = vpack.c.bf16 %v3102, %v3102
        %v3111 = vpack.c.bf16 %v3103, %v3103
        %v3112 = vpack.c.bf16 %v3104, %v3104
        %v3113 = vpack.c.bf16 %v3105, %v3105
        %v3115 = vunpack.c.l.b16 %v2562
        %v3116 = vpack.c.b16 %v3115, %v3115
        %3117 = vrot.lane.b32.xlu0 %v3116, 96
        %v3118 = vpop.permute.xlu0 %3117
        %v3120 = vsel %vm1071, %v3106, 0
        %v3123 = vsel %vm1171, %v3118, 0
        %3125 = vmatprep.subr.bf16.mxu0 0
        %3126 = vmatpush1.bf16.msra.mxu0 %v3123
        %3127 = vmatprep.subr.bf16.mxu0 0
        %3128 = vmatpush1.bf16.msra.mxu0 0
        %3129 = vmatprep.subr.bf16.mxu0 0
        %3130 = vmatpush1.bf16.msra.mxu0 0
        %3131 = vmatprep.subr.bf16.mxu0 0
        %3132 = vmatpush1.bf16.msra.mxu0 0
        %3133 = vmatprep.subr.bf16.mxu0 0
        %3134 = vmatpush1.bf16.msra.mxu0 0
        %3135 = vmatprep.subr.bf16.mxu0 0
        %3136 = vmatpush1.bf16.msra.mxu0 0
        %3137 = vmatprep.subr.bf16.mxu0 0
        %3138 = vmatpush1.bf16.msra.mxu0 0
        %3139 = vmatprep.subr.bf16.mxu0 0
        %3140 = vmatpush1.bf16.msra.mxu0 0
        %3141 = vmatprep.subr.bf16.mxu0 0
        %3142 = vmatpush1.bf16.msra.mxu0 0
        %3143 = vmatprep.subr.bf16.mxu0 0
        %3144 = vmatpush1.bf16.msra.mxu0 0
        %3145 = vmatprep.subr.bf16.mxu0 0
        %3146 = vmatpush1.bf16.msra.mxu0 0
        %3147 = vmatprep.subr.bf16.mxu0 0
        %3148 = vmatpush1.bf16.msra.mxu0 0
        %3149 = vmatprep.subr.bf16.mxu0 0
        %3150 = vmatpush1.bf16.msra.mxu0 0
        %3151 = vmatprep.subr.bf16.mxu0 0
        %3152 = vmatpush1.bf16.msra.mxu0 0
        %3153 = vmatprep.subr.bf16.mxu0 0
        %3154 = vmatpush1.bf16.msra.mxu0 0
        %3155 = vmatprep.subr.bf16.mxu0 0
        %3156 = vmatpush1.bf16.msra.mxu0 0
        %3157 = vmatprep.mubr.bf16.mxu0 0
        %3158 = vmatmul.mubr.bf16.gmra.mrb[0].mxu0 %v3120
        %v3159 = vpop.f32.mrb[0].mxu0
        %v3160 = vadd.f32 0.0, %v3159
        %v3161 = vpop.f32.mrb[0].mxu0
        %v3162 = vpop.f32.mrb[0].mxu0
        %v3163 = vpop.f32.mrb[0].mxu0
        %3164 = vdwg.mxu0
        %v3166 = vunpack.c.l.b16 %v2563
        %v3167 = vpack.c.b16 %v3166, %v3166
        %3168 = vrot.lane.b32.xlu0 %v3167, 96
        %v3169 = vpop.permute.xlu0 %3168
        %v3171 = vsel %vm1071, %v3107, 0
        %v3174 = vsel %vm1171, %v3169, 0
        %3176 = vmatprep.subr.bf16.mxu0 0
        %3177 = vmatpush1.bf16.msra.mxu0 %v3174
        %3178 = vmatprep.subr.bf16.mxu0 0
        %3179 = vmatpush1.bf16.msra.mxu0 0
        %3180 = vmatprep.subr.bf16.mxu0 0
        %3181 = vmatpush1.bf16.msra.mxu0 0
        %3182 = vmatprep.subr.bf16.mxu0 0
        %3183 = vmatpush1.bf16.msra.mxu0 0
        %3184 = vmatprep.subr.bf16.mxu0 0
        %3185 = vmatpush1.bf16.msra.mxu0 0
        %3186 = vmatprep.subr.bf16.mxu0 0
        %3187 = vmatpush1.bf16.msra.mxu0 0
        %3188 = vmatprep.subr.bf16.mxu0 0
        %3189 = vmatpush1.bf16.msra.mxu0 0
        %3190 = vmatprep.subr.bf16.mxu0 0
        %3191 = vmatpush1.bf16.msra.mxu0 0
        %3192 = vmatprep.subr.bf16.mxu0 0
        %3193 = vmatpush1.bf16.msra.mxu0 0
        %3194 = vmatprep.subr.bf16.mxu0 0
        %3195 = vmatpush1.bf16.msra.mxu0 0
        %3196 = vmatprep.subr.bf16.mxu0 0
        %3197 = vmatpush1.bf16.msra.mxu0 0
        %3198 = vmatprep.subr.bf16.mxu0 0
        %3199 = vmatpush1.bf16.msra.mxu0 0
        %3200 = vmatprep.subr.bf16.mxu0 0
        %3201 = vmatpush1.bf16.msra.mxu0 0
        %3202 = vmatprep.subr.bf16.mxu0 0
        %3203 = vmatpush1.bf16.msra.mxu0 0
        %3204 = vmatprep.subr.bf16.mxu0 0
        %3205 = vmatpush1.bf16.msra.mxu0 0
        %3206 = vmatprep.subr.bf16.mxu0 0
        %3207 = vmatpush1.bf16.msra.mxu0 0
        %3208 = vmatprep.mubr.bf16.mxu0 0
        %3209 = vmatmul.mubr.bf16.gmra.mrb[0].mxu0 %v3171
        %v3210 = vpop.f32.mrb[0].mxu0
        %v3211 = vadd.f32 0.0, %v3210
        %v3212 = vpop.f32.mrb[0].mxu0
        %v3213 = vpop.f32.mrb[0].mxu0
        %v3214 = vpop.f32.mrb[0].mxu0
        %3215 = vdwg.mxu0
        %v3217 = vunpack.c.l.b16 %v2564
        %v3218 = vpack.c.b16 %v3217, %v3217
        %3219 = vrot.lane.b32.xlu0 %v3218, 96
        %v3220 = vpop.permute.xlu0 %3219
        %v3222 = vsel %vm1071, %v3108, 0
        %v3225 = vsel %vm1171, %v3220, 0
        %3227 = vmatprep.subr.bf16.mxu0 0
        %3228 = vmatpush1.bf16.msra.mxu0 %v3225
        %3229 = vmatprep.subr.bf16.mxu0 0
        %3230 = vmatpush1.bf16.msra.mxu0 0
        %3231 = vmatprep.subr.bf16.mxu0 0
        %3232 = vmatpush1.bf16.msra.mxu0 0
        %3233 = vmatprep.subr.bf16.mxu0 0
        %3234 = vmatpush1.bf16.msra.mxu0 0
        %3235 = vmatprep.subr.bf16.mxu0 0
        %3236 = vmatpush1.bf16.msra.mxu0 0
        %3237 = vmatprep.subr.bf16.mxu0 0
        %3238 = vmatpush1.bf16.msra.mxu0 0
        %3239 = vmatprep.subr.bf16.mxu0 0
        %3240 = vmatpush1.bf16.msra.mxu0 0
        %3241 = vmatprep.subr.bf16.mxu0 0
        %3242 = vmatpush1.bf16.msra.mxu0 0
        %3243 = vmatprep.subr.bf16.mxu0 0
        %3244 = vmatpush1.bf16.msra.mxu0 0
        %3245 = vmatprep.subr.bf16.mxu0 0
        %3246 = vmatpush1.bf16.msra.mxu0 0
        %3247 = vmatprep.subr.bf16.mxu0 0
        %3248 = vmatpush1.bf16.msra.mxu0 0
        %3249 = vmatprep.subr.bf16.mxu0 0
        %3250 = vmatpush1.bf16.msra.mxu0 0
        %3251 = vmatprep.subr.bf16.mxu0 0
        %3252 = vmatpush1.bf16.msra.mxu0 0
        %3253 = vmatprep.subr.bf16.mxu0 0
        %3254 = vmatpush1.bf16.msra.mxu0 0
        %3255 = vmatprep.subr.bf16.mxu0 0
        %3256 = vmatpush1.bf16.msra.mxu0 0
        %3257 = vmatprep.subr.bf16.mxu0 0
        %3258 = vmatpush1.bf16.msra.mxu0 0
        %3259 = vmatprep.mubr.bf16.mxu0 0
        %3260 = vmatmul.mubr.bf16.gmra.mrb[0].mxu0 %v3222
        %v3261 = vpop.f32.mrb[0].mxu0
        %v3262 = vadd.f32 0.0, %v3261
        %v3263 = vpop.f32.mrb[0].mxu0
        %v3264 = vpop.f32.mrb[0].mxu0
        %v3265 = vpop.f32.mrb[0].mxu0
        %3266 = vdwg.mxu0
        %v3268 = vunpack.c.l.b16 %v2565
        %v3269 = vpack.c.b16 %v3268, %v3268
        %3270 = vrot.lane.b32.xlu0 %v3269, 96
        %v3271 = vpop.permute.xlu0 %3270
        %v3273 = vsel %vm1071, %v3109, 0
        %v3276 = vsel %vm1171, %v3271, 0
        %3278 = vmatprep.subr.bf16.mxu0 0
        %3279 = vmatpush1.bf16.msra.mxu0 %v3276
        %3280 = vmatprep.subr.bf16.mxu0 0
        %3281 = vmatpush1.bf16.msra.mxu0 0
        %3282 = vmatprep.subr.bf16.mxu0 0
        %3283 = vmatpush1.bf16.msra.mxu0 0
        %3284 = vmatprep.subr.bf16.mxu0 0
        %3285 = vmatpush1.bf16.msra.mxu0 0
        %3286 = vmatprep.subr.bf16.mxu0 0
        %3287 = vmatpush1.bf16.msra.mxu0 0
        %3288 = vmatprep.subr.bf16.mxu0 0
        %3289 = vmatpush1.bf16.msra.mxu0 0
        %3290 = vmatprep.subr.bf16.mxu0 0
        %3291 = vmatpush1.bf16.msra.mxu0 0
        %3292 = vmatprep.subr.bf16.mxu0 0
        %3293 = vmatpush1.bf16.msra.mxu0 0
        %3294 = vmatprep.subr.bf16.mxu0 0
        %3295 = vmatpush1.bf16.msra.mxu0 0
        %3296 = vmatprep.subr.bf16.mxu0 0
        %3297 = vmatpush1.bf16.msra.mxu0 0
        %3298 = vmatprep.subr.bf16.mxu0 0
        %3299 = vmatpush1.bf16.msra.mxu0 0
        %3300 = vmatprep.subr.bf16.mxu0 0
        %3301 = vmatpush1.bf16.msra.mxu0 0
        %3302 = vmatprep.subr.bf16.mxu0 0
        %3303 = vmatpush1.bf16.msra.mxu0 0
        %3304 = vmatprep.subr.bf16.mxu0 0
        %3305 = vmatpush1.bf16.msra.mxu0 0
        %3306 = vmatprep.subr.bf16.mxu0 0
        %3307 = vmatpush1.bf16.msra.mxu0 0
        %3308 = vmatprep.subr.bf16.mxu0 0
        %3309 = vmatpush1.bf16.msra.mxu0 0
        %3310 = vmatprep.mubr.bf16.mxu0 0
        %3311 = vmatmul.mubr.bf16.gmra.mrb[0].mxu0 %v3273
        %v3312 = vpop.f32.mrb[0].mxu0
        %v3313 = vadd.f32 0.0, %v3312
        %v3314 = vpop.f32.mrb[0].mxu0
        %v3315 = vpop.f32.mrb[0].mxu0
        %v3316 = vpop.f32.mrb[0].mxu0
        %3317 = vdwg.mxu0
        %v3319 = vunpack.c.l.b16 %v2566
        %v3320 = vpack.c.b16 %v3319, %v3319
        %3321 = vrot.lane.b32.xlu0 %v3320, 96
        %v3322 = vpop.permute.xlu0 %3321
        %v3324 = vsel %vm1071, %v3110, 0
        %v3327 = vsel %vm1171, %v3322, 0
        %3329 = vmatprep.subr.bf16.mxu0 0
        %3330 = vmatpush1.bf16.msra.mxu0 %v3327
        %3331 = vmatprep.subr.bf16.mxu0 0
        %3332 = vmatpush1.bf16.msra.mxu0 0
        %3333 = vmatprep.subr.bf16.mxu0 0
        %3334 = vmatpush1.bf16.msra.mxu0 0
        %3335 = vmatprep.subr.bf16.mxu0 0
        %3336 = vmatpush1.bf16.msra.mxu0 0
        %3337 = vmatprep.subr.bf16.mxu0 0
        %3338 = vmatpush1.bf16.msra.mxu0 0
        %3339 = vmatprep.subr.bf16.mxu0 0
        %3340 = vmatpush1.bf16.msra.mxu0 0
        %3341 = vmatprep.subr.bf16.mxu0 0
        %3342 = vmatpush1.bf16.msra.mxu0 0
        %3343 = vmatprep.subr.bf16.mxu0 0
        %3344 = vmatpush1.bf16.msra.mxu0 0
        %3345 = vmatprep.subr.bf16.mxu0 0
        %3346 = vmatpush1.bf16.msra.mxu0 0
        %3347 = vmatprep.subr.bf16.mxu0 0
        %3348 = vmatpush1.bf16.msra.mxu0 0
        %3349 = vmatprep.subr.bf16.mxu0 0
        %3350 = vmatpush1.bf16.msra.mxu0 0
        %3351 = vmatprep.subr.bf16.mxu0 0
        %3352 = vmatpush1.bf16.msra.mxu0 0
        %3353 = vmatprep.subr.bf16.mxu0 0
        %3354 = vmatpush1.bf16.msra.mxu0 0
        %3355 = vmatprep.subr.bf16.mxu0 0
        %3356 = vmatpush1.bf16.msra.mxu0 0
        %3357 = vmatprep.subr.bf16.mxu0 0
        %3358 = vmatpush1.bf16.msra.mxu0 0
        %3359 = vmatprep.subr.bf16.mxu0 0
        %3360 = vmatpush1.bf16.msra.mxu0 0
        %3361 = vmatprep.mubr.bf16.mxu0 0
        %3362 = vmatmul.mubr.bf16.gmra.mrb[0].mxu0 %v3324
        %v3363 = vpop.f32.mrb[0].mxu0
        %v3364 = vadd.f32 0.0, %v3363
        %v3365 = vpop.f32.mrb[0].mxu0
        %v3366 = vpop.f32.mrb[0].mxu0
        %v3367 = vpop.f32.mrb[0].mxu0
        %3368 = vdwg.mxu0
        %v3370 = vunpack.c.l.b16 %v2567
        %v3371 = vpack.c.b16 %v3370, %v3370
        %3372 = vrot.lane.b32.xlu0 %v3371, 96
        %v3373 = vpop.permute.xlu0 %3372
        %v3375 = vsel %vm1071, %v3111, 0
        %v3378 = vsel %vm1171, %v3373, 0
        %3380 = vmatprep.subr.bf16.mxu0 0
        %3381 = vmatpush1.bf16.msra.mxu0 %v3378
        %3382 = vmatprep.subr.bf16.mxu0 0
        %3383 = vmatpush1.bf16.msra.mxu0 0
        %3384 = vmatprep.subr.bf16.mxu0 0
        %3385 = vmatpush1.bf16.msra.mxu0 0
        %3386 = vmatprep.subr.bf16.mxu0 0
        %3387 = vmatpush1.bf16.msra.mxu0 0
        %3388 = vmatprep.subr.bf16.mxu0 0
        %3389 = vmatpush1.bf16.msra.mxu0 0
        %3390 = vmatprep.subr.bf16.mxu0 0
        %3391 = vmatpush1.bf16.msra.mxu0 0
        %3392 = vmatprep.subr.bf16.mxu0 0
        %3393 = vmatpush1.bf16.msra.mxu0 0
        %3394 = vmatprep.subr.bf16.mxu0 0
        %3395 = vmatpush1.bf16.msra.mxu0 0
        %3396 = vmatprep.subr.bf16.mxu0 0
        %3397 = vmatpush1.bf16.msra.mxu0 0
        %3398 = vmatprep.subr.bf16.mxu0 0
        %3399 = vmatpush1.bf16.msra.mxu0 0
        %3400 = vmatprep.subr.bf16.mxu0 0
        %3401 = vmatpush1.bf16.msra.mxu0 0
        %3402 = vmatprep.subr.bf16.mxu0 0
        %3403 = vmatpush1.bf16.msra.mxu0 0
        %3404 = vmatprep.subr.bf16.mxu0 0
        %3405 = vmatpush1.bf16.msra.mxu0 0
        %3406 = vmatprep.subr.bf16.mxu0 0
        %3407 = vmatpush1.bf16.msra.mxu0 0
        %3408 = vmatprep.subr.bf16.mxu0 0
        %3409 = vmatpush1.bf16.msra.mxu0 0
        %3410 = vmatprep.subr.bf16.mxu0 0
        %3411 = vmatpush1.bf16.msra.mxu0 0
        %3412 = vmatprep.mubr.bf16.mxu0 0
        %3413 = vmatmul.mubr.bf16.gmra.mrb[0].mxu0 %v3375
        %v3414 = vpop.f32.mrb[0].mxu0
        %v3415 = vadd.f32 0.0, %v3414
        %v3416 = vpop.f32.mrb[0].mxu0
        %v3417 = vpop.f32.mrb[0].mxu0
        %v3418 = vpop.f32.mrb[0].mxu0
        %3419 = vdwg.mxu0
        %v3421 = vunpack.c.l.b16 %v2568
        %v3422 = vpack.c.b16 %v3421, %v3421
        %3423 = vrot.lane.b32.xlu0 %v3422, 96
        %v3424 = vpop.permute.xlu0 %3423
        %v3426 = vsel %vm1071, %v3112, 0
        %v3429 = vsel %vm1171, %v3424, 0
        %3431 = vmatprep.subr.bf16.mxu0 0
        %3432 = vmatpush1.bf16.msra.mxu0 %v3429
        %3433 = vmatprep.subr.bf16.mxu0 0
        %3434 = vmatpush1.bf16.msra.mxu0 0
        %3435 = vmatprep.subr.bf16.mxu0 0
        %3436 = vmatpush1.bf16.msra.mxu0 0
        %3437 = vmatprep.subr.bf16.mxu0 0
        %3438 = vmatpush1.bf16.msra.mxu0 0
        %3439 = vmatprep.subr.bf16.mxu0 0
        %3440 = vmatpush1.bf16.msra.mxu0 0
        %3441 = vmatprep.subr.bf16.mxu0 0
        %3442 = vmatpush1.bf16.msra.mxu0 0
        %3443 = vmatprep.subr.bf16.mxu0 0
        %3444 = vmatpush1.bf16.msra.mxu0 0
        %3445 = vmatprep.subr.bf16.mxu0 0
        %3446 = vmatpush1.bf16.msra.mxu0 0
        %3447 = vmatprep.subr.bf16.mxu0 0
        %3448 = vmatpush1.bf16.msra.mxu0 0
        %3449 = vmatprep.subr.bf16.mxu0 0
        %3450 = vmatpush1.bf16.msra.mxu0 0
        %3451 = vmatprep.subr.bf16.mxu0 0
        %3452 = vmatpush1.bf16.msra.mxu0 0
        %3453 = vmatprep.subr.bf16.mxu0 0
        %3454 = vmatpush1.bf16.msra.mxu0 0
        %3455 = vmatprep.subr.bf16.mxu0 0
        %3456 = vmatpush1.bf16.msra.mxu0 0
        %3457 = vmatprep.subr.bf16.mxu0 0
        %3458 = vmatpush1.bf16.msra.mxu0 0
        %3459 = vmatprep.subr.bf16.mxu0 0
        %3460 = vmatpush1.bf16.msra.mxu0 0
        %3461 = vmatprep.subr.bf16.mxu0 0
        %3462 = vmatpush1.bf16.msra.mxu0 0
        %3463 = vmatprep.mubr.bf16.mxu0 0
        %3464 = vmatmul.mubr.bf16.gmra.mrb[0].mxu0 %v3426
        %v3465 = vpop.f32.mrb[0].mxu0
        %v3466 = vadd.f32 0.0, %v3465
        %v3467 = vpop.f32.mrb[0].mxu0
        %v3468 = vpop.f32.mrb[0].mxu0
        %v3469 = vpop.f32.mrb[0].mxu0
        %3470 = vdwg.mxu0
        %v3472 = vunpack.c.l.b16 %v2569
        %v3473 = vpack.c.b16 %v3472, %v3472
        %3474 = vrot.lane.b32.xlu0 %v3473, 96
        %v3475 = vpop.permute.xlu0 %3474
        %v3477 = vsel %vm1071, %v3113, 0
        %v3480 = vsel %vm1171, %v3475, 0
        %3482 = vmatprep.subr.bf16.mxu0 0
        %3483 = vmatpush1.bf16.msra.mxu0 %v3480
        %3484 = vmatprep.subr.bf16.mxu0 0
        %3485 = vmatpush1.bf16.msra.mxu0 0
        %3486 = vmatprep.subr.bf16.mxu0 0
        %3487 = vmatpush1.bf16.msra.mxu0 0
        %3488 = vmatprep.subr.bf16.mxu0 0
        %3489 = vmatpush1.bf16.msra.mxu0 0
        %3490 = vmatprep.subr.bf16.mxu0 0
        %3491 = vmatpush1.bf16.msra.mxu0 0
        %3492 = vmatprep.subr.bf16.mxu0 0
        %3493 = vmatpush1.bf16.msra.mxu0 0
        %3494 = vmatprep.subr.bf16.mxu0 0
        %3495 = vmatpush1.bf16.msra.mxu0 0
        %3496 = vmatprep.subr.bf16.mxu0 0
        %3497 = vmatpush1.bf16.msra.mxu0 0
        %3498 = vmatprep.subr.bf16.mxu0 0
        %3499 = vmatpush1.bf16.msra.mxu0 0
        %3500 = vmatprep.subr.bf16.mxu0 0
        %3501 = vmatpush1.bf16.msra.mxu0 0
        %3502 = vmatprep.subr.bf16.mxu0 0
        %3503 = vmatpush1.bf16.msra.mxu0 0
        %3504 = vmatprep.subr.bf16.mxu0 0
        %3505 = vmatpush1.bf16.msra.mxu0 0
        %3506 = vmatprep.subr.bf16.mxu0 0
        %3507 = vmatpush1.bf16.msra.mxu0 0
        %3508 = vmatprep.subr.bf16.mxu0 0
        %3509 = vmatpush1.bf16.msra.mxu0 0
        %3510 = vmatprep.subr.bf16.mxu0 0
        %3511 = vmatpush1.bf16.msra.mxu0 0
        %3512 = vmatprep.subr.bf16.mxu0 0
        %3513 = vmatpush1.bf16.msra.mxu0 0
        %3514 = vmatprep.mubr.bf16.mxu0 0
        %3515 = vmatmul.mubr.bf16.gmra.mrb[0].mxu0 %v3477
        %v3516 = vpop.f32.mrb[0].mxu0
        %v3517 = vadd.f32 0.0, %v3516
        %v3518 = vpop.f32.mrb[0].mxu0
        %v3519 = vpop.f32.mrb[0].mxu0
        %v3520 = vpop.f32.mrb[0].mxu0
        %3521 = vdwg.mxu0
        %v3522 = vpack.c.bf16 %v3211, %v3160
        %v3523 = vpack.c.bf16 %v3313, %v3262
        %v3524 = vpack.c.bf16 %v3415, %v3364
        %v3525 = vpack.c.bf16 %v3517, %v3466
        %3530 = vrot.lane.b32.xlu0 %v3522, 32
        %v3531 = vpop.permute.xlu0 %3530
        %3532 = vrot.lane.b32.xlu0 %v3523, 32
        %v3533 = vpop.permute.xlu0 %3532
        %3534 = vrot.lane.b32.xlu0 %v3524, 32
        %v3535 = vpop.permute.xlu0 %3534
        %3536 = vrot.lane.b32.xlu0 %v3525, 32
        %v3537 = vpop.permute.xlu0 %3536
        %vm3542 = vcmask 392448
        %3543 = vst.msk [vmem:[#allocation3] sm:$0xff] %vm3542, %v3531
        %3544 = vst.msk [vmem:[#allocation3 + $0x8] sm:$0xff] %vm3542, %v3533
        %3545 = vst.msk [vmem:[#allocation3 + $0x10] sm:$0xff] %vm3542, %v3535
        %3546 = vst.msk [vmem:[#allocation3 + $0x18] sm:$0xff] %vm3542, %v3537
        %v3547 = vld [vmem:[#allocation2] sm:$0xf]
        %v3548 = vld [vmem:[#allocation2 + $0xc] sm:$0xf]
        %v3549 = vld [vmem:[#allocation2 + $0x18] sm:$0xf]
        %v3550 = vld [vmem:[#allocation2 + $0x24] sm:$0xf]
        %v3551 = vld [vmem:[#allocation2 + $0x30] sm:$0xf]
        %v3552 = vld [vmem:[#allocation2 + $0x3c] sm:$0xf]
        %v3553 = vld [vmem:[#allocation2 + $0x48] sm:$0xf]
        %v3554 = vld [vmem:[#allocation2 + $0x54] sm:$0xf]
        %v3555 = vld [vmem:[#allocation2 + $0x4] sm:$0xf]
        %v3556 = vld [vmem:[#allocation2 + $0x10] sm:$0xf]
        %v3557 = vld [vmem:[#allocation2 + $0x1c] sm:$0xf]
        %v3558 = vld [vmem:[#allocation2 + $0x28] sm:$0xf]
        %v3559 = vld [vmem:[#allocation2 + $0x34] sm:$0xf]
        %v3560 = vld [vmem:[#allocation2 + $0x40] sm:$0xf]
        %v3561 = vld [vmem:[#allocation2 + $0x4c] sm:$0xf]
        %v3562 = vld [vmem:[#allocation2 + $0x58] sm:$0xf]
        %v3563 = vld [vmem:[#allocation2 + $0x8] sm:$0xf]
        %v3564 = vld [vmem:[#allocation2 + $0x14] sm:$0xf]
        %v3565 = vld [vmem:[#allocation2 + $0x20] sm:$0xf]
        %v3566 = vld [vmem:[#allocation2 + $0x2c] sm:$0xf]
        %v3567 = vld [vmem:[#allocation2 + $0x38] sm:$0xf]
        %v3568 = vld [vmem:[#allocation2 + $0x44] sm:$0xf]
        %v3569 = vld [vmem:[#allocation2 + $0x50] sm:$0xf]
        %v3570 = vld [vmem:[#allocation2 + $0x5c] sm:$0xf]
        %v3572 = vunpack.c.l.b16 %v3547
        %v3573 = vpack.c.b16 %v3572, %v3572
        %3574 = vrot.lane.b32.xlu0 %v3573, 80
        %v3575 = vpop.permute.xlu0 %3574
        %v3577 = vunpack.c.l.b16 %v3555
        %v3578 = vpack.c.b16 %v3577, %v3577
        %3579 = vrot.lane.b32.xlu0 %v3578, 80
        %v3580 = vpop.permute.xlu0 %3579
        %v3582 = vsel %vm702, %v3575, 0
        %v3585 = vsel %vm702, %v3580, 0
        %3587 = vmatprep.subr.bf16.mxu0 0
        %3588 = vmatpush1.bf16.xpose.msra.mxu0 %v3585
        %3589 = vmatprep.subr.bf16.mxu0 0
        %3590 = vmatpush1.bf16.xpose.msra.mxu0 0
        %3591 = vmatprep.subr.bf16.mxu0 0
        %3592 = vmatpush1.bf16.xpose.msra.mxu0 0
        %3593 = vmatprep.subr.bf16.mxu0 0
        %3594 = vmatpush1.bf16.xpose.msra.mxu0 0
        %3595 = vmatprep.subr.bf16.mxu0 0
        %3596 = vmatpush1.bf16.xpose.msra.mxu0 0
        %3597 = vmatprep.subr.bf16.mxu0 0
        %3598 = vmatpush1.bf16.xpose.msra.mxu0 0
        %3599 = vmatprep.subr.bf16.mxu0 0
        %3600 = vmatpush1.bf16.xpose.msra.mxu0 0
        %3601 = vmatprep.subr.bf16.mxu0 0
        %3602 = vmatpush1.bf16.xpose.msra.mxu0 0
        %3603 = vmatprep.subr.bf16.mxu0 0
        %3604 = vmatpush1.bf16.xpose.msra.mxu0 0
        %3605 = vmatprep.subr.bf16.mxu0 0
        %3606 = vmatpush1.bf16.xpose.msra.mxu0 0
        %3607 = vmatprep.subr.bf16.mxu0 0
        %3608 = vmatpush1.bf16.xpose.msra.mxu0 0
        %3609 = vmatprep.subr.bf16.mxu0 0
        %3610 = vmatpush1.bf16.xpose.msra.mxu0 0
        %3611 = vmatprep.subr.bf16.mxu0 0
        %3612 = vmatpush1.bf16.xpose.msra.mxu0 0
        %3613 = vmatprep.subr.bf16.mxu0 0
        %3614 = vmatpush1.bf16.xpose.msra.mxu0 0
        %3615 = vmatprep.subr.bf16.mxu0 0
        %3616 = vmatpush1.bf16.xpose.msra.mxu0 0
        %3617 = vmatprep.subr.bf16.mxu0 0
        %3618 = vmatpush1.bf16.xpose.msra.mxu0 0
        %3619 = vmatprep.mubr.bf16.mxu0 0
        %3620 = vmatmul.mubr.bf16.gmra.mrb[0].mxu0 %v3582
        %v3621 = vpop.f32.mrb[0].mxu0
        %v3622 = vadd.f32 0.0, %v3621
        %v3623 = vpop.f32.mrb[0].mxu0
        %v3624 = vpop.f32.mrb[0].mxu0
        %v3625 = vpop.f32.mrb[0].mxu0
        %3626 = vdwg.mxu0
        %v3628 = vunpack.c.l.b16 %v3548
        %v3629 = vpack.c.b16 %v3628, %v3628
        %3630 = vrot.lane.b32.xlu0 %v3629, 80
        %v3631 = vpop.permute.xlu0 %3630
        %v3633 = vunpack.c.l.b16 %v3556
        %v3634 = vpack.c.b16 %v3633, %v3633
        %3635 = vrot.lane.b32.xlu0 %v3634, 80
        %v3636 = vpop.permute.xlu0 %3635
        %v3638 = vsel %vm702, %v3631, 0
        %v3641 = vsel %vm702, %v3636, 0
        %3643 = vmatprep.subr.bf16.mxu0 0
        %3644 = vmatpush1.bf16.xpose.msra.mxu0 %v3641
        %3645 = vmatprep.subr.bf16.mxu0 0
        %3646 = vmatpush1.bf16.xpose.msra.mxu0 0
        %3647 = vmatprep.subr.bf16.mxu0 0
        %3648 = vmatpush1.bf16.xpose.msra.mxu0 0
        %3649 = vmatprep.subr.bf16.mxu0 0
        %3650 = vmatpush1.bf16.xpose.msra.mxu0 0
        %3651 = vmatprep.subr.bf16.mxu0 0
        %3652 = vmatpush1.bf16.xpose.msra.mxu0 0
        %3653 = vmatprep.subr.bf16.mxu0 0
        %3654 = vmatpush1.bf16.xpose.msra.mxu0 0
        %3655 = vmatprep.subr.bf16.mxu0 0
        %3656 = vmatpush1.bf16.xpose.msra.mxu0 0
        %3657 = vmatprep.subr.bf16.mxu0 0
        %3658 = vmatpush1.bf16.xpose.msra.mxu0 0
        %3659 = vmatprep.subr.bf16.mxu0 0
        %3660 = vmatpush1.bf16.xpose.msra.mxu0 0
        %3661 = vmatprep.subr.bf16.mxu0 0
        %3662 = vmatpush1.bf16.xpose.msra.mxu0 0
        %3663 = vmatprep.subr.bf16.mxu0 0
        %3664 = vmatpush1.bf16.xpose.msra.mxu0 0
        %3665 = vmatprep.subr.bf16.mxu0 0
        %3666 = vmatpush1.bf16.xpose.msra.mxu0 0
        %3667 = vmatprep.subr.bf16.mxu0 0
        %3668 = vmatpush1.bf16.xpose.msra.mxu0 0
        %3669 = vmatprep.subr.bf16.mxu0 0
        %3670 = vmatpush1.bf16.xpose.msra.mxu0 0
        %3671 = vmatprep.subr.bf16.mxu0 0
        %3672 = vmatpush1.bf16.xpose.msra.mxu0 0
        %3673 = vmatprep.subr.bf16.mxu0 0
        %3674 = vmatpush1.bf16.xpose.msra.mxu0 0
        %3675 = vmatprep.mubr.bf16.mxu0 0
        %3676 = vmatmul.mubr.bf16.gmra.mrb[0].mxu0 %v3638
        %v3677 = vpop.f32.mrb[0].mxu0
        %v3678 = vadd.f32 0.0, %v3677
        %v3679 = vpop.f32.mrb[0].mxu0
        %v3680 = vpop.f32.mrb[0].mxu0
        %v3681 = vpop.f32.mrb[0].mxu0
        %3682 = vdwg.mxu0
        %v3684 = vunpack.c.l.b16 %v3549
        %v3685 = vpack.c.b16 %v3684, %v3684
        %3686 = vrot.lane.b32.xlu0 %v3685, 80
        %v3687 = vpop.permute.xlu0 %3686
        %v3689 = vunpack.c.l.b16 %v3557
        %v3690 = vpack.c.b16 %v3689, %v3689
        %3691 = vrot.lane.b32.xlu0 %v3690, 80
        %v3692 = vpop.permute.xlu0 %3691
        %v3694 = vsel %vm702, %v3687, 0
        %v3697 = vsel %vm702, %v3692, 0
        %3699 = vmatprep.subr.bf16.mxu0 0
        %3700 = vmatpush1.bf16.xpose.msra.mxu0 %v3697
        %3701 = vmatprep.subr.bf16.mxu0 0
        %3702 = vmatpush1.bf16.xpose.msra.mxu0 0
        %3703 = vmatprep.subr.bf16.mxu0 0
        %3704 = vmatpush1.bf16.xpose.msra.mxu0 0
        %3705 = vmatprep.subr.bf16.mxu0 0
        %3706 = vmatpush1.bf16.xpose.msra.mxu0 0
        %3707 = vmatprep.subr.bf16.mxu0 0
        %3708 = vmatpush1.bf16.xpose.msra.mxu0 0
        %3709 = vmatprep.subr.bf16.mxu0 0
        %3710 = vmatpush1.bf16.xpose.msra.mxu0 0
        %3711 = vmatprep.subr.bf16.mxu0 0
        %3712 = vmatpush1.bf16.xpose.msra.mxu0 0
        %3713 = vmatprep.subr.bf16.mxu0 0
        %3714 = vmatpush1.bf16.xpose.msra.mxu0 0
        %3715 = vmatprep.subr.bf16.mxu0 0
        %3716 = vmatpush1.bf16.xpose.msra.mxu0 0
        %3717 = vmatprep.subr.bf16.mxu0 0
        %3718 = vmatpush1.bf16.xpose.msra.mxu0 0
        %3719 = vmatprep.subr.bf16.mxu0 0
        %3720 = vmatpush1.bf16.xpose.msra.mxu0 0
        %3721 = vmatprep.subr.bf16.mxu0 0
        %3722 = vmatpush1.bf16.xpose.msra.mxu0 0
        %3723 = vmatprep.subr.bf16.mxu0 0
        %3724 = vmatpush1.bf16.xpose.msra.mxu0 0
        %3725 = vmatprep.subr.bf16.mxu0 0
        %3726 = vmatpush1.bf16.xpose.msra.mxu0 0
        %3727 = vmatprep.subr.bf16.mxu0 0
        %3728 = vmatpush1.bf16.xpose.msra.mxu0 0
        %3729 = vmatprep.subr.bf16.mxu0 0
        %3730 = vmatpush1.bf16.xpose.msra.mxu0 0
        %3731 = vmatprep.mubr.bf16.mxu0 0
        %3732 = vmatmul.mubr.bf16.gmra.mrb[0].mxu0 %v3694
        %v3733 = vpop.f32.mrb[0].mxu0
        %v3734 = vadd.f32 0.0, %v3733
        %v3735 = vpop.f32.mrb[0].mxu0
        %v3736 = vpop.f32.mrb[0].mxu0
        %v3737 = vpop.f32.mrb[0].mxu0
        %3738 = vdwg.mxu0
        %v3740 = vunpack.c.l.b16 %v3550
        %v3741 = vpack.c.b16 %v3740, %v3740
        %3742 = vrot.lane.b32.xlu0 %v3741, 80
        %v3743 = vpop.permute.xlu0 %3742
        %v3745 = vunpack.c.l.b16 %v3558
        %v3746 = vpack.c.b16 %v3745, %v3745
        %3747 = vrot.lane.b32.xlu0 %v3746, 80
        %v3748 = vpop.permute.xlu0 %3747
        %v3750 = vsel %vm702, %v3743, 0
        %v3753 = vsel %vm702, %v3748, 0
        %3755 = vmatprep.subr.bf16.mxu0 0
        %3756 = vmatpush1.bf16.xpose.msra.mxu0 %v3753
        %3757 = vmatprep.subr.bf16.mxu0 0
        %3758 = vmatpush1.bf16.xpose.msra.mxu0 0
        %3759 = vmatprep.subr.bf16.mxu0 0
        %3760 = vmatpush1.bf16.xpose.msra.mxu0 0
        %3761 = vmatprep.subr.bf16.mxu0 0
        %3762 = vmatpush1.bf16.xpose.msra.mxu0 0
        %3763 = vmatprep.subr.bf16.mxu0 0
        %3764 = vmatpush1.bf16.xpose.msra.mxu0 0
        %3765 = vmatprep.subr.bf16.mxu0 0
        %3766 = vmatpush1.bf16.xpose.msra.mxu0 0
        %3767 = vmatprep.subr.bf16.mxu0 0
        %3768 = vmatpush1.bf16.xpose.msra.mxu0 0
        %3769 = vmatprep.subr.bf16.mxu0 0
        %3770 = vmatpush1.bf16.xpose.msra.mxu0 0
        %3771 = vmatprep.subr.bf16.mxu0 0
        %3772 = vmatpush1.bf16.xpose.msra.mxu0 0
        %3773 = vmatprep.subr.bf16.mxu0 0
        %3774 = vmatpush1.bf16.xpose.msra.mxu0 0
        %3775 = vmatprep.subr.bf16.mxu0 0
        %3776 = vmatpush1.bf16.xpose.msra.mxu0 0
        %3777 = vmatprep.subr.bf16.mxu0 0
        %3778 = vmatpush1.bf16.xpose.msra.mxu0 0
        %3779 = vmatprep.subr.bf16.mxu0 0
        %3780 = vmatpush1.bf16.xpose.msra.mxu0 0
        %3781 = vmatprep.subr.bf16.mxu0 0
        %3782 = vmatpush1.bf16.xpose.msra.mxu0 0
        %3783 = vmatprep.subr.bf16.mxu0 0
        %3784 = vmatpush1.bf16.xpose.msra.mxu0 0
        %3785 = vmatprep.subr.bf16.mxu0 0
        %3786 = vmatpush1.bf16.xpose.msra.mxu0 0
        %3787 = vmatprep.mubr.bf16.mxu0 0
        %3788 = vmatmul.mubr.bf16.gmra.mrb[0].mxu0 %v3750
        %v3789 = vpop.f32.mrb[0].mxu0
        %v3790 = vadd.f32 0.0, %v3789
        %v3791 = vpop.f32.mrb[0].mxu0
        %v3792 = vpop.f32.mrb[0].mxu0
        %v3793 = vpop.f32.mrb[0].mxu0
        %3794 = vdwg.mxu0
        %v3796 = vunpack.c.l.b16 %v3551
        %v3797 = vpack.c.b16 %v3796, %v3796
        %3798 = vrot.lane.b32.xlu0 %v3797, 80
        %v3799 = vpop.permute.xlu0 %3798
        %v3801 = vunpack.c.l.b16 %v3559
        %v3802 = vpack.c.b16 %v3801, %v3801
        %3803 = vrot.lane.b32.xlu0 %v3802, 80
        %v3804 = vpop.permute.xlu0 %3803
        %v3806 = vsel %vm702, %v3799, 0
        %v3809 = vsel %vm702, %v3804, 0
        %3811 = vmatprep.subr.bf16.mxu0 0
        %3812 = vmatpush1.bf16.xpose.msra.mxu0 %v3809
        %3813 = vmatprep.subr.bf16.mxu0 0
        %3814 = vmatpush1.bf16.xpose.msra.mxu0 0
        %3815 = vmatprep.subr.bf16.mxu0 0
        %3816 = vmatpush1.bf16.xpose.msra.mxu0 0
        %3817 = vmatprep.subr.bf16.mxu0 0
        %3818 = vmatpush1.bf16.xpose.msra.mxu0 0
        %3819 = vmatprep.subr.bf16.mxu0 0
        %3820 = vmatpush1.bf16.xpose.msra.mxu0 0
        %3821 = vmatprep.subr.bf16.mxu0 0
        %3822 = vmatpush1.bf16.xpose.msra.mxu0 0
        %3823 = vmatprep.subr.bf16.mxu0 0
        %3824 = vmatpush1.bf16.xpose.msra.mxu0 0
        %3825 = vmatprep.subr.bf16.mxu0 0
        %3826 = vmatpush1.bf16.xpose.msra.mxu0 0
        %3827 = vmatprep.subr.bf16.mxu0 0
        %3828 = vmatpush1.bf16.xpose.msra.mxu0 0
        %3829 = vmatprep.subr.bf16.mxu0 0
        %3830 = vmatpush1.bf16.xpose.msra.mxu0 0
        %3831 = vmatprep.subr.bf16.mxu0 0
        %3832 = vmatpush1.bf16.xpose.msra.mxu0 0
        %3833 = vmatprep.subr.bf16.mxu0 0
        %3834 = vmatpush1.bf16.xpose.msra.mxu0 0
        %3835 = vmatprep.subr.bf16.mxu0 0
        %3836 = vmatpush1.bf16.xpose.msra.mxu0 0
        %3837 = vmatprep.subr.bf16.mxu0 0
        %3838 = vmatpush1.bf16.xpose.msra.mxu0 0
        %3839 = vmatprep.subr.bf16.mxu0 0
        %3840 = vmatpush1.bf16.xpose.msra.mxu0 0
        %3841 = vmatprep.subr.bf16.mxu0 0
        %3842 = vmatpush1.bf16.xpose.msra.mxu0 0
        %3843 = vmatprep.mubr.bf16.mxu0 0
        %3844 = vmatmul.mubr.bf16.gmra.mrb[0].mxu0 %v3806
        %v3845 = vpop.f32.mrb[0].mxu0
        %v3846 = vadd.f32 0.0, %v3845
        %v3847 = vpop.f32.mrb[0].mxu0
        %v3848 = vpop.f32.mrb[0].mxu0
        %v3849 = vpop.f32.mrb[0].mxu0
        %3850 = vdwg.mxu0
        %v3852 = vunpack.c.l.b16 %v3552
        %v3853 = vpack.c.b16 %v3852, %v3852
        %3854 = vrot.lane.b32.xlu0 %v3853, 80
        %v3855 = vpop.permute.xlu0 %3854
        %v3857 = vunpack.c.l.b16 %v3560
        %v3858 = vpack.c.b16 %v3857, %v3857
        %3859 = vrot.lane.b32.xlu0 %v3858, 80
        %v3860 = vpop.permute.xlu0 %3859
        %v3862 = vsel %vm702, %v3855, 0
        %v3865 = vsel %vm702, %v3860, 0
        %3867 = vmatprep.subr.bf16.mxu0 0
        %3868 = vmatpush1.bf16.xpose.msra.mxu0 %v3865
        %3869 = vmatprep.subr.bf16.mxu0 0
        %3870 = vmatpush1.bf16.xpose.msra.mxu0 0
        %3871 = vmatprep.subr.bf16.mxu0 0
        %3872 = vmatpush1.bf16.xpose.msra.mxu0 0
        %3873 = vmatprep.subr.bf16.mxu0 0
        %3874 = vmatpush1.bf16.xpose.msra.mxu0 0
        %3875 = vmatprep.subr.bf16.mxu0 0
        %3876 = vmatpush1.bf16.xpose.msra.mxu0 0
        %3877 = vmatprep.subr.bf16.mxu0 0
        %3878 = vmatpush1.bf16.xpose.msra.mxu0 0
        %3879 = vmatprep.subr.bf16.mxu0 0
        %3880 = vmatpush1.bf16.xpose.msra.mxu0 0
        %3881 = vmatprep.subr.bf16.mxu0 0
        %3882 = vmatpush1.bf16.xpose.msra.mxu0 0
        %3883 = vmatprep.subr.bf16.mxu0 0
        %3884 = vmatpush1.bf16.xpose.msra.mxu0 0
        %3885 = vmatprep.subr.bf16.mxu0 0
        %3886 = vmatpush1.bf16.xpose.msra.mxu0 0
        %3887 = vmatprep.subr.bf16.mxu0 0
        %3888 = vmatpush1.bf16.xpose.msra.mxu0 0
        %3889 = vmatprep.subr.bf16.mxu0 0
        %3890 = vmatpush1.bf16.xpose.msra.mxu0 0
        %3891 = vmatprep.subr.bf16.mxu0 0
        %3892 = vmatpush1.bf16.xpose.msra.mxu0 0
        %3893 = vmatprep.subr.bf16.mxu0 0
        %3894 = vmatpush1.bf16.xpose.msra.mxu0 0
        %3895 = vmatprep.subr.bf16.mxu0 0
        %3896 = vmatpush1.bf16.xpose.msra.mxu0 0
        %3897 = vmatprep.subr.bf16.mxu0 0
        %3898 = vmatpush1.bf16.xpose.msra.mxu0 0
        %3899 = vmatprep.mubr.bf16.mxu0 0
        %3900 = vmatmul.mubr.bf16.gmra.mrb[0].mxu0 %v3862
        %v3901 = vpop.f32.mrb[0].mxu0
        %v3902 = vadd.f32 0.0, %v3901
        %v3903 = vpop.f32.mrb[0].mxu0
        %v3904 = vpop.f32.mrb[0].mxu0
        %v3905 = vpop.f32.mrb[0].mxu0
        %3906 = vdwg.mxu0
        %v3908 = vunpack.c.l.b16 %v3553
        %v3909 = vpack.c.b16 %v3908, %v3908
        %3910 = vrot.lane.b32.xlu0 %v3909, 80
        %v3911 = vpop.permute.xlu0 %3910
        %v3913 = vunpack.c.l.b16 %v3561
        %v3914 = vpack.c.b16 %v3913, %v3913
        %3915 = vrot.lane.b32.xlu0 %v3914, 80
        %v3916 = vpop.permute.xlu0 %3915
        %v3918 = vsel %vm702, %v3911, 0
        %v3921 = vsel %vm702, %v3916, 0
        %3923 = vmatprep.subr.bf16.mxu0 0
        %3924 = vmatpush1.bf16.xpose.msra.mxu0 %v3921
        %3925 = vmatprep.subr.bf16.mxu0 0
        %3926 = vmatpush1.bf16.xpose.msra.mxu0 0
        %3927 = vmatprep.subr.bf16.mxu0 0
        %3928 = vmatpush1.bf16.xpose.msra.mxu0 0
        %3929 = vmatprep.subr.bf16.mxu0 0
        %3930 = vmatpush1.bf16.xpose.msra.mxu0 0
        %3931 = vmatprep.subr.bf16.mxu0 0
        %3932 = vmatpush1.bf16.xpose.msra.mxu0 0
        %3933 = vmatprep.subr.bf16.mxu0 0
        %3934 = vmatpush1.bf16.xpose.msra.mxu0 0
        %3935 = vmatprep.subr.bf16.mxu0 0
        %3936 = vmatpush1.bf16.xpose.msra.mxu0 0
        %3937 = vmatprep.subr.bf16.mxu0 0
        %3938 = vmatpush1.bf16.xpose.msra.mxu0 0
        %3939 = vmatprep.subr.bf16.mxu0 0
        %3940 = vmatpush1.bf16.xpose.msra.mxu0 0
        %3941 = vmatprep.subr.bf16.mxu0 0
        %3942 = vmatpush1.bf16.xpose.msra.mxu0 0
        %3943 = vmatprep.subr.bf16.mxu0 0
        %3944 = vmatpush1.bf16.xpose.msra.mxu0 0
        %3945 = vmatprep.subr.bf16.mxu0 0
        %3946 = vmatpush1.bf16.xpose.msra.mxu0 0
        %3947 = vmatprep.subr.bf16.mxu0 0
        %3948 = vmatpush1.bf16.xpose.msra.mxu0 0
        %3949 = vmatprep.subr.bf16.mxu0 0
        %3950 = vmatpush1.bf16.xpose.msra.mxu0 0
        %3951 = vmatprep.subr.bf16.mxu0 0
        %3952 = vmatpush1.bf16.xpose.msra.mxu0 0
        %3953 = vmatprep.subr.bf16.mxu0 0
        %3954 = vmatpush1.bf16.xpose.msra.mxu0 0
        %3955 = vmatprep.mubr.bf16.mxu0 0
        %3956 = vmatmul.mubr.bf16.gmra.mrb[0].mxu0 %v3918
        %v3957 = vpop.f32.mrb[0].mxu0
        %v3958 = vadd.f32 0.0, %v3957
        %v3959 = vpop.f32.mrb[0].mxu0
        %v3960 = vpop.f32.mrb[0].mxu0
        %v3961 = vpop.f32.mrb[0].mxu0
        %3962 = vdwg.mxu0
        %v3964 = vunpack.c.l.b16 %v3554
        %v3965 = vpack.c.b16 %v3964, %v3964
        %3966 = vrot.lane.b32.xlu0 %v3965, 80
        %v3967 = vpop.permute.xlu0 %3966
        %v3969 = vunpack.c.l.b16 %v3562
        %v3970 = vpack.c.b16 %v3969, %v3969
        %3971 = vrot.lane.b32.xlu0 %v3970, 80
        %v3972 = vpop.permute.xlu0 %3971
        %v3974 = vsel %vm702, %v3967, 0
        %v3977 = vsel %vm702, %v3972, 0
        %3979 = vmatprep.subr.bf16.mxu0 0
        %3980 = vmatpush1.bf16.xpose.msra.mxu0 %v3977
        %3981 = vmatprep.subr.bf16.mxu0 0
        %3982 = vmatpush1.bf16.xpose.msra.mxu0 0
        %3983 = vmatprep.subr.bf16.mxu0 0
        %3984 = vmatpush1.bf16.xpose.msra.mxu0 0
        %3985 = vmatprep.subr.bf16.mxu0 0
        %3986 = vmatpush1.bf16.xpose.msra.mxu0 0
        %3987 = vmatprep.subr.bf16.mxu0 0
        %3988 = vmatpush1.bf16.xpose.msra.mxu0 0
        %3989 = vmatprep.subr.bf16.mxu0 0
        %3990 = vmatpush1.bf16.xpose.msra.mxu0 0
        %3991 = vmatprep.subr.bf16.mxu0 0
        %3992 = vmatpush1.bf16.xpose.msra.mxu0 0
        %3993 = vmatprep.subr.bf16.mxu0 0
        %3994 = vmatpush1.bf16.xpose.msra.mxu0 0
        %3995 = vmatprep.subr.bf16.mxu0 0
        %3996 = vmatpush1.bf16.xpose.msra.mxu0 0
        %3997 = vmatprep.subr.bf16.mxu0 0
        %3998 = vmatpush1.bf16.xpose.msra.mxu0 0
        %3999 = vmatprep.subr.bf16.mxu0 0
        %4000 = vmatpush1.bf16.xpose.msra.mxu0 0
        %4001 = vmatprep.subr.bf16.mxu0 0
        %4002 = vmatpush1.bf16.xpose.msra.mxu0 0
        %4003 = vmatprep.subr.bf16.mxu0 0
        %4004 = vmatpush1.bf16.xpose.msra.mxu0 0
        %4005 = vmatprep.subr.bf16.mxu0 0
        %4006 = vmatpush1.bf16.xpose.msra.mxu0 0
        %4007 = vmatprep.subr.bf16.mxu0 0
        %4008 = vmatpush1.bf16.xpose.msra.mxu0 0
        %4009 = vmatprep.subr.bf16.mxu0 0
        %4010 = vmatpush1.bf16.xpose.msra.mxu0 0
        %4011 = vmatprep.mubr.bf16.mxu0 0
        %4012 = vmatmul.mubr.bf16.gmra.mrb[0].mxu0 %v3974
        %v4013 = vpop.f32.mrb[0].mxu0
        %v4014 = vadd.f32 0.0, %v4013
        %v4015 = vpop.f32.mrb[0].mxu0
        %v4016 = vpop.f32.mrb[0].mxu0
        %v4017 = vpop.f32.mrb[0].mxu0
        %4018 = vdwg.mxu0
        %v4019 = vsel %vm1071, %v3622, -inf
        %4020 = vmax.xlane.f32.xlu0 %v4019
        %v4021 = vpop.xlane.xlu0 %4020
        %v4022 = vsel %vm1071, %v3678, -inf
        %4023 = vmax.xlane.f32.xlu0 %v4022
        %v4024 = vpop.xlane.xlu0 %4023
        %v4025 = vsel %vm1071, %v3734, -inf
        %4026 = vmax.xlane.f32.xlu0 %v4025
        %v4027 = vpop.xlane.xlu0 %4026
        %v4028 = vsel %vm1071, %v3790, -inf
        %4029 = vmax.xlane.f32.xlu0 %v4028
        %v4030 = vpop.xlane.xlu0 %4029
        %v4031 = vsel %vm1071, %v3846, -inf
        %4032 = vmax.xlane.f32.xlu0 %v4031
        %v4033 = vpop.xlane.xlu0 %4032
        %v4034 = vsel %vm1071, %v3902, -inf
        %4035 = vmax.xlane.f32.xlu0 %v4034
        %v4036 = vpop.xlane.xlu0 %4035
        %v4037 = vsel %vm1071, %v3958, -inf
        %4038 = vmax.xlane.f32.xlu0 %v4037
        %v4039 = vpop.xlane.xlu0 %4038
        %v4040 = vsel %vm1071, %v4014, -inf
        %4041 = vmax.xlane.f32.xlu0 %v4040
        %v4042 = vpop.xlane.xlu0 %4041
        %v4043 = vsub.f32 %v3622, %v4021
        %v4044 = vsub.f32 %v3678, %v4024
        %v4045 = vsub.f32 %v3734, %v4027
        %v4046 = vsub.f32 %v3790, %v4030
        %v4047 = vsub.f32 %v3846, %v4033
        %v4048 = vsub.f32 %v3902, %v4036
        %v4049 = vsub.f32 %v3958, %v4039
        %v4050 = vsub.f32 %v4014, %v4042
        %v4051 = vmul.f32 %v4043, 1.442695
        %v4052 = vpow.pop %v4051
        %v4053 = vmul.f32 %v4044, 1.442695
        %v4054 = vpow.pop %v4053
        %v4055 = vmul.f32 %v4045, 1.442695
        %v4056 = vpow.pop %v4055
        %v4057 = vmul.f32 %v4046, 1.442695
        %v4058 = vpow.pop %v4057
        %v4059 = vmul.f32 %v4047, 1.442695
        %v4060 = vpow.pop %v4059
        %v4061 = vmul.f32 %v4048, 1.442695
        %v4062 = vpow.pop %v4061
        %v4063 = vmul.f32 %v4049, 1.442695
        %v4064 = vpow.pop %v4063
        %v4065 = vmul.f32 %v4050, 1.442695
        %v4066 = vpow.pop %v4065
        %v4067 = vsel %vm1071, %v4052, 0.0
        %4068 = vadd.xlane.f32.xlu0 %v4067
        %v4069 = vpop.xlane.xlu0 %4068
        %v4070 = vsel %vm1071, %v4054, 0.0
        %4071 = vadd.xlane.f32.xlu0 %v4070
        %v4072 = vpop.xlane.xlu0 %4071
        %v4073 = vsel %vm1071, %v4056, 0.0
        %4074 = vadd.xlane.f32.xlu0 %v4073
        %v4075 = vpop.xlane.xlu0 %4074
        %v4076 = vsel %vm1071, %v4058, 0.0
        %4077 = vadd.xlane.f32.xlu0 %v4076
        %v4078 = vpop.xlane.xlu0 %4077
        %v4079 = vsel %vm1071, %v4060, 0.0
        %4080 = vadd.xlane.f32.xlu0 %v4079
        %v4081 = vpop.xlane.xlu0 %4080
        %v4082 = vsel %vm1071, %v4062, 0.0
        %4083 = vadd.xlane.f32.xlu0 %v4082
        %v4084 = vpop.xlane.xlu0 %4083
        %v4085 = vsel %vm1071, %v4064, 0.0
        %4086 = vadd.xlane.f32.xlu0 %v4085
        %v4087 = vpop.xlane.xlu0 %4086
        %v4088 = vsel %vm1071, %v4066, 0.0
        %4089 = vadd.xlane.f32.xlu0 %v4088
        %v4090 = vpop.xlane.xlu0 %4089
        %v4091 = vrcp.pop %v4069
        %v4092 = vrcp.pop %v4072
        %v4093 = vrcp.pop %v4075
        %v4094 = vrcp.pop %v4078
        %v4095 = vrcp.pop %v4081
        %v4096 = vrcp.pop %v4084
        %v4097 = vrcp.pop %v4087
        %v4098 = vrcp.pop %v4090
        %v4099 = vmul.f32 %v4052, %v4091
        %v4100 = vmul.f32 %v4054, %v4092
        %v4101 = vmul.f32 %v4056, %v4093
        %v4102 = vmul.f32 %v4058, %v4094
        %v4103 = vmul.f32 %v4060, %v4095
        %v4104 = vmul.f32 %v4062, %v4096
        %v4105 = vmul.f32 %v4064, %v4097
        %v4106 = vmul.f32 %v4066, %v4098
        %v4107 = vpack.c.bf16 %v4099, %v4099
        %v4108 = vpack.c.bf16 %v4100, %v4100
        %v4109 = vpack.c.bf16 %v4101, %v4101
        %v4110 = vpack.c.bf16 %v4102, %v4102
        %v4111 = vpack.c.bf16 %v4103, %v4103
        %v4112 = vpack.c.bf16 %v4104, %v4104
        %v4113 = vpack.c.bf16 %v4105, %v4105
        %v4114 = vpack.c.bf16 %v4106, %v4106
        %v4116 = vunpack.c.l.b16 %v3563
        %v4117 = vpack.c.b16 %v4116, %v4116
        %4118 = vrot.lane.b32.xlu0 %v4117, 80
        %v4119 = vpop.permute.xlu0 %4118
        %v4121 = vsel %vm1071, %v4107, 0
        %v4124 = vsel %vm1171, %v4119, 0
        %4126 = vmatprep.subr.bf16.mxu0 0
        %4127 = vmatpush1.bf16.msra.mxu0 %v4124
        %4128 = vmatprep.subr.bf16.mxu0 0
        %4129 = vmatpush1.bf16.msra.mxu0 0
        %4130 = vmatprep.subr.bf16.mxu0 0
        %4131 = vmatpush1.bf16.msra.mxu0 0
        %4132 = vmatprep.subr.bf16.mxu0 0
        %4133 = vmatpush1.bf16.msra.mxu0 0
        %4134 = vmatprep.subr.bf16.mxu0 0
        %4135 = vmatpush1.bf16.msra.mxu0 0
        %4136 = vmatprep.subr.bf16.mxu0 0
        %4137 = vmatpush1.bf16.msra.mxu0 0
        %4138 = vmatprep.subr.bf16.mxu0 0
        %4139 = vmatpush1.bf16.msra.mxu0 0
        %4140 = vmatprep.subr.bf16.mxu0 0
        %4141 = vmatpush1.bf16.msra.mxu0 0
        %4142 = vmatprep.subr.bf16.mxu0 0
        %4143 = vmatpush1.bf16.msra.mxu0 0
        %4144 = vmatprep.subr.bf16.mxu0 0
        %4145 = vmatpush1.bf16.msra.mxu0 0
        %4146 = vmatprep.subr.bf16.mxu0 0
        %4147 = vmatpush1.bf16.msra.mxu0 0
        %4148 = vmatprep.subr.bf16.mxu0 0
        %4149 = vmatpush1.bf16.msra.mxu0 0
        %4150 = vmatprep.subr.bf16.mxu0 0
        %4151 = vmatpush1.bf16.msra.mxu0 0
        %4152 = vmatprep.subr.bf16.mxu0 0
        %4153 = vmatpush1.bf16.msra.mxu0 0
        %4154 = vmatprep.subr.bf16.mxu0 0
        %4155 = vmatpush1.bf16.msra.mxu0 0
        %4156 = vmatprep.subr.bf16.mxu0 0
        %4157 = vmatpush1.bf16.msra.mxu0 0
        %4158 = vmatprep.mubr.bf16.mxu0 0
        %4159 = vmatmul.mubr.bf16.gmra.mrb[0].mxu0 %v4121
        %v4160 = vpop.f32.mrb[0].mxu0
        %v4161 = vadd.f32 0.0, %v4160
        %v4162 = vpop.f32.mrb[0].mxu0
        %v4163 = vpop.f32.mrb[0].mxu0
        %v4164 = vpop.f32.mrb[0].mxu0
        %4165 = vdwg.mxu0
        %v4167 = vunpack.c.l.b16 %v3564
        %v4168 = vpack.c.b16 %v4167, %v4167
        %4169 = vrot.lane.b32.xlu0 %v4168, 80
        %v4170 = vpop.permute.xlu0 %4169
        %v4172 = vsel %vm1071, %v4108, 0
        %v4175 = vsel %vm1171, %v4170, 0
        %4177 = vmatprep.subr.bf16.mxu0 0
        %4178 = vmatpush1.bf16.msra.mxu0 %v4175
        %4179 = vmatprep.subr.bf16.mxu0 0
        %4180 = vmatpush1.bf16.msra.mxu0 0
        %4181 = vmatprep.subr.bf16.mxu0 0
        %4182 = vmatpush1.bf16.msra.mxu0 0
        %4183 = vmatprep.subr.bf16.mxu0 0
        %4184 = vmatpush1.bf16.msra.mxu0 0
        %4185 = vmatprep.subr.bf16.mxu0 0
        %4186 = vmatpush1.bf16.msra.mxu0 0
        %4187 = vmatprep.subr.bf16.mxu0 0
        %4188 = vmatpush1.bf16.msra.mxu0 0
        %4189 = vmatprep.subr.bf16.mxu0 0
        %4190 = vmatpush1.bf16.msra.mxu0 0
        %4191 = vmatprep.subr.bf16.mxu0 0
        %4192 = vmatpush1.bf16.msra.mxu0 0
        %4193 = vmatprep.subr.bf16.mxu0 0
        %4194 = vmatpush1.bf16.msra.mxu0 0
        %4195 = vmatprep.subr.bf16.mxu0 0
        %4196 = vmatpush1.bf16.msra.mxu0 0
        %4197 = vmatprep.subr.bf16.mxu0 0
        %4198 = vmatpush1.bf16.msra.mxu0 0
        %4199 = vmatprep.subr.bf16.mxu0 0
        %4200 = vmatpush1.bf16.msra.mxu0 0
        %4201 = vmatprep.subr.bf16.mxu0 0
        %4202 = vmatpush1.bf16.msra.mxu0 0
        %4203 = vmatprep.subr.bf16.mxu0 0
        %4204 = vmatpush1.bf16.msra.mxu0 0
        %4205 = vmatprep.subr.bf16.mxu0 0
        %4206 = vmatpush1.bf16.msra.mxu0 0
        %4207 = vmatprep.subr.bf16.mxu0 0
        %4208 = vmatpush1.bf16.msra.mxu0 0
        %4209 = vmatprep.mubr.bf16.mxu0 0
        %4210 = vmatmul.mubr.bf16.gmra.mrb[0].mxu0 %v4172
        %v4211 = vpop.f32.mrb[0].mxu0
        %v4212 = vadd.f32 0.0, %v4211
        %v4213 = vpop.f32.mrb[0].mxu0
        %v4214 = vpop.f32.mrb[0].mxu0
        %v4215 = vpop.f32.mrb[0].mxu0
        %4216 = vdwg.mxu0
        %v4218 = vunpack.c.l.b16 %v3565
        %v4219 = vpack.c.b16 %v4218, %v4218
        %4220 = vrot.lane.b32.xlu0 %v4219, 80
        %v4221 = vpop.permute.xlu0 %4220
        %v4223 = vsel %vm1071, %v4109, 0
        %v4226 = vsel %vm1171, %v4221, 0
        %4228 = vmatprep.subr.bf16.mxu0 0
        %4229 = vmatpush1.bf16.msra.mxu0 %v4226
        %4230 = vmatprep.subr.bf16.mxu0 0
        %4231 = vmatpush1.bf16.msra.mxu0 0
        %4232 = vmatprep.subr.bf16.mxu0 0
        %4233 = vmatpush1.bf16.msra.mxu0 0
        %4234 = vmatprep.subr.bf16.mxu0 0
        %4235 = vmatpush1.bf16.msra.mxu0 0
        %4236 = vmatprep.subr.bf16.mxu0 0
        %4237 = vmatpush1.bf16.msra.mxu0 0
        %4238 = vmatprep.subr.bf16.mxu0 0
        %4239 = vmatpush1.bf16.msra.mxu0 0
        %4240 = vmatprep.subr.bf16.mxu0 0
        %4241 = vmatpush1.bf16.msra.mxu0 0
        %4242 = vmatprep.subr.bf16.mxu0 0
        %4243 = vmatpush1.bf16.msra.mxu0 0
        %4244 = vmatprep.subr.bf16.mxu0 0
        %4245 = vmatpush1.bf16.msra.mxu0 0
        %4246 = vmatprep.subr.bf16.mxu0 0
        %4247 = vmatpush1.bf16.msra.mxu0 0
        %4248 = vmatprep.subr.bf16.mxu0 0
        %4249 = vmatpush1.bf16.msra.mxu0 0
        %4250 = vmatprep.subr.bf16.mxu0 0
        %4251 = vmatpush1.bf16.msra.mxu0 0
        %4252 = vmatprep.subr.bf16.mxu0 0
        %4253 = vmatpush1.bf16.msra.mxu0 0
        %4254 = vmatprep.subr.bf16.mxu0 0
        %4255 = vmatpush1.bf16.msra.mxu0 0
        %4256 = vmatprep.subr.bf16.mxu0 0
        %4257 = vmatpush1.bf16.msra.mxu0 0
        %4258 = vmatprep.subr.bf16.mxu0 0
        %4259 = vmatpush1.bf16.msra.mxu0 0
        %4260 = vmatprep.mubr.bf16.mxu0 0
        %4261 = vmatmul.mubr.bf16.gmra.mrb[0].mxu0 %v4223
        %v4262 = vpop.f32.mrb[0].mxu0
        %v4263 = vadd.f32 0.0, %v4262
        %v4264 = vpop.f32.mrb[0].mxu0
        %v4265 = vpop.f32.mrb[0].mxu0
        %v4266 = vpop.f32.mrb[0].mxu0
        %4267 = vdwg.mxu0
        %v4269 = vunpack.c.l.b16 %v3566
        %v4270 = vpack.c.b16 %v4269, %v4269
        %4271 = vrot.lane.b32.xlu0 %v4270, 80
        %v4272 = vpop.permute.xlu0 %4271
        %v4274 = vsel %vm1071, %v4110, 0
        %v4277 = vsel %vm1171, %v4272, 0
        %4279 = vmatprep.subr.bf16.mxu0 0
        %4280 = vmatpush1.bf16.msra.mxu0 %v4277
        %4281 = vmatprep.subr.bf16.mxu0 0
        %4282 = vmatpush1.bf16.msra.mxu0 0
        %4283 = vmatprep.subr.bf16.mxu0 0
        %4284 = vmatpush1.bf16.msra.mxu0 0
        %4285 = vmatprep.subr.bf16.mxu0 0
        %4286 = vmatpush1.bf16.msra.mxu0 0
        %4287 = vmatprep.subr.bf16.mxu0 0
        %4288 = vmatpush1.bf16.msra.mxu0 0
        %4289 = vmatprep.subr.bf16.mxu0 0
        %4290 = vmatpush1.bf16.msra.mxu0 0
        %4291 = vmatprep.subr.bf16.mxu0 0
        %4292 = vmatpush1.bf16.msra.mxu0 0
        %4293 = vmatprep.subr.bf16.mxu0 0
        %4294 = vmatpush1.bf16.msra.mxu0 0
        %4295 = vmatprep.subr.bf16.mxu0 0
        %4296 = vmatpush1.bf16.msra.mxu0 0
        %4297 = vmatprep.subr.bf16.mxu0 0
        %4298 = vmatpush1.bf16.msra.mxu0 0
        %4299 = vmatprep.subr.bf16.mxu0 0
        %4300 = vmatpush1.bf16.msra.mxu0 0
        %4301 = vmatprep.subr.bf16.mxu0 0
        %4302 = vmatpush1.bf16.msra.mxu0 0
        %4303 = vmatprep.subr.bf16.mxu0 0
        %4304 = vmatpush1.bf16.msra.mxu0 0
        %4305 = vmatprep.subr.bf16.mxu0 0
        %4306 = vmatpush1.bf16.msra.mxu0 0
        %4307 = vmatprep.subr.bf16.mxu0 0
        %4308 = vmatpush1.bf16.msra.mxu0 0
        %4309 = vmatprep.subr.bf16.mxu0 0
        %4310 = vmatpush1.bf16.msra.mxu0 0
        %4311 = vmatprep.mubr.bf16.mxu0 0
        %4312 = vmatmul.mubr.bf16.gmra.mrb[0].mxu0 %v4274
        %v4313 = vpop.f32.mrb[0].mxu0
        %v4314 = vadd.f32 0.0, %v4313
        %v4315 = vpop.f32.mrb[0].mxu0
        %v4316 = vpop.f32.mrb[0].mxu0
        %v4317 = vpop.f32.mrb[0].mxu0
        %4318 = vdwg.mxu0
        %v4320 = vunpack.c.l.b16 %v3567
        %v4321 = vpack.c.b16 %v4320, %v4320
        %4322 = vrot.lane.b32.xlu0 %v4321, 80
        %v4323 = vpop.permute.xlu0 %4322
        %v4325 = vsel %vm1071, %v4111, 0
        %v4328 = vsel %vm1171, %v4323, 0
        %4330 = vmatprep.subr.bf16.mxu0 0
        %4331 = vmatpush1.bf16.msra.mxu0 %v4328
        %4332 = vmatprep.subr.bf16.mxu0 0
        %4333 = vmatpush1.bf16.msra.mxu0 0
        %4334 = vmatprep.subr.bf16.mxu0 0
        %4335 = vmatpush1.bf16.msra.mxu0 0
        %4336 = vmatprep.subr.bf16.mxu0 0
        %4337 = vmatpush1.bf16.msra.mxu0 0
        %4338 = vmatprep.subr.bf16.mxu0 0
        %4339 = vmatpush1.bf16.msra.mxu0 0
        %4340 = vmatprep.subr.bf16.mxu0 0
        %4341 = vmatpush1.bf16.msra.mxu0 0
        %4342 = vmatprep.subr.bf16.mxu0 0
        %4343 = vmatpush1.bf16.msra.mxu0 0
        %4344 = vmatprep.subr.bf16.mxu0 0
        %4345 = vmatpush1.bf16.msra.mxu0 0
        %4346 = vmatprep.subr.bf16.mxu0 0
        %4347 = vmatpush1.bf16.msra.mxu0 0
        %4348 = vmatprep.subr.bf16.mxu0 0
        %4349 = vmatpush1.bf16.msra.mxu0 0
        %4350 = vmatprep.subr.bf16.mxu0 0
        %4351 = vmatpush1.bf16.msra.mxu0 0
        %4352 = vmatprep.subr.bf16.mxu0 0
        %4353 = vmatpush1.bf16.msra.mxu0 0
        %4354 = vmatprep.subr.bf16.mxu0 0
        %4355 = vmatpush1.bf16.msra.mxu0 0
        %4356 = vmatprep.subr.bf16.mxu0 0
        %4357 = vmatpush1.bf16.msra.mxu0 0
        %4358 = vmatprep.subr.bf16.mxu0 0
        %4359 = vmatpush1.bf16.msra.mxu0 0
        %4360 = vmatprep.subr.bf16.mxu0 0
        %4361 = vmatpush1.bf16.msra.mxu0 0
        %4362 = vmatprep.mubr.bf16.mxu0 0
        %4363 = vmatmul.mubr.bf16.gmra.mrb[0].mxu0 %v4325
        %v4364 = vpop.f32.mrb[0].mxu0
        %v4365 = vadd.f32 0.0, %v4364
        %v4366 = vpop.f32.mrb[0].mxu0
        %v4367 = vpop.f32.mrb[0].mxu0
        %v4368 = vpop.f32.mrb[0].mxu0
        %4369 = vdwg.mxu0
        %v4371 = vunpack.c.l.b16 %v3568
        %v4372 = vpack.c.b16 %v4371, %v4371
        %4373 = vrot.lane.b32.xlu0 %v4372, 80
        %v4374 = vpop.permute.xlu0 %4373
        %v4376 = vsel %vm1071, %v4112, 0
        %v4379 = vsel %vm1171, %v4374, 0
        %4381 = vmatprep.subr.bf16.mxu0 0
        %4382 = vmatpush1.bf16.msra.mxu0 %v4379
        %4383 = vmatprep.subr.bf16.mxu0 0
        %4384 = vmatpush1.bf16.msra.mxu0 0
        %4385 = vmatprep.subr.bf16.mxu0 0
        %4386 = vmatpush1.bf16.msra.mxu0 0
        %4387 = vmatprep.subr.bf16.mxu0 0
        %4388 = vmatpush1.bf16.msra.mxu0 0
        %4389 = vmatprep.subr.bf16.mxu0 0
        %4390 = vmatpush1.bf16.msra.mxu0 0
        %4391 = vmatprep.subr.bf16.mxu0 0
        %4392 = vmatpush1.bf16.msra.mxu0 0
        %4393 = vmatprep.subr.bf16.mxu0 0
        %4394 = vmatpush1.bf16.msra.mxu0 0
        %4395 = vmatprep.subr.bf16.mxu0 0
        %4396 = vmatpush1.bf16.msra.mxu0 0
        %4397 = vmatprep.subr.bf16.mxu0 0
        %4398 = vmatpush1.bf16.msra.mxu0 0
        %4399 = vmatprep.subr.bf16.mxu0 0
        %4400 = vmatpush1.bf16.msra.mxu0 0
        %4401 = vmatprep.subr.bf16.mxu0 0
        %4402 = vmatpush1.bf16.msra.mxu0 0
        %4403 = vmatprep.subr.bf16.mxu0 0
        %4404 = vmatpush1.bf16.msra.mxu0 0
        %4405 = vmatprep.subr.bf16.mxu0 0
        %4406 = vmatpush1.bf16.msra.mxu0 0
        %4407 = vmatprep.subr.bf16.mxu0 0
        %4408 = vmatpush1.bf16.msra.mxu0 0
        %4409 = vmatprep.subr.bf16.mxu0 0
        %4410 = vmatpush1.bf16.msra.mxu0 0
        %4411 = vmatprep.subr.bf16.mxu0 0
        %4412 = vmatpush1.bf16.msra.mxu0 0
        %4413 = vmatprep.mubr.bf16.mxu0 0
        %4414 = vmatmul.mubr.bf16.gmra.mrb[0].mxu0 %v4376
        %v4415 = vpop.f32.mrb[0].mxu0
        %v4416 = vadd.f32 0.0, %v4415
        %v4417 = vpop.f32.mrb[0].mxu0
        %v4418 = vpop.f32.mrb[0].mxu0
        %v4419 = vpop.f32.mrb[0].mxu0
        %4420 = vdwg.mxu0
        %v4422 = vunpack.c.l.b16 %v3569
        %v4423 = vpack.c.b16 %v4422, %v4422
        %4424 = vrot.lane.b32.xlu0 %v4423, 80
        %v4425 = vpop.permute.xlu0 %4424
        %v4427 = vsel %vm1071, %v4113, 0
        %v4430 = vsel %vm1171, %v4425, 0
        %4432 = vmatprep.subr.bf16.mxu0 0
        %4433 = vmatpush1.bf16.msra.mxu0 %v4430
        %4434 = vmatprep.subr.bf16.mxu0 0
        %4435 = vmatpush1.bf16.msra.mxu0 0
        %4436 = vmatprep.subr.bf16.mxu0 0
        %4437 = vmatpush1.bf16.msra.mxu0 0
        %4438 = vmatprep.subr.bf16.mxu0 0
        %4439 = vmatpush1.bf16.msra.mxu0 0
        %4440 = vmatprep.subr.bf16.mxu0 0
        %4441 = vmatpush1.bf16.msra.mxu0 0
        %4442 = vmatprep.subr.bf16.mxu0 0
        %4443 = vmatpush1.bf16.msra.mxu0 0
        %4444 = vmatprep.subr.bf16.mxu0 0
        %4445 = vmatpush1.bf16.msra.mxu0 0
        %4446 = vmatprep.subr.bf16.mxu0 0
        %4447 = vmatpush1.bf16.msra.mxu0 0
        %4448 = vmatprep.subr.bf16.mxu0 0
        %4449 = vmatpush1.bf16.msra.mxu0 0
        %4450 = vmatprep.subr.bf16.mxu0 0
        %4451 = vmatpush1.bf16.msra.mxu0 0
        %4452 = vmatprep.subr.bf16.mxu0 0
        %4453 = vmatpush1.bf16.msra.mxu0 0
        %4454 = vmatprep.subr.bf16.mxu0 0
        %4455 = vmatpush1.bf16.msra.mxu0 0
        %4456 = vmatprep.subr.bf16.mxu0 0
        %4457 = vmatpush1.bf16.msra.mxu0 0
        %4458 = vmatprep.subr.bf16.mxu0 0
        %4459 = vmatpush1.bf16.msra.mxu0 0
        %4460 = vmatprep.subr.bf16.mxu0 0
        %4461 = vmatpush1.bf16.msra.mxu0 0
        %4462 = vmatprep.subr.bf16.mxu0 0
        %4463 = vmatpush1.bf16.msra.mxu0 0
        %4464 = vmatprep.mubr.bf16.mxu0 0
        %4465 = vmatmul.mubr.bf16.gmra.mrb[0].mxu0 %v4427
        %v4466 = vpop.f32.mrb[0].mxu0
        %v4467 = vadd.f32 0.0, %v4466
        %v4468 = vpop.f32.mrb[0].mxu0
        %v4469 = vpop.f32.mrb[0].mxu0
        %v4470 = vpop.f32.mrb[0].mxu0
        %4471 = vdwg.mxu0
        %v4473 = vunpack.c.l.b16 %v3570
        %v4474 = vpack.c.b16 %v4473, %v4473
        %4475 = vrot.lane.b32.xlu0 %v4474, 80
        %v4476 = vpop.permute.xlu0 %4475
        %v4478 = vsel %vm1071, %v4114, 0
        %v4481 = vsel %vm1171, %v4476, 0
        %4483 = vmatprep.subr.bf16.mxu0 0
        %4484 = vmatpush1.bf16.msra.mxu0 %v4481
        %4485 = vmatprep.subr.bf16.mxu0 0
        %4486 = vmatpush1.bf16.msra.mxu0 0
        %4487 = vmatprep.subr.bf16.mxu0 0
        %4488 = vmatpush1.bf16.msra.mxu0 0
        %4489 = vmatprep.subr.bf16.mxu0 0
        %4490 = vmatpush1.bf16.msra.mxu0 0
        %4491 = vmatprep.subr.bf16.mxu0 0
        %4492 = vmatpush1.bf16.msra.mxu0 0
        %4493 = vmatprep.subr.bf16.mxu0 0
        %4494 = vmatpush1.bf16.msra.mxu0 0
        %4495 = vmatprep.subr.bf16.mxu0 0
        %4496 = vmatpush1.bf16.msra.mxu0 0
        %4497 = vmatprep.subr.bf16.mxu0 0
        %4498 = vmatpush1.bf16.msra.mxu0 0
        %4499 = vmatprep.subr.bf16.mxu0 0
        %4500 = vmatpush1.bf16.msra.mxu0 0
        %4501 = vmatprep.subr.bf16.mxu0 0
        %4502 = vmatpush1.bf16.msra.mxu0 0
        %4503 = vmatprep.subr.bf16.mxu0 0
        %4504 = vmatpush1.bf16.msra.mxu0 0
        %4505 = vmatprep.subr.bf16.mxu0 0
        %4506 = vmatpush1.bf16.msra.mxu0 0
        %4507 = vmatprep.subr.bf16.mxu0 0
        %4508 = vmatpush1.bf16.msra.mxu0 0
        %4509 = vmatprep.subr.bf16.mxu0 0
        %4510 = vmatpush1.bf16.msra.mxu0 0
        %4511 = vmatprep.subr.bf16.mxu0 0
        %4512 = vmatpush1.bf16.msra.mxu0 0
        %4513 = vmatprep.subr.bf16.mxu0 0
        %4514 = vmatpush1.bf16.msra.mxu0 0
        %4515 = vmatprep.mubr.bf16.mxu0 0
        %4516 = vmatmul.mubr.bf16.gmra.mrb[0].mxu0 %v4478
        %v4517 = vpop.f32.mrb[0].mxu0
        %v4518 = vadd.f32 0.0, %v4517
        %v4519 = vpop.f32.mrb[0].mxu0
        %v4520 = vpop.f32.mrb[0].mxu0
        %v4521 = vpop.f32.mrb[0].mxu0
        %4522 = vdwg.mxu0
        %v4523 = vpack.c.bf16 %v4212, %v4161
        %v4524 = vpack.c.bf16 %v4314, %v4263
        %v4525 = vpack.c.bf16 %v4416, %v4365
        %v4526 = vpack.c.bf16 %v4518, %v4467
        %4531 = vrot.lane.b32.xlu0 %v4523, 48
        %v4532 = vpop.permute.xlu0 %4531
        %4533 = vrot.lane.b32.xlu0 %v4524, 48
        %v4534 = vpop.permute.xlu0 %4533
        %4535 = vrot.lane.b32.xlu0 %v4525, 48
        %v4536 = vpop.permute.xlu0 %4535
        %4537 = vrot.lane.b32.xlu0 %v4526, 48
        %v4538 = vpop.permute.xlu0 %4537
        %vm4543 = vcmask 523648
        %4544 = vst.msk [vmem:[#allocation3] sm:$0xff] %vm4543, %v4532
        %4545 = vst.msk [vmem:[#allocation3 + $0x8] sm:$0xff] %vm4543, %v4534
        %4546 = vst.msk [vmem:[#allocation3 + $0x10] sm:$0xff] %vm4543, %v4536
        %4547 = vst.msk [vmem:[#allocation3 + $0x18] sm:$0xff] %vm4543, %v4538
        %v4548 = vld [vmem:[#allocation2] sm:$0xf]
        %v4549 = vld [vmem:[#allocation2 + $0xc] sm:$0xf]
        %v4550 = vld [vmem:[#allocation2 + $0x18] sm:$0xf]
        %v4551 = vld [vmem:[#allocation2 + $0x24] sm:$0xf]
        %v4552 = vld [vmem:[#allocation2 + $0x30] sm:$0xf]
        %v4553 = vld [vmem:[#allocation2 + $0x3c] sm:$0xf]
        %v4554 = vld [vmem:[#allocation2 + $0x48] sm:$0xf]
        %v4555 = vld [vmem:[#allocation2 + $0x54] sm:$0xf]
        %v4556 = vld [vmem:[#allocation2 + $0x4] sm:$0xf]
        %v4557 = vld [vmem:[#allocation2 + $0x10] sm:$0xf]
        %v4558 = vld [vmem:[#allocation2 + $0x1c] sm:$0xf]
        %v4559 = vld [vmem:[#allocation2 + $0x28] sm:$0xf]
        %v4560 = vld [vmem:[#allocation2 + $0x34] sm:$0xf]
        %v4561 = vld [vmem:[#allocation2 + $0x40] sm:$0xf]
        %v4562 = vld [vmem:[#allocation2 + $0x4c] sm:$0xf]
        %v4563 = vld [vmem:[#allocation2 + $0x58] sm:$0xf]
        %v4564 = vld [vmem:[#allocation2 + $0x8] sm:$0xf]
        %v4565 = vld [vmem:[#allocation2 + $0x14] sm:$0xf]
        %v4566 = vld [vmem:[#allocation2 + $0x20] sm:$0xf]
        %v4567 = vld [vmem:[#allocation2 + $0x2c] sm:$0xf]
        %v4568 = vld [vmem:[#allocation2 + $0x38] sm:$0xf]
        %v4569 = vld [vmem:[#allocation2 + $0x44] sm:$0xf]
        %v4570 = vld [vmem:[#allocation2 + $0x50] sm:$0xf]
        %v4571 = vld [vmem:[#allocation2 + $0x5c] sm:$0xf]
        %v4573 = vunpack.c.l.b16 %v4548
        %v4574 = vpack.c.b16 %v4573, %v4573
        %4575 = vrot.lane.b32.xlu0 %v4574, 64
        %v4576 = vpop.permute.xlu0 %4575
        %v4578 = vunpack.c.l.b16 %v4556
        %v4579 = vpack.c.b16 %v4578, %v4578
        %4580 = vrot.lane.b32.xlu0 %v4579, 64
        %v4581 = vpop.permute.xlu0 %4580
        %v4583 = vsel %vm702, %v4576, 0
        %v4586 = vsel %vm702, %v4581, 0
        %4588 = vmatprep.subr.bf16.mxu0 0
        %4589 = vmatpush1.bf16.xpose.msra.mxu0 %v4586
        %4590 = vmatprep.subr.bf16.mxu0 0
        %4591 = vmatpush1.bf16.xpose.msra.mxu0 0
        %4592 = vmatprep.subr.bf16.mxu0 0
        %4593 = vmatpush1.bf16.xpose.msra.mxu0 0
        %4594 = vmatprep.subr.bf16.mxu0 0
        %4595 = vmatpush1.bf16.xpose.msra.mxu0 0
        %4596 = vmatprep.subr.bf16.mxu0 0
        %4597 = vmatpush1.bf16.xpose.msra.mxu0 0
        %4598 = vmatprep.subr.bf16.mxu0 0
        %4599 = vmatpush1.bf16.xpose.msra.mxu0 0
        %4600 = vmatprep.subr.bf16.mxu0 0
        %4601 = vmatpush1.bf16.xpose.msra.mxu0 0
        %4602 = vmatprep.subr.bf16.mxu0 0
        %4603 = vmatpush1.bf16.xpose.msra.mxu0 0
        %4604 = vmatprep.subr.bf16.mxu0 0
        %4605 = vmatpush1.bf16.xpose.msra.mxu0 0
        %4606 = vmatprep.subr.bf16.mxu0 0
        %4607 = vmatpush1.bf16.xpose.msra.mxu0 0
        %4608 = vmatprep.subr.bf16.mxu0 0
        %4609 = vmatpush1.bf16.xpose.msra.mxu0 0
        %4610 = vmatprep.subr.bf16.mxu0 0
        %4611 = vmatpush1.bf16.xpose.msra.mxu0 0
        %4612 = vmatprep.subr.bf16.mxu0 0
        %4613 = vmatpush1.bf16.xpose.msra.mxu0 0
        %4614 = vmatprep.subr.bf16.mxu0 0
        %4615 = vmatpush1.bf16.xpose.msra.mxu0 0
        %4616 = vmatprep.subr.bf16.mxu0 0
        %4617 = vmatpush1.bf16.xpose.msra.mxu0 0
        %4618 = vmatprep.subr.bf16.mxu0 0
        %4619 = vmatpush1.bf16.xpose.msra.mxu0 0
        %4620 = vmatprep.mubr.bf16.mxu0 0
        %4621 = vmatmul.mubr.bf16.gmra.mrb[0].mxu0 %v4583
        %v4622 = vpop.f32.mrb[0].mxu0
        %v4623 = vadd.f32 0.0, %v4622
        %v4624 = vpop.f32.mrb[0].mxu0
        %v4625 = vpop.f32.mrb[0].mxu0
        %v4626 = vpop.f32.mrb[0].mxu0
        %4627 = vdwg.mxu0
        %v4629 = vunpack.c.l.b16 %v4549
        %v4630 = vpack.c.b16 %v4629, %v4629
        %4631 = vrot.lane.b32.xlu0 %v4630, 64
        %v4632 = vpop.permute.xlu0 %4631
        %v4634 = vunpack.c.l.b16 %v4557
        %v4635 = vpack.c.b16 %v4634, %v4634
        %4636 = vrot.lane.b32.xlu0 %v4635, 64
        %v4637 = vpop.permute.xlu0 %4636
        %v4639 = vsel %vm702, %v4632, 0
        %v4642 = vsel %vm702, %v4637, 0
        %4644 = vmatprep.subr.bf16.mxu0 0
        %4645 = vmatpush1.bf16.xpose.msra.mxu0 %v4642
        %4646 = vmatprep.subr.bf16.mxu0 0
        %4647 = vmatpush1.bf16.xpose.msra.mxu0 0
        %4648 = vmatprep.subr.bf16.mxu0 0
        %4649 = vmatpush1.bf16.xpose.msra.mxu0 0
        %4650 = vmatprep.subr.bf16.mxu0 0
        %4651 = vmatpush1.bf16.xpose.msra.mxu0 0
        %4652 = vmatprep.subr.bf16.mxu0 0
        %4653 = vmatpush1.bf16.xpose.msra.mxu0 0
        %4654 = vmatprep.subr.bf16.mxu0 0
        %4655 = vmatpush1.bf16.xpose.msra.mxu0 0
        %4656 = vmatprep.subr.bf16.mxu0 0
        %4657 = vmatpush1.bf16.xpose.msra.mxu0 0
        %4658 = vmatprep.subr.bf16.mxu0 0
        %4659 = vmatpush1.bf16.xpose.msra.mxu0 0
        %4660 = vmatprep.subr.bf16.mxu0 0
        %4661 = vmatpush1.bf16.xpose.msra.mxu0 0
        %4662 = vmatprep.subr.bf16.mxu0 0
        %4663 = vmatpush1.bf16.xpose.msra.mxu0 0
        %4664 = vmatprep.subr.bf16.mxu0 0
        %4665 = vmatpush1.bf16.xpose.msra.mxu0 0
        %4666 = vmatprep.subr.bf16.mxu0 0
        %4667 = vmatpush1.bf16.xpose.msra.mxu0 0
        %4668 = vmatprep.subr.bf16.mxu0 0
        %4669 = vmatpush1.bf16.xpose.msra.mxu0 0
        %4670 = vmatprep.subr.bf16.mxu0 0
        %4671 = vmatpush1.bf16.xpose.msra.mxu0 0
        %4672 = vmatprep.subr.bf16.mxu0 0
        %4673 = vmatpush1.bf16.xpose.msra.mxu0 0
        %4674 = vmatprep.subr.bf16.mxu0 0
        %4675 = vmatpush1.bf16.xpose.msra.mxu0 0
        %4676 = vmatprep.mubr.bf16.mxu0 0
        %4677 = vmatmul.mubr.bf16.gmra.mrb[0].mxu0 %v4639
        %v4678 = vpop.f32.mrb[0].mxu0
        %v4679 = vadd.f32 0.0, %v4678
        %v4680 = vpop.f32.mrb[0].mxu0
        %v4681 = vpop.f32.mrb[0].mxu0
        %v4682 = vpop.f32.mrb[0].mxu0
        %4683 = vdwg.mxu0
        %v4685 = vunpack.c.l.b16 %v4550
        %v4686 = vpack.c.b16 %v4685, %v4685
        %4687 = vrot.lane.b32.xlu0 %v4686, 64
        %v4688 = vpop.permute.xlu0 %4687
        %v4690 = vunpack.c.l.b16 %v4558
        %v4691 = vpack.c.b16 %v4690, %v4690
        %4692 = vrot.lane.b32.xlu0 %v4691, 64
        %v4693 = vpop.permute.xlu0 %4692
        %v4695 = vsel %vm702, %v4688, 0
        %v4698 = vsel %vm702, %v4693, 0
        %4700 = vmatprep.subr.bf16.mxu0 0
        %4701 = vmatpush1.bf16.xpose.msra.mxu0 %v4698
        %4702 = vmatprep.subr.bf16.mxu0 0
        %4703 = vmatpush1.bf16.xpose.msra.mxu0 0
        %4704 = vmatprep.subr.bf16.mxu0 0
        %4705 = vmatpush1.bf16.xpose.msra.mxu0 0
        %4706 = vmatprep.subr.bf16.mxu0 0
        %4707 = vmatpush1.bf16.xpose.msra.mxu0 0
        %4708 = vmatprep.subr.bf16.mxu0 0
        %4709 = vmatpush1.bf16.xpose.msra.mxu0 0
        %4710 = vmatprep.subr.bf16.mxu0 0
        %4711 = vmatpush1.bf16.xpose.msra.mxu0 0
        %4712 = vmatprep.subr.bf16.mxu0 0
        %4713 = vmatpush1.bf16.xpose.msra.mxu0 0
        %4714 = vmatprep.subr.bf16.mxu0 0
        %4715 = vmatpush1.bf16.xpose.msra.mxu0 0
        %4716 = vmatprep.subr.bf16.mxu0 0
        %4717 = vmatpush1.bf16.xpose.msra.mxu0 0
        %4718 = vmatprep.subr.bf16.mxu0 0
        %4719 = vmatpush1.bf16.xpose.msra.mxu0 0
        %4720 = vmatprep.subr.bf16.mxu0 0
        %4721 = vmatpush1.bf16.xpose.msra.mxu0 0
        %4722 = vmatprep.subr.bf16.mxu0 0
        %4723 = vmatpush1.bf16.xpose.msra.mxu0 0
        %4724 = vmatprep.subr.bf16.mxu0 0
        %4725 = vmatpush1.bf16.xpose.msra.mxu0 0
        %4726 = vmatprep.subr.bf16.mxu0 0
        %4727 = vmatpush1.bf16.xpose.msra.mxu0 0
        %4728 = vmatprep.subr.bf16.mxu0 0
        %4729 = vmatpush1.bf16.xpose.msra.mxu0 0
        %4730 = vmatprep.subr.bf16.mxu0 0
        %4731 = vmatpush1.bf16.xpose.msra.mxu0 0
        %4732 = vmatprep.mubr.bf16.mxu0 0
        %4733 = vmatmul.mubr.bf16.gmra.mrb[0].mxu0 %v4695
        %v4734 = vpop.f32.mrb[0].mxu0
        %v4735 = vadd.f32 0.0, %v4734
        %v4736 = vpop.f32.mrb[0].mxu0
        %v4737 = vpop.f32.mrb[0].mxu0
        %v4738 = vpop.f32.mrb[0].mxu0
        %4739 = vdwg.mxu0
        %v4741 = vunpack.c.l.b16 %v4551
        %v4742 = vpack.c.b16 %v4741, %v4741
        %4743 = vrot.lane.b32.xlu0 %v4742, 64
        %v4744 = vpop.permute.xlu0 %4743
        %v4746 = vunpack.c.l.b16 %v4559
        %v4747 = vpack.c.b16 %v4746, %v4746
        %4748 = vrot.lane.b32.xlu0 %v4747, 64
        %v4749 = vpop.permute.xlu0 %4748
        %v4751 = vsel %vm702, %v4744, 0
        %v4754 = vsel %vm702, %v4749, 0
        %4756 = vmatprep.subr.bf16.mxu0 0
        %4757 = vmatpush1.bf16.xpose.msra.mxu0 %v4754
        %4758 = vmatprep.subr.bf16.mxu0 0
        %4759 = vmatpush1.bf16.xpose.msra.mxu0 0
        %4760 = vmatprep.subr.bf16.mxu0 0
        %4761 = vmatpush1.bf16.xpose.msra.mxu0 0
        %4762 = vmatprep.subr.bf16.mxu0 0
        %4763 = vmatpush1.bf16.xpose.msra.mxu0 0
        %4764 = vmatprep.subr.bf16.mxu0 0
        %4765 = vmatpush1.bf16.xpose.msra.mxu0 0
        %4766 = vmatprep.subr.bf16.mxu0 0
        %4767 = vmatpush1.bf16.xpose.msra.mxu0 0
        %4768 = vmatprep.subr.bf16.mxu0 0
        %4769 = vmatpush1.bf16.xpose.msra.mxu0 0
        %4770 = vmatprep.subr.bf16.mxu0 0
        %4771 = vmatpush1.bf16.xpose.msra.mxu0 0
        %4772 = vmatprep.subr.bf16.mxu0 0
        %4773 = vmatpush1.bf16.xpose.msra.mxu0 0
        %4774 = vmatprep.subr.bf16.mxu0 0
        %4775 = vmatpush1.bf16.xpose.msra.mxu0 0
        %4776 = vmatprep.subr.bf16.mxu0 0
        %4777 = vmatpush1.bf16.xpose.msra.mxu0 0
        %4778 = vmatprep.subr.bf16.mxu0 0
        %4779 = vmatpush1.bf16.xpose.msra.mxu0 0
        %4780 = vmatprep.subr.bf16.mxu0 0
        %4781 = vmatpush1.bf16.xpose.msra.mxu0 0
        %4782 = vmatprep.subr.bf16.mxu0 0
        %4783 = vmatpush1.bf16.xpose.msra.mxu0 0
        %4784 = vmatprep.subr.bf16.mxu0 0
        %4785 = vmatpush1.bf16.xpose.msra.mxu0 0
        %4786 = vmatprep.subr.bf16.mxu0 0
        %4787 = vmatpush1.bf16.xpose.msra.mxu0 0
        %4788 = vmatprep.mubr.bf16.mxu0 0
        %4789 = vmatmul.mubr.bf16.gmra.mrb[0].mxu0 %v4751
        %v4790 = vpop.f32.mrb[0].mxu0
        %v4791 = vadd.f32 0.0, %v4790
        %v4792 = vpop.f32.mrb[0].mxu0
        %v4793 = vpop.f32.mrb[0].mxu0
        %v4794 = vpop.f32.mrb[0].mxu0
        %4795 = vdwg.mxu0
        %v4797 = vunpack.c.l.b16 %v4552
        %v4798 = vpack.c.b16 %v4797, %v4797
        %4799 = vrot.lane.b32.xlu0 %v4798, 64
        %v4800 = vpop.permute.xlu0 %4799
        %v4802 = vunpack.c.l.b16 %v4560
        %v4803 = vpack.c.b16 %v4802, %v4802
        %4804 = vrot.lane.b32.xlu0 %v4803, 64
        %v4805 = vpop.permute.xlu0 %4804
        %v4807 = vsel %vm702, %v4800, 0
        %v4810 = vsel %vm702, %v4805, 0
        %4812 = vmatprep.subr.bf16.mxu0 0
        %4813 = vmatpush1.bf16.xpose.msra.mxu0 %v4810
        %4814 = vmatprep.subr.bf16.mxu0 0
        %4815 = vmatpush1.bf16.xpose.msra.mxu0 0
        %4816 = vmatprep.subr.bf16.mxu0 0
        %4817 = vmatpush1.bf16.xpose.msra.mxu0 0
        %4818 = vmatprep.subr.bf16.mxu0 0
        %4819 = vmatpush1.bf16.xpose.msra.mxu0 0
        %4820 = vmatprep.subr.bf16.mxu0 0
        %4821 = vmatpush1.bf16.xpose.msra.mxu0 0
        %4822 = vmatprep.subr.bf16.mxu0 0
        %4823 = vmatpush1.bf16.xpose.msra.mxu0 0
        %4824 = vmatprep.subr.bf16.mxu0 0
        %4825 = vmatpush1.bf16.xpose.msra.mxu0 0
        %4826 = vmatprep.subr.bf16.mxu0 0
        %4827 = vmatpush1.bf16.xpose.msra.mxu0 0
        %4828 = vmatprep.subr.bf16.mxu0 0
        %4829 = vmatpush1.bf16.xpose.msra.mxu0 0
        %4830 = vmatprep.subr.bf16.mxu0 0
        %4831 = vmatpush1.bf16.xpose.msra.mxu0 0
        %4832 = vmatprep.subr.bf16.mxu0 0
        %4833 = vmatpush1.bf16.xpose.msra.mxu0 0
        %4834 = vmatprep.subr.bf16.mxu0 0
        %4835 = vmatpush1.bf16.xpose.msra.mxu0 0
        %4836 = vmatprep.subr.bf16.mxu0 0
        %4837 = vmatpush1.bf16.xpose.msra.mxu0 0
        %4838 = vmatprep.subr.bf16.mxu0 0
        %4839 = vmatpush1.bf16.xpose.msra.mxu0 0
        %4840 = vmatprep.subr.bf16.mxu0 0
        %4841 = vmatpush1.bf16.xpose.msra.mxu0 0
        %4842 = vmatprep.subr.bf16.mxu0 0
        %4843 = vmatpush1.bf16.xpose.msra.mxu0 0
        %4844 = vmatprep.mubr.bf16.mxu0 0
        %4845 = vmatmul.mubr.bf16.gmra.mrb[0].mxu0 %v4807
        %v4846 = vpop.f32.mrb[0].mxu0
        %v4847 = vadd.f32 0.0, %v4846
        %v4848 = vpop.f32.mrb[0].mxu0
        %v4849 = vpop.f32.mrb[0].mxu0
        %v4850 = vpop.f32.mrb[0].mxu0
        %4851 = vdwg.mxu0
        %v4853 = vunpack.c.l.b16 %v4553
        %v4854 = vpack.c.b16 %v4853, %v4853
        %4855 = vrot.lane.b32.xlu0 %v4854, 64
        %v4856 = vpop.permute.xlu0 %4855
        %v4858 = vunpack.c.l.b16 %v4561
        %v4859 = vpack.c.b16 %v4858, %v4858
        %4860 = vrot.lane.b32.xlu0 %v4859, 64
        %v4861 = vpop.permute.xlu0 %4860
        %v4863 = vsel %vm702, %v4856, 0
        %v4866 = vsel %vm702, %v4861, 0
        %4868 = vmatprep.subr.bf16.mxu0 0
        %4869 = vmatpush1.bf16.xpose.msra.mxu0 %v4866
        %4870 = vmatprep.subr.bf16.mxu0 0
        %4871 = vmatpush1.bf16.xpose.msra.mxu0 0
        %4872 = vmatprep.subr.bf16.mxu0 0
        %4873 = vmatpush1.bf16.xpose.msra.mxu0 0
        %4874 = vmatprep.subr.bf16.mxu0 0
        %4875 = vmatpush1.bf16.xpose.msra.mxu0 0
        %4876 = vmatprep.subr.bf16.mxu0 0
        %4877 = vmatpush1.bf16.xpose.msra.mxu0 0
        %4878 = vmatprep.subr.bf16.mxu0 0
        %4879 = vmatpush1.bf16.xpose.msra.mxu0 0
        %4880 = vmatprep.subr.bf16.mxu0 0
        %4881 = vmatpush1.bf16.xpose.msra.mxu0 0
        %4882 = vmatprep.subr.bf16.mxu0 0
        %4883 = vmatpush1.bf16.xpose.msra.mxu0 0
        %4884 = vmatprep.subr.bf16.mxu0 0
        %4885 = vmatpush1.bf16.xpose.msra.mxu0 0
        %4886 = vmatprep.subr.bf16.mxu0 0
        %4887 = vmatpush1.bf16.xpose.msra.mxu0 0
        %4888 = vmatprep.subr.bf16.mxu0 0
        %4889 = vmatpush1.bf16.xpose.msra.mxu0 0
        %4890 = vmatprep.subr.bf16.mxu0 0
        %4891 = vmatpush1.bf16.xpose.msra.mxu0 0
        %4892 = vmatprep.subr.bf16.mxu0 0
        %4893 = vmatpush1.bf16.xpose.msra.mxu0 0
        %4894 = vmatprep.subr.bf16.mxu0 0
        %4895 = vmatpush1.bf16.xpose.msra.mxu0 0
        %4896 = vmatprep.subr.bf16.mxu0 0
        %4897 = vmatpush1.bf16.xpose.msra.mxu0 0
        %4898 = vmatprep.subr.bf16.mxu0 0
        %4899 = vmatpush1.bf16.xpose.msra.mxu0 0
        %4900 = vmatprep.mubr.bf16.mxu0 0
        %4901 = vmatmul.mubr.bf16.gmra.mrb[0].mxu0 %v4863
        %v4902 = vpop.f32.mrb[0].mxu0
        %v4903 = vadd.f32 0.0, %v4902
        %v4904 = vpop.f32.mrb[0].mxu0
        %v4905 = vpop.f32.mrb[0].mxu0
        %v4906 = vpop.f32.mrb[0].mxu0
        %4907 = vdwg.mxu0
        %v4909 = vunpack.c.l.b16 %v4554
        %v4910 = vpack.c.b16 %v4909, %v4909
        %4911 = vrot.lane.b32.xlu0 %v4910, 64
        %v4912 = vpop.permute.xlu0 %4911
        %v4914 = vunpack.c.l.b16 %v4562
        %v4915 = vpack.c.b16 %v4914, %v4914
        %4916 = vrot.lane.b32.xlu0 %v4915, 64
        %v4917 = vpop.permute.xlu0 %4916
        %v4919 = vsel %vm702, %v4912, 0
        %v4922 = vsel %vm702, %v4917, 0
        %4924 = vmatprep.subr.bf16.mxu0 0
        %4925 = vmatpush1.bf16.xpose.msra.mxu0 %v4922
        %4926 = vmatprep.subr.bf16.mxu0 0
        %4927 = vmatpush1.bf16.xpose.msra.mxu0 0
        %4928 = vmatprep.subr.bf16.mxu0 0
        %4929 = vmatpush1.bf16.xpose.msra.mxu0 0
        %4930 = vmatprep.subr.bf16.mxu0 0
        %4931 = vmatpush1.bf16.xpose.msra.mxu0 0
        %4932 = vmatprep.subr.bf16.mxu0 0
        %4933 = vmatpush1.bf16.xpose.msra.mxu0 0
        %4934 = vmatprep.subr.bf16.mxu0 0
        %4935 = vmatpush1.bf16.xpose.msra.mxu0 0
        %4936 = vmatprep.subr.bf16.mxu0 0
        %4937 = vmatpush1.bf16.xpose.msra.mxu0 0
        %4938 = vmatprep.subr.bf16.mxu0 0
        %4939 = vmatpush1.bf16.xpose.msra.mxu0 0
        %4940 = vmatprep.subr.bf16.mxu0 0
        %4941 = vmatpush1.bf16.xpose.msra.mxu0 0
        %4942 = vmatprep.subr.bf16.mxu0 0
        %4943 = vmatpush1.bf16.xpose.msra.mxu0 0
        %4944 = vmatprep.subr.bf16.mxu0 0
        %4945 = vmatpush1.bf16.xpose.msra.mxu0 0
        %4946 = vmatprep.subr.bf16.mxu0 0
        %4947 = vmatpush1.bf16.xpose.msra.mxu0 0
        %4948 = vmatprep.subr.bf16.mxu0 0
        %4949 = vmatpush1.bf16.xpose.msra.mxu0 0
        %4950 = vmatprep.subr.bf16.mxu0 0
        %4951 = vmatpush1.bf16.xpose.msra.mxu0 0
        %4952 = vmatprep.subr.bf16.mxu0 0
        %4953 = vmatpush1.bf16.xpose.msra.mxu0 0
        %4954 = vmatprep.subr.bf16.mxu0 0
        %4955 = vmatpush1.bf16.xpose.msra.mxu0 0
        %4956 = vmatprep.mubr.bf16.mxu0 0
        %4957 = vmatmul.mubr.bf16.gmra.mrb[0].mxu0 %v4919
        %v4958 = vpop.f32.mrb[0].mxu0
        %v4959 = vadd.f32 0.0, %v4958
        %v4960 = vpop.f32.mrb[0].mxu0
        %v4961 = vpop.f32.mrb[0].mxu0
        %v4962 = vpop.f32.mrb[0].mxu0
        %4963 = vdwg.mxu0
        %v4965 = vunpack.c.l.b16 %v4555
        %v4966 = vpack.c.b16 %v4965, %v4965
        %4967 = vrot.lane.b32.xlu0 %v4966, 64
        %v4968 = vpop.permute.xlu0 %4967
        %v4970 = vunpack.c.l.b16 %v4563
        %v4971 = vpack.c.b16 %v4970, %v4970
        %4972 = vrot.lane.b32.xlu0 %v4971, 64
        %v4973 = vpop.permute.xlu0 %4972
        %v4975 = vsel %vm702, %v4968, 0
        %v4978 = vsel %vm702, %v4973, 0
        %4980 = vmatprep.subr.bf16.mxu0 0
        %4981 = vmatpush1.bf16.xpose.msra.mxu0 %v4978
        %4982 = vmatprep.subr.bf16.mxu0 0
        %4983 = vmatpush1.bf16.xpose.msra.mxu0 0
        %4984 = vmatprep.subr.bf16.mxu0 0
        %4985 = vmatpush1.bf16.xpose.msra.mxu0 0
        %4986 = vmatprep.subr.bf16.mxu0 0
        %4987 = vmatpush1.bf16.xpose.msra.mxu0 0
        %4988 = vmatprep.subr.bf16.mxu0 0
        %4989 = vmatpush1.bf16.xpose.msra.mxu0 0
        %4990 = vmatprep.subr.bf16.mxu0 0
        %4991 = vmatpush1.bf16.xpose.msra.mxu0 0
        %4992 = vmatprep.subr.bf16.mxu0 0
        %4993 = vmatpush1.bf16.xpose.msra.mxu0 0
        %4994 = vmatprep.subr.bf16.mxu0 0
        %4995 = vmatpush1.bf16.xpose.msra.mxu0 0
        %4996 = vmatprep.subr.bf16.mxu0 0
        %4997 = vmatpush1.bf16.xpose.msra.mxu0 0
        %4998 = vmatprep.subr.bf16.mxu0 0
        %4999 = vmatpush1.bf16.xpose.msra.mxu0 0
        %5000 = vmatprep.subr.bf16.mxu0 0
        %5001 = vmatpush1.bf16.xpose.msra.mxu0 0
        %5002 = vmatprep.subr.bf16.mxu0 0
        %5003 = vmatpush1.bf16.xpose.msra.mxu0 0
        %5004 = vmatprep.subr.bf16.mxu0 0
        %5005 = vmatpush1.bf16.xpose.msra.mxu0 0
        %5006 = vmatprep.subr.bf16.mxu0 0
        %5007 = vmatpush1.bf16.xpose.msra.mxu0 0
        %5008 = vmatprep.subr.bf16.mxu0 0
        %5009 = vmatpush1.bf16.xpose.msra.mxu0 0
        %5010 = vmatprep.subr.bf16.mxu0 0
        %5011 = vmatpush1.bf16.xpose.msra.mxu0 0
        %5012 = vmatprep.mubr.bf16.mxu0 0
        %5013 = vmatmul.mubr.bf16.gmra.mrb[0].mxu0 %v4975
        %v5014 = vpop.f32.mrb[0].mxu0
        %v5015 = vadd.f32 0.0, %v5014
        %v5016 = vpop.f32.mrb[0].mxu0
        %v5017 = vpop.f32.mrb[0].mxu0
        %v5018 = vpop.f32.mrb[0].mxu0
        %5019 = vdwg.mxu0
        %v5020 = vsel %vm1071, %v4623, -inf
        %5021 = vmax.xlane.f32.xlu0 %v5020
        %v5022 = vpop.xlane.xlu0 %5021
        %v5023 = vsel %vm1071, %v4679, -inf
        %5024 = vmax.xlane.f32.xlu0 %v5023
        %v5025 = vpop.xlane.xlu0 %5024
        %v5026 = vsel %vm1071, %v4735, -inf
        %5027 = vmax.xlane.f32.xlu0 %v5026
        %v5028 = vpop.xlane.xlu0 %5027
        %v5029 = vsel %vm1071, %v4791, -inf
        %5030 = vmax.xlane.f32.xlu0 %v5029
        %v5031 = vpop.xlane.xlu0 %5030
        %v5032 = vsel %vm1071, %v4847, -inf
        %5033 = vmax.xlane.f32.xlu0 %v5032
        %v5034 = vpop.xlane.xlu0 %5033
        %v5035 = vsel %vm1071, %v4903, -inf
        %5036 = vmax.xlane.f32.xlu0 %v5035
        %v5037 = vpop.xlane.xlu0 %5036
        %v5038 = vsel %vm1071, %v4959, -inf
        %5039 = vmax.xlane.f32.xlu0 %v5038
        %v5040 = vpop.xlane.xlu0 %5039
        %v5041 = vsel %vm1071, %v5015, -inf
        %5042 = vmax.xlane.f32.xlu0 %v5041
        %v5043 = vpop.xlane.xlu0 %5042
        %v5044 = vsub.f32 %v4623, %v5022
        %v5045 = vsub.f32 %v4679, %v5025
        %v5046 = vsub.f32 %v4735, %v5028
        %v5047 = vsub.f32 %v4791, %v5031
        %v5048 = vsub.f32 %v4847, %v5034
        %v5049 = vsub.f32 %v4903, %v5037
        %v5050 = vsub.f32 %v4959, %v5040
        %v5051 = vsub.f32 %v5015, %v5043
        %v5052 = vmul.f32 %v5044, 1.442695
        %v5053 = vpow.pop %v5052
        %v5054 = vmul.f32 %v5045, 1.442695
        %v5055 = vpow.pop %v5054
        %v5056 = vmul.f32 %v5046, 1.442695
        %v5057 = vpow.pop %v5056
        %v5058 = vmul.f32 %v5047, 1.442695
        %v5059 = vpow.pop %v5058
        %v5060 = vmul.f32 %v5048, 1.442695
        %v5061 = vpow.pop %v5060
        %v5062 = vmul.f32 %v5049, 1.442695
        %v5063 = vpow.pop %v5062
        %v5064 = vmul.f32 %v5050, 1.442695
        %v5065 = vpow.pop %v5064
        %v5066 = vmul.f32 %v5051, 1.442695
        %v5067 = vpow.pop %v5066
        %v5068 = vsel %vm1071, %v5053, 0.0
        %5069 = vadd.xlane.f32.xlu0 %v5068
        %v5070 = vpop.xlane.xlu0 %5069
        %v5071 = vsel %vm1071, %v5055, 0.0
        %5072 = vadd.xlane.f32.xlu0 %v5071
        %v5073 = vpop.xlane.xlu0 %5072
        %v5074 = vsel %vm1071, %v5057, 0.0
        %5075 = vadd.xlane.f32.xlu0 %v5074
        %v5076 = vpop.xlane.xlu0 %5075
        %v5077 = vsel %vm1071, %v5059, 0.0
        %5078 = vadd.xlane.f32.xlu0 %v5077
        %v5079 = vpop.xlane.xlu0 %5078
        %v5080 = vsel %vm1071, %v5061, 0.0
        %5081 = vadd.xlane.f32.xlu0 %v5080
        %v5082 = vpop.xlane.xlu0 %5081
        %v5083 = vsel %vm1071, %v5063, 0.0
        %5084 = vadd.xlane.f32.xlu0 %v5083
        %v5085 = vpop.xlane.xlu0 %5084
        %v5086 = vsel %vm1071, %v5065, 0.0
        %5087 = vadd.xlane.f32.xlu0 %v5086
        %v5088 = vpop.xlane.xlu0 %5087
        %v5089 = vsel %vm1071, %v5067, 0.0
        %5090 = vadd.xlane.f32.xlu0 %v5089
        %v5091 = vpop.xlane.xlu0 %5090
        %v5092 = vrcp.pop %v5070
        %v5093 = vrcp.pop %v5073
        %v5094 = vrcp.pop %v5076
        %v5095 = vrcp.pop %v5079
        %v5096 = vrcp.pop %v5082
        %v5097 = vrcp.pop %v5085
        %v5098 = vrcp.pop %v5088
        %v5099 = vrcp.pop %v5091
        %v5100 = vmul.f32 %v5053, %v5092
        %v5101 = vmul.f32 %v5055, %v5093
        %v5102 = vmul.f32 %v5057, %v5094
        %v5103 = vmul.f32 %v5059, %v5095
        %v5104 = vmul.f32 %v5061, %v5096
        %v5105 = vmul.f32 %v5063, %v5097
        %v5106 = vmul.f32 %v5065, %v5098
        %v5107 = vmul.f32 %v5067, %v5099
        %v5108 = vpack.c.bf16 %v5100, %v5100
        %v5109 = vpack.c.bf16 %v5101, %v5101
        %v5110 = vpack.c.bf16 %v5102, %v5102
        %v5111 = vpack.c.bf16 %v5103, %v5103
        %v5112 = vpack.c.bf16 %v5104, %v5104
        %v5113 = vpack.c.bf16 %v5105, %v5105
        %v5114 = vpack.c.bf16 %v5106, %v5106
        %v5115 = vpack.c.bf16 %v5107, %v5107
        %v5117 = vunpack.c.l.b16 %v4564
        %v5118 = vpack.c.b16 %v5117, %v5117
        %5119 = vrot.lane.b32.xlu0 %v5118, 64
        %v5120 = vpop.permute.xlu0 %5119
        %v5122 = vsel %vm1071, %v5108, 0
        %v5125 = vsel %vm1171, %v5120, 0
        %5127 = vmatprep.subr.bf16.mxu0 0
        %5128 = vmatpush1.bf16.msra.mxu0 %v5125
        %5129 = vmatprep.subr.bf16.mxu0 0
        %5130 = vmatpush1.bf16.msra.mxu0 0
        %5131 = vmatprep.subr.bf16.mxu0 0
        %5132 = vmatpush1.bf16.msra.mxu0 0
        %5133 = vmatprep.subr.bf16.mxu0 0
        %5134 = vmatpush1.bf16.msra.mxu0 0
        %5135 = vmatprep.subr.bf16.mxu0 0
        %5136 = vmatpush1.bf16.msra.mxu0 0
        %5137 = vmatprep.subr.bf16.mxu0 0
        %5138 = vmatpush1.bf16.msra.mxu0 0
        %5139 = vmatprep.subr.bf16.mxu0 0
        %5140 = vmatpush1.bf16.msra.mxu0 0
        %5141 = vmatprep.subr.bf16.mxu0 0
        %5142 = vmatpush1.bf16.msra.mxu0 0
        %5143 = vmatprep.subr.bf16.mxu0 0
        %5144 = vmatpush1.bf16.msra.mxu0 0
        %5145 = vmatprep.subr.bf16.mxu0 0
        %5146 = vmatpush1.bf16.msra.mxu0 0
        %5147 = vmatprep.subr.bf16.mxu0 0
        %5148 = vmatpush1.bf16.msra.mxu0 0
        %5149 = vmatprep.subr.bf16.mxu0 0
        %5150 = vmatpush1.bf16.msra.mxu0 0
        %5151 = vmatprep.subr.bf16.mxu0 0
        %5152 = vmatpush1.bf16.msra.mxu0 0
        %5153 = vmatprep.subr.bf16.mxu0 0
        %5154 = vmatpush1.bf16.msra.mxu0 0
        %5155 = vmatprep.subr.bf16.mxu0 0
        %5156 = vmatpush1.bf16.msra.mxu0 0
        %5157 = vmatprep.subr.bf16.mxu0 0
        %5158 = vmatpush1.bf16.msra.mxu0 0
        %5159 = vmatprep.mubr.bf16.mxu0 0
        %5160 = vmatmul.mubr.bf16.gmra.mrb[0].mxu0 %v5122
        %v5161 = vpop.f32.mrb[0].mxu0
        %v5162 = vadd.f32 0.0, %v5161
        %v5163 = vpop.f32.mrb[0].mxu0
        %v5164 = vpop.f32.mrb[0].mxu0
        %v5165 = vpop.f32.mrb[0].mxu0
        %5166 = vdwg.mxu0
        %v5168 = vunpack.c.l.b16 %v4565
        %v5169 = vpack.c.b16 %v5168, %v5168
        %5170 = vrot.lane.b32.xlu0 %v5169, 64
        %v5171 = vpop.permute.xlu0 %5170
        %v5173 = vsel %vm1071, %v5109, 0
        %v5176 = vsel %vm1171, %v5171, 0
        %5178 = vmatprep.subr.bf16.mxu0 0
        %5179 = vmatpush1.bf16.msra.mxu0 %v5176
        %5180 = vmatprep.subr.bf16.mxu0 0
        %5181 = vmatpush1.bf16.msra.mxu0 0
        %5182 = vmatprep.subr.bf16.mxu0 0
        %5183 = vmatpush1.bf16.msra.mxu0 0
        %5184 = vmatprep.subr.bf16.mxu0 0
        %5185 = vmatpush1.bf16.msra.mxu0 0
        %5186 = vmatprep.subr.bf16.mxu0 0
        %5187 = vmatpush1.bf16.msra.mxu0 0
        %5188 = vmatprep.subr.bf16.mxu0 0
        %5189 = vmatpush1.bf16.msra.mxu0 0
        %5190 = vmatprep.subr.bf16.mxu0 0
        %5191 = vmatpush1.bf16.msra.mxu0 0
        %5192 = vmatprep.subr.bf16.mxu0 0
        %5193 = vmatpush1.bf16.msra.mxu0 0
        %5194 = vmatprep.subr.bf16.mxu0 0
        %5195 = vmatpush1.bf16.msra.mxu0 0
        %5196 = vmatprep.subr.bf16.mxu0 0
        %5197 = vmatpush1.bf16.msra.mxu0 0
        %5198 = vmatprep.subr.bf16.mxu0 0
        %5199 = vmatpush1.bf16.msra.mxu0 0
        %5200 = vmatprep.subr.bf16.mxu0 0
        %5201 = vmatpush1.bf16.msra.mxu0 0
        %5202 = vmatprep.subr.bf16.mxu0 0
        %5203 = vmatpush1.bf16.msra.mxu0 0
        %5204 = vmatprep.subr.bf16.mxu0 0
        %5205 = vmatpush1.bf16.msra.mxu0 0
        %5206 = vmatprep.subr.bf16.mxu0 0
        %5207 = vmatpush1.bf16.msra.mxu0 0
        %5208 = vmatprep.subr.bf16.mxu0 0
        %5209 = vmatpush1.bf16.msra.mxu0 0
        %5210 = vmatprep.mubr.bf16.mxu0 0
        %5211 = vmatmul.mubr.bf16.gmra.mrb[0].mxu0 %v5173
        %v5212 = vpop.f32.mrb[0].mxu0
        %v5213 = vadd.f32 0.0, %v5212
        %v5214 = vpop.f32.mrb[0].mxu0
        %v5215 = vpop.f32.mrb[0].mxu0
        %v5216 = vpop.f32.mrb[0].mxu0
        %5217 = vdwg.mxu0
        %v5219 = vunpack.c.l.b16 %v4566
        %v5220 = vpack.c.b16 %v5219, %v5219
        %5221 = vrot.lane.b32.xlu0 %v5220, 64
        %v5222 = vpop.permute.xlu0 %5221
        %v5224 = vsel %vm1071, %v5110, 0
        %v5227 = vsel %vm1171, %v5222, 0
        %5229 = vmatprep.subr.bf16.mxu0 0
        %5230 = vmatpush1.bf16.msra.mxu0 %v5227
        %5231 = vmatprep.subr.bf16.mxu0 0
        %5232 = vmatpush1.bf16.msra.mxu0 0
        %5233 = vmatprep.subr.bf16.mxu0 0
        %5234 = vmatpush1.bf16.msra.mxu0 0
        %5235 = vmatprep.subr.bf16.mxu0 0
        %5236 = vmatpush1.bf16.msra.mxu0 0
        %5237 = vmatprep.subr.bf16.mxu0 0
        %5238 = vmatpush1.bf16.msra.mxu0 0
        %5239 = vmatprep.subr.bf16.mxu0 0
        %5240 = vmatpush1.bf16.msra.mxu0 0
        %5241 = vmatprep.subr.bf16.mxu0 0
        %5242 = vmatpush1.bf16.msra.mxu0 0
        %5243 = vmatprep.subr.bf16.mxu0 0
        %5244 = vmatpush1.bf16.msra.mxu0 0
        %5245 = vmatprep.subr.bf16.mxu0 0
        %5246 = vmatpush1.bf16.msra.mxu0 0
        %5247 = vmatprep.subr.bf16.mxu0 0
        %5248 = vmatpush1.bf16.msra.mxu0 0
        %5249 = vmatprep.subr.bf16.mxu0 0
        %5250 = vmatpush1.bf16.msra.mxu0 0
        %5251 = vmatprep.subr.bf16.mxu0 0
        %5252 = vmatpush1.bf16.msra.mxu0 0
        %5253 = vmatprep.subr.bf16.mxu0 0
        %5254 = vmatpush1.bf16.msra.mxu0 0
        %5255 = vmatprep.subr.bf16.mxu0 0
        %5256 = vmatpush1.bf16.msra.mxu0 0
        %5257 = vmatprep.subr.bf16.mxu0 0
        %5258 = vmatpush1.bf16.msra.mxu0 0
        %5259 = vmatprep.subr.bf16.mxu0 0
        %5260 = vmatpush1.bf16.msra.mxu0 0
        %5261 = vmatprep.mubr.bf16.mxu0 0
        %5262 = vmatmul.mubr.bf16.gmra.mrb[0].mxu0 %v5224
        %v5263 = vpop.f32.mrb[0].mxu0
        %v5264 = vadd.f32 0.0, %v5263
        %v5265 = vpop.f32.mrb[0].mxu0
        %v5266 = vpop.f32.mrb[0].mxu0
        %v5267 = vpop.f32.mrb[0].mxu0
        %5268 = vdwg.mxu0
        %v5270 = vunpack.c.l.b16 %v4567
        %v5271 = vpack.c.b16 %v5270, %v5270
        %5272 = vrot.lane.b32.xlu0 %v5271, 64
        %v5273 = vpop.permute.xlu0 %5272
        %v5275 = vsel %vm1071, %v5111, 0
        %v5278 = vsel %vm1171, %v5273, 0
        %5280 = vmatprep.subr.bf16.mxu0 0
        %5281 = vmatpush1.bf16.msra.mxu0 %v5278
        %5282 = vmatprep.subr.bf16.mxu0 0
        %5283 = vmatpush1.bf16.msra.mxu0 0
        %5284 = vmatprep.subr.bf16.mxu0 0
        %5285 = vmatpush1.bf16.msra.mxu0 0
        %5286 = vmatprep.subr.bf16.mxu0 0
        %5287 = vmatpush1.bf16.msra.mxu0 0
        %5288 = vmatprep.subr.bf16.mxu0 0
        %5289 = vmatpush1.bf16.msra.mxu0 0
        %5290 = vmatprep.subr.bf16.mxu0 0
        %5291 = vmatpush1.bf16.msra.mxu0 0
        %5292 = vmatprep.subr.bf16.mxu0 0
        %5293 = vmatpush1.bf16.msra.mxu0 0
        %5294 = vmatprep.subr.bf16.mxu0 0
        %5295 = vmatpush1.bf16.msra.mxu0 0
        %5296 = vmatprep.subr.bf16.mxu0 0
        %5297 = vmatpush1.bf16.msra.mxu0 0
        %5298 = vmatprep.subr.bf16.mxu0 0
        %5299 = vmatpush1.bf16.msra.mxu0 0
        %5300 = vmatprep.subr.bf16.mxu0 0
        %5301 = vmatpush1.bf16.msra.mxu0 0
        %5302 = vmatprep.subr.bf16.mxu0 0
        %5303 = vmatpush1.bf16.msra.mxu0 0
        %5304 = vmatprep.subr.bf16.mxu0 0
        %5305 = vmatpush1.bf16.msra.mxu0 0
        %5306 = vmatprep.subr.bf16.mxu0 0
        %5307 = vmatpush1.bf16.msra.mxu0 0
        %5308 = vmatprep.subr.bf16.mxu0 0
        %5309 = vmatpush1.bf16.msra.mxu0 0
        %5310 = vmatprep.subr.bf16.mxu0 0
        %5311 = vmatpush1.bf16.msra.mxu0 0
        %5312 = vmatprep.mubr.bf16.mxu0 0
        %5313 = vmatmul.mubr.bf16.gmra.mrb[0].mxu0 %v5275
        %v5314 = vpop.f32.mrb[0].mxu0
        %v5315 = vadd.f32 0.0, %v5314
        %v5316 = vpop.f32.mrb[0].mxu0
        %v5317 = vpop.f32.mrb[0].mxu0
        %v5318 = vpop.f32.mrb[0].mxu0
        %5319 = vdwg.mxu0
        %v5321 = vunpack.c.l.b16 %v4568
        %v5322 = vpack.c.b16 %v5321, %v5321
        %5323 = vrot.lane.b32.xlu0 %v5322, 64
        %v5324 = vpop.permute.xlu0 %5323
        %v5326 = vsel %vm1071, %v5112, 0
        %v5329 = vsel %vm1171, %v5324, 0
        %5331 = vmatprep.subr.bf16.mxu0 0
        %5332 = vmatpush1.bf16.msra.mxu0 %v5329
        %5333 = vmatprep.subr.bf16.mxu0 0
        %5334 = vmatpush1.bf16.msra.mxu0 0
        %5335 = vmatprep.subr.bf16.mxu0 0
        %5336 = vmatpush1.bf16.msra.mxu0 0
        %5337 = vmatprep.subr.bf16.mxu0 0
        %5338 = vmatpush1.bf16.msra.mxu0 0
        %5339 = vmatprep.subr.bf16.mxu0 0
        %5340 = vmatpush1.bf16.msra.mxu0 0
        %5341 = vmatprep.subr.bf16.mxu0 0
        %5342 = vmatpush1.bf16.msra.mxu0 0
        %5343 = vmatprep.subr.bf16.mxu0 0
        %5344 = vmatpush1.bf16.msra.mxu0 0
        %5345 = vmatprep.subr.bf16.mxu0 0
        %5346 = vmatpush1.bf16.msra.mxu0 0
        %5347 = vmatprep.subr.bf16.mxu0 0
        %5348 = vmatpush1.bf16.msra.mxu0 0
        %5349 = vmatprep.subr.bf16.mxu0 0
        %5350 = vmatpush1.bf16.msra.mxu0 0
        %5351 = vmatprep.subr.bf16.mxu0 0
        %5352 = vmatpush1.bf16.msra.mxu0 0
        %5353 = vmatprep.subr.bf16.mxu0 0
        %5354 = vmatpush1.bf16.msra.mxu0 0
        %5355 = vmatprep.subr.bf16.mxu0 0
        %5356 = vmatpush1.bf16.msra.mxu0 0
        %5357 = vmatprep.subr.bf16.mxu0 0
        %5358 = vmatpush1.bf16.msra.mxu0 0
        %5359 = vmatprep.subr.bf16.mxu0 0
        %5360 = vmatpush1.bf16.msra.mxu0 0
        %5361 = vmatprep.subr.bf16.mxu0 0
        %5362 = vmatpush1.bf16.msra.mxu0 0
        %5363 = vmatprep.mubr.bf16.mxu0 0
        %5364 = vmatmul.mubr.bf16.gmra.mrb[0].mxu0 %v5326
        %v5365 = vpop.f32.mrb[0].mxu0
        %v5366 = vadd.f32 0.0, %v5365
        %v5367 = vpop.f32.mrb[0].mxu0
        %v5368 = vpop.f32.mrb[0].mxu0
        %v5369 = vpop.f32.mrb[0].mxu0
        %5370 = vdwg.mxu0
        %v5372 = vunpack.c.l.b16 %v4569
        %v5373 = vpack.c.b16 %v5372, %v5372
        %5374 = vrot.lane.b32.xlu0 %v5373, 64
        %v5375 = vpop.permute.xlu0 %5374
        %v5377 = vsel %vm1071, %v5113, 0
        %v5380 = vsel %vm1171, %v5375, 0
        %5382 = vmatprep.subr.bf16.mxu0 0
        %5383 = vmatpush1.bf16.msra.mxu0 %v5380
        %5384 = vmatprep.subr.bf16.mxu0 0
        %5385 = vmatpush1.bf16.msra.mxu0 0
        %5386 = vmatprep.subr.bf16.mxu0 0
        %5387 = vmatpush1.bf16.msra.mxu0 0
        %5388 = vmatprep.subr.bf16.mxu0 0
        %5389 = vmatpush1.bf16.msra.mxu0 0
        %5390 = vmatprep.subr.bf16.mxu0 0
        %5391 = vmatpush1.bf16.msra.mxu0 0
        %5392 = vmatprep.subr.bf16.mxu0 0
        %5393 = vmatpush1.bf16.msra.mxu0 0
        %5394 = vmatprep.subr.bf16.mxu0 0
        %5395 = vmatpush1.bf16.msra.mxu0 0
        %5396 = vmatprep.subr.bf16.mxu0 0
        %5397 = vmatpush1.bf16.msra.mxu0 0
        %5398 = vmatprep.subr.bf16.mxu0 0
        %5399 = vmatpush1.bf16.msra.mxu0 0
        %5400 = vmatprep.subr.bf16.mxu0 0
        %5401 = vmatpush1.bf16.msra.mxu0 0
        %5402 = vmatprep.subr.bf16.mxu0 0
        %5403 = vmatpush1.bf16.msra.mxu0 0
        %5404 = vmatprep.subr.bf16.mxu0 0
        %5405 = vmatpush1.bf16.msra.mxu0 0
        %5406 = vmatprep.subr.bf16.mxu0 0
        %5407 = vmatpush1.bf16.msra.mxu0 0
        %5408 = vmatprep.subr.bf16.mxu0 0
        %5409 = vmatpush1.bf16.msra.mxu0 0
        %5410 = vmatprep.subr.bf16.mxu0 0
        %5411 = vmatpush1.bf16.msra.mxu0 0
        %5412 = vmatprep.subr.bf16.mxu0 0
        %5413 = vmatpush1.bf16.msra.mxu0 0
        %5414 = vmatprep.mubr.bf16.mxu0 0
        %5415 = vmatmul.mubr.bf16.gmra.mrb[0].mxu0 %v5377
        %v5416 = vpop.f32.mrb[0].mxu0
        %v5417 = vadd.f32 0.0, %v5416
        %v5418 = vpop.f32.mrb[0].mxu0
        %v5419 = vpop.f32.mrb[0].mxu0
        %v5420 = vpop.f32.mrb[0].mxu0
        %5421 = vdwg.mxu0
        %v5423 = vunpack.c.l.b16 %v4570
        %v5424 = vpack.c.b16 %v5423, %v5423
        %5425 = vrot.lane.b32.xlu0 %v5424, 64
        %v5426 = vpop.permute.xlu0 %5425
        %v5428 = vsel %vm1071, %v5114, 0
        %v5431 = vsel %vm1171, %v5426, 0
        %5433 = vmatprep.subr.bf16.mxu0 0
        %5434 = vmatpush1.bf16.msra.mxu0 %v5431
        %5435 = vmatprep.subr.bf16.mxu0 0
        %5436 = vmatpush1.bf16.msra.mxu0 0
        %5437 = vmatprep.subr.bf16.mxu0 0
        %5438 = vmatpush1.bf16.msra.mxu0 0
        %5439 = vmatprep.subr.bf16.mxu0 0
        %5440 = vmatpush1.bf16.msra.mxu0 0
        %5441 = vmatprep.subr.bf16.mxu0 0
        %5442 = vmatpush1.bf16.msra.mxu0 0
        %5443 = vmatprep.subr.bf16.mxu0 0
        %5444 = vmatpush1.bf16.msra.mxu0 0
        %5445 = vmatprep.subr.bf16.mxu0 0
        %5446 = vmatpush1.bf16.msra.mxu0 0
        %5447 = vmatprep.subr.bf16.mxu0 0
        %5448 = vmatpush1.bf16.msra.mxu0 0
        %5449 = vmatprep.subr.bf16.mxu0 0
        %5450 = vmatpush1.bf16.msra.mxu0 0
        %5451 = vmatprep.subr.bf16.mxu0 0
        %5452 = vmatpush1.bf16.msra.mxu0 0
        %5453 = vmatprep.subr.bf16.mxu0 0
        %5454 = vmatpush1.bf16.msra.mxu0 0
        %5455 = vmatprep.subr.bf16.mxu0 0
        %5456 = vmatpush1.bf16.msra.mxu0 0
        %5457 = vmatprep.subr.bf16.mxu0 0
        %5458 = vmatpush1.bf16.msra.mxu0 0
        %5459 = vmatprep.subr.bf16.mxu0 0
        %5460 = vmatpush1.bf16.msra.mxu0 0
        %5461 = vmatprep.subr.bf16.mxu0 0
        %5462 = vmatpush1.bf16.msra.mxu0 0
        %5463 = vmatprep.subr.bf16.mxu0 0
        %5464 = vmatpush1.bf16.msra.mxu0 0
        %5465 = vmatprep.mubr.bf16.mxu0 0
        %5466 = vmatmul.mubr.bf16.gmra.mrb[0].mxu0 %v5428
        %v5467 = vpop.f32.mrb[0].mxu0
        %v5468 = vadd.f32 0.0, %v5467
        %v5469 = vpop.f32.mrb[0].mxu0
        %v5470 = vpop.f32.mrb[0].mxu0
        %v5471 = vpop.f32.mrb[0].mxu0
        %5472 = vdwg.mxu0
        %v5474 = vunpack.c.l.b16 %v4571
        %v5475 = vpack.c.b16 %v5474, %v5474
        %5476 = vrot.lane.b32.xlu0 %v5475, 64
        %v5477 = vpop.permute.xlu0 %5476
        %v5479 = vsel %vm1071, %v5115, 0
        %v5482 = vsel %vm1171, %v5477, 0
        %5484 = vmatprep.subr.bf16.mxu0 0
        %5485 = vmatpush1.bf16.msra.mxu0 %v5482
        %5486 = vmatprep.subr.bf16.mxu0 0
        %5487 = vmatpush1.bf16.msra.mxu0 0
        %5488 = vmatprep.subr.bf16.mxu0 0
        %5489 = vmatpush1.bf16.msra.mxu0 0
        %5490 = vmatprep.subr.bf16.mxu0 0
        %5491 = vmatpush1.bf16.msra.mxu0 0
        %5492 = vmatprep.subr.bf16.mxu0 0
        %5493 = vmatpush1.bf16.msra.mxu0 0
        %5494 = vmatprep.subr.bf16.mxu0 0
        %5495 = vmatpush1.bf16.msra.mxu0 0
        %5496 = vmatprep.subr.bf16.mxu0 0
        %5497 = vmatpush1.bf16.msra.mxu0 0
        %5498 = vmatprep.subr.bf16.mxu0 0
        %5499 = vmatpush1.bf16.msra.mxu0 0
        %5500 = vmatprep.subr.bf16.mxu0 0
        %5501 = vmatpush1.bf16.msra.mxu0 0
        %5502 = vmatprep.subr.bf16.mxu0 0
        %5503 = vmatpush1.bf16.msra.mxu0 0
        %5504 = vmatprep.subr.bf16.mxu0 0
        %5505 = vmatpush1.bf16.msra.mxu0 0
        %5506 = vmatprep.subr.bf16.mxu0 0
        %5507 = vmatpush1.bf16.msra.mxu0 0
        %5508 = vmatprep.subr.bf16.mxu0 0
        %5509 = vmatpush1.bf16.msra.mxu0 0
        %5510 = vmatprep.subr.bf16.mxu0 0
        %5511 = vmatpush1.bf16.msra.mxu0 0
        %5512 = vmatprep.subr.bf16.mxu0 0
        %5513 = vmatpush1.bf16.msra.mxu0 0
        %5514 = vmatprep.subr.bf16.mxu0 0
        %5515 = vmatpush1.bf16.msra.mxu0 0
        %5516 = vmatprep.mubr.bf16.mxu0 0
        %5517 = vmatmul.mubr.bf16.gmra.mrb[0].mxu0 %v5479
        %v5518 = vpop.f32.mrb[0].mxu0
        %v5519 = vadd.f32 0.0, %v5518
        %v5520 = vpop.f32.mrb[0].mxu0
        %v5521 = vpop.f32.mrb[0].mxu0
        %v5522 = vpop.f32.mrb[0].mxu0
        %5523 = vdwg.mxu0
        %v5524 = vpack.c.bf16 %v5213, %v5162
        %v5525 = vpack.c.bf16 %v5315, %v5264
        %v5526 = vpack.c.bf16 %v5417, %v5366
        %v5527 = vpack.c.bf16 %v5519, %v5468
        %5532 = vrot.lane.b32.xlu0 %v5524, 64
        %v5533 = vpop.permute.xlu0 %5532
        %5534 = vrot.lane.b32.xlu0 %v5525, 64
        %v5535 = vpop.permute.xlu0 %5534
        %5536 = vrot.lane.b32.xlu0 %v5526, 64
        %v5537 = vpop.permute.xlu0 %5536
        %5538 = vrot.lane.b32.xlu0 %v5527, 64
        %v5539 = vpop.permute.xlu0 %5538
        %vm5544 = vcmask 654848
        %5545 = vst.msk [vmem:[#allocation3] sm:$0xff] %vm5544, %v5533
        %5546 = vst.msk [vmem:[#allocation3 + $0x8] sm:$0xff] %vm5544, %v5535
        %5547 = vst.msk [vmem:[#allocation3 + $0x10] sm:$0xff] %vm5544, %v5537
        %5548 = vst.msk [vmem:[#allocation3 + $0x18] sm:$0xff] %vm5544, %v5539
        %v5549 = vld [vmem:[#allocation2] sm:$0xf]
        %v5550 = vld [vmem:[#allocation2 + $0xc] sm:$0xf]
        %v5551 = vld [vmem:[#allocation2 + $0x18] sm:$0xf]
        %v5552 = vld [vmem:[#allocation2 + $0x24] sm:$0xf]
        %v5553 = vld [vmem:[#allocation2 + $0x30] sm:$0xf]
        %v5554 = vld [vmem:[#allocation2 + $0x3c] sm:$0xf]
        %v5555 = vld [vmem:[#allocation2 + $0x48] sm:$0xf]
        %v5556 = vld [vmem:[#allocation2 + $0x54] sm:$0xf]
        %v5557 = vld [vmem:[#allocation2 + $0x4] sm:$0xf]
        %v5558 = vld [vmem:[#allocation2 + $0x10] sm:$0xf]
        %v5559 = vld [vmem:[#allocation2 + $0x1c] sm:$0xf]
        %v5560 = vld [vmem:[#allocation2 + $0x28] sm:$0xf]
        %v5561 = vld [vmem:[#allocation2 + $0x34] sm:$0xf]
        %v5562 = vld [vmem:[#allocation2 + $0x40] sm:$0xf]
        %v5563 = vld [vmem:[#allocation2 + $0x4c] sm:$0xf]
        %v5564 = vld [vmem:[#allocation2 + $0x58] sm:$0xf]
        %v5565 = vld [vmem:[#allocation2 + $0x8] sm:$0xf]
        %v5566 = vld [vmem:[#allocation2 + $0x14] sm:$0xf]
        %v5567 = vld [vmem:[#allocation2 + $0x20] sm:$0xf]
        %v5568 = vld [vmem:[#allocation2 + $0x2c] sm:$0xf]
        %v5569 = vld [vmem:[#allocation2 + $0x38] sm:$0xf]
        %v5570 = vld [vmem:[#allocation2 + $0x44] sm:$0xf]
        %v5571 = vld [vmem:[#allocation2 + $0x50] sm:$0xf]
        %v5572 = vld [vmem:[#allocation2 + $0x5c] sm:$0xf]
        %v5574 = vunpack.c.l.b16 %v5549
        %v5575 = vpack.c.b16 %v5574, %v5574
        %5576 = vrot.lane.b32.xlu0 %v5575, 48
        %v5577 = vpop.permute.xlu0 %5576
        %v5579 = vunpack.c.l.b16 %v5557
        %v5580 = vpack.c.b16 %v5579, %v5579
        %5581 = vrot.lane.b32.xlu0 %v5580, 48
        %v5582 = vpop.permute.xlu0 %5581
        %v5584 = vsel %vm702, %v5577, 0
        %v5587 = vsel %vm702, %v5582, 0
        %5589 = vmatprep.subr.bf16.mxu0 0
        %5590 = vmatpush1.bf16.xpose.msra.mxu0 %v5587
        %5591 = vmatprep.subr.bf16.mxu0 0
        %5592 = vmatpush1.bf16.xpose.msra.mxu0 0
        %5593 = vmatprep.subr.bf16.mxu0 0
        %5594 = vmatpush1.bf16.xpose.msra.mxu0 0
        %5595 = vmatprep.subr.bf16.mxu0 0
        %5596 = vmatpush1.bf16.xpose.msra.mxu0 0
        %5597 = vmatprep.subr.bf16.mxu0 0
        %5598 = vmatpush1.bf16.xpose.msra.mxu0 0
        %5599 = vmatprep.subr.bf16.mxu0 0
        %5600 = vmatpush1.bf16.xpose.msra.mxu0 0
        %5601 = vmatprep.subr.bf16.mxu0 0
        %5602 = vmatpush1.bf16.xpose.msra.mxu0 0
        %5603 = vmatprep.subr.bf16.mxu0 0
        %5604 = vmatpush1.bf16.xpose.msra.mxu0 0
        %5605 = vmatprep.subr.bf16.mxu0 0
        %5606 = vmatpush1.bf16.xpose.msra.mxu0 0
        %5607 = vmatprep.subr.bf16.mxu0 0
        %5608 = vmatpush1.bf16.xpose.msra.mxu0 0
        %5609 = vmatprep.subr.bf16.mxu0 0
        %5610 = vmatpush1.bf16.xpose.msra.mxu0 0
        %5611 = vmatprep.subr.bf16.mxu0 0
        %5612 = vmatpush1.bf16.xpose.msra.mxu0 0
        %5613 = vmatprep.subr.bf16.mxu0 0
        %5614 = vmatpush1.bf16.xpose.msra.mxu0 0
        %5615 = vmatprep.subr.bf16.mxu0 0
        %5616 = vmatpush1.bf16.xpose.msra.mxu0 0
        %5617 = vmatprep.subr.bf16.mxu0 0
        %5618 = vmatpush1.bf16.xpose.msra.mxu0 0
        %5619 = vmatprep.subr.bf16.mxu0 0
        %5620 = vmatpush1.bf16.xpose.msra.mxu0 0
        %5621 = vmatprep.mubr.bf16.mxu0 0
        %5622 = vmatmul.mubr.bf16.gmra.mrb[0].mxu0 %v5584
        %v5623 = vpop.f32.mrb[0].mxu0
        %v5624 = vadd.f32 0.0, %v5623
        %v5625 = vpop.f32.mrb[0].mxu0
        %v5626 = vpop.f32.mrb[0].mxu0
        %v5627 = vpop.f32.mrb[0].mxu0
        %5628 = vdwg.mxu0
        %v5630 = vunpack.c.l.b16 %v5550
        %v5631 = vpack.c.b16 %v5630, %v5630
        %5632 = vrot.lane.b32.xlu0 %v5631, 48
        %v5633 = vpop.permute.xlu0 %5632
        %v5635 = vunpack.c.l.b16 %v5558
        %v5636 = vpack.c.b16 %v5635, %v5635
        %5637 = vrot.lane.b32.xlu0 %v5636, 48
        %v5638 = vpop.permute.xlu0 %5637
        %v5640 = vsel %vm702, %v5633, 0
        %v5643 = vsel %vm702, %v5638, 0
        %5645 = vmatprep.subr.bf16.mxu0 0
        %5646 = vmatpush1.bf16.xpose.msra.mxu0 %v5643
        %5647 = vmatprep.subr.bf16.mxu0 0
        %5648 = vmatpush1.bf16.xpose.msra.mxu0 0
        %5649 = vmatprep.subr.bf16.mxu0 0
        %5650 = vmatpush1.bf16.xpose.msra.mxu0 0
        %5651 = vmatprep.subr.bf16.mxu0 0
        %5652 = vmatpush1.bf16.xpose.msra.mxu0 0
        %5653 = vmatprep.subr.bf16.mxu0 0
        %5654 = vmatpush1.bf16.xpose.msra.mxu0 0
        %5655 = vmatprep.subr.bf16.mxu0 0
        %5656 = vmatpush1.bf16.xpose.msra.mxu0 0
        %5657 = vmatprep.subr.bf16.mxu0 0
        %5658 = vmatpush1.bf16.xpose.msra.mxu0 0
        %5659 = vmatprep.subr.bf16.mxu0 0
        %5660 = vmatpush1.bf16.xpose.msra.mxu0 0
        %5661 = vmatprep.subr.bf16.mxu0 0
        %5662 = vmatpush1.bf16.xpose.msra.mxu0 0
        %5663 = vmatprep.subr.bf16.mxu0 0
        %5664 = vmatpush1.bf16.xpose.msra.mxu0 0
        %5665 = vmatprep.subr.bf16.mxu0 0
        %5666 = vmatpush1.bf16.xpose.msra.mxu0 0
        %5667 = vmatprep.subr.bf16.mxu0 0
        %5668 = vmatpush1.bf16.xpose.msra.mxu0 0
        %5669 = vmatprep.subr.bf16.mxu0 0
        %5670 = vmatpush1.bf16.xpose.msra.mxu0 0
        %5671 = vmatprep.subr.bf16.mxu0 0
        %5672 = vmatpush1.bf16.xpose.msra.mxu0 0
        %5673 = vmatprep.subr.bf16.mxu0 0
        %5674 = vmatpush1.bf16.xpose.msra.mxu0 0
        %5675 = vmatprep.subr.bf16.mxu0 0
        %5676 = vmatpush1.bf16.xpose.msra.mxu0 0
        %5677 = vmatprep.mubr.bf16.mxu0 0
        %5678 = vmatmul.mubr.bf16.gmra.mrb[0].mxu0 %v5640
        %v5679 = vpop.f32.mrb[0].mxu0
        %v5680 = vadd.f32 0.0, %v5679
        %v5681 = vpop.f32.mrb[0].mxu0
        %v5682 = vpop.f32.mrb[0].mxu0
        %v5683 = vpop.f32.mrb[0].mxu0
        %5684 = vdwg.mxu0
        %v5686 = vunpack.c.l.b16 %v5551
        %v5687 = vpack.c.b16 %v5686, %v5686
        %5688 = vrot.lane.b32.xlu0 %v5687, 48
        %v5689 = vpop.permute.xlu0 %5688
        %v5691 = vunpack.c.l.b16 %v5559
        %v5692 = vpack.c.b16 %v5691, %v5691
        %5693 = vrot.lane.b32.xlu0 %v5692, 48
        %v5694 = vpop.permute.xlu0 %5693
        %v5696 = vsel %vm702, %v5689, 0
        %v5699 = vsel %vm702, %v5694, 0
        %5701 = vmatprep.subr.bf16.mxu0 0
        %5702 = vmatpush1.bf16.xpose.msra.mxu0 %v5699
        %5703 = vmatprep.subr.bf16.mxu0 0
        %5704 = vmatpush1.bf16.xpose.msra.mxu0 0
        %5705 = vmatprep.subr.bf16.mxu0 0
        %5706 = vmatpush1.bf16.xpose.msra.mxu0 0
        %5707 = vmatprep.subr.bf16.mxu0 0
        %5708 = vmatpush1.bf16.xpose.msra.mxu0 0
        %5709 = vmatprep.subr.bf16.mxu0 0
        %5710 = vmatpush1.bf16.xpose.msra.mxu0 0
        %5711 = vmatprep.subr.bf16.mxu0 0
        %5712 = vmatpush1.bf16.xpose.msra.mxu0 0
        %5713 = vmatprep.subr.bf16.mxu0 0
        %5714 = vmatpush1.bf16.xpose.msra.mxu0 0
        %5715 = vmatprep.subr.bf16.mxu0 0
        %5716 = vmatpush1.bf16.xpose.msra.mxu0 0
        %5717 = vmatprep.subr.bf16.mxu0 0
        %5718 = vmatpush1.bf16.xpose.msra.mxu0 0
        %5719 = vmatprep.subr.bf16.mxu0 0
        %5720 = vmatpush1.bf16.xpose.msra.mxu0 0
        %5721 = vmatprep.subr.bf16.mxu0 0
        %5722 = vmatpush1.bf16.xpose.msra.mxu0 0
        %5723 = vmatprep.subr.bf16.mxu0 0
        %5724 = vmatpush1.bf16.xpose.msra.mxu0 0
        %5725 = vmatprep.subr.bf16.mxu0 0
        %5726 = vmatpush1.bf16.xpose.msra.mxu0 0
        %5727 = vmatprep.subr.bf16.mxu0 0
        %5728 = vmatpush1.bf16.xpose.msra.mxu0 0
        %5729 = vmatprep.subr.bf16.mxu0 0
        %5730 = vmatpush1.bf16.xpose.msra.mxu0 0
        %5731 = vmatprep.subr.bf16.mxu0 0
        %5732 = vmatpush1.bf16.xpose.msra.mxu0 0
        %5733 = vmatprep.mubr.bf16.mxu0 0
        %5734 = vmatmul.mubr.bf16.gmra.mrb[0].mxu0 %v5696
        %v5735 = vpop.f32.mrb[0].mxu0
        %v5736 = vadd.f32 0.0, %v5735
        %v5737 = vpop.f32.mrb[0].mxu0
        %v5738 = vpop.f32.mrb[0].mxu0
        %v5739 = vpop.f32.mrb[0].mxu0
        %5740 = vdwg.mxu0
        %v5742 = vunpack.c.l.b16 %v5552
        %v5743 = vpack.c.b16 %v5742, %v5742
        %5744 = vrot.lane.b32.xlu0 %v5743, 48
        %v5745 = vpop.permute.xlu0 %5744
        %v5747 = vunpack.c.l.b16 %v5560
        %v5748 = vpack.c.b16 %v5747, %v5747
        %5749 = vrot.lane.b32.xlu0 %v5748, 48
        %v5750 = vpop.permute.xlu0 %5749
        %v5752 = vsel %vm702, %v5745, 0
        %v5755 = vsel %vm702, %v5750, 0
        %5757 = vmatprep.subr.bf16.mxu0 0
        %5758 = vmatpush1.bf16.xpose.msra.mxu0 %v5755
        %5759 = vmatprep.subr.bf16.mxu0 0
        %5760 = vmatpush1.bf16.xpose.msra.mxu0 0
        %5761 = vmatprep.subr.bf16.mxu0 0
        %5762 = vmatpush1.bf16.xpose.msra.mxu0 0
        %5763 = vmatprep.subr.bf16.mxu0 0
        %5764 = vmatpush1.bf16.xpose.msra.mxu0 0
        %5765 = vmatprep.subr.bf16.mxu0 0
        %5766 = vmatpush1.bf16.xpose.msra.mxu0 0
        %5767 = vmatprep.subr.bf16.mxu0 0
        %5768 = vmatpush1.bf16.xpose.msra.mxu0 0
        %5769 = vmatprep.subr.bf16.mxu0 0
        %5770 = vmatpush1.bf16.xpose.msra.mxu0 0
        %5771 = vmatprep.subr.bf16.mxu0 0
        %5772 = vmatpush1.bf16.xpose.msra.mxu0 0
        %5773 = vmatprep.subr.bf16.mxu0 0
        %5774 = vmatpush1.bf16.xpose.msra.mxu0 0
        %5775 = vmatprep.subr.bf16.mxu0 0
        %5776 = vmatpush1.bf16.xpose.msra.mxu0 0
        %5777 = vmatprep.subr.bf16.mxu0 0
        %5778 = vmatpush1.bf16.xpose.msra.mxu0 0
        %5779 = vmatprep.subr.bf16.mxu0 0
        %5780 = vmatpush1.bf16.xpose.msra.mxu0 0
        %5781 = vmatprep.subr.bf16.mxu0 0
        %5782 = vmatpush1.bf16.xpose.msra.mxu0 0
        %5783 = vmatprep.subr.bf16.mxu0 0
        %5784 = vmatpush1.bf16.xpose.msra.mxu0 0
        %5785 = vmatprep.subr.bf16.mxu0 0
        %5786 = vmatpush1.bf16.xpose.msra.mxu0 0
        %5787 = vmatprep.subr.bf16.mxu0 0
        %5788 = vmatpush1.bf16.xpose.msra.mxu0 0
        %5789 = vmatprep.mubr.bf16.mxu0 0
        %5790 = vmatmul.mubr.bf16.gmra.mrb[0].mxu0 %v5752
        %v5791 = vpop.f32.mrb[0].mxu0
        %v5792 = vadd.f32 0.0, %v5791
        %v5793 = vpop.f32.mrb[0].mxu0
        %v5794 = vpop.f32.mrb[0].mxu0
        %v5795 = vpop.f32.mrb[0].mxu0
        %5796 = vdwg.mxu0
        %v5798 = vunpack.c.l.b16 %v5553
        %v5799 = vpack.c.b16 %v5798, %v5798
        %5800 = vrot.lane.b32.xlu0 %v5799, 48
        %v5801 = vpop.permute.xlu0 %5800
        %v5803 = vunpack.c.l.b16 %v5561
        %v5804 = vpack.c.b16 %v5803, %v5803
        %5805 = vrot.lane.b32.xlu0 %v5804, 48
        %v5806 = vpop.permute.xlu0 %5805
        %v5808 = vsel %vm702, %v5801, 0
        %v5811 = vsel %vm702, %v5806, 0
        %5813 = vmatprep.subr.bf16.mxu0 0
        %5814 = vmatpush1.bf16.xpose.msra.mxu0 %v5811
        %5815 = vmatprep.subr.bf16.mxu0 0
        %5816 = vmatpush1.bf16.xpose.msra.mxu0 0
        %5817 = vmatprep.subr.bf16.mxu0 0
        %5818 = vmatpush1.bf16.xpose.msra.mxu0 0
        %5819 = vmatprep.subr.bf16.mxu0 0
        %5820 = vmatpush1.bf16.xpose.msra.mxu0 0
        %5821 = vmatprep.subr.bf16.mxu0 0
        %5822 = vmatpush1.bf16.xpose.msra.mxu0 0
        %5823 = vmatprep.subr.bf16.mxu0 0
        %5824 = vmatpush1.bf16.xpose.msra.mxu0 0
        %5825 = vmatprep.subr.bf16.mxu0 0
        %5826 = vmatpush1.bf16.xpose.msra.mxu0 0
        %5827 = vmatprep.subr.bf16.mxu0 0
        %5828 = vmatpush1.bf16.xpose.msra.mxu0 0
        %5829 = vmatprep.subr.bf16.mxu0 0
        %5830 = vmatpush1.bf16.xpose.msra.mxu0 0
        %5831 = vmatprep.subr.bf16.mxu0 0
        %5832 = vmatpush1.bf16.xpose.msra.mxu0 0
        %5833 = vmatprep.subr.bf16.mxu0 0
        %5834 = vmatpush1.bf16.xpose.msra.mxu0 0
        %5835 = vmatprep.subr.bf16.mxu0 0
        %5836 = vmatpush1.bf16.xpose.msra.mxu0 0
        %5837 = vmatprep.subr.bf16.mxu0 0
        %5838 = vmatpush1.bf16.xpose.msra.mxu0 0
        %5839 = vmatprep.subr.bf16.mxu0 0
        %5840 = vmatpush1.bf16.xpose.msra.mxu0 0
        %5841 = vmatprep.subr.bf16.mxu0 0
        %5842 = vmatpush1.bf16.xpose.msra.mxu0 0
        %5843 = vmatprep.subr.bf16.mxu0 0
        %5844 = vmatpush1.bf16.xpose.msra.mxu0 0
        %5845 = vmatprep.mubr.bf16.mxu0 0
        %5846 = vmatmul.mubr.bf16.gmra.mrb[0].mxu0 %v5808
        %v5847 = vpop.f32.mrb[0].mxu0
        %v5848 = vadd.f32 0.0, %v5847
        %v5849 = vpop.f32.mrb[0].mxu0
        %v5850 = vpop.f32.mrb[0].mxu0
        %v5851 = vpop.f32.mrb[0].mxu0
        %5852 = vdwg.mxu0
        %v5854 = vunpack.c.l.b16 %v5554
        %v5855 = vpack.c.b16 %v5854, %v5854
        %5856 = vrot.lane.b32.xlu0 %v5855, 48
        %v5857 = vpop.permute.xlu0 %5856
        %v5859 = vunpack.c.l.b16 %v5562
        %v5860 = vpack.c.b16 %v5859, %v5859
        %5861 = vrot.lane.b32.xlu0 %v5860, 48
        %v5862 = vpop.permute.xlu0 %5861
        %v5864 = vsel %vm702, %v5857, 0
        %v5867 = vsel %vm702, %v5862, 0
        %5869 = vmatprep.subr.bf16.mxu0 0
        %5870 = vmatpush1.bf16.xpose.msra.mxu0 %v5867
        %5871 = vmatprep.subr.bf16.mxu0 0
        %5872 = vmatpush1.bf16.xpose.msra.mxu0 0
        %5873 = vmatprep.subr.bf16.mxu0 0
        %5874 = vmatpush1.bf16.xpose.msra.mxu0 0
        %5875 = vmatprep.subr.bf16.mxu0 0
        %5876 = vmatpush1.bf16.xpose.msra.mxu0 0
        %5877 = vmatprep.subr.bf16.mxu0 0
        %5878 = vmatpush1.bf16.xpose.msra.mxu0 0
        %5879 = vmatprep.subr.bf16.mxu0 0
        %5880 = vmatpush1.bf16.xpose.msra.mxu0 0
        %5881 = vmatprep.subr.bf16.mxu0 0
        %5882 = vmatpush1.bf16.xpose.msra.mxu0 0
        %5883 = vmatprep.subr.bf16.mxu0 0
        %5884 = vmatpush1.bf16.xpose.msra.mxu0 0
        %5885 = vmatprep.subr.bf16.mxu0 0
        %5886 = vmatpush1.bf16.xpose.msra.mxu0 0
        %5887 = vmatprep.subr.bf16.mxu0 0
        %5888 = vmatpush1.bf16.xpose.msra.mxu0 0
        %5889 = vmatprep.subr.bf16.mxu0 0
        %5890 = vmatpush1.bf16.xpose.msra.mxu0 0
        %5891 = vmatprep.subr.bf16.mxu0 0
        %5892 = vmatpush1.bf16.xpose.msra.mxu0 0
        %5893 = vmatprep.subr.bf16.mxu0 0
        %5894 = vmatpush1.bf16.xpose.msra.mxu0 0
        %5895 = vmatprep.subr.bf16.mxu0 0
        %5896 = vmatpush1.bf16.xpose.msra.mxu0 0
        %5897 = vmatprep.subr.bf16.mxu0 0
        %5898 = vmatpush1.bf16.xpose.msra.mxu0 0
        %5899 = vmatprep.subr.bf16.mxu0 0
        %5900 = vmatpush1.bf16.xpose.msra.mxu0 0
        %5901 = vmatprep.mubr.bf16.mxu0 0
        %5902 = vmatmul.mubr.bf16.gmra.mrb[0].mxu0 %v5864
        %v5903 = vpop.f32.mrb[0].mxu0
        %v5904 = vadd.f32 0.0, %v5903
        %v5905 = vpop.f32.mrb[0].mxu0
        %v5906 = vpop.f32.mrb[0].mxu0
        %v5907 = vpop.f32.mrb[0].mxu0
        %5908 = vdwg.mxu0
        %v5910 = vunpack.c.l.b16 %v5555
        %v5911 = vpack.c.b16 %v5910, %v5910
        %5912 = vrot.lane.b32.xlu0 %v5911, 48
        %v5913 = vpop.permute.xlu0 %5912
        %v5915 = vunpack.c.l.b16 %v5563
        %v5916 = vpack.c.b16 %v5915, %v5915
        %5917 = vrot.lane.b32.xlu0 %v5916, 48
        %v5918 = vpop.permute.xlu0 %5917
        %v5920 = vsel %vm702, %v5913, 0
        %v5923 = vsel %vm702, %v5918, 0
        %5925 = vmatprep.subr.bf16.mxu0 0
        %5926 = vmatpush1.bf16.xpose.msra.mxu0 %v5923
        %5927 = vmatprep.subr.bf16.mxu0 0
        %5928 = vmatpush1.bf16.xpose.msra.mxu0 0
        %5929 = vmatprep.subr.bf16.mxu0 0
        %5930 = vmatpush1.bf16.xpose.msra.mxu0 0
        %5931 = vmatprep.subr.bf16.mxu0 0
        %5932 = vmatpush1.bf16.xpose.msra.mxu0 0
        %5933 = vmatprep.subr.bf16.mxu0 0
        %5934 = vmatpush1.bf16.xpose.msra.mxu0 0
        %5935 = vmatprep.subr.bf16.mxu0 0
        %5936 = vmatpush1.bf16.xpose.msra.mxu0 0
        %5937 = vmatprep.subr.bf16.mxu0 0
        %5938 = vmatpush1.bf16.xpose.msra.mxu0 0
        %5939 = vmatprep.subr.bf16.mxu0 0
        %5940 = vmatpush1.bf16.xpose.msra.mxu0 0
        %5941 = vmatprep.subr.bf16.mxu0 0
        %5942 = vmatpush1.bf16.xpose.msra.mxu0 0
        %5943 = vmatprep.subr.bf16.mxu0 0
        %5944 = vmatpush1.bf16.xpose.msra.mxu0 0
        %5945 = vmatprep.subr.bf16.mxu0 0
        %5946 = vmatpush1.bf16.xpose.msra.mxu0 0
        %5947 = vmatprep.subr.bf16.mxu0 0
        %5948 = vmatpush1.bf16.xpose.msra.mxu0 0
        %5949 = vmatprep.subr.bf16.mxu0 0
        %5950 = vmatpush1.bf16.xpose.msra.mxu0 0
        %5951 = vmatprep.subr.bf16.mxu0 0
        %5952 = vmatpush1.bf16.xpose.msra.mxu0 0
        %5953 = vmatprep.subr.bf16.mxu0 0
        %5954 = vmatpush1.bf16.xpose.msra.mxu0 0
        %5955 = vmatprep.subr.bf16.mxu0 0
        %5956 = vmatpush1.bf16.xpose.msra.mxu0 0
        %5957 = vmatprep.mubr.bf16.mxu0 0
        %5958 = vmatmul.mubr.bf16.gmra.mrb[0].mxu0 %v5920
        %v5959 = vpop.f32.mrb[0].mxu0
        %v5960 = vadd.f32 0.0, %v5959
        %v5961 = vpop.f32.mrb[0].mxu0
        %v5962 = vpop.f32.mrb[0].mxu0
        %v5963 = vpop.f32.mrb[0].mxu0
        %5964 = vdwg.mxu0
        %v5966 = vunpack.c.l.b16 %v5556
        %v5967 = vpack.c.b16 %v5966, %v5966
        %5968 = vrot.lane.b32.xlu0 %v5967, 48
        %v5969 = vpop.permute.xlu0 %5968
        %v5971 = vunpack.c.l.b16 %v5564
        %v5972 = vpack.c.b16 %v5971, %v5971
        %5973 = vrot.lane.b32.xlu0 %v5972, 48
        %v5974 = vpop.permute.xlu0 %5973
        %v5976 = vsel %vm702, %v5969, 0
        %v5979 = vsel %vm702, %v5974, 0
        %5981 = vmatprep.subr.bf16.mxu0 0
        %5982 = vmatpush1.bf16.xpose.msra.mxu0 %v5979
        %5983 = vmatprep.subr.bf16.mxu0 0
        %5984 = vmatpush1.bf16.xpose.msra.mxu0 0
        %5985 = vmatprep.subr.bf16.mxu0 0
        %5986 = vmatpush1.bf16.xpose.msra.mxu0 0
        %5987 = vmatprep.subr.bf16.mxu0 0
        %5988 = vmatpush1.bf16.xpose.msra.mxu0 0
        %5989 = vmatprep.subr.bf16.mxu0 0
        %5990 = vmatpush1.bf16.xpose.msra.mxu0 0
        %5991 = vmatprep.subr.bf16.mxu0 0
        %5992 = vmatpush1.bf16.xpose.msra.mxu0 0
        %5993 = vmatprep.subr.bf16.mxu0 0
        %5994 = vmatpush1.bf16.xpose.msra.mxu0 0
        %5995 = vmatprep.subr.bf16.mxu0 0
        %5996 = vmatpush1.bf16.xpose.msra.mxu0 0
        %5997 = vmatprep.subr.bf16.mxu0 0
        %5998 = vmatpush1.bf16.xpose.msra.mxu0 0
        %5999 = vmatprep.subr.bf16.mxu0 0
        %6000 = vmatpush1.bf16.xpose.msra.mxu0 0
        %6001 = vmatprep.subr.bf16.mxu0 0
        %6002 = vmatpush1.bf16.xpose.msra.mxu0 0
        %6003 = vmatprep.subr.bf16.mxu0 0
        %6004 = vmatpush1.bf16.xpose.msra.mxu0 0
        %6005 = vmatprep.subr.bf16.mxu0 0
        %6006 = vmatpush1.bf16.xpose.msra.mxu0 0
        %6007 = vmatprep.subr.bf16.mxu0 0
        %6008 = vmatpush1.bf16.xpose.msra.mxu0 0
        %6009 = vmatprep.subr.bf16.mxu0 0
        %6010 = vmatpush1.bf16.xpose.msra.mxu0 0
        %6011 = vmatprep.subr.bf16.mxu0 0
        %6012 = vmatpush1.bf16.xpose.msra.mxu0 0
        %6013 = vmatprep.mubr.bf16.mxu0 0
        %6014 = vmatmul.mubr.bf16.gmra.mrb[0].mxu0 %v5976
        %v6015 = vpop.f32.mrb[0].mxu0
        %v6016 = vadd.f32 0.0, %v6015
        %v6017 = vpop.f32.mrb[0].mxu0
        %v6018 = vpop.f32.mrb[0].mxu0
        %v6019 = vpop.f32.mrb[0].mxu0
        %6020 = vdwg.mxu0
        %v6021 = vsel %vm1071, %v5624, -inf
        %6022 = vmax.xlane.f32.xlu0 %v6021
        %v6023 = vpop.xlane.xlu0 %6022
        %v6024 = vsel %vm1071, %v5680, -inf
        %6025 = vmax.xlane.f32.xlu0 %v6024
        %v6026 = vpop.xlane.xlu0 %6025
        %v6027 = vsel %vm1071, %v5736, -inf
        %6028 = vmax.xlane.f32.xlu0 %v6027
        %v6029 = vpop.xlane.xlu0 %6028
        %v6030 = vsel %vm1071, %v5792, -inf
        %6031 = vmax.xlane.f32.xlu0 %v6030
        %v6032 = vpop.xlane.xlu0 %6031
        %v6033 = vsel %vm1071, %v5848, -inf
        %6034 = vmax.xlane.f32.xlu0 %v6033
        %v6035 = vpop.xlane.xlu0 %6034
        %v6036 = vsel %vm1071, %v5904, -inf
        %6037 = vmax.xlane.f32.xlu0 %v6036
        %v6038 = vpop.xlane.xlu0 %6037
        %v6039 = vsel %vm1071, %v5960, -inf
        %6040 = vmax.xlane.f32.xlu0 %v6039
        %v6041 = vpop.xlane.xlu0 %6040
        %v6042 = vsel %vm1071, %v6016, -inf
        %6043 = vmax.xlane.f32.xlu0 %v6042
        %v6044 = vpop.xlane.xlu0 %6043
        %v6045 = vsub.f32 %v5624, %v6023
        %v6046 = vsub.f32 %v5680, %v6026
        %v6047 = vsub.f32 %v5736, %v6029
        %v6048 = vsub.f32 %v5792, %v6032
        %v6049 = vsub.f32 %v5848, %v6035
        %v6050 = vsub.f32 %v5904, %v6038
        %v6051 = vsub.f32 %v5960, %v6041
        %v6052 = vsub.f32 %v6016, %v6044
        %v6053 = vmul.f32 %v6045, 1.442695
        %v6054 = vpow.pop %v6053
        %v6055 = vmul.f32 %v6046, 1.442695
        %v6056 = vpow.pop %v6055
        %v6057 = vmul.f32 %v6047, 1.442695
        %v6058 = vpow.pop %v6057
        %v6059 = vmul.f32 %v6048, 1.442695
        %v6060 = vpow.pop %v6059
        %v6061 = vmul.f32 %v6049, 1.442695
        %v6062 = vpow.pop %v6061
        %v6063 = vmul.f32 %v6050, 1.442695
        %v6064 = vpow.pop %v6063
        %v6065 = vmul.f32 %v6051, 1.442695
        %v6066 = vpow.pop %v6065
        %v6067 = vmul.f32 %v6052, 1.442695
        %v6068 = vpow.pop %v6067
        %v6069 = vsel %vm1071, %v6054, 0.0
        %6070 = vadd.xlane.f32.xlu0 %v6069
        %v6071 = vpop.xlane.xlu0 %6070
        %v6072 = vsel %vm1071, %v6056, 0.0
        %6073 = vadd.xlane.f32.xlu0 %v6072
        %v6074 = vpop.xlane.xlu0 %6073
        %v6075 = vsel %vm1071, %v6058, 0.0
        %6076 = vadd.xlane.f32.xlu0 %v6075
        %v6077 = vpop.xlane.xlu0 %6076
        %v6078 = vsel %vm1071, %v6060, 0.0
        %6079 = vadd.xlane.f32.xlu0 %v6078
        %v6080 = vpop.xlane.xlu0 %6079
        %v6081 = vsel %vm1071, %v6062, 0.0
        %6082 = vadd.xlane.f32.xlu0 %v6081
        %v6083 = vpop.xlane.xlu0 %6082
        %v6084 = vsel %vm1071, %v6064, 0.0
        %6085 = vadd.xlane.f32.xlu0 %v6084
        %v6086 = vpop.xlane.xlu0 %6085
        %v6087 = vsel %vm1071, %v6066, 0.0
        %6088 = vadd.xlane.f32.xlu0 %v6087
        %v6089 = vpop.xlane.xlu0 %6088
        %v6090 = vsel %vm1071, %v6068, 0.0
        %6091 = vadd.xlane.f32.xlu0 %v6090
        %v6092 = vpop.xlane.xlu0 %6091
        %v6093 = vrcp.pop %v6071
        %v6094 = vrcp.pop %v6074
        %v6095 = vrcp.pop %v6077
        %v6096 = vrcp.pop %v6080
        %v6097 = vrcp.pop %v6083
        %v6098 = vrcp.pop %v6086
        %v6099 = vrcp.pop %v6089
        %v6100 = vrcp.pop %v6092
        %v6101 = vmul.f32 %v6054, %v6093
        %v6102 = vmul.f32 %v6056, %v6094
        %v6103 = vmul.f32 %v6058, %v6095
        %v6104 = vmul.f32 %v6060, %v6096
        %v6105 = vmul.f32 %v6062, %v6097
        %v6106 = vmul.f32 %v6064, %v6098
        %v6107 = vmul.f32 %v6066, %v6099
        %v6108 = vmul.f32 %v6068, %v6100
        %v6109 = vpack.c.bf16 %v6101, %v6101
        %v6110 = vpack.c.bf16 %v6102, %v6102
        %v6111 = vpack.c.bf16 %v6103, %v6103
        %v6112 = vpack.c.bf16 %v6104, %v6104
        %v6113 = vpack.c.bf16 %v6105, %v6105
        %v6114 = vpack.c.bf16 %v6106, %v6106
        %v6115 = vpack.c.bf16 %v6107, %v6107
        %v6116 = vpack.c.bf16 %v6108, %v6108
        %v6118 = vunpack.c.l.b16 %v5565
        %v6119 = vpack.c.b16 %v6118, %v6118
        %6120 = vrot.lane.b32.xlu0 %v6119, 48
        %v6121 = vpop.permute.xlu0 %6120
        %v6123 = vsel %vm1071, %v6109, 0
        %v6126 = vsel %vm1171, %v6121, 0
        %6128 = vmatprep.subr.bf16.mxu0 0
        %6129 = vmatpush1.bf16.msra.mxu0 %v6126
        %6130 = vmatprep.subr.bf16.mxu0 0
        %6131 = vmatpush1.bf16.msra.mxu0 0
        %6132 = vmatprep.subr.bf16.mxu0 0
        %6133 = vmatpush1.bf16.msra.mxu0 0
        %6134 = vmatprep.subr.bf16.mxu0 0
        %6135 = vmatpush1.bf16.msra.mxu0 0
        %6136 = vmatprep.subr.bf16.mxu0 0
        %6137 = vmatpush1.bf16.msra.mxu0 0
        %6138 = vmatprep.subr.bf16.mxu0 0
        %6139 = vmatpush1.bf16.msra.mxu0 0
        %6140 = vmatprep.subr.bf16.mxu0 0
        %6141 = vmatpush1.bf16.msra.mxu0 0
        %6142 = vmatprep.subr.bf16.mxu0 0
        %6143 = vmatpush1.bf16.msra.mxu0 0
        %6144 = vmatprep.subr.bf16.mxu0 0
        %6145 = vmatpush1.bf16.msra.mxu0 0
        %6146 = vmatprep.subr.bf16.mxu0 0
        %6147 = vmatpush1.bf16.msra.mxu0 0
        %6148 = vmatprep.subr.bf16.mxu0 0
        %6149 = vmatpush1.bf16.msra.mxu0 0
        %6150 = vmatprep.subr.bf16.mxu0 0
        %6151 = vmatpush1.bf16.msra.mxu0 0
        %6152 = vmatprep.subr.bf16.mxu0 0
        %6153 = vmatpush1.bf16.msra.mxu0 0
        %6154 = vmatprep.subr.bf16.mxu0 0
        %6155 = vmatpush1.bf16.msra.mxu0 0
        %6156 = vmatprep.subr.bf16.mxu0 0
        %6157 = vmatpush1.bf16.msra.mxu0 0
        %6158 = vmatprep.subr.bf16.mxu0 0
        %6159 = vmatpush1.bf16.msra.mxu0 0
        %6160 = vmatprep.mubr.bf16.mxu0 0
        %6161 = vmatmul.mubr.bf16.gmra.mrb[0].mxu0 %v6123
        %v6162 = vpop.f32.mrb[0].mxu0
        %v6163 = vadd.f32 0.0, %v6162
        %v6164 = vpop.f32.mrb[0].mxu0
        %v6165 = vpop.f32.mrb[0].mxu0
        %v6166 = vpop.f32.mrb[0].mxu0
        %6167 = vdwg.mxu0
        %v6169 = vunpack.c.l.b16 %v5566
        %v6170 = vpack.c.b16 %v6169, %v6169
        %6171 = vrot.lane.b32.xlu0 %v6170, 48
        %v6172 = vpop.permute.xlu0 %6171
        %v6174 = vsel %vm1071, %v6110, 0
        %v6177 = vsel %vm1171, %v6172, 0
        %6179 = vmatprep.subr.bf16.mxu0 0
        %6180 = vmatpush1.bf16.msra.mxu0 %v6177
        %6181 = vmatprep.subr.bf16.mxu0 0
        %6182 = vmatpush1.bf16.msra.mxu0 0
        %6183 = vmatprep.subr.bf16.mxu0 0
        %6184 = vmatpush1.bf16.msra.mxu0 0
        %6185 = vmatprep.subr.bf16.mxu0 0
        %6186 = vmatpush1.bf16.msra.mxu0 0
        %6187 = vmatprep.subr.bf16.mxu0 0
        %6188 = vmatpush1.bf16.msra.mxu0 0
        %6189 = vmatprep.subr.bf16.mxu0 0
        %6190 = vmatpush1.bf16.msra.mxu0 0
        %6191 = vmatprep.subr.bf16.mxu0 0
        %6192 = vmatpush1.bf16.msra.mxu0 0
        %6193 = vmatprep.subr.bf16.mxu0 0
        %6194 = vmatpush1.bf16.msra.mxu0 0
        %6195 = vmatprep.subr.bf16.mxu0 0
        %6196 = vmatpush1.bf16.msra.mxu0 0
        %6197 = vmatprep.subr.bf16.mxu0 0
        %6198 = vmatpush1.bf16.msra.mxu0 0
        %6199 = vmatprep.subr.bf16.mxu0 0
        %6200 = vmatpush1.bf16.msra.mxu0 0
        %6201 = vmatprep.subr.bf16.mxu0 0
        %6202 = vmatpush1.bf16.msra.mxu0 0
        %6203 = vmatprep.subr.bf16.mxu0 0
        %6204 = vmatpush1.bf16.msra.mxu0 0
        %6205 = vmatprep.subr.bf16.mxu0 0
        %6206 = vmatpush1.bf16.msra.mxu0 0
        %6207 = vmatprep.subr.bf16.mxu0 0
        %6208 = vmatpush1.bf16.msra.mxu0 0
        %6209 = vmatprep.subr.bf16.mxu0 0
        %6210 = vmatpush1.bf16.msra.mxu0 0
        %6211 = vmatprep.mubr.bf16.mxu0 0
        %6212 = vmatmul.mubr.bf16.gmra.mrb[0].mxu0 %v6174
        %v6213 = vpop.f32.mrb[0].mxu0
        %v6214 = vadd.f32 0.0, %v6213
        %v6215 = vpop.f32.mrb[0].mxu0
        %v6216 = vpop.f32.mrb[0].mxu0
        %v6217 = vpop.f32.mrb[0].mxu0
        %6218 = vdwg.mxu0
        %v6220 = vunpack.c.l.b16 %v5567
        %v6221 = vpack.c.b16 %v6220, %v6220
        %6222 = vrot.lane.b32.xlu0 %v6221, 48
        %v6223 = vpop.permute.xlu0 %6222
        %v6225 = vsel %vm1071, %v6111, 0
        %v6228 = vsel %vm1171, %v6223, 0
        %6230 = vmatprep.subr.bf16.mxu0 0
        %6231 = vmatpush1.bf16.msra.mxu0 %v6228
        %6232 = vmatprep.subr.bf16.mxu0 0
        %6233 = vmatpush1.bf16.msra.mxu0 0
        %6234 = vmatprep.subr.bf16.mxu0 0
        %6235 = vmatpush1.bf16.msra.mxu0 0
        %6236 = vmatprep.subr.bf16.mxu0 0
        %6237 = vmatpush1.bf16.msra.mxu0 0
        %6238 = vmatprep.subr.bf16.mxu0 0
        %6239 = vmatpush1.bf16.msra.mxu0 0
        %6240 = vmatprep.subr.bf16.mxu0 0
        %6241 = vmatpush1.bf16.msra.mxu0 0
        %6242 = vmatprep.subr.bf16.mxu0 0
        %6243 = vmatpush1.bf16.msra.mxu0 0
        %6244 = vmatprep.subr.bf16.mxu0 0
        %6245 = vmatpush1.bf16.msra.mxu0 0
        %6246 = vmatprep.subr.bf16.mxu0 0
        %6247 = vmatpush1.bf16.msra.mxu0 0
        %6248 = vmatprep.subr.bf16.mxu0 0
        %6249 = vmatpush1.bf16.msra.mxu0 0
        %6250 = vmatprep.subr.bf16.mxu0 0
        %6251 = vmatpush1.bf16.msra.mxu0 0
        %6252 = vmatprep.subr.bf16.mxu0 0
        %6253 = vmatpush1.bf16.msra.mxu0 0
        %6254 = vmatprep.subr.bf16.mxu0 0
        %6255 = vmatpush1.bf16.msra.mxu0 0
        %6256 = vmatprep.subr.bf16.mxu0 0
        %6257 = vmatpush1.bf16.msra.mxu0 0
        %6258 = vmatprep.subr.bf16.mxu0 0
        %6259 = vmatpush1.bf16.msra.mxu0 0
        %6260 = vmatprep.subr.bf16.mxu0 0
        %6261 = vmatpush1.bf16.msra.mxu0 0
        %6262 = vmatprep.mubr.bf16.mxu0 0
        %6263 = vmatmul.mubr.bf16.gmra.mrb[0].mxu0 %v6225
        %v6264 = vpop.f32.mrb[0].mxu0
        %v6265 = vadd.f32 0.0, %v6264
        %v6266 = vpop.f32.mrb[0].mxu0
        %v6267 = vpop.f32.mrb[0].mxu0
        %v6268 = vpop.f32.mrb[0].mxu0
        %6269 = vdwg.mxu0
        %v6271 = vunpack.c.l.b16 %v5568
        %v6272 = vpack.c.b16 %v6271, %v6271
        %6273 = vrot.lane.b32.xlu0 %v6272, 48
        %v6274 = vpop.permute.xlu0 %6273
        %v6276 = vsel %vm1071, %v6112, 0
        %v6279 = vsel %vm1171, %v6274, 0
        %6281 = vmatprep.subr.bf16.mxu0 0
        %6282 = vmatpush1.bf16.msra.mxu0 %v6279
        %6283 = vmatprep.subr.bf16.mxu0 0
        %6284 = vmatpush1.bf16.msra.mxu0 0
        %6285 = vmatprep.subr.bf16.mxu0 0
        %6286 = vmatpush1.bf16.msra.mxu0 0
        %6287 = vmatprep.subr.bf16.mxu0 0
        %6288 = vmatpush1.bf16.msra.mxu0 0
        %6289 = vmatprep.subr.bf16.mxu0 0
        %6290 = vmatpush1.bf16.msra.mxu0 0
        %6291 = vmatprep.subr.bf16.mxu0 0
        %6292 = vmatpush1.bf16.msra.mxu0 0
        %6293 = vmatprep.subr.bf16.mxu0 0
        %6294 = vmatpush1.bf16.msra.mxu0 0
        %6295 = vmatprep.subr.bf16.mxu0 0
        %6296 = vmatpush1.bf16.msra.mxu0 0
        %6297 = vmatprep.subr.bf16.mxu0 0
        %6298 = vmatpush1.bf16.msra.mxu0 0
        %6299 = vmatprep.subr.bf16.mxu0 0
        %6300 = vmatpush1.bf16.msra.mxu0 0
        %6301 = vmatprep.subr.bf16.mxu0 0
        %6302 = vmatpush1.bf16.msra.mxu0 0
        %6303 = vmatprep.subr.bf16.mxu0 0
        %6304 = vmatpush1.bf16.msra.mxu0 0
        %6305 = vmatprep.subr.bf16.mxu0 0
        %6306 = vmatpush1.bf16.msra.mxu0 0
        %6307 = vmatprep.subr.bf16.mxu0 0
        %6308 = vmatpush1.bf16.msra.mxu0 0
        %6309 = vmatprep.subr.bf16.mxu0 0
        %6310 = vmatpush1.bf16.msra.mxu0 0
        %6311 = vmatprep.subr.bf16.mxu0 0
        %6312 = vmatpush1.bf16.msra.mxu0 0
        %6313 = vmatprep.mubr.bf16.mxu0 0
        %6314 = vmatmul.mubr.bf16.gmra.mrb[0].mxu0 %v6276
        %v6315 = vpop.f32.mrb[0].mxu0
        %v6316 = vadd.f32 0.0, %v6315
        %v6317 = vpop.f32.mrb[0].mxu0
        %v6318 = vpop.f32.mrb[0].mxu0
        %v6319 = vpop.f32.mrb[0].mxu0
        %6320 = vdwg.mxu0
        %v6322 = vunpack.c.l.b16 %v5569
        %v6323 = vpack.c.b16 %v6322, %v6322
        %6324 = vrot.lane.b32.xlu0 %v6323, 48
        %v6325 = vpop.permute.xlu0 %6324
        %v6327 = vsel %vm1071, %v6113, 0
        %v6330 = vsel %vm1171, %v6325, 0
        %6332 = vmatprep.subr.bf16.mxu0 0
        %6333 = vmatpush1.bf16.msra.mxu0 %v6330
        %6334 = vmatprep.subr.bf16.mxu0 0
        %6335 = vmatpush1.bf16.msra.mxu0 0
        %6336 = vmatprep.subr.bf16.mxu0 0
        %6337 = vmatpush1.bf16.msra.mxu0 0
        %6338 = vmatprep.subr.bf16.mxu0 0
        %6339 = vmatpush1.bf16.msra.mxu0 0
        %6340 = vmatprep.subr.bf16.mxu0 0
        %6341 = vmatpush1.bf16.msra.mxu0 0
        %6342 = vmatprep.subr.bf16.mxu0 0
        %6343 = vmatpush1.bf16.msra.mxu0 0
        %6344 = vmatprep.subr.bf16.mxu0 0
        %6345 = vmatpush1.bf16.msra.mxu0 0
        %6346 = vmatprep.subr.bf16.mxu0 0
        %6347 = vmatpush1.bf16.msra.mxu0 0
        %6348 = vmatprep.subr.bf16.mxu0 0
        %6349 = vmatpush1.bf16.msra.mxu0 0
        %6350 = vmatprep.subr.bf16.mxu0 0
        %6351 = vmatpush1.bf16.msra.mxu0 0
        %6352 = vmatprep.subr.bf16.mxu0 0
        %6353 = vmatpush1.bf16.msra.mxu0 0
        %6354 = vmatprep.subr.bf16.mxu0 0
        %6355 = vmatpush1.bf16.msra.mxu0 0
        %6356 = vmatprep.subr.bf16.mxu0 0
        %6357 = vmatpush1.bf16.msra.mxu0 0
        %6358 = vmatprep.subr.bf16.mxu0 0
        %6359 = vmatpush1.bf16.msra.mxu0 0
        %6360 = vmatprep.subr.bf16.mxu0 0
        %6361 = vmatpush1.bf16.msra.mxu0 0
        %6362 = vmatprep.subr.bf16.mxu0 0
        %6363 = vmatpush1.bf16.msra.mxu0 0
        %6364 = vmatprep.mubr.bf16.mxu0 0
        %6365 = vmatmul.mubr.bf16.gmra.mrb[0].mxu0 %v6327
        %v6366 = vpop.f32.mrb[0].mxu0
        %v6367 = vadd.f32 0.0, %v6366
        %v6368 = vpop.f32.mrb[0].mxu0
        %v6369 = vpop.f32.mrb[0].mxu0
        %v6370 = vpop.f32.mrb[0].mxu0
        %6371 = vdwg.mxu0
        %v6373 = vunpack.c.l.b16 %v5570
        %v6374 = vpack.c.b16 %v6373, %v6373
        %6375 = vrot.lane.b32.xlu0 %v6374, 48
        %v6376 = vpop.permute.xlu0 %6375
        %v6378 = vsel %vm1071, %v6114, 0
        %v6381 = vsel %vm1171, %v6376, 0
        %6383 = vmatprep.subr.bf16.mxu0 0
        %6384 = vmatpush1.bf16.msra.mxu0 %v6381
        %6385 = vmatprep.subr.bf16.mxu0 0
        %6386 = vmatpush1.bf16.msra.mxu0 0
        %6387 = vmatprep.subr.bf16.mxu0 0
        %6388 = vmatpush1.bf16.msra.mxu0 0
        %6389 = vmatprep.subr.bf16.mxu0 0
        %6390 = vmatpush1.bf16.msra.mxu0 0
        %6391 = vmatprep.subr.bf16.mxu0 0
        %6392 = vmatpush1.bf16.msra.mxu0 0
        %6393 = vmatprep.subr.bf16.mxu0 0
        %6394 = vmatpush1.bf16.msra.mxu0 0
        %6395 = vmatprep.subr.bf16.mxu0 0
        %6396 = vmatpush1.bf16.msra.mxu0 0
        %6397 = vmatprep.subr.bf16.mxu0 0
        %6398 = vmatpush1.bf16.msra.mxu0 0
        %6399 = vmatprep.subr.bf16.mxu0 0
        %6400 = vmatpush1.bf16.msra.mxu0 0
        %6401 = vmatprep.subr.bf16.mxu0 0
        %6402 = vmatpush1.bf16.msra.mxu0 0
        %6403 = vmatprep.subr.bf16.mxu0 0
        %6404 = vmatpush1.bf16.msra.mxu0 0
        %6405 = vmatprep.subr.bf16.mxu0 0
        %6406 = vmatpush1.bf16.msra.mxu0 0
        %6407 = vmatprep.subr.bf16.mxu0 0
        %6408 = vmatpush1.bf16.msra.mxu0 0
        %6409 = vmatprep.subr.bf16.mxu0 0
        %6410 = vmatpush1.bf16.msra.mxu0 0
        %6411 = vmatprep.subr.bf16.mxu0 0
        %6412 = vmatpush1.bf16.msra.mxu0 0
        %6413 = vmatprep.subr.bf16.mxu0 0
        %6414 = vmatpush1.bf16.msra.mxu0 0
        %6415 = vmatprep.mubr.bf16.mxu0 0
        %6416 = vmatmul.mubr.bf16.gmra.mrb[0].mxu0 %v6378
        %v6417 = vpop.f32.mrb[0].mxu0
        %v6418 = vadd.f32 0.0, %v6417
        %v6419 = vpop.f32.mrb[0].mxu0
        %v6420 = vpop.f32.mrb[0].mxu0
        %v6421 = vpop.f32.mrb[0].mxu0
        %6422 = vdwg.mxu0
        %v6424 = vunpack.c.l.b16 %v5571
        %v6425 = vpack.c.b16 %v6424, %v6424
        %6426 = vrot.lane.b32.xlu0 %v6425, 48
        %v6427 = vpop.permute.xlu0 %6426
        %v6429 = vsel %vm1071, %v6115, 0
        %v6432 = vsel %vm1171, %v6427, 0
        %6434 = vmatprep.subr.bf16.mxu0 0
        %6435 = vmatpush1.bf16.msra.mxu0 %v6432
        %6436 = vmatprep.subr.bf16.mxu0 0
        %6437 = vmatpush1.bf16.msra.mxu0 0
        %6438 = vmatprep.subr.bf16.mxu0 0
        %6439 = vmatpush1.bf16.msra.mxu0 0
        %6440 = vmatprep.subr.bf16.mxu0 0
        %6441 = vmatpush1.bf16.msra.mxu0 0
        %6442 = vmatprep.subr.bf16.mxu0 0
        %6443 = vmatpush1.bf16.msra.mxu0 0
        %6444 = vmatprep.subr.bf16.mxu0 0
        %6445 = vmatpush1.bf16.msra.mxu0 0
        %6446 = vmatprep.subr.bf16.mxu0 0
        %6447 = vmatpush1.bf16.msra.mxu0 0
        %6448 = vmatprep.subr.bf16.mxu0 0
        %6449 = vmatpush1.bf16.msra.mxu0 0
        %6450 = vmatprep.subr.bf16.mxu0 0
        %6451 = vmatpush1.bf16.msra.mxu0 0
        %6452 = vmatprep.subr.bf16.mxu0 0
        %6453 = vmatpush1.bf16.msra.mxu0 0
        %6454 = vmatprep.subr.bf16.mxu0 0
        %6455 = vmatpush1.bf16.msra.mxu0 0
        %6456 = vmatprep.subr.bf16.mxu0 0
        %6457 = vmatpush1.bf16.msra.mxu0 0
        %6458 = vmatprep.subr.bf16.mxu0 0
        %6459 = vmatpush1.bf16.msra.mxu0 0
        %6460 = vmatprep.subr.bf16.mxu0 0
        %6461 = vmatpush1.bf16.msra.mxu0 0
        %6462 = vmatprep.subr.bf16.mxu0 0
        %6463 = vmatpush1.bf16.msra.mxu0 0
        %6464 = vmatprep.subr.bf16.mxu0 0
        %6465 = vmatpush1.bf16.msra.mxu0 0
        %6466 = vmatprep.mubr.bf16.mxu0 0
        %6467 = vmatmul.mubr.bf16.gmra.mrb[0].mxu0 %v6429
        %v6468 = vpop.f32.mrb[0].mxu0
        %v6469 = vadd.f32 0.0, %v6468
        %v6470 = vpop.f32.mrb[0].mxu0
        %v6471 = vpop.f32.mrb[0].mxu0
        %v6472 = vpop.f32.mrb[0].mxu0
        %6473 = vdwg.mxu0
        %v6475 = vunpack.c.l.b16 %v5572
        %v6476 = vpack.c.b16 %v6475, %v6475
        %6477 = vrot.lane.b32.xlu0 %v6476, 48
        %v6478 = vpop.permute.xlu0 %6477
        %v6480 = vsel %vm1071, %v6116, 0
        %v6483 = vsel %vm1171, %v6478, 0
        %6485 = vmatprep.subr.bf16.mxu0 0
        %6486 = vmatpush1.bf16.msra.mxu0 %v6483
        %6487 = vmatprep.subr.bf16.mxu0 0
        %6488 = vmatpush1.bf16.msra.mxu0 0
        %6489 = vmatprep.subr.bf16.mxu0 0
        %6490 = vmatpush1.bf16.msra.mxu0 0
        %6491 = vmatprep.subr.bf16.mxu0 0
        %6492 = vmatpush1.bf16.msra.mxu0 0
        %6493 = vmatprep.subr.bf16.mxu0 0
        %6494 = vmatpush1.bf16.msra.mxu0 0
        %6495 = vmatprep.subr.bf16.mxu0 0
        %6496 = vmatpush1.bf16.msra.mxu0 0
        %6497 = vmatprep.subr.bf16.mxu0 0
        %6498 = vmatpush1.bf16.msra.mxu0 0
        %6499 = vmatprep.subr.bf16.mxu0 0
        %6500 = vmatpush1.bf16.msra.mxu0 0
        %6501 = vmatprep.subr.bf16.mxu0 0
        %6502 = vmatpush1.bf16.msra.mxu0 0
        %6503 = vmatprep.subr.bf16.mxu0 0
        %6504 = vmatpush1.bf16.msra.mxu0 0
        %6505 = vmatprep.subr.bf16.mxu0 0
        %6506 = vmatpush1.bf16.msra.mxu0 0
        %6507 = vmatprep.subr.bf16.mxu0 0
        %6508 = vmatpush1.bf16.msra.mxu0 0
        %6509 = vmatprep.subr.bf16.mxu0 0
        %6510 = vmatpush1.bf16.msra.mxu0 0
        %6511 = vmatprep.subr.bf16.mxu0 0
        %6512 = vmatpush1.bf16.msra.mxu0 0
        %6513 = vmatprep.subr.bf16.mxu0 0
        %6514 = vmatpush1.bf16.msra.mxu0 0
        %6515 = vmatprep.subr.bf16.mxu0 0
        %6516 = vmatpush1.bf16.msra.mxu0 0
        %6517 = vmatprep.mubr.bf16.mxu0 0
        %6518 = vmatmul.mubr.bf16.gmra.mrb[0].mxu0 %v6480
        %v6519 = vpop.f32.mrb[0].mxu0
        %v6520 = vadd.f32 0.0, %v6519
        %v6521 = vpop.f32.mrb[0].mxu0
        %v6522 = vpop.f32.mrb[0].mxu0
        %v6523 = vpop.f32.mrb[0].mxu0
        %6524 = vdwg.mxu0
        %v6525 = vpack.c.bf16 %v6214, %v6163
        %v6526 = vpack.c.bf16 %v6316, %v6265
        %v6527 = vpack.c.bf16 %v6418, %v6367
        %v6528 = vpack.c.bf16 %v6520, %v6469
        %6533 = vrot.lane.b32.xlu0 %v6525, 80
        %v6534 = vpop.permute.xlu0 %6533
        %6535 = vrot.lane.b32.xlu0 %v6526, 80
        %v6536 = vpop.permute.xlu0 %6535
        %6537 = vrot.lane.b32.xlu0 %v6527, 80
        %v6538 = vpop.permute.xlu0 %6537
        %6539 = vrot.lane.b32.xlu0 %v6528, 80
        %v6540 = vpop.permute.xlu0 %6539
        %vm6545 = vcmask 786048
        %6546 = vst.msk [vmem:[#allocation3] sm:$0xff] %vm6545, %v6534
        %6547 = vst.msk [vmem:[#allocation3 + $0x8] sm:$0xff] %vm6545, %v6536
        %6548 = vst.msk [vmem:[#allocation3 + $0x10] sm:$0xff] %vm6545, %v6538
        %6549 = vst.msk [vmem:[#allocation3 + $0x18] sm:$0xff] %vm6545, %v6540
        %v6550 = vld [vmem:[#allocation2] sm:$0xf]
        %v6551 = vld [vmem:[#allocation2 + $0xc] sm:$0xf]
        %v6552 = vld [vmem:[#allocation2 + $0x18] sm:$0xf]
        %v6553 = vld [vmem:[#allocation2 + $0x24] sm:$0xf]
        %v6554 = vld [vmem:[#allocation2 + $0x30] sm:$0xf]
        %v6555 = vld [vmem:[#allocation2 + $0x3c] sm:$0xf]
        %v6556 = vld [vmem:[#allocation2 + $0x48] sm:$0xf]
        %v6557 = vld [vmem:[#allocation2 + $0x54] sm:$0xf]
        %v6558 = vld [vmem:[#allocation2 + $0x4] sm:$0xf]
        %v6559 = vld [vmem:[#allocation2 + $0x10] sm:$0xf]
        %v6560 = vld [vmem:[#allocation2 + $0x1c] sm:$0xf]
        %v6561 = vld [vmem:[#allocation2 + $0x28] sm:$0xf]
        %v6562 = vld [vmem:[#allocation2 + $0x34] sm:$0xf]
        %v6563 = vld [vmem:[#allocation2 + $0x40] sm:$0xf]
        %v6564 = vld [vmem:[#allocation2 + $0x4c] sm:$0xf]
        %v6565 = vld [vmem:[#allocation2 + $0x58] sm:$0xf]
        %v6566 = vld [vmem:[#allocation2 + $0x8] sm:$0xf]
        %v6567 = vld [vmem:[#allocation2 + $0x14] sm:$0xf]
        %v6568 = vld [vmem:[#allocation2 + $0x20] sm:$0xf]
        %v6569 = vld [vmem:[#allocation2 + $0x2c] sm:$0xf]
        %v6570 = vld [vmem:[#allocation2 + $0x38] sm:$0xf]
        %v6571 = vld [vmem:[#allocation2 + $0x44] sm:$0xf]
        %v6572 = vld [vmem:[#allocation2 + $0x50] sm:$0xf]
        %v6573 = vld [vmem:[#allocation2 + $0x5c] sm:$0xf]
        %v6575 = vunpack.c.l.b16 %v6550
        %v6576 = vpack.c.b16 %v6575, %v6575
        %6577 = vrot.lane.b32.xlu0 %v6576, 32
        %v6578 = vpop.permute.xlu0 %6577
        %v6580 = vunpack.c.l.b16 %v6558
        %v6581 = vpack.c.b16 %v6580, %v6580
        %6582 = vrot.lane.b32.xlu0 %v6581, 32
        %v6583 = vpop.permute.xlu0 %6582
        %v6585 = vsel %vm702, %v6578, 0
        %v6588 = vsel %vm702, %v6583, 0
        %6590 = vmatprep.subr.bf16.mxu0 0
        %6591 = vmatpush1.bf16.xpose.msra.mxu0 %v6588
        %6592 = vmatprep.subr.bf16.mxu0 0
        %6593 = vmatpush1.bf16.xpose.msra.mxu0 0
        %6594 = vmatprep.subr.bf16.mxu0 0
        %6595 = vmatpush1.bf16.xpose.msra.mxu0 0
        %6596 = vmatprep.subr.bf16.mxu0 0
        %6597 = vmatpush1.bf16.xpose.msra.mxu0 0
        %6598 = vmatprep.subr.bf16.mxu0 0
        %6599 = vmatpush1.bf16.xpose.msra.mxu0 0
        %6600 = vmatprep.subr.bf16.mxu0 0
        %6601 = vmatpush1.bf16.xpose.msra.mxu0 0
        %6602 = vmatprep.subr.bf16.mxu0 0
        %6603 = vmatpush1.bf16.xpose.msra.mxu0 0
        %6604 = vmatprep.subr.bf16.mxu0 0
        %6605 = vmatpush1.bf16.xpose.msra.mxu0 0
        %6606 = vmatprep.subr.bf16.mxu0 0
        %6607 = vmatpush1.bf16.xpose.msra.mxu0 0
        %6608 = vmatprep.subr.bf16.mxu0 0
        %6609 = vmatpush1.bf16.xpose.msra.mxu0 0
        %6610 = vmatprep.subr.bf16.mxu0 0
        %6611 = vmatpush1.bf16.xpose.msra.mxu0 0
        %6612 = vmatprep.subr.bf16.mxu0 0
        %6613 = vmatpush1.bf16.xpose.msra.mxu0 0
        %6614 = vmatprep.subr.bf16.mxu0 0
        %6615 = vmatpush1.bf16.xpose.msra.mxu0 0
        %6616 = vmatprep.subr.bf16.mxu0 0
        %6617 = vmatpush1.bf16.xpose.msra.mxu0 0
        %6618 = vmatprep.subr.bf16.mxu0 0
        %6619 = vmatpush1.bf16.xpose.msra.mxu0 0
        %6620 = vmatprep.subr.bf16.mxu0 0
        %6621 = vmatpush1.bf16.xpose.msra.mxu0 0
        %6622 = vmatprep.mubr.bf16.mxu0 0
        %6623 = vmatmul.mubr.bf16.gmra.mrb[0].mxu0 %v6585
        %v6624 = vpop.f32.mrb[0].mxu0
        %v6625 = vadd.f32 0.0, %v6624
        %v6626 = vpop.f32.mrb[0].mxu0
        %v6627 = vpop.f32.mrb[0].mxu0
        %v6628 = vpop.f32.mrb[0].mxu0
        %6629 = vdwg.mxu0
        %v6631 = vunpack.c.l.b16 %v6551
        %v6632 = vpack.c.b16 %v6631, %v6631
        %6633 = vrot.lane.b32.xlu0 %v6632, 32
        %v6634 = vpop.permute.xlu0 %6633
        %v6636 = vunpack.c.l.b16 %v6559
        %v6637 = vpack.c.b16 %v6636, %v6636
        %6638 = vrot.lane.b32.xlu0 %v6637, 32
        %v6639 = vpop.permute.xlu0 %6638
        %v6641 = vsel %vm702, %v6634, 0
        %v6644 = vsel %vm702, %v6639, 0
        %6646 = vmatprep.subr.bf16.mxu0 0
        %6647 = vmatpush1.bf16.xpose.msra.mxu0 %v6644
        %6648 = vmatprep.subr.bf16.mxu0 0
        %6649 = vmatpush1.bf16.xpose.msra.mxu0 0
        %6650 = vmatprep.subr.bf16.mxu0 0
        %6651 = vmatpush1.bf16.xpose.msra.mxu0 0
        %6652 = vmatprep.subr.bf16.mxu0 0
        %6653 = vmatpush1.bf16.xpose.msra.mxu0 0
        %6654 = vmatprep.subr.bf16.mxu0 0
        %6655 = vmatpush1.bf16.xpose.msra.mxu0 0
        %6656 = vmatprep.subr.bf16.mxu0 0
        %6657 = vmatpush1.bf16.xpose.msra.mxu0 0
        %6658 = vmatprep.subr.bf16.mxu0 0
        %6659 = vmatpush1.bf16.xpose.msra.mxu0 0
        %6660 = vmatprep.subr.bf16.mxu0 0
        %6661 = vmatpush1.bf16.xpose.msra.mxu0 0
        %6662 = vmatprep.subr.bf16.mxu0 0
        %6663 = vmatpush1.bf16.xpose.msra.mxu0 0
        %6664 = vmatprep.subr.bf16.mxu0 0
        %6665 = vmatpush1.bf16.xpose.msra.mxu0 0
        %6666 = vmatprep.subr.bf16.mxu0 0
        %6667 = vmatpush1.bf16.xpose.msra.mxu0 0
        %6668 = vmatprep.subr.bf16.mxu0 0
        %6669 = vmatpush1.bf16.xpose.msra.mxu0 0
        %6670 = vmatprep.subr.bf16.mxu0 0
        %6671 = vmatpush1.bf16.xpose.msra.mxu0 0
        %6672 = vmatprep.subr.bf16.mxu0 0
        %6673 = vmatpush1.bf16.xpose.msra.mxu0 0
        %6674 = vmatprep.subr.bf16.mxu0 0
        %6675 = vmatpush1.bf16.xpose.msra.mxu0 0
        %6676 = vmatprep.subr.bf16.mxu0 0
        %6677 = vmatpush1.bf16.xpose.msra.mxu0 0
        %6678 = vmatprep.mubr.bf16.mxu0 0
        %6679 = vmatmul.mubr.bf16.gmra.mrb[0].mxu0 %v6641
        %v6680 = vpop.f32.mrb[0].mxu0
        %v6681 = vadd.f32 0.0, %v6680
        %v6682 = vpop.f32.mrb[0].mxu0
        %v6683 = vpop.f32.mrb[0].mxu0
        %v6684 = vpop.f32.mrb[0].mxu0
        %6685 = vdwg.mxu0
        %v6687 = vunpack.c.l.b16 %v6552
        %v6688 = vpack.c.b16 %v6687, %v6687
        %6689 = vrot.lane.b32.xlu0 %v6688, 32
        %v6690 = vpop.permute.xlu0 %6689
        %v6692 = vunpack.c.l.b16 %v6560
        %v6693 = vpack.c.b16 %v6692, %v6692
        %6694 = vrot.lane.b32.xlu0 %v6693, 32
        %v6695 = vpop.permute.xlu0 %6694
        %v6697 = vsel %vm702, %v6690, 0
        %v6700 = vsel %vm702, %v6695, 0
        %6702 = vmatprep.subr.bf16.mxu0 0
        %6703 = vmatpush1.bf16.xpose.msra.mxu0 %v6700
        %6704 = vmatprep.subr.bf16.mxu0 0
        %6705 = vmatpush1.bf16.xpose.msra.mxu0 0
        %6706 = vmatprep.subr.bf16.mxu0 0
        %6707 = vmatpush1.bf16.xpose.msra.mxu0 0
        %6708 = vmatprep.subr.bf16.mxu0 0
        %6709 = vmatpush1.bf16.xpose.msra.mxu0 0
        %6710 = vmatprep.subr.bf16.mxu0 0
        %6711 = vmatpush1.bf16.xpose.msra.mxu0 0
        %6712 = vmatprep.subr.bf16.mxu0 0
        %6713 = vmatpush1.bf16.xpose.msra.mxu0 0
        %6714 = vmatprep.subr.bf16.mxu0 0
        %6715 = vmatpush1.bf16.xpose.msra.mxu0 0
        %6716 = vmatprep.subr.bf16.mxu0 0
        %6717 = vmatpush1.bf16.xpose.msra.mxu0 0
        %6718 = vmatprep.subr.bf16.mxu0 0
        %6719 = vmatpush1.bf16.xpose.msra.mxu0 0
        %6720 = vmatprep.subr.bf16.mxu0 0
        %6721 = vmatpush1.bf16.xpose.msra.mxu0 0
        %6722 = vmatprep.subr.bf16.mxu0 0
        %6723 = vmatpush1.bf16.xpose.msra.mxu0 0
        %6724 = vmatprep.subr.bf16.mxu0 0
        %6725 = vmatpush1.bf16.xpose.msra.mxu0 0
        %6726 = vmatprep.subr.bf16.mxu0 0
        %6727 = vmatpush1.bf16.xpose.msra.mxu0 0
        %6728 = vmatprep.subr.bf16.mxu0 0
        %6729 = vmatpush1.bf16.xpose.msra.mxu0 0
        %6730 = vmatprep.subr.bf16.mxu0 0
        %6731 = vmatpush1.bf16.xpose.msra.mxu0 0
        %6732 = vmatprep.subr.bf16.mxu0 0
        %6733 = vmatpush1.bf16.xpose.msra.mxu0 0
        %6734 = vmatprep.mubr.bf16.mxu0 0
        %6735 = vmatmul.mubr.bf16.gmra.mrb[0].mxu0 %v6697
        %v6736 = vpop.f32.mrb[0].mxu0
        %v6737 = vadd.f32 0.0, %v6736
        %v6738 = vpop.f32.mrb[0].mxu0
        %v6739 = vpop.f32.mrb[0].mxu0
        %v6740 = vpop.f32.mrb[0].mxu0
        %6741 = vdwg.mxu0
        %v6743 = vunpack.c.l.b16 %v6553
        %v6744 = vpack.c.b16 %v6743, %v6743
        %6745 = vrot.lane.b32.xlu0 %v6744, 32
        %v6746 = vpop.permute.xlu0 %6745
        %v6748 = vunpack.c.l.b16 %v6561
        %v6749 = vpack.c.b16 %v6748, %v6748
        %6750 = vrot.lane.b32.xlu0 %v6749, 32
        %v6751 = vpop.permute.xlu0 %6750
        %v6753 = vsel %vm702, %v6746, 0
        %v6756 = vsel %vm702, %v6751, 0
        %6758 = vmatprep.subr.bf16.mxu0 0
        %6759 = vmatpush1.bf16.xpose.msra.mxu0 %v6756
        %6760 = vmatprep.subr.bf16.mxu0 0
        %6761 = vmatpush1.bf16.xpose.msra.mxu0 0
        %6762 = vmatprep.subr.bf16.mxu0 0
        %6763 = vmatpush1.bf16.xpose.msra.mxu0 0
        %6764 = vmatprep.subr.bf16.mxu0 0
        %6765 = vmatpush1.bf16.xpose.msra.mxu0 0
        %6766 = vmatprep.subr.bf16.mxu0 0
        %6767 = vmatpush1.bf16.xpose.msra.mxu0 0
        %6768 = vmatprep.subr.bf16.mxu0 0
        %6769 = vmatpush1.bf16.xpose.msra.mxu0 0
        %6770 = vmatprep.subr.bf16.mxu0 0
        %6771 = vmatpush1.bf16.xpose.msra.mxu0 0
        %6772 = vmatprep.subr.bf16.mxu0 0
        %6773 = vmatpush1.bf16.xpose.msra.mxu0 0
        %6774 = vmatprep.subr.bf16.mxu0 0
        %6775 = vmatpush1.bf16.xpose.msra.mxu0 0
        %6776 = vmatprep.subr.bf16.mxu0 0
        %6777 = vmatpush1.bf16.xpose.msra.mxu0 0
        %6778 = vmatprep.subr.bf16.mxu0 0
        %6779 = vmatpush1.bf16.xpose.msra.mxu0 0
        %6780 = vmatprep.subr.bf16.mxu0 0
        %6781 = vmatpush1.bf16.xpose.msra.mxu0 0
        %6782 = vmatprep.subr.bf16.mxu0 0
        %6783 = vmatpush1.bf16.xpose.msra.mxu0 0
        %6784 = vmatprep.subr.bf16.mxu0 0
        %6785 = vmatpush1.bf16.xpose.msra.mxu0 0
        %6786 = vmatprep.subr.bf16.mxu0 0
        %6787 = vmatpush1.bf16.xpose.msra.mxu0 0
        %6788 = vmatprep.subr.bf16.mxu0 0
        %6789 = vmatpush1.bf16.xpose.msra.mxu0 0
        %6790 = vmatprep.mubr.bf16.mxu0 0
        %6791 = vmatmul.mubr.bf16.gmra.mrb[0].mxu0 %v6753
        %v6792 = vpop.f32.mrb[0].mxu0
        %v6793 = vadd.f32 0.0, %v6792
        %v6794 = vpop.f32.mrb[0].mxu0
        %v6795 = vpop.f32.mrb[0].mxu0
        %v6796 = vpop.f32.mrb[0].mxu0
        %6797 = vdwg.mxu0
        %v6799 = vunpack.c.l.b16 %v6554
        %v6800 = vpack.c.b16 %v6799, %v6799
        %6801 = vrot.lane.b32.xlu0 %v6800, 32
        %v6802 = vpop.permute.xlu0 %6801
        %v6804 = vunpack.c.l.b16 %v6562
        %v6805 = vpack.c.b16 %v6804, %v6804
        %6806 = vrot.lane.b32.xlu0 %v6805, 32
        %v6807 = vpop.permute.xlu0 %6806
        %v6809 = vsel %vm702, %v6802, 0
        %v6812 = vsel %vm702, %v6807, 0
        %6814 = vmatprep.subr.bf16.mxu0 0
        %6815 = vmatpush1.bf16.xpose.msra.mxu0 %v6812
        %6816 = vmatprep.subr.bf16.mxu0 0
        %6817 = vmatpush1.bf16.xpose.msra.mxu0 0
        %6818 = vmatprep.subr.bf16.mxu0 0
        %6819 = vmatpush1.bf16.xpose.msra.mxu0 0
        %6820 = vmatprep.subr.bf16.mxu0 0
        %6821 = vmatpush1.bf16.xpose.msra.mxu0 0
        %6822 = vmatprep.subr.bf16.mxu0 0
        %6823 = vmatpush1.bf16.xpose.msra.mxu0 0
        %6824 = vmatprep.subr.bf16.mxu0 0
        %6825 = vmatpush1.bf16.xpose.msra.mxu0 0
        %6826 = vmatprep.subr.bf16.mxu0 0
        %6827 = vmatpush1.bf16.xpose.msra.mxu0 0
        %6828 = vmatprep.subr.bf16.mxu0 0
        %6829 = vmatpush1.bf16.xpose.msra.mxu0 0
        %6830 = vmatprep.subr.bf16.mxu0 0
        %6831 = vmatpush1.bf16.xpose.msra.mxu0 0
        %6832 = vmatprep.subr.bf16.mxu0 0
        %6833 = vmatpush1.bf16.xpose.msra.mxu0 0
        %6834 = vmatprep.subr.bf16.mxu0 0
        %6835 = vmatpush1.bf16.xpose.msra.mxu0 0
        %6836 = vmatprep.subr.bf16.mxu0 0
        %6837 = vmatpush1.bf16.xpose.msra.mxu0 0
        %6838 = vmatprep.subr.bf16.mxu0 0
        %6839 = vmatpush1.bf16.xpose.msra.mxu0 0
        %6840 = vmatprep.subr.bf16.mxu0 0
        %6841 = vmatpush1.bf16.xpose.msra.mxu0 0
        %6842 = vmatprep.subr.bf16.mxu0 0
        %6843 = vmatpush1.bf16.xpose.msra.mxu0 0
        %6844 = vmatprep.subr.bf16.mxu0 0
        %6845 = vmatpush1.bf16.xpose.msra.mxu0 0
        %6846 = vmatprep.mubr.bf16.mxu0 0
        %6847 = vmatmul.mubr.bf16.gmra.mrb[0].mxu0 %v6809
        %v6848 = vpop.f32.mrb[0].mxu0
        %v6849 = vadd.f32 0.0, %v6848
        %v6850 = vpop.f32.mrb[0].mxu0
        %v6851 = vpop.f32.mrb[0].mxu0
        %v6852 = vpop.f32.mrb[0].mxu0
        %6853 = vdwg.mxu0
        %v6855 = vunpack.c.l.b16 %v6555
        %v6856 = vpack.c.b16 %v6855, %v6855
        %6857 = vrot.lane.b32.xlu0 %v6856, 32
        %v6858 = vpop.permute.xlu0 %6857
        %v6860 = vunpack.c.l.b16 %v6563
        %v6861 = vpack.c.b16 %v6860, %v6860
        %6862 = vrot.lane.b32.xlu0 %v6861, 32
        %v6863 = vpop.permute.xlu0 %6862
        %v6865 = vsel %vm702, %v6858, 0
        %v6868 = vsel %vm702, %v6863, 0
        %6870 = vmatprep.subr.bf16.mxu0 0
        %6871 = vmatpush1.bf16.xpose.msra.mxu0 %v6868
        %6872 = vmatprep.subr.bf16.mxu0 0
        %6873 = vmatpush1.bf16.xpose.msra.mxu0 0
        %6874 = vmatprep.subr.bf16.mxu0 0
        %6875 = vmatpush1.bf16.xpose.msra.mxu0 0
        %6876 = vmatprep.subr.bf16.mxu0 0
        %6877 = vmatpush1.bf16.xpose.msra.mxu0 0
        %6878 = vmatprep.subr.bf16.mxu0 0
        %6879 = vmatpush1.bf16.xpose.msra.mxu0 0
        %6880 = vmatprep.subr.bf16.mxu0 0
        %6881 = vmatpush1.bf16.xpose.msra.mxu0 0
        %6882 = vmatprep.subr.bf16.mxu0 0
        %6883 = vmatpush1.bf16.xpose.msra.mxu0 0
        %6884 = vmatprep.subr.bf16.mxu0 0
        %6885 = vmatpush1.bf16.xpose.msra.mxu0 0
        %6886 = vmatprep.subr.bf16.mxu0 0
        %6887 = vmatpush1.bf16.xpose.msra.mxu0 0
        %6888 = vmatprep.subr.bf16.mxu0 0
        %6889 = vmatpush1.bf16.xpose.msra.mxu0 0
        %6890 = vmatprep.subr.bf16.mxu0 0
        %6891 = vmatpush1.bf16.xpose.msra.mxu0 0
        %6892 = vmatprep.subr.bf16.mxu0 0
        %6893 = vmatpush1.bf16.xpose.msra.mxu0 0
        %6894 = vmatprep.subr.bf16.mxu0 0
        %6895 = vmatpush1.bf16.xpose.msra.mxu0 0
        %6896 = vmatprep.subr.bf16.mxu0 0
        %6897 = vmatpush1.bf16.xpose.msra.mxu0 0
        %6898 = vmatprep.subr.bf16.mxu0 0
        %6899 = vmatpush1.bf16.xpose.msra.mxu0 0
        %6900 = vmatprep.subr.bf16.mxu0 0
        %6901 = vmatpush1.bf16.xpose.msra.mxu0 0
        %6902 = vmatprep.mubr.bf16.mxu0 0
        %6903 = vmatmul.mubr.bf16.gmra.mrb[0].mxu0 %v6865
        %v6904 = vpop.f32.mrb[0].mxu0
        %v6905 = vadd.f32 0.0, %v6904
        %v6906 = vpop.f32.mrb[0].mxu0
        %v6907 = vpop.f32.mrb[0].mxu0
        %v6908 = vpop.f32.mrb[0].mxu0
        %6909 = vdwg.mxu0
        %v6911 = vunpack.c.l.b16 %v6556
        %v6912 = vpack.c.b16 %v6911, %v6911
        %6913 = vrot.lane.b32.xlu0 %v6912, 32
        %v6914 = vpop.permute.xlu0 %6913
        %v6916 = vunpack.c.l.b16 %v6564
        %v6917 = vpack.c.b16 %v6916, %v6916
        %6918 = vrot.lane.b32.xlu0 %v6917, 32
        %v6919 = vpop.permute.xlu0 %6918
        %v6921 = vsel %vm702, %v6914, 0
        %v6924 = vsel %vm702, %v6919, 0
        %6926 = vmatprep.subr.bf16.mxu0 0
        %6927 = vmatpush1.bf16.xpose.msra.mxu0 %v6924
        %6928 = vmatprep.subr.bf16.mxu0 0
        %6929 = vmatpush1.bf16.xpose.msra.mxu0 0
        %6930 = vmatprep.subr.bf16.mxu0 0
        %6931 = vmatpush1.bf16.xpose.msra.mxu0 0
        %6932 = vmatprep.subr.bf16.mxu0 0
        %6933 = vmatpush1.bf16.xpose.msra.mxu0 0
        %6934 = vmatprep.subr.bf16.mxu0 0
        %6935 = vmatpush1.bf16.xpose.msra.mxu0 0
        %6936 = vmatprep.subr.bf16.mxu0 0
        %6937 = vmatpush1.bf16.xpose.msra.mxu0 0
        %6938 = vmatprep.subr.bf16.mxu0 0
        %6939 = vmatpush1.bf16.xpose.msra.mxu0 0
        %6940 = vmatprep.subr.bf16.mxu0 0
        %6941 = vmatpush1.bf16.xpose.msra.mxu0 0
        %6942 = vmatprep.subr.bf16.mxu0 0
        %6943 = vmatpush1.bf16.xpose.msra.mxu0 0
        %6944 = vmatprep.subr.bf16.mxu0 0
        %6945 = vmatpush1.bf16.xpose.msra.mxu0 0
        %6946 = vmatprep.subr.bf16.mxu0 0
        %6947 = vmatpush1.bf16.xpose.msra.mxu0 0
        %6948 = vmatprep.subr.bf16.mxu0 0
        %6949 = vmatpush1.bf16.xpose.msra.mxu0 0
        %6950 = vmatprep.subr.bf16.mxu0 0
        %6951 = vmatpush1.bf16.xpose.msra.mxu0 0
        %6952 = vmatprep.subr.bf16.mxu0 0
        %6953 = vmatpush1.bf16.xpose.msra.mxu0 0
        %6954 = vmatprep.subr.bf16.mxu0 0
        %6955 = vmatpush1.bf16.xpose.msra.mxu0 0
        %6956 = vmatprep.subr.bf16.mxu0 0
        %6957 = vmatpush1.bf16.xpose.msra.mxu0 0
        %6958 = vmatprep.mubr.bf16.mxu0 0
        %6959 = vmatmul.mubr.bf16.gmra.mrb[0].mxu0 %v6921
        %v6960 = vpop.f32.mrb[0].mxu0
        %v6961 = vadd.f32 0.0, %v6960
        %v6962 = vpop.f32.mrb[0].mxu0
        %v6963 = vpop.f32.mrb[0].mxu0
        %v6964 = vpop.f32.mrb[0].mxu0
        %6965 = vdwg.mxu0
        %v6967 = vunpack.c.l.b16 %v6557
        %v6968 = vpack.c.b16 %v6967, %v6967
        %6969 = vrot.lane.b32.xlu0 %v6968, 32
        %v6970 = vpop.permute.xlu0 %6969
        %v6972 = vunpack.c.l.b16 %v6565
        %v6973 = vpack.c.b16 %v6972, %v6972
        %6974 = vrot.lane.b32.xlu0 %v6973, 32
        %v6975 = vpop.permute.xlu0 %6974
        %v6977 = vsel %vm702, %v6970, 0
        %v6980 = vsel %vm702, %v6975, 0
        %6982 = vmatprep.subr.bf16.mxu0 0
        %6983 = vmatpush1.bf16.xpose.msra.mxu0 %v6980
        %6984 = vmatprep.subr.bf16.mxu0 0
        %6985 = vmatpush1.bf16.xpose.msra.mxu0 0
        %6986 = vmatprep.subr.bf16.mxu0 0
        %6987 = vmatpush1.bf16.xpose.msra.mxu0 0
        %6988 = vmatprep.subr.bf16.mxu0 0
        %6989 = vmatpush1.bf16.xpose.msra.mxu0 0
        %6990 = vmatprep.subr.bf16.mxu0 0
        %6991 = vmatpush1.bf16.xpose.msra.mxu0 0
        %6992 = vmatprep.subr.bf16.mxu0 0
        %6993 = vmatpush1.bf16.xpose.msra.mxu0 0
        %6994 = vmatprep.subr.bf16.mxu0 0
        %6995 = vmatpush1.bf16.xpose.msra.mxu0 0
        %6996 = vmatprep.subr.bf16.mxu0 0
        %6997 = vmatpush1.bf16.xpose.msra.mxu0 0
        %6998 = vmatprep.subr.bf16.mxu0 0
        %6999 = vmatpush1.bf16.xpose.msra.mxu0 0
        %7000 = vmatprep.subr.bf16.mxu0 0
        %7001 = vmatpush1.bf16.xpose.msra.mxu0 0
        %7002 = vmatprep.subr.bf16.mxu0 0
        %7003 = vmatpush1.bf16.xpose.msra.mxu0 0
        %7004 = vmatprep.subr.bf16.mxu0 0
        %7005 = vmatpush1.bf16.xpose.msra.mxu0 0
        %7006 = vmatprep.subr.bf16.mxu0 0
        %7007 = vmatpush1.bf16.xpose.msra.mxu0 0
        %7008 = vmatprep.subr.bf16.mxu0 0
        %7009 = vmatpush1.bf16.xpose.msra.mxu0 0
        %7010 = vmatprep.subr.bf16.mxu0 0
        %7011 = vmatpush1.bf16.xpose.msra.mxu0 0
        %7012 = vmatprep.subr.bf16.mxu0 0
        %7013 = vmatpush1.bf16.xpose.msra.mxu0 0
        %7014 = vmatprep.mubr.bf16.mxu0 0
        %7015 = vmatmul.mubr.bf16.gmra.mrb[0].mxu0 %v6977
        %v7016 = vpop.f32.mrb[0].mxu0
        %v7017 = vadd.f32 0.0, %v7016
        %v7018 = vpop.f32.mrb[0].mxu0
        %v7019 = vpop.f32.mrb[0].mxu0
        %v7020 = vpop.f32.mrb[0].mxu0
        %7021 = vdwg.mxu0
        %v7022 = vsel %vm1071, %v6625, -inf
        %7023 = vmax.xlane.f32.xlu0 %v7022
        %v7024 = vpop.xlane.xlu0 %7023
        %v7025 = vsel %vm1071, %v6681, -inf
        %7026 = vmax.xlane.f32.xlu0 %v7025
        %v7027 = vpop.xlane.xlu0 %7026
        %v7028 = vsel %vm1071, %v6737, -inf
        %7029 = vmax.xlane.f32.xlu0 %v7028
        %v7030 = vpop.xlane.xlu0 %7029
        %v7031 = vsel %vm1071, %v6793, -inf
        %7032 = vmax.xlane.f32.xlu0 %v7031
        %v7033 = vpop.xlane.xlu0 %7032
        %v7034 = vsel %vm1071, %v6849, -inf
        %7035 = vmax.xlane.f32.xlu0 %v7034
        %v7036 = vpop.xlane.xlu0 %7035
        %v7037 = vsel %vm1071, %v6905, -inf
        %7038 = vmax.xlane.f32.xlu0 %v7037
        %v7039 = vpop.xlane.xlu0 %7038
        %v7040 = vsel %vm1071, %v6961, -inf
        %7041 = vmax.xlane.f32.xlu0 %v7040
        %v7042 = vpop.xlane.xlu0 %7041
        %v7043 = vsel %vm1071, %v7017, -inf
        %7044 = vmax.xlane.f32.xlu0 %v7043
        %v7045 = vpop.xlane.xlu0 %7044
        %v7046 = vsub.f32 %v6625, %v7024
        %v7047 = vsub.f32 %v6681, %v7027
        %v7048 = vsub.f32 %v6737, %v7030
        %v7049 = vsub.f32 %v6793, %v7033
        %v7050 = vsub.f32 %v6849, %v7036
        %v7051 = vsub.f32 %v6905, %v7039
        %v7052 = vsub.f32 %v6961, %v7042
        %v7053 = vsub.f32 %v7017, %v7045
        %v7054 = vmul.f32 %v7046, 1.442695
        %v7055 = vpow.pop %v7054
        %v7056 = vmul.f32 %v7047, 1.442695
        %v7057 = vpow.pop %v7056
        %v7058 = vmul.f32 %v7048, 1.442695
        %v7059 = vpow.pop %v7058
        %v7060 = vmul.f32 %v7049, 1.442695
        %v7061 = vpow.pop %v7060
        %v7062 = vmul.f32 %v7050, 1.442695
        %v7063 = vpow.pop %v7062
        %v7064 = vmul.f32 %v7051, 1.442695
        %v7065 = vpow.pop %v7064
        %v7066 = vmul.f32 %v7052, 1.442695
        %v7067 = vpow.pop %v7066
        %v7068 = vmul.f32 %v7053, 1.442695
        %v7069 = vpow.pop %v7068
        %v7070 = vsel %vm1071, %v7055, 0.0
        %7071 = vadd.xlane.f32.xlu0 %v7070
        %v7072 = vpop.xlane.xlu0 %7071
        %v7073 = vsel %vm1071, %v7057, 0.0
        %7074 = vadd.xlane.f32.xlu0 %v7073
        %v7075 = vpop.xlane.xlu0 %7074
        %v7076 = vsel %vm1071, %v7059, 0.0
        %7077 = vadd.xlane.f32.xlu0 %v7076
        %v7078 = vpop.xlane.xlu0 %7077
        %v7079 = vsel %vm1071, %v7061, 0.0
        %7080 = vadd.xlane.f32.xlu0 %v7079
        %v7081 = vpop.xlane.xlu0 %7080
        %v7082 = vsel %vm1071, %v7063, 0.0
        %7083 = vadd.xlane.f32.xlu0 %v7082
        %v7084 = vpop.xlane.xlu0 %7083
        %v7085 = vsel %vm1071, %v7065, 0.0
        %7086 = vadd.xlane.f32.xlu0 %v7085
        %v7087 = vpop.xlane.xlu0 %7086
        %v7088 = vsel %vm1071, %v7067, 0.0
        %7089 = vadd.xlane.f32.xlu0 %v7088
        %v7090 = vpop.xlane.xlu0 %7089
        %v7091 = vsel %vm1071, %v7069, 0.0
        %7092 = vadd.xlane.f32.xlu0 %v7091
        %v7093 = vpop.xlane.xlu0 %7092
        %v7094 = vrcp.pop %v7072
        %v7095 = vrcp.pop %v7075
        %v7096 = vrcp.pop %v7078
        %v7097 = vrcp.pop %v7081
        %v7098 = vrcp.pop %v7084
        %v7099 = vrcp.pop %v7087
        %v7100 = vrcp.pop %v7090
        %v7101 = vrcp.pop %v7093
        %v7102 = vmul.f32 %v7055, %v7094
        %v7103 = vmul.f32 %v7057, %v7095
        %v7104 = vmul.f32 %v7059, %v7096
        %v7105 = vmul.f32 %v7061, %v7097
        %v7106 = vmul.f32 %v7063, %v7098
        %v7107 = vmul.f32 %v7065, %v7099
        %v7108 = vmul.f32 %v7067, %v7100
        %v7109 = vmul.f32 %v7069, %v7101
        %v7110 = vpack.c.bf16 %v7102, %v7102
        %v7111 = vpack.c.bf16 %v7103, %v7103
        %v7112 = vpack.c.bf16 %v7104, %v7104
        %v7113 = vpack.c.bf16 %v7105, %v7105
        %v7114 = vpack.c.bf16 %v7106, %v7106
        %v7115 = vpack.c.bf16 %v7107, %v7107
        %v7116 = vpack.c.bf16 %v7108, %v7108
        %v7117 = vpack.c.bf16 %v7109, %v7109
        %v7119 = vunpack.c.l.b16 %v6566
        %v7120 = vpack.c.b16 %v7119, %v7119
        %7121 = vrot.lane.b32.xlu0 %v7120, 32
        %v7122 = vpop.permute.xlu0 %7121
        %v7124 = vsel %vm1071, %v7110, 0
        %v7127 = vsel %vm1171, %v7122, 0
        %7129 = vmatprep.subr.bf16.mxu0 0
        %7130 = vmatpush1.bf16.msra.mxu0 %v7127
        %7131 = vmatprep.subr.bf16.mxu0 0
        %7132 = vmatpush1.bf16.msra.mxu0 0
        %7133 = vmatprep.subr.bf16.mxu0 0
        %7134 = vmatpush1.bf16.msra.mxu0 0
        %7135 = vmatprep.subr.bf16.mxu0 0
        %7136 = vmatpush1.bf16.msra.mxu0 0
        %7137 = vmatprep.subr.bf16.mxu0 0
        %7138 = vmatpush1.bf16.msra.mxu0 0
        %7139 = vmatprep.subr.bf16.mxu0 0
        %7140 = vmatpush1.bf16.msra.mxu0 0
        %7141 = vmatprep.subr.bf16.mxu0 0
        %7142 = vmatpush1.bf16.msra.mxu0 0
        %7143 = vmatprep.subr.bf16.mxu0 0
        %7144 = vmatpush1.bf16.msra.mxu0 0
        %7145 = vmatprep.subr.bf16.mxu0 0
        %7146 = vmatpush1.bf16.msra.mxu0 0
        %7147 = vmatprep.subr.bf16.mxu0 0
        %7148 = vmatpush1.bf16.msra.mxu0 0
        %7149 = vmatprep.subr.bf16.mxu0 0
        %7150 = vmatpush1.bf16.msra.mxu0 0
        %7151 = vmatprep.subr.bf16.mxu0 0
        %7152 = vmatpush1.bf16.msra.mxu0 0
        %7153 = vmatprep.subr.bf16.mxu0 0
        %7154 = vmatpush1.bf16.msra.mxu0 0
        %7155 = vmatprep.subr.bf16.mxu0 0
        %7156 = vmatpush1.bf16.msra.mxu0 0
        %7157 = vmatprep.subr.bf16.mxu0 0
        %7158 = vmatpush1.bf16.msra.mxu0 0
        %7159 = vmatprep.subr.bf16.mxu0 0
        %7160 = vmatpush1.bf16.msra.mxu0 0
        %7161 = vmatprep.mubr.bf16.mxu0 0
        %7162 = vmatmul.mubr.bf16.gmra.mrb[0].mxu0 %v7124
        %v7163 = vpop.f32.mrb[0].mxu0
        %v7164 = vadd.f32 0.0, %v7163
        %v7165 = vpop.f32.mrb[0].mxu0
        %v7166 = vpop.f32.mrb[0].mxu0
        %v7167 = vpop.f32.mrb[0].mxu0
        %7168 = vdwg.mxu0
        %v7170 = vunpack.c.l.b16 %v6567
        %v7171 = vpack.c.b16 %v7170, %v7170
        %7172 = vrot.lane.b32.xlu0 %v7171, 32
        %v7173 = vpop.permute.xlu0 %7172
        %v7175 = vsel %vm1071, %v7111, 0
        %v7178 = vsel %vm1171, %v7173, 0
        %7180 = vmatprep.subr.bf16.mxu0 0
        %7181 = vmatpush1.bf16.msra.mxu0 %v7178
        %7182 = vmatprep.subr.bf16.mxu0 0
        %7183 = vmatpush1.bf16.msra.mxu0 0
        %7184 = vmatprep.subr.bf16.mxu0 0
        %7185 = vmatpush1.bf16.msra.mxu0 0
        %7186 = vmatprep.subr.bf16.mxu0 0
        %7187 = vmatpush1.bf16.msra.mxu0 0
        %7188 = vmatprep.subr.bf16.mxu0 0
        %7189 = vmatpush1.bf16.msra.mxu0 0
        %7190 = vmatprep.subr.bf16.mxu0 0
        %7191 = vmatpush1.bf16.msra.mxu0 0
        %7192 = vmatprep.subr.bf16.mxu0 0
        %7193 = vmatpush1.bf16.msra.mxu0 0
        %7194 = vmatprep.subr.bf16.mxu0 0
        %7195 = vmatpush1.bf16.msra.mxu0 0
        %7196 = vmatprep.subr.bf16.mxu0 0
        %7197 = vmatpush1.bf16.msra.mxu0 0
        %7198 = vmatprep.subr.bf16.mxu0 0
        %7199 = vmatpush1.bf16.msra.mxu0 0
        %7200 = vmatprep.subr.bf16.mxu0 0
        %7201 = vmatpush1.bf16.msra.mxu0 0
        %7202 = vmatprep.subr.bf16.mxu0 0
        %7203 = vmatpush1.bf16.msra.mxu0 0
        %7204 = vmatprep.subr.bf16.mxu0 0
        %7205 = vmatpush1.bf16.msra.mxu0 0
        %7206 = vmatprep.subr.bf16.mxu0 0
        %7207 = vmatpush1.bf16.msra.mxu0 0
        %7208 = vmatprep.subr.bf16.mxu0 0
        %7209 = vmatpush1.bf16.msra.mxu0 0
        %7210 = vmatprep.subr.bf16.mxu0 0
        %7211 = vmatpush1.bf16.msra.mxu0 0
        %7212 = vmatprep.mubr.bf16.mxu0 0
        %7213 = vmatmul.mubr.bf16.gmra.mrb[0].mxu0 %v7175
        %v7214 = vpop.f32.mrb[0].mxu0
        %v7215 = vadd.f32 0.0, %v7214
        %v7216 = vpop.f32.mrb[0].mxu0
        %v7217 = vpop.f32.mrb[0].mxu0
        %v7218 = vpop.f32.mrb[0].mxu0
        %7219 = vdwg.mxu0
        %v7221 = vunpack.c.l.b16 %v6568
        %v7222 = vpack.c.b16 %v7221, %v7221
        %7223 = vrot.lane.b32.xlu0 %v7222, 32
        %v7224 = vpop.permute.xlu0 %7223
        %v7226 = vsel %vm1071, %v7112, 0
        %v7229 = vsel %vm1171, %v7224, 0
        %7231 = vmatprep.subr.bf16.mxu0 0
        %7232 = vmatpush1.bf16.msra.mxu0 %v7229
        %7233 = vmatprep.subr.bf16.mxu0 0
        %7234 = vmatpush1.bf16.msra.mxu0 0
        %7235 = vmatprep.subr.bf16.mxu0 0
        %7236 = vmatpush1.bf16.msra.mxu0 0
        %7237 = vmatprep.subr.bf16.mxu0 0
        %7238 = vmatpush1.bf16.msra.mxu0 0
        %7239 = vmatprep.subr.bf16.mxu0 0
        %7240 = vmatpush1.bf16.msra.mxu0 0
        %7241 = vmatprep.subr.bf16.mxu0 0
        %7242 = vmatpush1.bf16.msra.mxu0 0
        %7243 = vmatprep.subr.bf16.mxu0 0
        %7244 = vmatpush1.bf16.msra.mxu0 0
        %7245 = vmatprep.subr.bf16.mxu0 0
        %7246 = vmatpush1.bf16.msra.mxu0 0
        %7247 = vmatprep.subr.bf16.mxu0 0
        %7248 = vmatpush1.bf16.msra.mxu0 0
        %7249 = vmatprep.subr.bf16.mxu0 0
        %7250 = vmatpush1.bf16.msra.mxu0 0
        %7251 = vmatprep.subr.bf16.mxu0 0
        %7252 = vmatpush1.bf16.msra.mxu0 0
        %7253 = vmatprep.subr.bf16.mxu0 0
        %7254 = vmatpush1.bf16.msra.mxu0 0
        %7255 = vmatprep.subr.bf16.mxu0 0
        %7256 = vmatpush1.bf16.msra.mxu0 0
        %7257 = vmatprep.subr.bf16.mxu0 0
        %7258 = vmatpush1.bf16.msra.mxu0 0
        %7259 = vmatprep.subr.bf16.mxu0 0
        %7260 = vmatpush1.bf16.msra.mxu0 0
        %7261 = vmatprep.subr.bf16.mxu0 0
        %7262 = vmatpush1.bf16.msra.mxu0 0
        %7263 = vmatprep.mubr.bf16.mxu0 0
        %7264 = vmatmul.mubr.bf16.gmra.mrb[0].mxu0 %v7226
        %v7265 = vpop.f32.mrb[0].mxu0
        %v7266 = vadd.f32 0.0, %v7265
        %v7267 = vpop.f32.mrb[0].mxu0
        %v7268 = vpop.f32.mrb[0].mxu0
        %v7269 = vpop.f32.mrb[0].mxu0
        %7270 = vdwg.mxu0
        %v7272 = vunpack.c.l.b16 %v6569
        %v7273 = vpack.c.b16 %v7272, %v7272
        %7274 = vrot.lane.b32.xlu0 %v7273, 32
        %v7275 = vpop.permute.xlu0 %7274
        %v7277 = vsel %vm1071, %v7113, 0
        %v7280 = vsel %vm1171, %v7275, 0
        %7282 = vmatprep.subr.bf16.mxu0 0
        %7283 = vmatpush1.bf16.msra.mxu0 %v7280
        %7284 = vmatprep.subr.bf16.mxu0 0
        %7285 = vmatpush1.bf16.msra.mxu0 0
        %7286 = vmatprep.subr.bf16.mxu0 0
        %7287 = vmatpush1.bf16.msra.mxu0 0
        %7288 = vmatprep.subr.bf16.mxu0 0
        %7289 = vmatpush1.bf16.msra.mxu0 0
        %7290 = vmatprep.subr.bf16.mxu0 0
        %7291 = vmatpush1.bf16.msra.mxu0 0
        %7292 = vmatprep.subr.bf16.mxu0 0
        %7293 = vmatpush1.bf16.msra.mxu0 0
        %7294 = vmatprep.subr.bf16.mxu0 0
        %7295 = vmatpush1.bf16.msra.mxu0 0
        %7296 = vmatprep.subr.bf16.mxu0 0
        %7297 = vmatpush1.bf16.msra.mxu0 0
        %7298 = vmatprep.subr.bf16.mxu0 0
        %7299 = vmatpush1.bf16.msra.mxu0 0
        %7300 = vmatprep.subr.bf16.mxu0 0
        %7301 = vmatpush1.bf16.msra.mxu0 0
        %7302 = vmatprep.subr.bf16.mxu0 0
        %7303 = vmatpush1.bf16.msra.mxu0 0
        %7304 = vmatprep.subr.bf16.mxu0 0
        %7305 = vmatpush1.bf16.msra.mxu0 0
        %7306 = vmatprep.subr.bf16.mxu0 0
        %7307 = vmatpush1.bf16.msra.mxu0 0
        %7308 = vmatprep.subr.bf16.mxu0 0
        %7309 = vmatpush1.bf16.msra.mxu0 0
        %7310 = vmatprep.subr.bf16.mxu0 0
        %7311 = vmatpush1.bf16.msra.mxu0 0
        %7312 = vmatprep.subr.bf16.mxu0 0
        %7313 = vmatpush1.bf16.msra.mxu0 0
        %7314 = vmatprep.mubr.bf16.mxu0 0
        %7315 = vmatmul.mubr.bf16.gmra.mrb[0].mxu0 %v7277
        %v7316 = vpop.f32.mrb[0].mxu0
        %v7317 = vadd.f32 0.0, %v7316
        %v7318 = vpop.f32.mrb[0].mxu0
        %v7319 = vpop.f32.mrb[0].mxu0
        %v7320 = vpop.f32.mrb[0].mxu0
        %7321 = vdwg.mxu0
        %v7323 = vunpack.c.l.b16 %v6570
        %v7324 = vpack.c.b16 %v7323, %v7323
        %7325 = vrot.lane.b32.xlu0 %v7324, 32
        %v7326 = vpop.permute.xlu0 %7325
        %v7328 = vsel %vm1071, %v7114, 0
        %v7331 = vsel %vm1171, %v7326, 0
        %7333 = vmatprep.subr.bf16.mxu0 0
        %7334 = vmatpush1.bf16.msra.mxu0 %v7331
        %7335 = vmatprep.subr.bf16.mxu0 0
        %7336 = vmatpush1.bf16.msra.mxu0 0
        %7337 = vmatprep.subr.bf16.mxu0 0
        %7338 = vmatpush1.bf16.msra.mxu0 0
        %7339 = vmatprep.subr.bf16.mxu0 0
        %7340 = vmatpush1.bf16.msra.mxu0 0
        %7341 = vmatprep.subr.bf16.mxu0 0
        %7342 = vmatpush1.bf16.msra.mxu0 0
        %7343 = vmatprep.subr.bf16.mxu0 0
        %7344 = vmatpush1.bf16.msra.mxu0 0
        %7345 = vmatprep.subr.bf16.mxu0 0
        %7346 = vmatpush1.bf16.msra.mxu0 0
        %7347 = vmatprep.subr.bf16.mxu0 0
        %7348 = vmatpush1.bf16.msra.mxu0 0
        %7349 = vmatprep.subr.bf16.mxu0 0
        %7350 = vmatpush1.bf16.msra.mxu0 0
        %7351 = vmatprep.subr.bf16.mxu0 0
        %7352 = vmatpush1.bf16.msra.mxu0 0
        %7353 = vmatprep.subr.bf16.mxu0 0
        %7354 = vmatpush1.bf16.msra.mxu0 0
        %7355 = vmatprep.subr.bf16.mxu0 0
        %7356 = vmatpush1.bf16.msra.mxu0 0
        %7357 = vmatprep.subr.bf16.mxu0 0
        %7358 = vmatpush1.bf16.msra.mxu0 0
        %7359 = vmatprep.subr.bf16.mxu0 0
        %7360 = vmatpush1.bf16.msra.mxu0 0
        %7361 = vmatprep.subr.bf16.mxu0 0
        %7362 = vmatpush1.bf16.msra.mxu0 0
        %7363 = vmatprep.subr.bf16.mxu0 0
        %7364 = vmatpush1.bf16.msra.mxu0 0
        %7365 = vmatprep.mubr.bf16.mxu0 0
        %7366 = vmatmul.mubr.bf16.gmra.mrb[0].mxu0 %v7328
        %v7367 = vpop.f32.mrb[0].mxu0
        %v7368 = vadd.f32 0.0, %v7367
        %v7369 = vpop.f32.mrb[0].mxu0
        %v7370 = vpop.f32.mrb[0].mxu0
        %v7371 = vpop.f32.mrb[0].mxu0
        %7372 = vdwg.mxu0
        %v7374 = vunpack.c.l.b16 %v6571
        %v7375 = vpack.c.b16 %v7374, %v7374
        %7376 = vrot.lane.b32.xlu0 %v7375, 32
        %v7377 = vpop.permute.xlu0 %7376
        %v7379 = vsel %vm1071, %v7115, 0
        %v7382 = vsel %vm1171, %v7377, 0
        %7384 = vmatprep.subr.bf16.mxu0 0
        %7385 = vmatpush1.bf16.msra.mxu0 %v7382
        %7386 = vmatprep.subr.bf16.mxu0 0
        %7387 = vmatpush1.bf16.msra.mxu0 0
        %7388 = vmatprep.subr.bf16.mxu0 0
        %7389 = vmatpush1.bf16.msra.mxu0 0
        %7390 = vmatprep.subr.bf16.mxu0 0
        %7391 = vmatpush1.bf16.msra.mxu0 0
        %7392 = vmatprep.subr.bf16.mxu0 0
        %7393 = vmatpush1.bf16.msra.mxu0 0
        %7394 = vmatprep.subr.bf16.mxu0 0
        %7395 = vmatpush1.bf16.msra.mxu0 0
        %7396 = vmatprep.subr.bf16.mxu0 0
        %7397 = vmatpush1.bf16.msra.mxu0 0
        %7398 = vmatprep.subr.bf16.mxu0 0
        %7399 = vmatpush1.bf16.msra.mxu0 0
        %7400 = vmatprep.subr.bf16.mxu0 0
        %7401 = vmatpush1.bf16.msra.mxu0 0
        %7402 = vmatprep.subr.bf16.mxu0 0
        %7403 = vmatpush1.bf16.msra.mxu0 0
        %7404 = vmatprep.subr.bf16.mxu0 0
        %7405 = vmatpush1.bf16.msra.mxu0 0
        %7406 = vmatprep.subr.bf16.mxu0 0
        %7407 = vmatpush1.bf16.msra.mxu0 0
        %7408 = vmatprep.subr.bf16.mxu0 0
        %7409 = vmatpush1.bf16.msra.mxu0 0
        %7410 = vmatprep.subr.bf16.mxu0 0
        %7411 = vmatpush1.bf16.msra.mxu0 0
        %7412 = vmatprep.subr.bf16.mxu0 0
        %7413 = vmatpush1.bf16.msra.mxu0 0
        %7414 = vmatprep.subr.bf16.mxu0 0
        %7415 = vmatpush1.bf16.msra.mxu0 0
        %7416 = vmatprep.mubr.bf16.mxu0 0
        %7417 = vmatmul.mubr.bf16.gmra.mrb[0].mxu0 %v7379
        %v7418 = vpop.f32.mrb[0].mxu0
        %v7419 = vadd.f32 0.0, %v7418
        %v7420 = vpop.f32.mrb[0].mxu0
        %v7421 = vpop.f32.mrb[0].mxu0
        %v7422 = vpop.f32.mrb[0].mxu0
        %7423 = vdwg.mxu0
        %v7425 = vunpack.c.l.b16 %v6572
        %v7426 = vpack.c.b16 %v7425, %v7425
        %7427 = vrot.lane.b32.xlu0 %v7426, 32
        %v7428 = vpop.permute.xlu0 %7427
        %v7430 = vsel %vm1071, %v7116, 0
        %v7433 = vsel %vm1171, %v7428, 0
        %7435 = vmatprep.subr.bf16.mxu0 0
        %7436 = vmatpush1.bf16.msra.mxu0 %v7433
        %7437 = vmatprep.subr.bf16.mxu0 0
        %7438 = vmatpush1.bf16.msra.mxu0 0
        %7439 = vmatprep.subr.bf16.mxu0 0
        %7440 = vmatpush1.bf16.msra.mxu0 0
        %7441 = vmatprep.subr.bf16.mxu0 0
        %7442 = vmatpush1.bf16.msra.mxu0 0
        %7443 = vmatprep.subr.bf16.mxu0 0
        %7444 = vmatpush1.bf16.msra.mxu0 0
        %7445 = vmatprep.subr.bf16.mxu0 0
        %7446 = vmatpush1.bf16.msra.mxu0 0
        %7447 = vmatprep.subr.bf16.mxu0 0
        %7448 = vmatpush1.bf16.msra.mxu0 0
        %7449 = vmatprep.subr.bf16.mxu0 0
        %7450 = vmatpush1.bf16.msra.mxu0 0
        %7451 = vmatprep.subr.bf16.mxu0 0
        %7452 = vmatpush1.bf16.msra.mxu0 0
        %7453 = vmatprep.subr.bf16.mxu0 0
        %7454 = vmatpush1.bf16.msra.mxu0 0
        %7455 = vmatprep.subr.bf16.mxu0 0
        %7456 = vmatpush1.bf16.msra.mxu0 0
        %7457 = vmatprep.subr.bf16.mxu0 0
        %7458 = vmatpush1.bf16.msra.mxu0 0
        %7459 = vmatprep.subr.bf16.mxu0 0
        %7460 = vmatpush1.bf16.msra.mxu0 0
        %7461 = vmatprep.subr.bf16.mxu0 0
        %7462 = vmatpush1.bf16.msra.mxu0 0
        %7463 = vmatprep.subr.bf16.mxu0 0
        %7464 = vmatpush1.bf16.msra.mxu0 0
        %7465 = vmatprep.subr.bf16.mxu0 0
        %7466 = vmatpush1.bf16.msra.mxu0 0
        %7467 = vmatprep.mubr.bf16.mxu0 0
        %7468 = vmatmul.mubr.bf16.gmra.mrb[0].mxu0 %v7430
        %v7469 = vpop.f32.mrb[0].mxu0
        %v7470 = vadd.f32 0.0, %v7469
        %v7471 = vpop.f32.mrb[0].mxu0
        %v7472 = vpop.f32.mrb[0].mxu0
        %v7473 = vpop.f32.mrb[0].mxu0
        %7474 = vdwg.mxu0
        %v7476 = vunpack.c.l.b16 %v6573
        %v7477 = vpack.c.b16 %v7476, %v7476
        %7478 = vrot.lane.b32.xlu0 %v7477, 32
        %v7479 = vpop.permute.xlu0 %7478
        %v7481 = vsel %vm1071, %v7117, 0
        %v7484 = vsel %vm1171, %v7479, 0
        %7486 = vmatprep.subr.bf16.mxu0 0
        %7487 = vmatpush1.bf16.msra.mxu0 %v7484
        %7488 = vmatprep.subr.bf16.mxu0 0
        %7489 = vmatpush1.bf16.msra.mxu0 0
        %7490 = vmatprep.subr.bf16.mxu0 0
        %7491 = vmatpush1.bf16.msra.mxu0 0
        %7492 = vmatprep.subr.bf16.mxu0 0
        %7493 = vmatpush1.bf16.msra.mxu0 0
        %7494 = vmatprep.subr.bf16.mxu0 0
        %7495 = vmatpush1.bf16.msra.mxu0 0
        %7496 = vmatprep.subr.bf16.mxu0 0
        %7497 = vmatpush1.bf16.msra.mxu0 0
        %7498 = vmatprep.subr.bf16.mxu0 0
        %7499 = vmatpush1.bf16.msra.mxu0 0
        %7500 = vmatprep.subr.bf16.mxu0 0
        %7501 = vmatpush1.bf16.msra.mxu0 0
        %7502 = vmatprep.subr.bf16.mxu0 0
        %7503 = vmatpush1.bf16.msra.mxu0 0
        %7504 = vmatprep.subr.bf16.mxu0 0
        %7505 = vmatpush1.bf16.msra.mxu0 0
        %7506 = vmatprep.subr.bf16.mxu0 0
        %7507 = vmatpush1.bf16.msra.mxu0 0
        %7508 = vmatprep.subr.bf16.mxu0 0
        %7509 = vmatpush1.bf16.msra.mxu0 0
        %7510 = vmatprep.subr.bf16.mxu0 0
        %7511 = vmatpush1.bf16.msra.mxu0 0
        %7512 = vmatprep.subr.bf16.mxu0 0
        %7513 = vmatpush1.bf16.msra.mxu0 0
        %7514 = vmatprep.subr.bf16.mxu0 0
        %7515 = vmatpush1.bf16.msra.mxu0 0
        %7516 = vmatprep.subr.bf16.mxu0 0
        %7517 = vmatpush1.bf16.msra.mxu0 0
        %7518 = vmatprep.mubr.bf16.mxu0 0
        %7519 = vmatmul.mubr.bf16.gmra.mrb[0].mxu0 %v7481
        %v7520 = vpop.f32.mrb[0].mxu0
        %v7521 = vadd.f32 0.0, %v7520
        %v7522 = vpop.f32.mrb[0].mxu0
        %v7523 = vpop.f32.mrb[0].mxu0
        %v7524 = vpop.f32.mrb[0].mxu0
        %7525 = vdwg.mxu0
        %v7526 = vpack.c.bf16 %v7215, %v7164
        %v7527 = vpack.c.bf16 %v7317, %v7266
        %v7528 = vpack.c.bf16 %v7419, %v7368
        %v7529 = vpack.c.bf16 %v7521, %v7470
        %7534 = vrot.lane.b32.xlu0 %v7526, 96
        %v7535 = vpop.permute.xlu0 %7534
        %7536 = vrot.lane.b32.xlu0 %v7527, 96
        %v7537 = vpop.permute.xlu0 %7536
        %7538 = vrot.lane.b32.xlu0 %v7528, 96
        %v7539 = vpop.permute.xlu0 %7538
        %7540 = vrot.lane.b32.xlu0 %v7529, 96
        %v7541 = vpop.permute.xlu0 %7540
        %vm7546 = vcmask 917248
        %7547 = vst.msk [vmem:[#allocation3] sm:$0xff] %vm7546, %v7535
        %7548 = vst.msk [vmem:[#allocation3 + $0x8] sm:$0xff] %vm7546, %v7537
        %7549 = vst.msk [vmem:[#allocation3 + $0x10] sm:$0xff] %vm7546, %v7539
        %7550 = vst.msk [vmem:[#allocation3 + $0x18] sm:$0xff] %vm7546, %v7541
        %v7551 = vld [vmem:[#allocation2] sm:$0xf]
        %v7552 = vld [vmem:[#allocation2 + $0xc] sm:$0xf]
        %v7553 = vld [vmem:[#allocation2 + $0x18] sm:$0xf]
        %v7554 = vld [vmem:[#allocation2 + $0x24] sm:$0xf]
        %v7555 = vld [vmem:[#allocation2 + $0x30] sm:$0xf]
        %v7556 = vld [vmem:[#allocation2 + $0x3c] sm:$0xf]
        %v7557 = vld [vmem:[#allocation2 + $0x48] sm:$0xf]
        %v7558 = vld [vmem:[#allocation2 + $0x54] sm:$0xf]
        %v7559 = vld [vmem:[#allocation2 + $0x4] sm:$0xf]
        %v7560 = vld [vmem:[#allocation2 + $0x10] sm:$0xf]
        %v7561 = vld [vmem:[#allocation2 + $0x1c] sm:$0xf]
        %v7562 = vld [vmem:[#allocation2 + $0x28] sm:$0xf]
        %v7563 = vld [vmem:[#allocation2 + $0x34] sm:$0xf]
        %v7564 = vld [vmem:[#allocation2 + $0x40] sm:$0xf]
        %v7565 = vld [vmem:[#allocation2 + $0x4c] sm:$0xf]
        %v7566 = vld [vmem:[#allocation2 + $0x58] sm:$0xf]
        %v7567 = vld [vmem:[#allocation2 + $0x8] sm:$0xf]
        %v7568 = vld [vmem:[#allocation2 + $0x14] sm:$0xf]
        %v7569 = vld [vmem:[#allocation2 + $0x20] sm:$0xf]
        %v7570 = vld [vmem:[#allocation2 + $0x2c] sm:$0xf]
        %v7571 = vld [vmem:[#allocation2 + $0x38] sm:$0xf]
        %v7572 = vld [vmem:[#allocation2 + $0x44] sm:$0xf]
        %v7573 = vld [vmem:[#allocation2 + $0x50] sm:$0xf]
        %v7574 = vld [vmem:[#allocation2 + $0x5c] sm:$0xf]
        %v7576 = vunpack.c.l.b16 %v7551
        %v7577 = vpack.c.b16 %v7576, %v7576
        %7578 = vrot.lane.b32.xlu0 %v7577, 16
        %v7579 = vpop.permute.xlu0 %7578
        %v7581 = vunpack.c.l.b16 %v7559
        %v7582 = vpack.c.b16 %v7581, %v7581
        %7583 = vrot.lane.b32.xlu0 %v7582, 16
        %v7584 = vpop.permute.xlu0 %7583
        %v7586 = vsel %vm702, %v7579, 0
        %v7589 = vsel %vm702, %v7584, 0
        %7591 = vmatprep.subr.bf16.mxu0 0
        %7592 = vmatpush1.bf16.xpose.msra.mxu0 %v7589
        %7593 = vmatprep.subr.bf16.mxu0 0
        %7594 = vmatpush1.bf16.xpose.msra.mxu0 0
        %7595 = vmatprep.subr.bf16.mxu0 0
        %7596 = vmatpush1.bf16.xpose.msra.mxu0 0
        %7597 = vmatprep.subr.bf16.mxu0 0
        %7598 = vmatpush1.bf16.xpose.msra.mxu0 0
        %7599 = vmatprep.subr.bf16.mxu0 0
        %7600 = vmatpush1.bf16.xpose.msra.mxu0 0
        %7601 = vmatprep.subr.bf16.mxu0 0
        %7602 = vmatpush1.bf16.xpose.msra.mxu0 0
        %7603 = vmatprep.subr.bf16.mxu0 0
        %7604 = vmatpush1.bf16.xpose.msra.mxu0 0
        %7605 = vmatprep.subr.bf16.mxu0 0
        %7606 = vmatpush1.bf16.xpose.msra.mxu0 0
        %7607 = vmatprep.subr.bf16.mxu0 0
        %7608 = vmatpush1.bf16.xpose.msra.mxu0 0
        %7609 = vmatprep.subr.bf16.mxu0 0
        %7610 = vmatpush1.bf16.xpose.msra.mxu0 0
        %7611 = vmatprep.subr.bf16.mxu0 0
        %7612 = vmatpush1.bf16.xpose.msra.mxu0 0
        %7613 = vmatprep.subr.bf16.mxu0 0
        %7614 = vmatpush1.bf16.xpose.msra.mxu0 0
        %7615 = vmatprep.subr.bf16.mxu0 0
        %7616 = vmatpush1.bf16.xpose.msra.mxu0 0
        %7617 = vmatprep.subr.bf16.mxu0 0
        %7618 = vmatpush1.bf16.xpose.msra.mxu0 0
        %7619 = vmatprep.subr.bf16.mxu0 0
        %7620 = vmatpush1.bf16.xpose.msra.mxu0 0
        %7621 = vmatprep.subr.bf16.mxu0 0
        %7622 = vmatpush1.bf16.xpose.msra.mxu0 0
        %7623 = vmatprep.mubr.bf16.mxu0 0
        %7624 = vmatmul.mubr.bf16.gmra.mrb[0].mxu0 %v7586
        %v7625 = vpop.f32.mrb[0].mxu0
        %v7626 = vadd.f32 0.0, %v7625
        %v7627 = vpop.f32.mrb[0].mxu0
        %v7628 = vpop.f32.mrb[0].mxu0
        %v7629 = vpop.f32.mrb[0].mxu0
        %7630 = vdwg.mxu0
        %v7632 = vunpack.c.l.b16 %v7552
        %v7633 = vpack.c.b16 %v7632, %v7632
        %7634 = vrot.lane.b32.xlu0 %v7633, 16
        %v7635 = vpop.permute.xlu0 %7634
        %v7637 = vunpack.c.l.b16 %v7560
        %v7638 = vpack.c.b16 %v7637, %v7637
        %7639 = vrot.lane.b32.xlu0 %v7638, 16
        %v7640 = vpop.permute.xlu0 %7639
        %v7642 = vsel %vm702, %v7635, 0
        %v7645 = vsel %vm702, %v7640, 0
        %7647 = vmatprep.subr.bf16.mxu0 0
        %7648 = vmatpush1.bf16.xpose.msra.mxu0 %v7645
        %7649 = vmatprep.subr.bf16.mxu0 0
        %7650 = vmatpush1.bf16.xpose.msra.mxu0 0
        %7651 = vmatprep.subr.bf16.mxu0 0
        %7652 = vmatpush1.bf16.xpose.msra.mxu0 0
        %7653 = vmatprep.subr.bf16.mxu0 0
        %7654 = vmatpush1.bf16.xpose.msra.mxu0 0
        %7655 = vmatprep.subr.bf16.mxu0 0
        %7656 = vmatpush1.bf16.xpose.msra.mxu0 0
        %7657 = vmatprep.subr.bf16.mxu0 0
        %7658 = vmatpush1.bf16.xpose.msra.mxu0 0
        %7659 = vmatprep.subr.bf16.mxu0 0
        %7660 = vmatpush1.bf16.xpose.msra.mxu0 0
        %7661 = vmatprep.subr.bf16.mxu0 0
        %7662 = vmatpush1.bf16.xpose.msra.mxu0 0
        %7663 = vmatprep.subr.bf16.mxu0 0
        %7664 = vmatpush1.bf16.xpose.msra.mxu0 0
        %7665 = vmatprep.subr.bf16.mxu0 0
        %7666 = vmatpush1.bf16.xpose.msra.mxu0 0
        %7667 = vmatprep.subr.bf16.mxu0 0
        %7668 = vmatpush1.bf16.xpose.msra.mxu0 0
        %7669 = vmatprep.subr.bf16.mxu0 0
        %7670 = vmatpush1.bf16.xpose.msra.mxu0 0
        %7671 = vmatprep.subr.bf16.mxu0 0
        %7672 = vmatpush1.bf16.xpose.msra.mxu0 0
        %7673 = vmatprep.subr.bf16.mxu0 0
        %7674 = vmatpush1.bf16.xpose.msra.mxu0 0
        %7675 = vmatprep.subr.bf16.mxu0 0
        %7676 = vmatpush1.bf16.xpose.msra.mxu0 0
        %7677 = vmatprep.subr.bf16.mxu0 0
        %7678 = vmatpush1.bf16.xpose.msra.mxu0 0
        %7679 = vmatprep.mubr.bf16.mxu0 0
        %7680 = vmatmul.mubr.bf16.gmra.mrb[0].mxu0 %v7642
        %v7681 = vpop.f32.mrb[0].mxu0
        %v7682 = vadd.f32 0.0, %v7681
        %v7683 = vpop.f32.mrb[0].mxu0
        %v7684 = vpop.f32.mrb[0].mxu0
        %v7685 = vpop.f32.mrb[0].mxu0
        %7686 = vdwg.mxu0
        %v7688 = vunpack.c.l.b16 %v7553
        %v7689 = vpack.c.b16 %v7688, %v7688
        %7690 = vrot.lane.b32.xlu0 %v7689, 16
        %v7691 = vpop.permute.xlu0 %7690
        %v7693 = vunpack.c.l.b16 %v7561
        %v7694 = vpack.c.b16 %v7693, %v7693
        %7695 = vrot.lane.b32.xlu0 %v7694, 16
        %v7696 = vpop.permute.xlu0 %7695
        %v7698 = vsel %vm702, %v7691, 0
        %v7701 = vsel %vm702, %v7696, 0
        %7703 = vmatprep.subr.bf16.mxu0 0
        %7704 = vmatpush1.bf16.xpose.msra.mxu0 %v7701
        %7705 = vmatprep.subr.bf16.mxu0 0
        %7706 = vmatpush1.bf16.xpose.msra.mxu0 0
        %7707 = vmatprep.subr.bf16.mxu0 0
        %7708 = vmatpush1.bf16.xpose.msra.mxu0 0
        %7709 = vmatprep.subr.bf16.mxu0 0
        %7710 = vmatpush1.bf16.xpose.msra.mxu0 0
        %7711 = vmatprep.subr.bf16.mxu0 0
        %7712 = vmatpush1.bf16.xpose.msra.mxu0 0
        %7713 = vmatprep.subr.bf16.mxu0 0
        %7714 = vmatpush1.bf16.xpose.msra.mxu0 0
        %7715 = vmatprep.subr.bf16.mxu0 0
        %7716 = vmatpush1.bf16.xpose.msra.mxu0 0
        %7717 = vmatprep.subr.bf16.mxu0 0
        %7718 = vmatpush1.bf16.xpose.msra.mxu0 0
        %7719 = vmatprep.subr.bf16.mxu0 0
        %7720 = vmatpush1.bf16.xpose.msra.mxu0 0
        %7721 = vmatprep.subr.bf16.mxu0 0
        %7722 = vmatpush1.bf16.xpose.msra.mxu0 0
        %7723 = vmatprep.subr.bf16.mxu0 0
        %7724 = vmatpush1.bf16.xpose.msra.mxu0 0
        %7725 = vmatprep.subr.bf16.mxu0 0
        %7726 = vmatpush1.bf16.xpose.msra.mxu0 0
        %7727 = vmatprep.subr.bf16.mxu0 0
        %7728 = vmatpush1.bf16.xpose.msra.mxu0 0
        %7729 = vmatprep.subr.bf16.mxu0 0
        %7730 = vmatpush1.bf16.xpose.msra.mxu0 0
        %7731 = vmatprep.subr.bf16.mxu0 0
        %7732 = vmatpush1.bf16.xpose.msra.mxu0 0
        %7733 = vmatprep.subr.bf16.mxu0 0
        %7734 = vmatpush1.bf16.xpose.msra.mxu0 0
        %7735 = vmatprep.mubr.bf16.mxu0 0
        %7736 = vmatmul.mubr.bf16.gmra.mrb[0].mxu0 %v7698
        %v7737 = vpop.f32.mrb[0].mxu0
        %v7738 = vadd.f32 0.0, %v7737
        %v7739 = vpop.f32.mrb[0].mxu0
        %v7740 = vpop.f32.mrb[0].mxu0
        %v7741 = vpop.f32.mrb[0].mxu0
        %7742 = vdwg.mxu0
        %v7744 = vunpack.c.l.b16 %v7554
        %v7745 = vpack.c.b16 %v7744, %v7744
        %7746 = vrot.lane.b32.xlu0 %v7745, 16
        %v7747 = vpop.permute.xlu0 %7746
        %v7749 = vunpack.c.l.b16 %v7562
        %v7750 = vpack.c.b16 %v7749, %v7749
        %7751 = vrot.lane.b32.xlu0 %v7750, 16
        %v7752 = vpop.permute.xlu0 %7751
        %v7754 = vsel %vm702, %v7747, 0
        %v7757 = vsel %vm702, %v7752, 0
        %7759 = vmatprep.subr.bf16.mxu0 0
        %7760 = vmatpush1.bf16.xpose.msra.mxu0 %v7757
        %7761 = vmatprep.subr.bf16.mxu0 0
        %7762 = vmatpush1.bf16.xpose.msra.mxu0 0
        %7763 = vmatprep.subr.bf16.mxu0 0
        %7764 = vmatpush1.bf16.xpose.msra.mxu0 0
        %7765 = vmatprep.subr.bf16.mxu0 0
        %7766 = vmatpush1.bf16.xpose.msra.mxu0 0
        %7767 = vmatprep.subr.bf16.mxu0 0
        %7768 = vmatpush1.bf16.xpose.msra.mxu0 0
        %7769 = vmatprep.subr.bf16.mxu0 0
        %7770 = vmatpush1.bf16.xpose.msra.mxu0 0
        %7771 = vmatprep.subr.bf16.mxu0 0
        %7772 = vmatpush1.bf16.xpose.msra.mxu0 0
        %7773 = vmatprep.subr.bf16.mxu0 0
        %7774 = vmatpush1.bf16.xpose.msra.mxu0 0
        %7775 = vmatprep.subr.bf16.mxu0 0
        %7776 = vmatpush1.bf16.xpose.msra.mxu0 0
        %7777 = vmatprep.subr.bf16.mxu0 0
        %7778 = vmatpush1.bf16.xpose.msra.mxu0 0
        %7779 = vmatprep.subr.bf16.mxu0 0
        %7780 = vmatpush1.bf16.xpose.msra.mxu0 0
        %7781 = vmatprep.subr.bf16.mxu0 0
        %7782 = vmatpush1.bf16.xpose.msra.mxu0 0
        %7783 = vmatprep.subr.bf16.mxu0 0
        %7784 = vmatpush1.bf16.xpose.msra.mxu0 0
        %7785 = vmatprep.subr.bf16.mxu0 0
        %7786 = vmatpush1.bf16.xpose.msra.mxu0 0
        %7787 = vmatprep.subr.bf16.mxu0 0
        %7788 = vmatpush1.bf16.xpose.msra.mxu0 0
        %7789 = vmatprep.subr.bf16.mxu0 0
        %7790 = vmatpush1.bf16.xpose.msra.mxu0 0
        %7791 = vmatprep.mubr.bf16.mxu0 0
        %7792 = vmatmul.mubr.bf16.gmra.mrb[0].mxu0 %v7754
        %v7793 = vpop.f32.mrb[0].mxu0
        %v7794 = vadd.f32 0.0, %v7793
        %v7795 = vpop.f32.mrb[0].mxu0
        %v7796 = vpop.f32.mrb[0].mxu0
        %v7797 = vpop.f32.mrb[0].mxu0
        %7798 = vdwg.mxu0
        %v7800 = vunpack.c.l.b16 %v7555
        %v7801 = vpack.c.b16 %v7800, %v7800
        %7802 = vrot.lane.b32.xlu0 %v7801, 16
        %v7803 = vpop.permute.xlu0 %7802
        %v7805 = vunpack.c.l.b16 %v7563
        %v7806 = vpack.c.b16 %v7805, %v7805
        %7807 = vrot.lane.b32.xlu0 %v7806, 16
        %v7808 = vpop.permute.xlu0 %7807
        %v7810 = vsel %vm702, %v7803, 0
        %v7813 = vsel %vm702, %v7808, 0
        %7815 = vmatprep.subr.bf16.mxu0 0
        %7816 = vmatpush1.bf16.xpose.msra.mxu0 %v7813
        %7817 = vmatprep.subr.bf16.mxu0 0
        %7818 = vmatpush1.bf16.xpose.msra.mxu0 0
        %7819 = vmatprep.subr.bf16.mxu0 0
        %7820 = vmatpush1.bf16.xpose.msra.mxu0 0
        %7821 = vmatprep.subr.bf16.mxu0 0
        %7822 = vmatpush1.bf16.xpose.msra.mxu0 0
        %7823 = vmatprep.subr.bf16.mxu0 0
        %7824 = vmatpush1.bf16.xpose.msra.mxu0 0
        %7825 = vmatprep.subr.bf16.mxu0 0
        %7826 = vmatpush1.bf16.xpose.msra.mxu0 0
        %7827 = vmatprep.subr.bf16.mxu0 0
        %7828 = vmatpush1.bf16.xpose.msra.mxu0 0
        %7829 = vmatprep.subr.bf16.mxu0 0
        %7830 = vmatpush1.bf16.xpose.msra.mxu0 0
        %7831 = vmatprep.subr.bf16.mxu0 0
        %7832 = vmatpush1.bf16.xpose.msra.mxu0 0
        %7833 = vmatprep.subr.bf16.mxu0 0
        %7834 = vmatpush1.bf16.xpose.msra.mxu0 0
        %7835 = vmatprep.subr.bf16.mxu0 0
        %7836 = vmatpush1.bf16.xpose.msra.mxu0 0
        %7837 = vmatprep.subr.bf16.mxu0 0
        %7838 = vmatpush1.bf16.xpose.msra.mxu0 0
        %7839 = vmatprep.subr.bf16.mxu0 0
        %7840 = vmatpush1.bf16.xpose.msra.mxu0 0
        %7841 = vmatprep.subr.bf16.mxu0 0
        %7842 = vmatpush1.bf16.xpose.msra.mxu0 0
        %7843 = vmatprep.subr.bf16.mxu0 0
        %7844 = vmatpush1.bf16.xpose.msra.mxu0 0
        %7845 = vmatprep.subr.bf16.mxu0 0
        %7846 = vmatpush1.bf16.xpose.msra.mxu0 0
        %7847 = vmatprep.mubr.bf16.mxu0 0
        %7848 = vmatmul.mubr.bf16.gmra.mrb[0].mxu0 %v7810
        %v7849 = vpop.f32.mrb[0].mxu0
        %v7850 = vadd.f32 0.0, %v7849
        %v7851 = vpop.f32.mrb[0].mxu0
        %v7852 = vpop.f32.mrb[0].mxu0
        %v7853 = vpop.f32.mrb[0].mxu0
        %7854 = vdwg.mxu0
        %v7856 = vunpack.c.l.b16 %v7556
        %v7857 = vpack.c.b16 %v7856, %v7856
        %7858 = vrot.lane.b32.xlu0 %v7857, 16
        %v7859 = vpop.permute.xlu0 %7858
        %v7861 = vunpack.c.l.b16 %v7564
        %v7862 = vpack.c.b16 %v7861, %v7861
        %7863 = vrot.lane.b32.xlu0 %v7862, 16
        %v7864 = vpop.permute.xlu0 %7863
        %v7866 = vsel %vm702, %v7859, 0
        %v7869 = vsel %vm702, %v7864, 0
        %7871 = vmatprep.subr.bf16.mxu0 0
        %7872 = vmatpush1.bf16.xpose.msra.mxu0 %v7869
        %7873 = vmatprep.subr.bf16.mxu0 0
        %7874 = vmatpush1.bf16.xpose.msra.mxu0 0
        %7875 = vmatprep.subr.bf16.mxu0 0
        %7876 = vmatpush1.bf16.xpose.msra.mxu0 0
        %7877 = vmatprep.subr.bf16.mxu0 0
        %7878 = vmatpush1.bf16.xpose.msra.mxu0 0
        %7879 = vmatprep.subr.bf16.mxu0 0
        %7880 = vmatpush1.bf16.xpose.msra.mxu0 0
        %7881 = vmatprep.subr.bf16.mxu0 0
        %7882 = vmatpush1.bf16.xpose.msra.mxu0 0
        %7883 = vmatprep.subr.bf16.mxu0 0
        %7884 = vmatpush1.bf16.xpose.msra.mxu0 0
        %7885 = vmatprep.subr.bf16.mxu0 0
        %7886 = vmatpush1.bf16.xpose.msra.mxu0 0
        %7887 = vmatprep.subr.bf16.mxu0 0
        %7888 = vmatpush1.bf16.xpose.msra.mxu0 0
        %7889 = vmatprep.subr.bf16.mxu0 0
        %7890 = vmatpush1.bf16.xpose.msra.mxu0 0
        %7891 = vmatprep.subr.bf16.mxu0 0
        %7892 = vmatpush1.bf16.xpose.msra.mxu0 0
        %7893 = vmatprep.subr.bf16.mxu0 0
        %7894 = vmatpush1.bf16.xpose.msra.mxu0 0
        %7895 = vmatprep.subr.bf16.mxu0 0
        %7896 = vmatpush1.bf16.xpose.msra.mxu0 0
        %7897 = vmatprep.subr.bf16.mxu0 0
        %7898 = vmatpush1.bf16.xpose.msra.mxu0 0
        %7899 = vmatprep.subr.bf16.mxu0 0
        %7900 = vmatpush1.bf16.xpose.msra.mxu0 0
        %7901 = vmatprep.subr.bf16.mxu0 0
        %7902 = vmatpush1.bf16.xpose.msra.mxu0 0
        %7903 = vmatprep.mubr.bf16.mxu0 0
        %7904 = vmatmul.mubr.bf16.gmra.mrb[0].mxu0 %v7866
        %v7905 = vpop.f32.mrb[0].mxu0
        %v7906 = vadd.f32 0.0, %v7905
        %v7907 = vpop.f32.mrb[0].mxu0
        %v7908 = vpop.f32.mrb[0].mxu0
        %v7909 = vpop.f32.mrb[0].mxu0
        %7910 = vdwg.mxu0
        %v7912 = vunpack.c.l.b16 %v7557
        %v7913 = vpack.c.b16 %v7912, %v7912
        %7914 = vrot.lane.b32.xlu0 %v7913, 16
        %v7915 = vpop.permute.xlu0 %7914
        %v7917 = vunpack.c.l.b16 %v7565
        %v7918 = vpack.c.b16 %v7917, %v7917
        %7919 = vrot.lane.b32.xlu0 %v7918, 16
        %v7920 = vpop.permute.xlu0 %7919
        %v7922 = vsel %vm702, %v7915, 0
        %v7925 = vsel %vm702, %v7920, 0
        %7927 = vmatprep.subr.bf16.mxu0 0
        %7928 = vmatpush1.bf16.xpose.msra.mxu0 %v7925
        %7929 = vmatprep.subr.bf16.mxu0 0
        %7930 = vmatpush1.bf16.xpose.msra.mxu0 0
        %7931 = vmatprep.subr.bf16.mxu0 0
        %7932 = vmatpush1.bf16.xpose.msra.mxu0 0
        %7933 = vmatprep.subr.bf16.mxu0 0
        %7934 = vmatpush1.bf16.xpose.msra.mxu0 0
        %7935 = vmatprep.subr.bf16.mxu0 0
        %7936 = vmatpush1.bf16.xpose.msra.mxu0 0
        %7937 = vmatprep.subr.bf16.mxu0 0
        %7938 = vmatpush1.bf16.xpose.msra.mxu0 0
        %7939 = vmatprep.subr.bf16.mxu0 0
        %7940 = vmatpush1.bf16.xpose.msra.mxu0 0
        %7941 = vmatprep.subr.bf16.mxu0 0
        %7942 = vmatpush1.bf16.xpose.msra.mxu0 0
        %7943 = vmatprep.subr.bf16.mxu0 0
        %7944 = vmatpush1.bf16.xpose.msra.mxu0 0
        %7945 = vmatprep.subr.bf16.mxu0 0
        %7946 = vmatpush1.bf16.xpose.msra.mxu0 0
        %7947 = vmatprep.subr.bf16.mxu0 0
        %7948 = vmatpush1.bf16.xpose.msra.mxu0 0
        %7949 = vmatprep.subr.bf16.mxu0 0
        %7950 = vmatpush1.bf16.xpose.msra.mxu0 0
        %7951 = vmatprep.subr.bf16.mxu0 0
        %7952 = vmatpush1.bf16.xpose.msra.mxu0 0
        %7953 = vmatprep.subr.bf16.mxu0 0
        %7954 = vmatpush1.bf16.xpose.msra.mxu0 0
        %7955 = vmatprep.subr.bf16.mxu0 0
        %7956 = vmatpush1.bf16.xpose.msra.mxu0 0
        %7957 = vmatprep.subr.bf16.mxu0 0
        %7958 = vmatpush1.bf16.xpose.msra.mxu0 0
        %7959 = vmatprep.mubr.bf16.mxu0 0
        %7960 = vmatmul.mubr.bf16.gmra.mrb[0].mxu0 %v7922
        %v7961 = vpop.f32.mrb[0].mxu0
        %v7962 = vadd.f32 0.0, %v7961
        %v7963 = vpop.f32.mrb[0].mxu0
        %v7964 = vpop.f32.mrb[0].mxu0
        %v7965 = vpop.f32.mrb[0].mxu0
        %7966 = vdwg.mxu0
        %v7968 = vunpack.c.l.b16 %v7558
        %v7969 = vpack.c.b16 %v7968, %v7968
        %7970 = vrot.lane.b32.xlu0 %v7969, 16
        %v7971 = vpop.permute.xlu0 %7970
        %v7973 = vunpack.c.l.b16 %v7566
        %v7974 = vpack.c.b16 %v7973, %v7973
        %7975 = vrot.lane.b32.xlu0 %v7974, 16
        %v7976 = vpop.permute.xlu0 %7975
        %v7978 = vsel %vm702, %v7971, 0
        %v7981 = vsel %vm702, %v7976, 0
        %7983 = vmatprep.subr.bf16.mxu0 0
        %7984 = vmatpush1.bf16.xpose.msra.mxu0 %v7981
        %7985 = vmatprep.subr.bf16.mxu0 0
        %7986 = vmatpush1.bf16.xpose.msra.mxu0 0
        %7987 = vmatprep.subr.bf16.mxu0 0
        %7988 = vmatpush1.bf16.xpose.msra.mxu0 0
        %7989 = vmatprep.subr.bf16.mxu0 0
        %7990 = vmatpush1.bf16.xpose.msra.mxu0 0
        %7991 = vmatprep.subr.bf16.mxu0 0
        %7992 = vmatpush1.bf16.xpose.msra.mxu0 0
        %7993 = vmatprep.subr.bf16.mxu0 0
        %7994 = vmatpush1.bf16.xpose.msra.mxu0 0
        %7995 = vmatprep.subr.bf16.mxu0 0
        %7996 = vmatpush1.bf16.xpose.msra.mxu0 0
        %7997 = vmatprep.subr.bf16.mxu0 0
        %7998 = vmatpush1.bf16.xpose.msra.mxu0 0
        %7999 = vmatprep.subr.bf16.mxu0 0
        %8000 = vmatpush1.bf16.xpose.msra.mxu0 0
        %8001 = vmatprep.subr.bf16.mxu0 0
        %8002 = vmatpush1.bf16.xpose.msra.mxu0 0
        %8003 = vmatprep.subr.bf16.mxu0 0
        %8004 = vmatpush1.bf16.xpose.msra.mxu0 0
        %8005 = vmatprep.subr.bf16.mxu0 0
        %8006 = vmatpush1.bf16.xpose.msra.mxu0 0
        %8007 = vmatprep.subr.bf16.mxu0 0
        %8008 = vmatpush1.bf16.xpose.msra.mxu0 0
        %8009 = vmatprep.subr.bf16.mxu0 0
        %8010 = vmatpush1.bf16.xpose.msra.mxu0 0
        %8011 = vmatprep.subr.bf16.mxu0 0
        %8012 = vmatpush1.bf16.xpose.msra.mxu0 0
        %8013 = vmatprep.subr.bf16.mxu0 0
        %8014 = vmatpush1.bf16.xpose.msra.mxu0 0
        %8015 = vmatprep.mubr.bf16.mxu0 0
        %8016 = vmatmul.mubr.bf16.gmra.mrb[0].mxu0 %v7978
        %v8017 = vpop.f32.mrb[0].mxu0
        %v8018 = vadd.f32 0.0, %v8017
        %v8019 = vpop.f32.mrb[0].mxu0
        %v8020 = vpop.f32.mrb[0].mxu0
        %v8021 = vpop.f32.mrb[0].mxu0
        %8022 = vdwg.mxu0
        %v8023 = vsel %vm1071, %v7626, -inf
        %8024 = vmax.xlane.f32.xlu0 %v8023
        %v8025 = vpop.xlane.xlu0 %8024
        %v8026 = vsel %vm1071, %v7682, -inf
        %8027 = vmax.xlane.f32.xlu0 %v8026
        %v8028 = vpop.xlane.xlu0 %8027
        %v8029 = vsel %vm1071, %v7738, -inf
        %8030 = vmax.xlane.f32.xlu0 %v8029
        %v8031 = vpop.xlane.xlu0 %8030
        %v8032 = vsel %vm1071, %v7794, -inf
        %8033 = vmax.xlane.f32.xlu0 %v8032
        %v8034 = vpop.xlane.xlu0 %8033
        %v8035 = vsel %vm1071, %v7850, -inf
        %8036 = vmax.xlane.f32.xlu0 %v8035
        %v8037 = vpop.xlane.xlu0 %8036
        %v8038 = vsel %vm1071, %v7906, -inf
        %8039 = vmax.xlane.f32.xlu0 %v8038
        %v8040 = vpop.xlane.xlu0 %8039
        %v8041 = vsel %vm1071, %v7962, -inf
        %8042 = vmax.xlane.f32.xlu0 %v8041
        %v8043 = vpop.xlane.xlu0 %8042
        %v8044 = vsel %vm1071, %v8018, -inf
        %8045 = vmax.xlane.f32.xlu0 %v8044
        %v8046 = vpop.xlane.xlu0 %8045
        %v8047 = vsub.f32 %v7626, %v8025
        %v8048 = vsub.f32 %v7682, %v8028
        %v8049 = vsub.f32 %v7738, %v8031
        %v8050 = vsub.f32 %v7794, %v8034
        %v8051 = vsub.f32 %v7850, %v8037
        %v8052 = vsub.f32 %v7906, %v8040
        %v8053 = vsub.f32 %v7962, %v8043
        %v8054 = vsub.f32 %v8018, %v8046
        %v8055 = vmul.f32 %v8047, 1.442695
        %v8056 = vpow.pop %v8055
        %v8057 = vmul.f32 %v8048, 1.442695
        %v8058 = vpow.pop %v8057
        %v8059 = vmul.f32 %v8049, 1.442695
        %v8060 = vpow.pop %v8059
        %v8061 = vmul.f32 %v8050, 1.442695
        %v8062 = vpow.pop %v8061
        %v8063 = vmul.f32 %v8051, 1.442695
        %v8064 = vpow.pop %v8063
        %v8065 = vmul.f32 %v8052, 1.442695
        %v8066 = vpow.pop %v8065
        %v8067 = vmul.f32 %v8053, 1.442695
        %v8068 = vpow.pop %v8067
        %v8069 = vmul.f32 %v8054, 1.442695
        %v8070 = vpow.pop %v8069
        %v8071 = vsel %vm1071, %v8056, 0.0
        %8072 = vadd.xlane.f32.xlu0 %v8071
        %v8073 = vpop.xlane.xlu0 %8072
        %v8074 = vsel %vm1071, %v8058, 0.0
        %8075 = vadd.xlane.f32.xlu0 %v8074
        %v8076 = vpop.xlane.xlu0 %8075
        %v8077 = vsel %vm1071, %v8060, 0.0
        %8078 = vadd.xlane.f32.xlu0 %v8077
        %v8079 = vpop.xlane.xlu0 %8078
        %v8080 = vsel %vm1071, %v8062, 0.0
        %8081 = vadd.xlane.f32.xlu0 %v8080
        %v8082 = vpop.xlane.xlu0 %8081
        %v8083 = vsel %vm1071, %v8064, 0.0
        %8084 = vadd.xlane.f32.xlu0 %v8083
        %v8085 = vpop.xlane.xlu0 %8084
        %v8086 = vsel %vm1071, %v8066, 0.0
        %8087 = vadd.xlane.f32.xlu0 %v8086
        %v8088 = vpop.xlane.xlu0 %8087
        %v8089 = vsel %vm1071, %v8068, 0.0
        %8090 = vadd.xlane.f32.xlu0 %v8089
        %v8091 = vpop.xlane.xlu0 %8090
        %v8092 = vsel %vm1071, %v8070, 0.0
        %8093 = vadd.xlane.f32.xlu0 %v8092
        %v8094 = vpop.xlane.xlu0 %8093
        %v8095 = vrcp.pop %v8073
        %v8096 = vrcp.pop %v8076
        %v8097 = vrcp.pop %v8079
        %v8098 = vrcp.pop %v8082
        %v8099 = vrcp.pop %v8085
        %v8100 = vrcp.pop %v8088
        %v8101 = vrcp.pop %v8091
        %v8102 = vrcp.pop %v8094
        %v8103 = vmul.f32 %v8056, %v8095
        %v8104 = vmul.f32 %v8058, %v8096
        %v8105 = vmul.f32 %v8060, %v8097
        %v8106 = vmul.f32 %v8062, %v8098
        %v8107 = vmul.f32 %v8064, %v8099
        %v8108 = vmul.f32 %v8066, %v8100
        %v8109 = vmul.f32 %v8068, %v8101
        %v8110 = vmul.f32 %v8070, %v8102
        %v8111 = vpack.c.bf16 %v8103, %v8103
        %v8112 = vpack.c.bf16 %v8104, %v8104
        %v8113 = vpack.c.bf16 %v8105, %v8105
        %v8114 = vpack.c.bf16 %v8106, %v8106
        %v8115 = vpack.c.bf16 %v8107, %v8107
        %v8116 = vpack.c.bf16 %v8108, %v8108
        %v8117 = vpack.c.bf16 %v8109, %v8109
        %v8118 = vpack.c.bf16 %v8110, %v8110
        %v8120 = vunpack.c.l.b16 %v7567
        %v8121 = vpack.c.b16 %v8120, %v8120
        %8122 = vrot.lane.b32.xlu0 %v8121, 16
        %v8123 = vpop.permute.xlu0 %8122
        %v8125 = vsel %vm1071, %v8111, 0
        %v8128 = vsel %vm1171, %v8123, 0
        %8130 = vmatprep.subr.bf16.mxu0 0
        %8131 = vmatpush1.bf16.msra.mxu0 %v8128
        %8132 = vmatprep.subr.bf16.mxu0 0
        %8133 = vmatpush1.bf16.msra.mxu0 0
        %8134 = vmatprep.subr.bf16.mxu0 0
        %8135 = vmatpush1.bf16.msra.mxu0 0
        %8136 = vmatprep.subr.bf16.mxu0 0
        %8137 = vmatpush1.bf16.msra.mxu0 0
        %8138 = vmatprep.subr.bf16.mxu0 0
        %8139 = vmatpush1.bf16.msra.mxu0 0
        %8140 = vmatprep.subr.bf16.mxu0 0
        %8141 = vmatpush1.bf16.msra.mxu0 0
        %8142 = vmatprep.subr.bf16.mxu0 0
        %8143 = vmatpush1.bf16.msra.mxu0 0
        %8144 = vmatprep.subr.bf16.mxu0 0
        %8145 = vmatpush1.bf16.msra.mxu0 0
        %8146 = vmatprep.subr.bf16.mxu0 0
        %8147 = vmatpush1.bf16.msra.mxu0 0
        %8148 = vmatprep.subr.bf16.mxu0 0
        %8149 = vmatpush1.bf16.msra.mxu0 0
        %8150 = vmatprep.subr.bf16.mxu0 0
        %8151 = vmatpush1.bf16.msra.mxu0 0
        %8152 = vmatprep.subr.bf16.mxu0 0
        %8153 = vmatpush1.bf16.msra.mxu0 0
        %8154 = vmatprep.subr.bf16.mxu0 0
        %8155 = vmatpush1.bf16.msra.mxu0 0
        %8156 = vmatprep.subr.bf16.mxu0 0
        %8157 = vmatpush1.bf16.msra.mxu0 0
        %8158 = vmatprep.subr.bf16.mxu0 0
        %8159 = vmatpush1.bf16.msra.mxu0 0
        %8160 = vmatprep.subr.bf16.mxu0 0
        %8161 = vmatpush1.bf16.msra.mxu0 0
        %8162 = vmatprep.mubr.bf16.mxu0 0
        %8163 = vmatmul.mubr.bf16.gmra.mrb[0].mxu0 %v8125
        %v8164 = vpop.f32.mrb[0].mxu0
        %v8165 = vadd.f32 0.0, %v8164
        %v8166 = vpop.f32.mrb[0].mxu0
        %v8167 = vpop.f32.mrb[0].mxu0
        %v8168 = vpop.f32.mrb[0].mxu0
        %8169 = vdwg.mxu0
        %v8171 = vunpack.c.l.b16 %v7568
        %v8172 = vpack.c.b16 %v8171, %v8171
        %8173 = vrot.lane.b32.xlu0 %v8172, 16
        %v8174 = vpop.permute.xlu0 %8173
        %v8176 = vsel %vm1071, %v8112, 0
        %v8179 = vsel %vm1171, %v8174, 0
        %8181 = vmatprep.subr.bf16.mxu0 0
        %8182 = vmatpush1.bf16.msra.mxu0 %v8179
        %8183 = vmatprep.subr.bf16.mxu0 0
        %8184 = vmatpush1.bf16.msra.mxu0 0
        %8185 = vmatprep.subr.bf16.mxu0 0
        %8186 = vmatpush1.bf16.msra.mxu0 0
        %8187 = vmatprep.subr.bf16.mxu0 0
        %8188 = vmatpush1.bf16.msra.mxu0 0
        %8189 = vmatprep.subr.bf16.mxu0 0
        %8190 = vmatpush1.bf16.msra.mxu0 0
        %8191 = vmatprep.subr.bf16.mxu0 0
        %8192 = vmatpush1.bf16.msra.mxu0 0
        %8193 = vmatprep.subr.bf16.mxu0 0
        %8194 = vmatpush1.bf16.msra.mxu0 0
        %8195 = vmatprep.subr.bf16.mxu0 0
        %8196 = vmatpush1.bf16.msra.mxu0 0
        %8197 = vmatprep.subr.bf16.mxu0 0
        %8198 = vmatpush1.bf16.msra.mxu0 0
        %8199 = vmatprep.subr.bf16.mxu0 0
        %8200 = vmatpush1.bf16.msra.mxu0 0
        %8201 = vmatprep.subr.bf16.mxu0 0
        %8202 = vmatpush1.bf16.msra.mxu0 0
        %8203 = vmatprep.subr.bf16.mxu0 0
        %8204 = vmatpush1.bf16.msra.mxu0 0
        %8205 = vmatprep.subr.bf16.mxu0 0
        %8206 = vmatpush1.bf16.msra.mxu0 0
        %8207 = vmatprep.subr.bf16.mxu0 0
        %8208 = vmatpush1.bf16.msra.mxu0 0
        %8209 = vmatprep.subr.bf16.mxu0 0
        %8210 = vmatpush1.bf16.msra.mxu0 0
        %8211 = vmatprep.subr.bf16.mxu0 0
        %8212 = vmatpush1.bf16.msra.mxu0 0
        %8213 = vmatprep.mubr.bf16.mxu0 0
        %8214 = vmatmul.mubr.bf16.gmra.mrb[0].mxu0 %v8176
        %v8215 = vpop.f32.mrb[0].mxu0
        %v8216 = vadd.f32 0.0, %v8215
        %v8217 = vpop.f32.mrb[0].mxu0
        %v8218 = vpop.f32.mrb[0].mxu0
        %v8219 = vpop.f32.mrb[0].mxu0
        %8220 = vdwg.mxu0
        %v8222 = vunpack.c.l.b16 %v7569
        %v8223 = vpack.c.b16 %v8222, %v8222
        %8224 = vrot.lane.b32.xlu0 %v8223, 16
        %v8225 = vpop.permute.xlu0 %8224
        %v8227 = vsel %vm1071, %v8113, 0
        %v8230 = vsel %vm1171, %v8225, 0
        %8232 = vmatprep.subr.bf16.mxu0 0
        %8233 = vmatpush1.bf16.msra.mxu0 %v8230
        %8234 = vmatprep.subr.bf16.mxu0 0
        %8235 = vmatpush1.bf16.msra.mxu0 0
        %8236 = vmatprep.subr.bf16.mxu0 0
        %8237 = vmatpush1.bf16.msra.mxu0 0
        %8238 = vmatprep.subr.bf16.mxu0 0
        %8239 = vmatpush1.bf16.msra.mxu0 0
        %8240 = vmatprep.subr.bf16.mxu0 0
        %8241 = vmatpush1.bf16.msra.mxu0 0
        %8242 = vmatprep.subr.bf16.mxu0 0
        %8243 = vmatpush1.bf16.msra.mxu0 0
        %8244 = vmatprep.subr.bf16.mxu0 0
        %8245 = vmatpush1.bf16.msra.mxu0 0
        %8246 = vmatprep.subr.bf16.mxu0 0
        %8247 = vmatpush1.bf16.msra.mxu0 0
        %8248 = vmatprep.subr.bf16.mxu0 0
        %8249 = vmatpush1.bf16.msra.mxu0 0
        %8250 = vmatprep.subr.bf16.mxu0 0
        %8251 = vmatpush1.bf16.msra.mxu0 0
        %8252 = vmatprep.subr.bf16.mxu0 0
        %8253 = vmatpush1.bf16.msra.mxu0 0
        %8254 = vmatprep.subr.bf16.mxu0 0
        %8255 = vmatpush1.bf16.msra.mxu0 0
        %8256 = vmatprep.subr.bf16.mxu0 0
        %8257 = vmatpush1.bf16.msra.mxu0 0
        %8258 = vmatprep.subr.bf16.mxu0 0
        %8259 = vmatpush1.bf16.msra.mxu0 0
        %8260 = vmatprep.subr.bf16.mxu0 0
        %8261 = vmatpush1.bf16.msra.mxu0 0
        %8262 = vmatprep.subr.bf16.mxu0 0
        %8263 = vmatpush1.bf16.msra.mxu0 0
        %8264 = vmatprep.mubr.bf16.mxu0 0
        %8265 = vmatmul.mubr.bf16.gmra.mrb[0].mxu0 %v8227
        %v8266 = vpop.f32.mrb[0].mxu0
        %v8267 = vadd.f32 0.0, %v8266
        %v8268 = vpop.f32.mrb[0].mxu0
        %v8269 = vpop.f32.mrb[0].mxu0
        %v8270 = vpop.f32.mrb[0].mxu0
        %8271 = vdwg.mxu0
        %v8273 = vunpack.c.l.b16 %v7570
        %v8274 = vpack.c.b16 %v8273, %v8273
        %8275 = vrot.lane.b32.xlu0 %v8274, 16
        %v8276 = vpop.permute.xlu0 %8275
        %v8278 = vsel %vm1071, %v8114, 0
        %v8281 = vsel %vm1171, %v8276, 0
        %8283 = vmatprep.subr.bf16.mxu0 0
        %8284 = vmatpush1.bf16.msra.mxu0 %v8281
        %8285 = vmatprep.subr.bf16.mxu0 0
        %8286 = vmatpush1.bf16.msra.mxu0 0
        %8287 = vmatprep.subr.bf16.mxu0 0
        %8288 = vmatpush1.bf16.msra.mxu0 0
        %8289 = vmatprep.subr.bf16.mxu0 0
        %8290 = vmatpush1.bf16.msra.mxu0 0
        %8291 = vmatprep.subr.bf16.mxu0 0
        %8292 = vmatpush1.bf16.msra.mxu0 0
        %8293 = vmatprep.subr.bf16.mxu0 0
        %8294 = vmatpush1.bf16.msra.mxu0 0
        %8295 = vmatprep.subr.bf16.mxu0 0
        %8296 = vmatpush1.bf16.msra.mxu0 0
        %8297 = vmatprep.subr.bf16.mxu0 0
        %8298 = vmatpush1.bf16.msra.mxu0 0
        %8299 = vmatprep.subr.bf16.mxu0 0
        %8300 = vmatpush1.bf16.msra.mxu0 0
        %8301 = vmatprep.subr.bf16.mxu0 0
        %8302 = vmatpush1.bf16.msra.mxu0 0
        %8303 = vmatprep.subr.bf16.mxu0 0
        %8304 = vmatpush1.bf16.msra.mxu0 0
        %8305 = vmatprep.subr.bf16.mxu0 0
        %8306 = vmatpush1.bf16.msra.mxu0 0
        %8307 = vmatprep.subr.bf16.mxu0 0
        %8308 = vmatpush1.bf16.msra.mxu0 0
        %8309 = vmatprep.subr.bf16.mxu0 0
        %8310 = vmatpush1.bf16.msra.mxu0 0
        %8311 = vmatprep.subr.bf16.mxu0 0
        %8312 = vmatpush1.bf16.msra.mxu0 0
        %8313 = vmatprep.subr.bf16.mxu0 0
        %8314 = vmatpush1.bf16.msra.mxu0 0
        %8315 = vmatprep.mubr.bf16.mxu0 0
        %8316 = vmatmul.mubr.bf16.gmra.mrb[0].mxu0 %v8278
        %v8317 = vpop.f32.mrb[0].mxu0
        %v8318 = vadd.f32 0.0, %v8317
        %v8319 = vpop.f32.mrb[0].mxu0
        %v8320 = vpop.f32.mrb[0].mxu0
        %v8321 = vpop.f32.mrb[0].mxu0
        %8322 = vdwg.mxu0
        %v8324 = vunpack.c.l.b16 %v7571
        %v8325 = vpack.c.b16 %v8324, %v8324
        %8326 = vrot.lane.b32.xlu0 %v8325, 16
        %v8327 = vpop.permute.xlu0 %8326
        %v8329 = vsel %vm1071, %v8115, 0
        %v8332 = vsel %vm1171, %v8327, 0
        %8334 = vmatprep.subr.bf16.mxu0 0
        %8335 = vmatpush1.bf16.msra.mxu0 %v8332
        %8336 = vmatprep.subr.bf16.mxu0 0
        %8337 = vmatpush1.bf16.msra.mxu0 0
        %8338 = vmatprep.subr.bf16.mxu0 0
        %8339 = vmatpush1.bf16.msra.mxu0 0
        %8340 = vmatprep.subr.bf16.mxu0 0
        %8341 = vmatpush1.bf16.msra.mxu0 0
        %8342 = vmatprep.subr.bf16.mxu0 0
        %8343 = vmatpush1.bf16.msra.mxu0 0
        %8344 = vmatprep.subr.bf16.mxu0 0
        %8345 = vmatpush1.bf16.msra.mxu0 0
        %8346 = vmatprep.subr.bf16.mxu0 0
        %8347 = vmatpush1.bf16.msra.mxu0 0
        %8348 = vmatprep.subr.bf16.mxu0 0
        %8349 = vmatpush1.bf16.msra.mxu0 0
        %8350 = vmatprep.subr.bf16.mxu0 0
        %8351 = vmatpush1.bf16.msra.mxu0 0
        %8352 = vmatprep.subr.bf16.mxu0 0
        %8353 = vmatpush1.bf16.msra.mxu0 0
        %8354 = vmatprep.subr.bf16.mxu0 0
        %8355 = vmatpush1.bf16.msra.mxu0 0
        %8356 = vmatprep.subr.bf16.mxu0 0
        %8357 = vmatpush1.bf16.msra.mxu0 0
        %8358 = vmatprep.subr.bf16.mxu0 0
        %8359 = vmatpush1.bf16.msra.mxu0 0
        %8360 = vmatprep.subr.bf16.mxu0 0
        %8361 = vmatpush1.bf16.msra.mxu0 0
        %8362 = vmatprep.subr.bf16.mxu0 0
        %8363 = vmatpush1.bf16.msra.mxu0 0
        %8364 = vmatprep.subr.bf16.mxu0 0
        %8365 = vmatpush1.bf16.msra.mxu0 0
        %8366 = vmatprep.mubr.bf16.mxu0 0
        %8367 = vmatmul.mubr.bf16.gmra.mrb[0].mxu0 %v8329
        %v8368 = vpop.f32.mrb[0].mxu0
        %v8369 = vadd.f32 0.0, %v8368
        %v8370 = vpop.f32.mrb[0].mxu0
        %v8371 = vpop.f32.mrb[0].mxu0
        %v8372 = vpop.f32.mrb[0].mxu0
        %8373 = vdwg.mxu0
        %v8375 = vunpack.c.l.b16 %v7572
        %v8376 = vpack.c.b16 %v8375, %v8375
        %8377 = vrot.lane.b32.xlu0 %v8376, 16
        %v8378 = vpop.permute.xlu0 %8377
        %v8380 = vsel %vm1071, %v8116, 0
        %v8383 = vsel %vm1171, %v8378, 0
        %8385 = vmatprep.subr.bf16.mxu0 0
        %8386 = vmatpush1.bf16.msra.mxu0 %v8383
        %8387 = vmatprep.subr.bf16.mxu0 0
        %8388 = vmatpush1.bf16.msra.mxu0 0
        %8389 = vmatprep.subr.bf16.mxu0 0
        %8390 = vmatpush1.bf16.msra.mxu0 0
        %8391 = vmatprep.subr.bf16.mxu0 0
        %8392 = vmatpush1.bf16.msra.mxu0 0
        %8393 = vmatprep.subr.bf16.mxu0 0
        %8394 = vmatpush1.bf16.msra.mxu0 0
        %8395 = vmatprep.subr.bf16.mxu0 0
        %8396 = vmatpush1.bf16.msra.mxu0 0
        %8397 = vmatprep.subr.bf16.mxu0 0
        %8398 = vmatpush1.bf16.msra.mxu0 0
        %8399 = vmatprep.subr.bf16.mxu0 0
        %8400 = vmatpush1.bf16.msra.mxu0 0
        %8401 = vmatprep.subr.bf16.mxu0 0
        %8402 = vmatpush1.bf16.msra.mxu0 0
        %8403 = vmatprep.subr.bf16.mxu0 0
        %8404 = vmatpush1.bf16.msra.mxu0 0
        %8405 = vmatprep.subr.bf16.mxu0 0
        %8406 = vmatpush1.bf16.msra.mxu0 0
        %8407 = vmatprep.subr.bf16.mxu0 0
        %8408 = vmatpush1.bf16.msra.mxu0 0
        %8409 = vmatprep.subr.bf16.mxu0 0
        %8410 = vmatpush1.bf16.msra.mxu0 0
        %8411 = vmatprep.subr.bf16.mxu0 0
        %8412 = vmatpush1.bf16.msra.mxu0 0
        %8413 = vmatprep.subr.bf16.mxu0 0
        %8414 = vmatpush1.bf16.msra.mxu0 0
        %8415 = vmatprep.subr.bf16.mxu0 0
        %8416 = vmatpush1.bf16.msra.mxu0 0
        %8417 = vmatprep.mubr.bf16.mxu0 0
        %8418 = vmatmul.mubr.bf16.gmra.mrb[0].mxu0 %v8380
        %v8419 = vpop.f32.mrb[0].mxu0
        %v8420 = vadd.f32 0.0, %v8419
        %v8421 = vpop.f32.mrb[0].mxu0
        %v8422 = vpop.f32.mrb[0].mxu0
        %v8423 = vpop.f32.mrb[0].mxu0
        %8424 = vdwg.mxu0
        %v8426 = vunpack.c.l.b16 %v7573
        %v8427 = vpack.c.b16 %v8426, %v8426
        %8428 = vrot.lane.b32.xlu0 %v8427, 16
        %v8429 = vpop.permute.xlu0 %8428
        %v8431 = vsel %vm1071, %v8117, 0
        %v8434 = vsel %vm1171, %v8429, 0
        %8436 = vmatprep.subr.bf16.mxu0 0
        %8437 = vmatpush1.bf16.msra.mxu0 %v8434
        %8438 = vmatprep.subr.bf16.mxu0 0
        %8439 = vmatpush1.bf16.msra.mxu0 0
        %8440 = vmatprep.subr.bf16.mxu0 0
        %8441 = vmatpush1.bf16.msra.mxu0 0
        %8442 = vmatprep.subr.bf16.mxu0 0
        %8443 = vmatpush1.bf16.msra.mxu0 0
        %8444 = vmatprep.subr.bf16.mxu0 0
        %8445 = vmatpush1.bf16.msra.mxu0 0
        %8446 = vmatprep.subr.bf16.mxu0 0
        %8447 = vmatpush1.bf16.msra.mxu0 0
        %8448 = vmatprep.subr.bf16.mxu0 0
        %8449 = vmatpush1.bf16.msra.mxu0 0
        %8450 = vmatprep.subr.bf16.mxu0 0
        %8451 = vmatpush1.bf16.msra.mxu0 0
        %8452 = vmatprep.subr.bf16.mxu0 0
        %8453 = vmatpush1.bf16.msra.mxu0 0
        %8454 = vmatprep.subr.bf16.mxu0 0
        %8455 = vmatpush1.bf16.msra.mxu0 0
        %8456 = vmatprep.subr.bf16.mxu0 0
        %8457 = vmatpush1.bf16.msra.mxu0 0
        %8458 = vmatprep.subr.bf16.mxu0 0
        %8459 = vmatpush1.bf16.msra.mxu0 0
        %8460 = vmatprep.subr.bf16.mxu0 0
        %8461 = vmatpush1.bf16.msra.mxu0 0
        %8462 = vmatprep.subr.bf16.mxu0 0
        %8463 = vmatpush1.bf16.msra.mxu0 0
        %8464 = vmatprep.subr.bf16.mxu0 0
        %8465 = vmatpush1.bf16.msra.mxu0 0
        %8466 = vmatprep.subr.bf16.mxu0 0
        %8467 = vmatpush1.bf16.msra.mxu0 0
        %8468 = vmatprep.mubr.bf16.mxu0 0
        %8469 = vmatmul.mubr.bf16.gmra.mrb[0].mxu0 %v8431
        %v8470 = vpop.f32.mrb[0].mxu0
        %v8471 = vadd.f32 0.0, %v8470
        %v8472 = vpop.f32.mrb[0].mxu0
        %v8473 = vpop.f32.mrb[0].mxu0
        %v8474 = vpop.f32.mrb[0].mxu0
        %8475 = vdwg.mxu0
        %v8477 = vunpack.c.l.b16 %v7574
        %v8478 = vpack.c.b16 %v8477, %v8477
        %8479 = vrot.lane.b32.xlu0 %v8478, 16
        %v8480 = vpop.permute.xlu0 %8479
        %v8482 = vsel %vm1071, %v8118, 0
        %v8485 = vsel %vm1171, %v8480, 0
        %8487 = vmatprep.subr.bf16.mxu0 0
        %8488 = vmatpush1.bf16.msra.mxu0 %v8485
        %8489 = vmatprep.subr.bf16.mxu0 0
        %8490 = vmatpush1.bf16.msra.mxu0 0
        %8491 = vmatprep.subr.bf16.mxu0 0
        %8492 = vmatpush1.bf16.msra.mxu0 0
        %8493 = vmatprep.subr.bf16.mxu0 0
        %8494 = vmatpush1.bf16.msra.mxu0 0
        %8495 = vmatprep.subr.bf16.mxu0 0
        %8496 = vmatpush1.bf16.msra.mxu0 0
        %8497 = vmatprep.subr.bf16.mxu0 0
        %8498 = vmatpush1.bf16.msra.mxu0 0
        %8499 = vmatprep.subr.bf16.mxu0 0
        %8500 = vmatpush1.bf16.msra.mxu0 0
        %8501 = vmatprep.subr.bf16.mxu0 0
        %8502 = vmatpush1.bf16.msra.mxu0 0
        %8503 = vmatprep.subr.bf16.mxu0 0
        %8504 = vmatpush1.bf16.msra.mxu0 0
        %8505 = vmatprep.subr.bf16.mxu0 0
        %8506 = vmatpush1.bf16.msra.mxu0 0
        %8507 = vmatprep.subr.bf16.mxu0 0
        %8508 = vmatpush1.bf16.msra.mxu0 0
        %8509 = vmatprep.subr.bf16.mxu0 0
        %8510 = vmatpush1.bf16.msra.mxu0 0
        %8511 = vmatprep.subr.bf16.mxu0 0
        %8512 = vmatpush1.bf16.msra.mxu0 0
        %8513 = vmatprep.subr.bf16.mxu0 0
        %8514 = vmatpush1.bf16.msra.mxu0 0
        %8515 = vmatprep.subr.bf16.mxu0 0
        %8516 = vmatpush1.bf16.msra.mxu0 0
        %8517 = vmatprep.subr.bf16.mxu0 0
        %8518 = vmatpush1.bf16.msra.mxu0 0
        %8519 = vmatprep.mubr.bf16.mxu0 0
        %8520 = vmatmul.mubr.bf16.gmra.mrb[0].mxu0 %v8482
        %v8521 = vpop.f32.mrb[0].mxu0
        %v8522 = vadd.f32 0.0, %v8521
        %v8523 = vpop.f32.mrb[0].mxu0
        %v8524 = vpop.f32.mrb[0].mxu0
        %v8525 = vpop.f32.mrb[0].mxu0
        %8526 = vdwg.mxu0
        %v8527 = vpack.c.bf16 %v8216, %v8165
        %v8528 = vpack.c.bf16 %v8318, %v8267
        %v8529 = vpack.c.bf16 %v8420, %v8369
        %v8530 = vpack.c.bf16 %v8522, %v8471
        %8535 = vrot.lane.b32.xlu0 %v8527, 112
        %v8536 = vpop.permute.xlu0 %8535
        %8537 = vrot.lane.b32.xlu0 %v8528, 112
        %v8538 = vpop.permute.xlu0 %8537
        %8539 = vrot.lane.b32.xlu0 %v8529, 112
        %v8540 = vpop.permute.xlu0 %8539
        %8541 = vrot.lane.b32.xlu0 %v8530, 112
        %v8542 = vpop.permute.xlu0 %8541
        %vm8547 = vcmask 1048448
        %8548 = vst.msk [vmem:[#allocation3] sm:$0xff] %vm8547, %v8536
        %8549 = vst.msk [vmem:[#allocation3 + $0x8] sm:$0xff] %vm8547, %v8538
        %8550 = vst.msk [vmem:[#allocation3 + $0x10] sm:$0xff] %vm8547, %v8540
        %8551 = vst.msk [vmem:[#allocation3 + $0x18] sm:$0xff] %vm8547, %v8542
        %v8552 = vld [vmem:[#allocation3] sm:$0xff]
        %v8553 = vld [vmem:[#allocation3 + $0x8] sm:$0xff]
        %v8554 = vld [vmem:[#allocation3 + $0x10] sm:$0xff]
        %v8555 = vld [vmem:[#allocation3 + $0x18] sm:$0xff]
        %v8556 = vld [vmem:[#allocation9] sm:$0xf]
        %v8557 = vld [vmem:[#allocation9 + $0x4] sm:$0xf]
        %v8558 = vld [vmem:[#allocation9 + $0x8] sm:$0xf]
        %v8559 = vld [vmem:[#allocation9 + $0xc] sm:$0xf]
        %v8560 = vld [vmem:[#allocation9 + $0x10] sm:$0xf]
        %v8561 = vld [vmem:[#allocation9 + $0x14] sm:$0xf]
        %v8562 = vld [vmem:[#allocation9 + $0x18] sm:$0xf]
        %v8563 = vld [vmem:[#allocation9 + $0x1c] sm:$0xf]
        %v8564 = vld [vmem:[#allocation9 + $0x20] sm:$0xf]
        %v8565 = vld [vmem:[#allocation9 + $0x24] sm:$0xf]
        %v8566 = vld [vmem:[#allocation9 + $0x28] sm:$0xf]
        %v8567 = vld [vmem:[#allocation9 + $0x2c] sm:$0xf]
        %v8568 = vld [vmem:[#allocation9 + $0x30] sm:$0xf]
        %v8569 = vld [vmem:[#allocation9 + $0x34] sm:$0xf]
        %v8570 = vld [vmem:[#allocation9 + $0x38] sm:$0xf]
        %v8571 = vld [vmem:[#allocation9 + $0x3c] sm:$0xf]
        %v8572 = vld [vmem:[%s3] sm:$0x1]
        %v8574 = vlaneseq
        %v8575 = vshrl.u32 %v8574, 7
        %v8576 = vsub.s32 0, %v8575
        %v8577 = vrot.slane %v8572, %v8576
        %v8595 = vunpack.c.l.b16 %v8556
        %v8596 = vunpack.c.l.b16 %v8557
        %v8597 = vunpack.c.l.b16 %v8558
        %v8598 = vunpack.c.l.b16 %v8559
        %v8599 = vunpack.c.l.b16 %v8560
        %v8600 = vunpack.c.l.b16 %v8561
        %v8601 = vunpack.c.l.b16 %v8562
        %v8602 = vunpack.c.l.b16 %v8563
        %v8603 = vunpack.c.l.b16 %v8564
        %v8604 = vunpack.c.l.b16 %v8565
        %v8605 = vunpack.c.l.b16 %v8566
        %v8606 = vunpack.c.l.b16 %v8567
        %v8607 = vunpack.c.l.b16 %v8568
        %v8608 = vunpack.c.l.b16 %v8569
        %v8609 = vunpack.c.l.b16 %v8570
        %v8610 = vunpack.c.l.b16 %v8571
        %v8611 = vpack.c.b16 %v8596, %v8595
        %v8612 = vpack.c.b16 %v8598, %v8597
        %v8613 = vpack.c.b16 %v8600, %v8599
        %v8614 = vpack.c.b16 %v8602, %v8601
        %v8615 = vpack.c.b16 %v8604, %v8603
        %v8616 = vpack.c.b16 %v8606, %v8605
        %v8617 = vpack.c.b16 %v8608, %v8607
        %v8618 = vpack.c.b16 %v8610, %v8609
        %8627 = vmatprep.subr.bf16.mxu0 0
        %8628 = vmatpush1.bf16.msra.mxu0 %v8611
        %8629 = vmatprep.subr.bf16.mxu0 0
        %8630 = vmatpush1.bf16.msra.mxu0 %v8612
        %8631 = vmatprep.subr.bf16.mxu0 0
        %8632 = vmatpush1.bf16.msra.mxu0 %v8613
        %8633 = vmatprep.subr.bf16.mxu0 0
        %8634 = vmatpush1.bf16.msra.mxu0 %v8614
        %8635 = vmatprep.subr.bf16.mxu0 0
        %8636 = vmatpush1.bf16.msra.mxu0 %v8615
        %8637 = vmatprep.subr.bf16.mxu0 0
        %8638 = vmatpush1.bf16.msra.mxu0 %v8616
        %8639 = vmatprep.subr.bf16.mxu0 0
        %8640 = vmatpush1.bf16.msra.mxu0 %v8617
        %8641 = vmatprep.subr.bf16.mxu0 0
        %8642 = vmatpush1.bf16.msra.mxu0 %v8618
        %8643 = vmatprep.subr.bf16.mxu0 0
        %8644 = vmatpush1.bf16.msra.mxu0 0
        %8645 = vmatprep.subr.bf16.mxu0 0
        %8646 = vmatpush1.bf16.msra.mxu0 0
        %8647 = vmatprep.subr.bf16.mxu0 0
        %8648 = vmatpush1.bf16.msra.mxu0 0
        %8649 = vmatprep.subr.bf16.mxu0 0
        %8650 = vmatpush1.bf16.msra.mxu0 0
        %8651 = vmatprep.subr.bf16.mxu0 0
        %8652 = vmatpush1.bf16.msra.mxu0 0
        %8653 = vmatprep.subr.bf16.mxu0 0
        %8654 = vmatpush1.bf16.msra.mxu0 0
        %8655 = vmatprep.subr.bf16.mxu0 0
        %8656 = vmatpush1.bf16.msra.mxu0 0
        %8657 = vmatprep.subr.bf16.mxu0 0
        %8658 = vmatpush1.bf16.msra.mxu0 0
        %8659 = vmatprep.mubr.bf16.mxu0 0
        %8660 = vmatmul.mubr.bf16.gmra.mrb[0].mxu0 %v8552
        %v8661 = vpop.f32.mrb[0].mxu0
        %v8662 = vadd.f32 %v8577, %v8661
        %v8663 = vpop.f32.mrb[0].mxu0
        %v8664 = vpop.f32.mrb[0].mxu0
        %v8665 = vadd.f32 %v8577, %v8664
        %v8666 = vpop.f32.mrb[0].mxu0
        %8667 = vmatprep.mubr.bf16.mxu0 0
        %8668 = vmatmul.mubr.bf16.gmra.mrb[0].mxu0 %v8553
        %v8669 = vpop.f32.mrb[0].mxu0
        %v8670 = vadd.f32 %v8577, %v8669
        %v8671 = vpop.f32.mrb[0].mxu0
        %v8672 = vpop.f32.mrb[0].mxu0
        %v8673 = vadd.f32 %v8577, %v8672
        %v8674 = vpop.f32.mrb[0].mxu0
        %8675 = vmatprep.mubr.bf16.mxu0 0
        %8676 = vmatmul.mubr.bf16.gmra.mrb[0].mxu0 %v8554
        %v8677 = vpop.f32.mrb[0].mxu0
        %v8678 = vadd.f32 %v8577, %v8677
        %v8679 = vpop.f32.mrb[0].mxu0
        %v8680 = vpop.f32.mrb[0].mxu0
        %v8681 = vadd.f32 %v8577, %v8680
        %v8682 = vpop.f32.mrb[0].mxu0
        %8683 = vmatprep.mubr.bf16.mxu0 0
        %8684 = vmatmul.mubr.bf16.gmra.mrb[0].mxu0 %v8555
        %v8685 = vpop.f32.mrb[0].mxu0
        %v8686 = vadd.f32 %v8577, %v8685
        %v8687 = vpop.f32.mrb[0].mxu0
        %v8688 = vpop.f32.mrb[0].mxu0
        %v8689 = vadd.f32 %v8577, %v8688
        %v8690 = vpop.f32.mrb[0].mxu0
        %8691 = vdwg.mxu0
        %8692 = vst [vmem:[%s244] sm:$0xff] %v8662
        %8693 = vst [vmem:[%s244 + $0x8] sm:$0xff] %v8665
        %8694 = vst [vmem:[%s244 + $0x10] sm:$0xff] %v8670
        %8695 = vst [vmem:[%s244 + $0x18] sm:$0xff] %v8673
        %8696 = vst [vmem:[%s244 + $0x20] sm:$0xff] %v8678
        %8697 = vst [vmem:[%s244 + $0x28] sm:$0xff] %v8681
        %8698 = vst [vmem:[%s244 + $0x30] sm:$0xff] %v8686
        %8699 = vst [vmem:[%s244 + $0x38] sm:$0xff] %v8689
        %s8700 = sand.u32 %s119, 1
        %s8701 = scalar_lea.sflag [#allocation6], %s8700
        %s8702 = sand.u32 %s119, 1
        %s8703 = smul.addr %s8702, 64
        %s8704 = scalar_lea.vmem [#allocation10], %s8703
        // Predicated region
        $region49: #{tpu_custom_call.1} parent=35 // pred_check
          %p8705 = pneg %p129
        $region50: #{tpu_custom_call.1} parent=35 // pred_check_branch
          %8707 = sbr.rel (%p8705) target = $region52
        $region51: #{tpu_custom_call.1} parent=35 // pred_region
          %s8708 = smul.u32 8, %s22
          %s8710 = ssub.s32 1024, 1024
          %8711 = vsyncadd %s8701, %s8710
          %s8712 = smul.addr %s8708, 128
          %s8713 = scalar_lea.hbm %s4, %s8712
          %s8714 = sshll.u32 %s8704, 4
          %s8715 = int_to_ptr.vmem [resolvable:$true] %s8714
          %8720 = dma.vmem_to_hbm [thread:$0]  %s8715, 1024, %s8713, %s8701, 128, 128, 8
        $region52: #{tpu_custom_call.1} parent=35 // pred_fallthru
          _
      $region36: #{tpu_custom_call.1} parent=5 // pred_fallthru
        _
      %p8721 = scmp.le.s32.totalorder 2, %s17
      // Predicated region
      $region53: #{tpu_custom_call.1} parent=5 // pred_check
        %p8722 = pneg %p8721
      $region54: #{tpu_custom_call.1} parent=5 // pred_check_branch
        %8724 = sbr.rel (%p8722) target = $region56
      $region55: #{tpu_custom_call.1} parent=5 // pred_region
        %s8725 = ssub.s32 %s17, 2
        // Predicated region
        $region57: #{tpu_custom_call.1} parent=55 // pred_check
          %p8726 = pneg %p135
        $region58: #{tpu_custom_call.1} parent=55 // pred_check_branch
          %8728 = sbr.rel (%p8726) target = $region60
        $region59: #{tpu_custom_call.1} parent=55 // pred_region
          %s8729 = sand.u32 %s120, 1
          %s8730 = scalar_lea.sflag [#allocation6], %s8729
          %s8731 = sand.u32 %s120, 1
          %s8732 = smul.addr %s8731, 64
          %s8733 = scalar_lea.vmem [#allocation10], %s8732
          %8734 = dma.done %s8730, 1024
        $region60: #{tpu_custom_call.1} parent=55 // pred_fallthru
          _
      $region56: #{tpu_custom_call.1} parent=5 // pred_fallthru
        _
    $region6: #{tpu_custom_call.1} parent=1 // loop_footer
      %s21 = sadd.s32 1, %s17
    $region7: #{tpu_custom_call.1} parent=1 // loop_footer_branch
      %16 = sbr.rel target = $region3
    $region8: #{tpu_custom_call.1} parent=1 // loop_exit
      _
    %8735 = vsyncpa [#allocation5], 1
    %s8736 = scalar_lea.sflag [#allocation5], 1
    %8737 = vsyncpa %s8736, 1
    %8738 = vsyncpa [#allocation8], 1
    %8739 = vsyncpa [#allocation6], 1
    %s8740 = scalar_lea.sflag [#allocation6], 1
    %8741 = vsyncpa %s8740, 1

</llo_original>
